<compile_context>
chip_gen: v7x
topology: tpu7x:2x2x1
jax: 0.10.0
libtpu: 0.0.40
codegen_flags: <defaults>
</compile_context>

<pallas_src>
import functools

import numpy as np

import jax
import jax.numpy as jnp
from jax.experimental import pallas as pl
from jax.experimental.pallas import tpu as pltpu


# ----------------------------------------------------------------------------
# In-kernel building blocks
# ----------------------------------------------------------------------------
def _convt_slab(x_bf16, b_ref, a_ref, out_cols):
    """y = sum_t A[t] @ (x @ B[t]), with the k taps of B pre-concatenated on lanes.

    x_bf16 : (N*Hin,  Win*Cin)        bf16 activation slab
    b_ref  : (Win*Cin, k*Wout*Cout)   bf16 wide mixing matrix [B0|B1|...|Bk-1]
    a_ref  : (k, N*Hout, N*Hin)       bf16 0/1 row-scatter (exact in bf16)
    returns: (N*Hout, Wout*Cout)      f32
    """
    k = a_ref.shape[0]
    tmp = jnp.dot(x_bf16, b_ref[...], preferred_element_type=jnp.float32)
    tmp = tmp.astype(jnp.bfloat16)          # A only selects/sums rows afterwards
    acc = None
    for t in range(k):                      # static unroll (k = 4)
        sl = tmp[:, t * out_cols:(t + 1) * out_cols]   # 256-aligned lane slice
        con = jnp.dot(a_ref[t], sl, preferred_element_type=jnp.float32)
        acc = con if acc is None else acc + con
    return acc


def _bn_relu(acc, s_ref, st_ref, count, eps):
    """BatchNorm2d training-mode batch stats (gamma=1, beta=0) + ReLU, all f32."""
    col_sum = jnp.sum(acc, axis=0, keepdims=True)                  # (1, Wout*Cout)
    col_sq = jnp.sum(acc * acc, axis=0, keepdims=True)
    ch_sum = jnp.dot(col_sum, s_ref[...], preferred_element_type=jnp.float32)
    ch_sq = jnp.dot(col_sq, s_ref[...], preferred_element_type=jnp.float32)
    inv_n = 1.0 / count
    mean = ch_sum * inv_n                                          # (1, Cout)
    var = jnp.maximum(ch_sq * inv_n - mean * mean, 0.0)            # biased + clamp
    scale = jax.lax.rsqrt(var + eps)
    bias = -mean * scale
    scale_cols = jnp.dot(scale, st_ref[...], preferred_element_type=jnp.float32)
    bias_cols = jnp.dot(bias, st_ref[...], preferred_element_type=jnp.float32)
    return jnp.maximum(acc * scale_cols + bias_cols, 0.0)


def _generator_kernel(*refs, meta, eps):
    """Whole DCGAN generator: 5x (ConvTranspose2d [+BN+ReLU]) + Tanh, one body."""
    o_ref = refs[-1]
    x = refs[0][...]                        # (N*1, 1*nz) bf16 lane slab
    pos = 1
    n_layers = len(meta)
    for li, (out_cols, count) in enumerate(meta):
        last = li == n_layers - 1
        if not last:
            b_ref, a_ref, s_ref, st_ref = refs[pos:pos + 4]
            pos += 4
            acc = _convt_slab(x, b_ref, a_ref, out_cols)
            # Next layer's input stays on-chip (bf16), never written to HBM.
            x = _bn_relu(acc, s_ref, st_ref, count, eps).astype(jnp.bfloat16)
        else:
            b_ref, a_ref = refs[pos:pos + 2]
            pos += 2
            acc = _convt_slab(x, b_ref, a_ref, out_cols)
            o_ref[...] = jnp.tanh(acc).astype(o_ref.dtype)        # tanh -> EUP slot


# ----------------------------------------------------------------------------
# Single fused pallas_call wrapper
# ----------------------------------------------------------------------------
def generator_forward_pallas(layers, z_nchw, eps=1e-5):
    n = z_nchw.shape[0]
    x = z_nchw.reshape(n, -1).astype(jnp.bfloat16)      # (N*1, 1*nz) lane slab
    inputs = [x]
    meta = []
    last = len(layers) - 1
    for li, L in enumerate(layers):
        inputs.append(L["B"])
        inputs.append(L["A"])
        if li < last:
            inputs.append(L["S"])
            inputs.append(L["ST"])
        meta.append((L["out_cols"], L["count"]))
    out_rows, out_cols = layers[-1]["out_rows"], layers[-1]["out_cols"]

    kern = functools.partial(_generator_kernel, meta=tuple(meta), eps=eps)
    vmem = pl.BlockSpec(memory_space=pltpu.MemorySpace.VMEM)
    out = pl.pallas_call(
        kern,
        out_shape=jax.ShapeDtypeStruct((out_rows, out_cols), jnp.bfloat16),
        in_specs=[vmem] * len(inputs),      # full arrays in VMEM, no grid/pipelining
        out_specs=vmem,
    )(*inputs)

    out_hw = layers[-1]["out_hw"]
    cout, cout_p = layers[-1]["cout"], layers[-1]["cout_p"]
    img = out.reshape(n, out_hw, out_hw, cout_p)        # (N*H, W*Cp) -> NHWC (bit-reshape)
    img = img[..., :cout].astype(jnp.float32)           # crop lane-pad channel, upcast
    return jnp.transpose(img, (0, 3, 1, 2))             # NHWC -> NCHW module boundary


# ----------------------------------------------------------------------------
# One-time setup: fold ConvTranspose2d spatial structure into constant matrices
# ----------------------------------------------------------------------------
def _tap_selectors(in_size, out_size, k, stride, padding):
    """sel[t][i, o] = 1  iff  o == i*stride - padding + t  (ConvTranspose2d map)."""
    sels = []
    for t in range(k):
        m = np.zeros((in_size, out_size), np.float32)
        for i in range(in_size):
            o = i * stride - padding + t
            if 0 <= o < out_size:
                m[i, o] = 1.0
        sels.append(m)
    return sels


def prepare_layers(params, conv_cfg, batch, pad_last_cout_to=4):
    """Precompute per-layer wide-B / A / S matrices (host-side, once)."""
    layers = []
    in_hw = 1
    nlayers = len(params)
    for li, (w, (stride, pad)) in enumerate(zip(params, conv_cfg)):
        w_np = np.asarray(jax.device_get(w), np.float32)   # (Cin, Cout, k, k)
        cin, cout, k, _ = w_np.shape
        cout_p = cout
        if li == nlayers - 1 and cout % pad_last_cout_to != 0:
            cout_p = pad_last_cout_to                      # lane-dense final output
            w_np = np.concatenate(
                [w_np, np.zeros((cin, cout_p - cout, k, k), np.float32)], axis=1)
        out_hw = (in_hw - 1) * stride - 2 * pad + k
        sel = _tap_selectors(in_hw, out_hw, k, stride, pad)
        # B[ky]: (in_hw*Cin, out_hw*Cout_p) width+channel mixing for kernel row ky;
        # concatenated along lanes so the kernel issues ONE wide dot per layer.
        B = [sum(np.kron(sel[kx], w_np[:, :, ky, kx]) for kx in range(k))
             for ky in range(k)]
        B_wide = np.concatenate(B, axis=1)                 # (in_hw*Cin, k*out_hw*Cout_p)
        # A[ky]: (N*out_hw, N*in_hw) block-diag row scatter (stride/padding/bounds);
        # entries are 0/1 -> exact in bf16.
        A = np.stack([np.kron(np.eye(batch, dtype=np.float32), sel[t].T)
                      for t in range(k)])
        # S / ST: interleaved-column <-> channel reduce / broadcast (kept f32 for BN).
        S = np.kron(np.ones((out_hw, 1), np.float32), np.eye(cout_p, dtype=np.float32))
        layers.append(dict(
            B=jnp.asarray(B_wide, jnp.bfloat16),
            A=jnp.asarray(A, jnp.bfloat16),
            S=jnp.asarray(S, jnp.float32),
            ST=jnp.asarray(S.T.copy(), jnp.float32),
            out_rows=batch * out_hw,
            out_cols=out_hw * cout_p,
            count=float(batch * out_hw * out_hw),
            out_hw=out_hw,
            cout=cout,
            cout_p=cout_p))
        in_hw = out_hw
    return layers


def init_generator_params(key, nz, ngf, nc):
    specs = [(nz,      ngf * 8, 4),
             (ngf * 8, ngf * 4, 4),
             (ngf * 4, ngf * 2, 4),
             (ngf * 2, ngf,     4),
             (ngf,     nc,      4)]
    params = []
    for cin, cout, k in specs:
        key, sub = jax.random.split(key)
        params.append(jax.random.normal(sub, (cin, cout, k, k),
                                        jnp.float32) * 0.02)     # DCGAN N(0, 0.02)
    return params


# ----------------------------------------------------------------------------
# Pure-JAX reference (dilate + pad + im2col formulation, f32) for validation
# ----------------------------------------------------------------------------
def _convt_ref(x_nhwc, w, stride, padding):
    N, H, W, Cin = x_nhwc.shape
    _, Cout, k, _ = w.shape
    OH = (H - 1) * stride - 2 * padding + k
    OW = (W - 1) * stride - 2 * padding + k
    DH, DW = (H - 1) * stride + 1, (W - 1) * stride + 1
    xd = jnp.zeros((N, DH, DW, Cin), jnp.float32)
    xd = xd.at[:, ::stride, ::stride, :].set(x_nhwc)
    pp = k - 1 - padding
    xp = jnp.pad(xd, ((0, 0), (pp, pp), (pp, pp), (0, 0)))
    cols = [xp[:, i:i + OH, j:j + OW, :] for i in range(k) for j in range(k)]
    col = jnp.concatenate(cols, axis=-1).reshape(N * OH * OW, k * k * Cin)
    wmat = jnp.transpose(w[:, :, ::-1, ::-1], (2, 3, 0, 1)).reshape(k * k * Cin, Cout)
    return (col @ wmat).reshape(N, OH, OW, Cout)


def generator_reference(params, z_nchw, conv_cfg, eps=1e-5):
    x = jnp.transpose(z_nchw.astype(jnp.float32), (0, 2, 3, 1))
    last = len(params) - 1
    for li, (w, (stride, pad)) in enumerate(zip(params, conv_cfg)):
        y = _convt_ref(x, w, stride, pad)
        if li < last:
            mean = jnp.mean(y, axis=(0, 1, 2))
            var = jnp.var(y, axis=(0, 1, 2))            # biased, as in torch BN
            y = (y - mean) * jax.lax.rsqrt(var + eps)
            y = jnp.maximum(y, 0.0)
        else:
            y = jnp.tanh(y)
        x = y
    return jnp.transpose(x, (0, 3, 1, 2))


# ----------------------------------------------------------------------------
if __name__ == "__main__":
    nz, ngf, nc, batch = 16, 8, 3, 2
    conv_cfg = [(1, 0), (2, 1), (2, 1), (2, 1), (2, 1)]   # (stride, padding) per layer

    key = jax.random.PRNGKey(0)
    k_param, k_z = jax.random.split(key)
    params = init_generator_params(k_param, nz, ngf, nc)
    z = jax.random.normal(k_z, (batch, nz, 1, 1), jnp.float32)

    layers = prepare_layers(params, conv_cfg, batch)
    fwd = jax.jit(functools.partial(generator_forward_pallas, layers))

    out = jax.block_until_ready(fwd(z))

    assert out.shape == (batch, nc, 64, 64), out.shape
    assert bool(jnp.all(jnp.isfinite(out)))
    assert bool(jnp.all(jnp.abs(out) <= 1.0 + 1e-6))       # tanh range

    ref = jax.block_until_ready(generator_reference(params, z, conv_cfg))
    max_err = float(jnp.max(jnp.abs(out - ref)))
    assert max_err < 0.1, f"max abs diff vs f32 reference too large: {max_err}"

    print("KERNEL_OK")
</pallas_src>

<mosaic_0001>
module attributes {stable_mosaic.version = 11 : i64} {
  func.func @_generator_kernel(%arg0: memref<2x16xbf16, #tpu.memory_space<vmem>>, %arg1: memref<16x1024xbf16, #tpu.memory_space<vmem>>, %arg2: memref<4x8x2xbf16, #tpu.memory_space<vmem>>, %arg3: memref<256x64xf32, #tpu.memory_space<vmem>>, %arg4: memref<64x256xf32, #tpu.memory_space<vmem>>, %arg5: memref<256x1024xbf16, #tpu.memory_space<vmem>>, %arg6: memref<4x16x8xbf16, #tpu.memory_space<vmem>>, %arg7: memref<256x32xf32, #tpu.memory_space<vmem>>, %arg8: memref<32x256xf32, #tpu.memory_space<vmem>>, %arg9: memref<256x1024xbf16, #tpu.memory_space<vmem>>, %arg10: memref<4x32x16xbf16, #tpu.memory_space<vmem>>, %arg11: memref<256x16xf32, #tpu.memory_space<vmem>>, %arg12: memref<16x256xf32, #tpu.memory_space<vmem>>, %arg13: memref<256x1024xbf16, #tpu.memory_space<vmem>>, %arg14: memref<4x64x32xbf16, #tpu.memory_space<vmem>>, %arg15: memref<256x8xf32, #tpu.memory_space<vmem>>, %arg16: memref<8x256xf32, #tpu.memory_space<vmem>>, %arg17: memref<256x1024xbf16, #tpu.memory_space<vmem>>, %arg18: memref<4x128x64xbf16, #tpu.memory_space<vmem>>, %arg19: memref<128x256xbf16, #tpu.memory_space<vmem>>) attributes {dimension_semantics = [], scalar_prefetch = 0 : i64, scratch_operands = 0 : i64, tpu.core_type = #tpu.core_type<tc>} {
    %c0 = arith.constant 0 : index
    %c0_0 = arith.constant 0 : index
    %0 = vector.load %arg0[%c0, %c0_0] : memref<2x16xbf16, #tpu.memory_space<vmem>>, vector<2x16xbf16>
    %c0_1 = arith.constant 0 : index
    %c0_2 = arith.constant 0 : index
    %1 = vector.load %arg1[%c0_1, %c0_2] : memref<16x1024xbf16, #tpu.memory_space<vmem>>, vector<16x1024xbf16>
    %cst = arith.constant dense<0.000000e+00> : vector<2x1024xf32>
    %2 = tpu.matmul %0, %1, %cst {dimension_numbers = #tpu.dot_dimension_numbers<[1], [0], [0], [1], [0, 0, 1, 1], [], []>} : vector<2x16xbf16>, vector<16x1024xbf16>, vector<2x1024xf32> -> vector<2x1024xf32>
    %3 = arith.truncf %2 : vector<2x1024xf32> to vector<2x1024xbf16>
    %4 = vector.extract_strided_slice %3 {offsets = [0, 0], sizes = [2, 256], strides = [1, 1]} : vector<2x1024xbf16> to vector<2x256xbf16>
    %c0_3 = arith.constant 0 : index
    %c0_4 = arith.constant 0 : index
    %c0_5 = arith.constant 0 : index
    %5 = vector.load %arg2[%c0_3, %c0_4, %c0_5] : memref<4x8x2xbf16, #tpu.memory_space<vmem>>, vector<1x8x2xbf16>
    %6 = vector.shape_cast %5 : vector<1x8x2xbf16> to vector<8x2xbf16>
    %cst_6 = arith.constant dense<0.000000e+00> : vector<8x256xf32>
    %7 = tpu.matmul %6, %4, %cst_6 {dimension_numbers = #tpu.dot_dimension_numbers<[1], [0], [0], [1], [0, 0, 1, 1], [], []>} : vector<8x2xbf16>, vector<2x256xbf16>, vector<8x256xf32> -> vector<8x256xf32>
    %8 = vector.extract_strided_slice %3 {offsets = [0, 256], sizes = [2, 256], strides = [1, 1]} : vector<2x1024xbf16> to vector<2x256xbf16>
    %c1 = arith.constant 1 : index
    %c0_7 = arith.constant 0 : index
    %c0_8 = arith.constant 0 : index
    %9 = vector.load %arg2[%c1, %c0_7, %c0_8] : memref<4x8x2xbf16, #tpu.memory_space<vmem>>, vector<1x8x2xbf16>
    %10 = vector.shape_cast %9 : vector<1x8x2xbf16> to vector<8x2xbf16>
    %cst_9 = arith.constant dense<0.000000e+00> : vector<8x256xf32>
    %11 = tpu.matmul %10, %8, %cst_9 {dimension_numbers = #tpu.dot_dimension_numbers<[1], [0], [0], [1], [0, 0, 1, 1], [], []>} : vector<8x2xbf16>, vector<2x256xbf16>, vector<8x256xf32> -> vector<8x256xf32>
    %12 = arith.addf %7, %11 : vector<8x256xf32>
    %13 = vector.extract_strided_slice %3 {offsets = [0, 512], sizes = [2, 256], strides = [1, 1]} : vector<2x1024xbf16> to vector<2x256xbf16>
    %c2 = arith.constant 2 : index
    %c0_10 = arith.constant 0 : index
    %c0_11 = arith.constant 0 : index
    %14 = vector.load %arg2[%c2, %c0_10, %c0_11] : memref<4x8x2xbf16, #tpu.memory_space<vmem>>, vector<1x8x2xbf16>
    %15 = vector.shape_cast %14 : vector<1x8x2xbf16> to vector<8x2xbf16>
    %cst_12 = arith.constant dense<0.000000e+00> : vector<8x256xf32>
    %16 = tpu.matmul %15, %13, %cst_12 {dimension_numbers = #tpu.dot_dimension_numbers<[1], [0], [0], [1], [0, 0, 1, 1], [], []>} : vector<8x2xbf16>, vector<2x256xbf16>, vector<8x256xf32> -> vector<8x256xf32>
    %17 = arith.addf %12, %16 : vector<8x256xf32>
    %18 = vector.extract_strided_slice %3 {offsets = [0, 768], sizes = [2, 256], strides = [1, 1]} : vector<2x1024xbf16> to vector<2x256xbf16>
    %c3 = arith.constant 3 : index
    %c0_13 = arith.constant 0 : index
    %c0_14 = arith.constant 0 : index
    %19 = vector.load %arg2[%c3, %c0_13, %c0_14] : memref<4x8x2xbf16, #tpu.memory_space<vmem>>, vector<1x8x2xbf16>
    %20 = vector.shape_cast %19 : vector<1x8x2xbf16> to vector<8x2xbf16>
    %cst_15 = arith.constant dense<0.000000e+00> : vector<8x256xf32>
    %21 = tpu.matmul %20, %18, %cst_15 {dimension_numbers = #tpu.dot_dimension_numbers<[1], [0], [0], [1], [0, 0, 1, 1], [], []>} : vector<8x2xbf16>, vector<2x256xbf16>, vector<8x256xf32> -> vector<8x256xf32>
    %22 = arith.addf %17, %21 : vector<8x256xf32>
    %cst_16 = arith.constant dense<0.000000e+00> : vector<256xf32>
    %23 = vector.multi_reduction <add>, %22, %cst_16 [0] : vector<8x256xf32> to vector<256xf32>
    %24 = vector.shape_cast %23 : vector<256xf32> to vector<1x256xf32>
    %25 = arith.mulf %22, %22 : vector<8x256xf32>
    %cst_17 = arith.constant dense<0.000000e+00> : vector<256xf32>
    %26 = vector.multi_reduction <add>, %25, %cst_17 [0] : vector<8x256xf32> to vector<256xf32>
    %27 = vector.shape_cast %26 : vector<256xf32> to vector<1x256xf32>
    %c0_18 = arith.constant 0 : index
    %c0_19 = arith.constant 0 : index
    %28 = vector.load %arg3[%c0_18, %c0_19] : memref<256x64xf32, #tpu.memory_space<vmem>>, vector<256x64xf32>
    %cst_20 = arith.constant dense<0.000000e+00> : vector<1x64xf32>
    %29 = tpu.matmul %24, %28, %cst_20 {dimension_numbers = #tpu.dot_dimension_numbers<[1], [0], [0], [1], [0, 0, 1, 1], [], []>} : vector<1x256xf32>, vector<256x64xf32>, vector<1x64xf32> -> vector<1x64xf32>
    %c0_21 = arith.constant 0 : index
    %c0_22 = arith.constant 0 : index
    %30 = vector.load %arg3[%c0_21, %c0_22] : memref<256x64xf32, #tpu.memory_space<vmem>>, vector<256x64xf32>
    %cst_23 = arith.constant dense<0.000000e+00> : vector<1x64xf32>
    %31 = tpu.matmul %27, %30, %cst_23 {dimension_numbers = #tpu.dot_dimension_numbers<[1], [0], [0], [1], [0, 0, 1, 1], [], []>} : vector<1x256xf32>, vector<256x64xf32>, vector<1x64xf32> -> vector<1x64xf32>
    %cst_24 = arith.constant 3.125000e-02 : f32
    %32 = vector.broadcast %cst_24 : f32 to vector<1x64xf32>
    %33 = arith.mulf %29, %32 : vector<1x64xf32>
    %cst_25 = arith.constant 3.125000e-02 : f32
    %34 = vector.broadcast %cst_25 : f32 to vector<1x64xf32>
    %35 = arith.mulf %31, %34 : vector<1x64xf32>
    %36 = arith.mulf %33, %33 : vector<1x64xf32>
    %37 = arith.subf %35, %36 : vector<1x64xf32>
    %cst_26 = arith.constant 0.000000e+00 : f32
    %38 = vector.broadcast %cst_26 : f32 to vector<1x64xf32>
    %39 = arith.maximumf %37, %38 : vector<1x64xf32>
    %cst_27 = arith.constant 9.99999974E-6 : f32
    %40 = vector.broadcast %cst_27 : f32 to vector<1x64xf32>
    %41 = arith.addf %39, %40 : vector<1x64xf32>
    %42 = math.rsqrt %41 : vector<1x64xf32>
    %cst_28 = arith.constant 0.000000e+00 : f32
    %43 = vector.broadcast %cst_28 : f32 to vector<1x64xf32>
    %44 = arith.subf %43, %33 : vector<1x64xf32>
    %45 = arith.mulf %44, %42 : vector<1x64xf32>
    %c0_29 = arith.constant 0 : index
    %c0_30 = arith.constant 0 : index
    %46 = vector.load %arg4[%c0_29, %c0_30] : memref<64x256xf32, #tpu.memory_space<vmem>>, vector<64x256xf32>
    %cst_31 = arith.constant dense<0.000000e+00> : vector<1x256xf32>
    %47 = tpu.matmul %42, %46, %cst_31 {dimension_numbers = #tpu.dot_dimension_numbers<[1], [0], [0], [1], [0, 0, 1, 1], [], []>} : vector<1x64xf32>, vector<64x256xf32>, vector<1x256xf32> -> vector<1x256xf32>
    %c0_32 = arith.constant 0 : index
    %c0_33 = arith.constant 0 : index
    %48 = vector.load %arg4[%c0_32, %c0_33] : memref<64x256xf32, #tpu.memory_space<vmem>>, vector<64x256xf32>
    %cst_34 = arith.constant dense<0.000000e+00> : vector<1x256xf32>
    %49 = tpu.matmul %45, %48, %cst_34 {dimension_numbers = #tpu.dot_dimension_numbers<[1], [0], [0], [1], [0, 0, 1, 1], [], []>} : vector<1x64xf32>, vector<64x256xf32>, vector<1x256xf32> -> vector<1x256xf32>
    %50 = vector.broadcast %47 : vector<1x256xf32> to vector<8x256xf32>
    %51 = arith.mulf %22, %50 : vector<8x256xf32>
    %52 = vector.broadcast %49 : vector<1x256xf32> to vector<8x256xf32>
    %53 = arith.addf %51, %52 : vector<8x256xf32>
    %cst_35 = arith.constant 0.000000e+00 : f32
    %54 = vector.broadcast %cst_35 : f32 to vector<8x256xf32>
    %55 = arith.maximumf %53, %54 : vector<8x256xf32>
    %56 = arith.truncf %55 : vector<8x256xf32> to vector<8x256xbf16>
    %c0_36 = arith.constant 0 : index
    %c0_37 = arith.constant 0 : index
    %57 = vector.load %arg5[%c0_36, %c0_37] : memref<256x1024xbf16, #tpu.memory_space<vmem>>, vector<256x1024xbf16>
    %cst_38 = arith.constant dense<0.000000e+00> : vector<8x1024xf32>
    %58 = tpu.matmul %56, %57, %cst_38 {dimension_numbers = #tpu.dot_dimension_numbers<[1], [0], [0], [1], [0, 0, 1, 1], [], []>} : vector<8x256xbf16>, vector<256x1024xbf16>, vector<8x1024xf32> -> vector<8x1024xf32>
    %59 = arith.truncf %58 : vector<8x1024xf32> to vector<8x1024xbf16>
    %60 = vector.extract_strided_slice %59 {offsets = [0, 0], sizes = [8, 256], strides = [1, 1]} : vector<8x1024xbf16> to vector<8x256xbf16>
    %c0_39 = arith.constant 0 : index
    %c0_40 = arith.constant 0 : index
    %c0_41 = arith.constant 0 : index
    %61 = vector.load %arg6[%c0_39, %c0_40, %c0_41] : memref<4x16x8xbf16, #tpu.memory_space<vmem>>, vector<1x16x8xbf16>
    %62 = vector.shape_cast %61 : vector<1x16x8xbf16> to vector<16x8xbf16>
    %cst_42 = arith.constant dense<0.000000e+00> : vector<16x256xf32>
    %63 = tpu.matmul %62, %60, %cst_42 {dimension_numbers = #tpu.dot_dimension_numbers<[1], [0], [0], [1], [0, 0, 1, 1], [], []>} : vector<16x8xbf16>, vector<8x256xbf16>, vector<16x256xf32> -> vector<16x256xf32>
    %64 = vector.extract_strided_slice %59 {offsets = [0, 256], sizes = [8, 256], strides = [1, 1]} : vector<8x1024xbf16> to vector<8x256xbf16>
    %c1_43 = arith.constant 1 : index
    %c0_44 = arith.constant 0 : index
    %c0_45 = arith.constant 0 : index
    %65 = vector.load %arg6[%c1_43, %c0_44, %c0_45] : memref<4x16x8xbf16, #tpu.memory_space<vmem>>, vector<1x16x8xbf16>
    %66 = vector.shape_cast %65 : vector<1x16x8xbf16> to vector<16x8xbf16>
    %cst_46 = arith.constant dense<0.000000e+00> : vector<16x256xf32>
    %67 = tpu.matmul %66, %64, %cst_46 {dimension_numbers = #tpu.dot_dimension_numbers<[1], [0], [0], [1], [0, 0, 1, 1], [], []>} : vector<16x8xbf16>, vector<8x256xbf16>, vector<16x256xf32> -> vector<16x256xf32>
    %68 = arith.addf %63, %67 : vector<16x256xf32>
    %69 = vector.extract_strided_slice %59 {offsets = [0, 512], sizes = [8, 256], strides = [1, 1]} : vector<8x1024xbf16> to vector<8x256xbf16>
    %c2_47 = arith.constant 2 : index
    %c0_48 = arith.constant 0 : index
    %c0_49 = arith.constant 0 : index
    %70 = vector.load %arg6[%c2_47, %c0_48, %c0_49] : memref<4x16x8xbf16, #tpu.memory_space<vmem>>, vector<1x16x8xbf16>
    %71 = vector.shape_cast %70 : vector<1x16x8xbf16> to vector<16x8xbf16>
    %cst_50 = arith.constant dense<0.000000e+00> : vector<16x256xf32>
    %72 = tpu.matmul %71, %69, %cst_50 {dimension_numbers = #tpu.dot_dimension_numbers<[1], [0], [0], [1], [0, 0, 1, 1], [], []>} : vector<16x8xbf16>, vector<8x256xbf16>, vector<16x256xf32> -> vector<16x256xf32>
    %73 = arith.addf %68, %72 : vector<16x256xf32>
    %74 = vector.extract_strided_slice %59 {offsets = [0, 768], sizes = [8, 256], strides = [1, 1]} : vector<8x1024xbf16> to vector<8x256xbf16>
    %c3_51 = arith.constant 3 : index
    %c0_52 = arith.constant 0 : index
    %c0_53 = arith.constant 0 : index
    %75 = vector.load %arg6[%c3_51, %c0_52, %c0_53] : memref<4x16x8xbf16, #tpu.memory_space<vmem>>, vector<1x16x8xbf16>
    %76 = vector.shape_cast %75 : vector<1x16x8xbf16> to vector<16x8xbf16>
    %cst_54 = arith.constant dense<0.000000e+00> : vector<16x256xf32>
    %77 = tpu.matmul %76, %74, %cst_54 {dimension_numbers = #tpu.dot_dimension_numbers<[1], [0], [0], [1], [0, 0, 1, 1], [], []>} : vector<16x8xbf16>, vector<8x256xbf16>, vector<16x256xf32> -> vector<16x256xf32>
    %78 = arith.addf %73, %77 : vector<16x256xf32>
    %cst_55 = arith.constant dense<0.000000e+00> : vector<256xf32>
    %79 = vector.multi_reduction <add>, %78, %cst_55 [0] : vector<16x256xf32> to vector<256xf32>
    %80 = vector.shape_cast %79 : vector<256xf32> to vector<1x256xf32>
    %81 = arith.mulf %78, %78 : vector<16x256xf32>
    %cst_56 = arith.constant dense<0.000000e+00> : vector<256xf32>
    %82 = vector.multi_reduction <add>, %81, %cst_56 [0] : vector<16x256xf32> to vector<256xf32>
    %83 = vector.shape_cast %82 : vector<256xf32> to vector<1x256xf32>
    %c0_57 = arith.constant 0 : index
    %c0_58 = arith.constant 0 : index
    %84 = vector.load %arg7[%c0_57, %c0_58] : memref<256x32xf32, #tpu.memory_space<vmem>>, vector<256x32xf32>
    %cst_59 = arith.constant dense<0.000000e+00> : vector<1x32xf32>
    %85 = tpu.matmul %80, %84, %cst_59 {dimension_numbers = #tpu.dot_dimension_numbers<[1], [0], [0], [1], [0, 0, 1, 1], [], []>} : vector<1x256xf32>, vector<256x32xf32>, vector<1x32xf32> -> vector<1x32xf32>
    %c0_60 = arith.constant 0 : index
    %c0_61 = arith.constant 0 : index
    %86 = vector.load %arg7[%c0_60, %c0_61] : memref<256x32xf32, #tpu.memory_space<vmem>>, vector<256x32xf32>
    %cst_62 = arith.constant dense<0.000000e+00> : vector<1x32xf32>
    %87 = tpu.matmul %83, %86, %cst_62 {dimension_numbers = #tpu.dot_dimension_numbers<[1], [0], [0], [1], [0, 0, 1, 1], [], []>} : vector<1x256xf32>, vector<256x32xf32>, vector<1x32xf32> -> vector<1x32xf32>
    %cst_63 = arith.constant 7.812500e-03 : f32
    %88 = vector.broadcast %cst_63 : f32 to vector<1x32xf32>
    %89 = arith.mulf %85, %88 : vector<1x32xf32>
    %cst_64 = arith.constant 7.812500e-03 : f32
    %90 = vector.broadcast %cst_64 : f32 to vector<1x32xf32>
    %91 = arith.mulf %87, %90 : vector<1x32xf32>
    %92 = arith.mulf %89, %89 : vector<1x32xf32>
    %93 = arith.subf %91, %92 : vector<1x32xf32>
    %cst_65 = arith.constant 0.000000e+00 : f32
    %94 = vector.broadcast %cst_65 : f32 to vector<1x32xf32>
    %95 = arith.maximumf %93, %94 : vector<1x32xf32>
    %cst_66 = arith.constant 9.99999974E-6 : f32
    %96 = vector.broadcast %cst_66 : f32 to vector<1x32xf32>
    %97 = arith.addf %95, %96 : vector<1x32xf32>
    %98 = math.rsqrt %97 : vector<1x32xf32>
    %cst_67 = arith.constant 0.000000e+00 : f32
    %99 = vector.broadcast %cst_67 : f32 to vector<1x32xf32>
    %100 = arith.subf %99, %89 : vector<1x32xf32>
    %101 = arith.mulf %100, %98 : vector<1x32xf32>
    %c0_68 = arith.constant 0 : index
    %c0_69 = arith.constant 0 : index
    %102 = vector.load %arg8[%c0_68, %c0_69] : memref<32x256xf32, #tpu.memory_space<vmem>>, vector<32x256xf32>
    %cst_70 = arith.constant dense<0.000000e+00> : vector<1x256xf32>
    %103 = tpu.matmul %98, %102, %cst_70 {dimension_numbers = #tpu.dot_dimension_numbers<[1], [0], [0], [1], [0, 0, 1, 1], [], []>} : vector<1x32xf32>, vector<32x256xf32>, vector<1x256xf32> -> vector<1x256xf32>
    %c0_71 = arith.constant 0 : index
    %c0_72 = arith.constant 0 : index
    %104 = vector.load %arg8[%c0_71, %c0_72] : memref<32x256xf32, #tpu.memory_space<vmem>>, vector<32x256xf32>
    %cst_73 = arith.constant dense<0.000000e+00> : vector<1x256xf32>
    %105 = tpu.matmul %101, %104, %cst_73 {dimension_numbers = #tpu.dot_dimension_numbers<[1], [0], [0], [1], [0, 0, 1, 1], [], []>} : vector<1x32xf32>, vector<32x256xf32>, vector<1x256xf32> -> vector<1x256xf32>
    %106 = vector.broadcast %103 : vector<1x256xf32> to vector<16x256xf32>
    %107 = arith.mulf %78, %106 : vector<16x256xf32>
    %108 = vector.broadcast %105 : vector<1x256xf32> to vector<16x256xf32>
    %109 = arith.addf %107, %108 : vector<16x256xf32>
    %cst_74 = arith.constant 0.000000e+00 : f32
    %110 = vector.broadcast %cst_74 : f32 to vector<16x256xf32>
    %111 = arith.maximumf %109, %110 : vector<16x256xf32>
    %112 = arith.truncf %111 : vector<16x256xf32> to vector<16x256xbf16>
    %c0_75 = arith.constant 0 : index
    %c0_76 = arith.constant 0 : index
    %113 = vector.load %arg9[%c0_75, %c0_76] : memref<256x1024xbf16, #tpu.memory_space<vmem>>, vector<256x1024xbf16>
    %cst_77 = arith.constant dense<0.000000e+00> : vector<16x1024xf32>
    %114 = tpu.matmul %112, %113, %cst_77 {dimension_numbers = #tpu.dot_dimension_numbers<[1], [0], [0], [1], [0, 0, 1, 1], [], []>} : vector<16x256xbf16>, vector<256x1024xbf16>, vector<16x1024xf32> -> vector<16x1024xf32>
    %115 = arith.truncf %114 : vector<16x1024xf32> to vector<16x1024xbf16>
    %116 = vector.extract_strided_slice %115 {offsets = [0, 0], sizes = [16, 256], strides = [1, 1]} : vector<16x1024xbf16> to vector<16x256xbf16>
    %c0_78 = arith.constant 0 : index
    %c0_79 = arith.constant 0 : index
    %c0_80 = arith.constant 0 : index
    %117 = vector.load %arg10[%c0_78, %c0_79, %c0_80] : memref<4x32x16xbf16, #tpu.memory_space<vmem>>, vector<1x32x16xbf16>
    %118 = vector.shape_cast %117 : vector<1x32x16xbf16> to vector<32x16xbf16>
    %cst_81 = arith.constant dense<0.000000e+00> : vector<32x256xf32>
    %119 = tpu.matmul %118, %116, %cst_81 {dimension_numbers = #tpu.dot_dimension_numbers<[1], [0], [0], [1], [0, 0, 1, 1], [], []>} : vector<32x16xbf16>, vector<16x256xbf16>, vector<32x256xf32> -> vector<32x256xf32>
    %120 = vector.extract_strided_slice %115 {offsets = [0, 256], sizes = [16, 256], strides = [1, 1]} : vector<16x1024xbf16> to vector<16x256xbf16>
    %c1_82 = arith.constant 1 : index
    %c0_83 = arith.constant 0 : index
    %c0_84 = arith.constant 0 : index
    %121 = vector.load %arg10[%c1_82, %c0_83, %c0_84] : memref<4x32x16xbf16, #tpu.memory_space<vmem>>, vector<1x32x16xbf16>
    %122 = vector.shape_cast %121 : vector<1x32x16xbf16> to vector<32x16xbf16>
    %cst_85 = arith.constant dense<0.000000e+00> : vector<32x256xf32>
    %123 = tpu.matmul %122, %120, %cst_85 {dimension_numbers = #tpu.dot_dimension_numbers<[1], [0], [0], [1], [0, 0, 1, 1], [], []>} : vector<32x16xbf16>, vector<16x256xbf16>, vector<32x256xf32> -> vector<32x256xf32>
    %124 = arith.addf %119, %123 : vector<32x256xf32>
    %125 = vector.extract_strided_slice %115 {offsets = [0, 512], sizes = [16, 256], strides = [1, 1]} : vector<16x1024xbf16> to vector<16x256xbf16>
    %c2_86 = arith.constant 2 : index
    %c0_87 = arith.constant 0 : index
    %c0_88 = arith.constant 0 : index
    %126 = vector.load %arg10[%c2_86, %c0_87, %c0_88] : memref<4x32x16xbf16, #tpu.memory_space<vmem>>, vector<1x32x16xbf16>
    %127 = vector.shape_cast %126 : vector<1x32x16xbf16> to vector<32x16xbf16>
    %cst_89 = arith.constant dense<0.000000e+00> : vector<32x256xf32>
    %128 = tpu.matmul %127, %125, %cst_89 {dimension_numbers = #tpu.dot_dimension_numbers<[1], [0], [0], [1], [0, 0, 1, 1], [], []>} : vector<32x16xbf16>, vector<16x256xbf16>, vector<32x256xf32> -> vector<32x256xf32>
    %129 = arith.addf %124, %128 : vector<32x256xf32>
    %130 = vector.extract_strided_slice %115 {offsets = [0, 768], sizes = [16, 256], strides = [1, 1]} : vector<16x1024xbf16> to vector<16x256xbf16>
    %c3_90 = arith.constant 3 : index
    %c0_91 = arith.constant 0 : index
    %c0_92 = arith.constant 0 : index
    %131 = vector.load %arg10[%c3_90, %c0_91, %c0_92] : memref<4x32x16xbf16, #tpu.memory_space<vmem>>, vector<1x32x16xbf16>
    %132 = vector.shape_cast %131 : vector<1x32x16xbf16> to vector<32x16xbf16>
    %cst_93 = arith.constant dense<0.000000e+00> : vector<32x256xf32>
    %133 = tpu.matmul %132, %130, %cst_93 {dimension_numbers = #tpu.dot_dimension_numbers<[1], [0], [0], [1], [0, 0, 1, 1], [], []>} : vector<32x16xbf16>, vector<16x256xbf16>, vector<32x256xf32> -> vector<32x256xf32>
    %134 = arith.addf %129, %133 : vector<32x256xf32>
    %cst_94 = arith.constant dense<0.000000e+00> : vector<256xf32>
    %135 = vector.multi_reduction <add>, %134, %cst_94 [0] : vector<32x256xf32> to vector<256xf32>
    %136 = vector.shape_cast %135 : vector<256xf32> to vector<1x256xf32>
    %137 = arith.mulf %134, %134 : vector<32x256xf32>
    %cst_95 = arith.constant dense<0.000000e+00> : vector<256xf32>
    %138 = vector.multi_reduction <add>, %137, %cst_95 [0] : vector<32x256xf32> to vector<256xf32>
    %139 = vector.shape_cast %138 : vector<256xf32> to vector<1x256xf32>
    %c0_96 = arith.constant 0 : index
    %c0_97 = arith.constant 0 : index
    %140 = vector.load %arg11[%c0_96, %c0_97] : memref<256x16xf32, #tpu.memory_space<vmem>>, vector<256x16xf32>
    %cst_98 = arith.constant dense<0.000000e+00> : vector<1x16xf32>
    %141 = tpu.matmul %136, %140, %cst_98 {dimension_numbers = #tpu.dot_dimension_numbers<[1], [0], [0], [1], [0, 0, 1, 1], [], []>} : vector<1x256xf32>, vector<256x16xf32>, vector<1x16xf32> -> vector<1x16xf32>
    %c0_99 = arith.constant 0 : index
    %c0_100 = arith.constant 0 : index
    %142 = vector.load %arg11[%c0_99, %c0_100] : memref<256x16xf32, #tpu.memory_space<vmem>>, vector<256x16xf32>
    %cst_101 = arith.constant dense<0.000000e+00> : vector<1x16xf32>
    %143 = tpu.matmul %139, %142, %cst_101 {dimension_numbers = #tpu.dot_dimension_numbers<[1], [0], [0], [1], [0, 0, 1, 1], [], []>} : vector<1x256xf32>, vector<256x16xf32>, vector<1x16xf32> -> vector<1x16xf32>
    %cst_102 = arith.constant 0.001953125 : f32
    %144 = vector.broadcast %cst_102 : f32 to vector<1x16xf32>
    %145 = arith.mulf %141, %144 : vector<1x16xf32>
    %cst_103 = arith.constant 0.001953125 : f32
    %146 = vector.broadcast %cst_103 : f32 to vector<1x16xf32>
    %147 = arith.mulf %143, %146 : vector<1x16xf32>
    %148 = arith.mulf %145, %145 : vector<1x16xf32>
    %149 = arith.subf %147, %148 : vector<1x16xf32>
    %cst_104 = arith.constant 0.000000e+00 : f32
    %150 = vector.broadcast %cst_104 : f32 to vector<1x16xf32>
    %151 = arith.maximumf %149, %150 : vector<1x16xf32>
    %cst_105 = arith.constant 9.99999974E-6 : f32
    %152 = vector.broadcast %cst_105 : f32 to vector<1x16xf32>
    %153 = arith.addf %151, %152 : vector<1x16xf32>
    %154 = math.rsqrt %153 : vector<1x16xf32>
    %cst_106 = arith.constant 0.000000e+00 : f32
    %155 = vector.broadcast %cst_106 : f32 to vector<1x16xf32>
    %156 = arith.subf %155, %145 : vector<1x16xf32>
    %157 = arith.mulf %156, %154 : vector<1x16xf32>
    %c0_107 = arith.constant 0 : index
    %c0_108 = arith.constant 0 : index
    %158 = vector.load %arg12[%c0_107, %c0_108] : memref<16x256xf32, #tpu.memory_space<vmem>>, vector<16x256xf32>
    %cst_109 = arith.constant dense<0.000000e+00> : vector<1x256xf32>
    %159 = tpu.matmul %154, %158, %cst_109 {dimension_numbers = #tpu.dot_dimension_numbers<[1], [0], [0], [1], [0, 0, 1, 1], [], []>} : vector<1x16xf32>, vector<16x256xf32>, vector<1x256xf32> -> vector<1x256xf32>
    %c0_110 = arith.constant 0 : index
    %c0_111 = arith.constant 0 : index
    %160 = vector.load %arg12[%c0_110, %c0_111] : memref<16x256xf32, #tpu.memory_space<vmem>>, vector<16x256xf32>
    %cst_112 = arith.constant dense<0.000000e+00> : vector<1x256xf32>
    %161 = tpu.matmul %157, %160, %cst_112 {dimension_numbers = #tpu.dot_dimension_numbers<[1], [0], [0], [1], [0, 0, 1, 1], [], []>} : vector<1x16xf32>, vector<16x256xf32>, vector<1x256xf32> -> vector<1x256xf32>
    %162 = vector.broadcast %159 : vector<1x256xf32> to vector<32x256xf32>
    %163 = arith.mulf %134, %162 : vector<32x256xf32>
    %164 = vector.broadcast %161 : vector<1x256xf32> to vector<32x256xf32>
    %165 = arith.addf %163, %164 : vector<32x256xf32>
    %cst_113 = arith.constant 0.000000e+00 : f32
    %166 = vector.broadcast %cst_113 : f32 to vector<32x256xf32>
    %167 = arith.maximumf %165, %166 : vector<32x256xf32>
    %168 = arith.truncf %167 : vector<32x256xf32> to vector<32x256xbf16>
    %c0_114 = arith.constant 0 : index
    %c0_115 = arith.constant 0 : index
    %169 = vector.load %arg13[%c0_114, %c0_115] : memref<256x1024xbf16, #tpu.memory_space<vmem>>, vector<256x1024xbf16>
    %cst_116 = arith.constant dense<0.000000e+00> : vector<32x1024xf32>
    %170 = tpu.matmul %168, %169, %cst_116 {dimension_numbers = #tpu.dot_dimension_numbers<[1], [0], [0], [1], [0, 0, 1, 1], [], []>} : vector<32x256xbf16>, vector<256x1024xbf16>, vector<32x1024xf32> -> vector<32x1024xf32>
    %171 = arith.truncf %170 : vector<32x1024xf32> to vector<32x1024xbf16>
    %172 = vector.extract_strided_slice %171 {offsets = [0, 0], sizes = [32, 256], strides = [1, 1]} : vector<32x1024xbf16> to vector<32x256xbf16>
    %c0_117 = arith.constant 0 : index
    %c0_118 = arith.constant 0 : index
    %c0_119 = arith.constant 0 : index
    %173 = vector.load %arg14[%c0_117, %c0_118, %c0_119] : memref<4x64x32xbf16, #tpu.memory_space<vmem>>, vector<1x64x32xbf16>
    %174 = vector.shape_cast %173 : vector<1x64x32xbf16> to vector<64x32xbf16>
    %cst_120 = arith.constant dense<0.000000e+00> : vector<64x256xf32>
    %175 = tpu.matmul %174, %172, %cst_120 {dimension_numbers = #tpu.dot_dimension_numbers<[1], [0], [0], [1], [0, 0, 1, 1], [], []>} : vector<64x32xbf16>, vector<32x256xbf16>, vector<64x256xf32> -> vector<64x256xf32>
    %176 = vector.extract_strided_slice %171 {offsets = [0, 256], sizes = [32, 256], strides = [1, 1]} : vector<32x1024xbf16> to vector<32x256xbf16>
    %c1_121 = arith.constant 1 : index
    %c0_122 = arith.constant 0 : index
    %c0_123 = arith.constant 0 : index
    %177 = vector.load %arg14[%c1_121, %c0_122, %c0_123] : memref<4x64x32xbf16, #tpu.memory_space<vmem>>, vector<1x64x32xbf16>
    %178 = vector.shape_cast %177 : vector<1x64x32xbf16> to vector<64x32xbf16>
    %cst_124 = arith.constant dense<0.000000e+00> : vector<64x256xf32>
    %179 = tpu.matmul %178, %176, %cst_124 {dimension_numbers = #tpu.dot_dimension_numbers<[1], [0], [0], [1], [0, 0, 1, 1], [], []>} : vector<64x32xbf16>, vector<32x256xbf16>, vector<64x256xf32> -> vector<64x256xf32>
    %180 = arith.addf %175, %179 : vector<64x256xf32>
    %181 = vector.extract_strided_slice %171 {offsets = [0, 512], sizes = [32, 256], strides = [1, 1]} : vector<32x1024xbf16> to vector<32x256xbf16>
    %c2_125 = arith.constant 2 : index
    %c0_126 = arith.constant 0 : index
    %c0_127 = arith.constant 0 : index
    %182 = vector.load %arg14[%c2_125, %c0_126, %c0_127] : memref<4x64x32xbf16, #tpu.memory_space<vmem>>, vector<1x64x32xbf16>
    %183 = vector.shape_cast %182 : vector<1x64x32xbf16> to vector<64x32xbf16>
    %cst_128 = arith.constant dense<0.000000e+00> : vector<64x256xf32>
    %184 = tpu.matmul %183, %181, %cst_128 {dimension_numbers = #tpu.dot_dimension_numbers<[1], [0], [0], [1], [0, 0, 1, 1], [], []>} : vector<64x32xbf16>, vector<32x256xbf16>, vector<64x256xf32> -> vector<64x256xf32>
    %185 = arith.addf %180, %184 : vector<64x256xf32>
    %186 = vector.extract_strided_slice %171 {offsets = [0, 768], sizes = [32, 256], strides = [1, 1]} : vector<32x1024xbf16> to vector<32x256xbf16>
    %c3_129 = arith.constant 3 : index
    %c0_130 = arith.constant 0 : index
    %c0_131 = arith.constant 0 : index
    %187 = vector.load %arg14[%c3_129, %c0_130, %c0_131] : memref<4x64x32xbf16, #tpu.memory_space<vmem>>, vector<1x64x32xbf16>
    %188 = vector.shape_cast %187 : vector<1x64x32xbf16> to vector<64x32xbf16>
    %cst_132 = arith.constant dense<0.000000e+00> : vector<64x256xf32>
    %189 = tpu.matmul %188, %186, %cst_132 {dimension_numbers = #tpu.dot_dimension_numbers<[1], [0], [0], [1], [0, 0, 1, 1], [], []>} : vector<64x32xbf16>, vector<32x256xbf16>, vector<64x256xf32> -> vector<64x256xf32>
    %190 = arith.addf %185, %189 : vector<64x256xf32>
    %cst_133 = arith.constant dense<0.000000e+00> : vector<256xf32>
    %191 = vector.multi_reduction <add>, %190, %cst_133 [0] : vector<64x256xf32> to vector<256xf32>
    %192 = vector.shape_cast %191 : vector<256xf32> to vector<1x256xf32>
    %193 = arith.mulf %190, %190 : vector<64x256xf32>
    %cst_134 = arith.constant dense<0.000000e+00> : vector<256xf32>
    %194 = vector.multi_reduction <add>, %193, %cst_134 [0] : vector<64x256xf32> to vector<256xf32>
    %195 = vector.shape_cast %194 : vector<256xf32> to vector<1x256xf32>
    %c0_135 = arith.constant 0 : index
    %c0_136 = arith.constant 0 : index
    %196 = vector.load %arg15[%c0_135, %c0_136] : memref<256x8xf32, #tpu.memory_space<vmem>>, vector<256x8xf32>
    %cst_137 = arith.constant dense<0.000000e+00> : vector<1x8xf32>
    %197 = tpu.matmul %192, %196, %cst_137 {dimension_numbers = #tpu.dot_dimension_numbers<[1], [0], [0], [1], [0, 0, 1, 1], [], []>} : vector<1x256xf32>, vector<256x8xf32>, vector<1x8xf32> -> vector<1x8xf32>
    %c0_138 = arith.constant 0 : index
    %c0_139 = arith.constant 0 : index
    %198 = vector.load %arg15[%c0_138, %c0_139] : memref<256x8xf32, #tpu.memory_space<vmem>>, vector<256x8xf32>
    %cst_140 = arith.constant dense<0.000000e+00> : vector<1x8xf32>
    %199 = tpu.matmul %195, %198, %cst_140 {dimension_numbers = #tpu.dot_dimension_numbers<[1], [0], [0], [1], [0, 0, 1, 1], [], []>} : vector<1x256xf32>, vector<256x8xf32>, vector<1x8xf32> -> vector<1x8xf32>
    %cst_141 = arith.constant 4.8828125E-4 : f32
    %200 = vector.broadcast %cst_141 : f32 to vector<1x8xf32>
    %201 = arith.mulf %197, %200 : vector<1x8xf32>
    %cst_142 = arith.constant 4.8828125E-4 : f32
    %202 = vector.broadcast %cst_142 : f32 to vector<1x8xf32>
    %203 = arith.mulf %199, %202 : vector<1x8xf32>
    %204 = arith.mulf %201, %201 : vector<1x8xf32>
    %205 = arith.subf %203, %204 : vector<1x8xf32>
    %cst_143 = arith.constant 0.000000e+00 : f32
    %206 = vector.broadcast %cst_143 : f32 to vector<1x8xf32>
    %207 = arith.maximumf %205, %206 : vector<1x8xf32>
    %cst_144 = arith.constant 9.99999974E-6 : f32
    %208 = vector.broadcast %cst_144 : f32 to vector<1x8xf32>
    %209 = arith.addf %207, %208 : vector<1x8xf32>
    %210 = math.rsqrt %209 : vector<1x8xf32>
    %cst_145 = arith.constant 0.000000e+00 : f32
    %211 = vector.broadcast %cst_145 : f32 to vector<1x8xf32>
    %212 = arith.subf %211, %201 : vector<1x8xf32>
    %213 = arith.mulf %212, %210 : vector<1x8xf32>
    %c0_146 = arith.constant 0 : index
    %c0_147 = arith.constant 0 : index
    %214 = vector.load %arg16[%c0_146, %c0_147] : memref<8x256xf32, #tpu.memory_space<vmem>>, vector<8x256xf32>
    %cst_148 = arith.constant dense<0.000000e+00> : vector<1x256xf32>
    %215 = tpu.matmul %210, %214, %cst_148 {dimension_numbers = #tpu.dot_dimension_numbers<[1], [0], [0], [1], [0, 0, 1, 1], [], []>} : vector<1x8xf32>, vector<8x256xf32>, vector<1x256xf32> -> vector<1x256xf32>
    %c0_149 = arith.constant 0 : index
    %c0_150 = arith.constant 0 : index
    %216 = vector.load %arg16[%c0_149, %c0_150] : memref<8x256xf32, #tpu.memory_space<vmem>>, vector<8x256xf32>
    %cst_151 = arith.constant dense<0.000000e+00> : vector<1x256xf32>
    %217 = tpu.matmul %213, %216, %cst_151 {dimension_numbers = #tpu.dot_dimension_numbers<[1], [0], [0], [1], [0, 0, 1, 1], [], []>} : vector<1x8xf32>, vector<8x256xf32>, vector<1x256xf32> -> vector<1x256xf32>
    %218 = vector.broadcast %215 : vector<1x256xf32> to vector<64x256xf32>
    %219 = arith.mulf %190, %218 : vector<64x256xf32>
    %220 = vector.broadcast %217 : vector<1x256xf32> to vector<64x256xf32>
    %221 = arith.addf %219, %220 : vector<64x256xf32>
    %cst_152 = arith.constant 0.000000e+00 : f32
    %222 = vector.broadcast %cst_152 : f32 to vector<64x256xf32>
    %223 = arith.maximumf %221, %222 : vector<64x256xf32>
    %224 = arith.truncf %223 : vector<64x256xf32> to vector<64x256xbf16>
    %c0_153 = arith.constant 0 : index
    %c0_154 = arith.constant 0 : index
    %225 = vector.load %arg17[%c0_153, %c0_154] : memref<256x1024xbf16, #tpu.memory_space<vmem>>, vector<256x1024xbf16>
    %cst_155 = arith.constant dense<0.000000e+00> : vector<64x1024xf32>
    %226 = tpu.matmul %224, %225, %cst_155 {dimension_numbers = #tpu.dot_dimension_numbers<[1], [0], [0], [1], [0, 0, 1, 1], [], []>} : vector<64x256xbf16>, vector<256x1024xbf16>, vector<64x1024xf32> -> vector<64x1024xf32>
    %227 = arith.truncf %226 : vector<64x1024xf32> to vector<64x1024xbf16>
    %228 = vector.extract_strided_slice %227 {offsets = [0, 0], sizes = [64, 256], strides = [1, 1]} : vector<64x1024xbf16> to vector<64x256xbf16>
    %c0_156 = arith.constant 0 : index
    %c0_157 = arith.constant 0 : index
    %c0_158 = arith.constant 0 : index
    %229 = vector.load %arg18[%c0_156, %c0_157, %c0_158] : memref<4x128x64xbf16, #tpu.memory_space<vmem>>, vector<1x128x64xbf16>
    %230 = vector.shape_cast %229 : vector<1x128x64xbf16> to vector<128x64xbf16>
    %cst_159 = arith.constant dense<0.000000e+00> : vector<128x256xf32>
    %231 = tpu.matmul %230, %228, %cst_159 {dimension_numbers = #tpu.dot_dimension_numbers<[1], [0], [0], [1], [0, 0, 1, 1], [], []>} : vector<128x64xbf16>, vector<64x256xbf16>, vector<128x256xf32> -> vector<128x256xf32>
    %232 = vector.extract_strided_slice %227 {offsets = [0, 256], sizes = [64, 256], strides = [1, 1]} : vector<64x1024xbf16> to vector<64x256xbf16>
    %c1_160 = arith.constant 1 : index
    %c0_161 = arith.constant 0 : index
    %c0_162 = arith.constant 0 : index
    %233 = vector.load %arg18[%c1_160, %c0_161, %c0_162] : memref<4x128x64xbf16, #tpu.memory_space<vmem>>, vector<1x128x64xbf16>
    %234 = vector.shape_cast %233 : vector<1x128x64xbf16> to vector<128x64xbf16>
    %cst_163 = arith.constant dense<0.000000e+00> : vector<128x256xf32>
    %235 = tpu.matmul %234, %232, %cst_163 {dimension_numbers = #tpu.dot_dimension_numbers<[1], [0], [0], [1], [0, 0, 1, 1], [], []>} : vector<128x64xbf16>, vector<64x256xbf16>, vector<128x256xf32> -> vector<128x256xf32>
    %236 = arith.addf %231, %235 : vector<128x256xf32>
    %237 = vector.extract_strided_slice %227 {offsets = [0, 512], sizes = [64, 256], strides = [1, 1]} : vector<64x1024xbf16> to vector<64x256xbf16>
    %c2_164 = arith.constant 2 : index
    %c0_165 = arith.constant 0 : index
    %c0_166 = arith.constant 0 : index
    %238 = vector.load %arg18[%c2_164, %c0_165, %c0_166] : memref<4x128x64xbf16, #tpu.memory_space<vmem>>, vector<1x128x64xbf16>
    %239 = vector.shape_cast %238 : vector<1x128x64xbf16> to vector<128x64xbf16>
    %cst_167 = arith.constant dense<0.000000e+00> : vector<128x256xf32>
    %240 = tpu.matmul %239, %237, %cst_167 {dimension_numbers = #tpu.dot_dimension_numbers<[1], [0], [0], [1], [0, 0, 1, 1], [], []>} : vector<128x64xbf16>, vector<64x256xbf16>, vector<128x256xf32> -> vector<128x256xf32>
    %241 = arith.addf %236, %240 : vector<128x256xf32>
    %242 = vector.extract_strided_slice %227 {offsets = [0, 768], sizes = [64, 256], strides = [1, 1]} : vector<64x1024xbf16> to vector<64x256xbf16>
    %c3_168 = arith.constant 3 : index
    %c0_169 = arith.constant 0 : index
    %c0_170 = arith.constant 0 : index
    %243 = vector.load %arg18[%c3_168, %c0_169, %c0_170] : memref<4x128x64xbf16, #tpu.memory_space<vmem>>, vector<1x128x64xbf16>
    %244 = vector.shape_cast %243 : vector<1x128x64xbf16> to vector<128x64xbf16>
    %cst_171 = arith.constant dense<0.000000e+00> : vector<128x256xf32>
    %245 = tpu.matmul %244, %242, %cst_171 {dimension_numbers = #tpu.dot_dimension_numbers<[1], [0], [0], [1], [0, 0, 1, 1], [], []>} : vector<128x64xbf16>, vector<64x256xbf16>, vector<128x256xf32> -> vector<128x256xf32>
    %246 = arith.addf %241, %245 : vector<128x256xf32>
    %247 = math.tanh %246 : vector<128x256xf32>
    %248 = arith.truncf %247 : vector<128x256xf32> to vector<128x256xbf16>
    %c0_172 = arith.constant 0 : index
    %c0_173 = arith.constant 0 : index
    %249 = vector.load %arg19[%c0_172, %c0_173] : memref<128x256xbf16, #tpu.memory_space<vmem>>, vector<128x256xbf16>
    tpu.vector_store %arg19[%c0_172, %c0_173], %248 {strides = array<i32>} : memref<128x256xbf16, #tpu.memory_space<vmem>>, vector<128x256xbf16>,
    return
  }
}

</mosaic_0001>

<llo_original>
// kernel: generator_forward_pallas.1
$region0: #{generator_forward_pallas.1}
  #allocation0 [shape = 'u32[]', space=smem, size = 0x4, offset = 0x4, fixed_abs, tag = 'smem constant byte address 0x4 - core index']
  #allocation1 [shape = 'u32[144,128]{1,0:T(1,128)}', space=vmem, size = 0x12000, scoped, tag = 'internal scratch']
  %s0 = inlined_call_operand.vmem [shape: bf16[2,16], index: 0, kind: input, shape index: {}]
  %s1 = inlined_call_operand.vmem [shape: bf16[16,1024], index: 1, kind: input, shape index: {}]
  %s2 = inlined_call_operand.vmem [shape: bf16[4,8,2], index: 2, kind: input, shape index: {}]
  %s3 = inlined_call_operand.vmem [shape: f32[256,64], index: 3, kind: input, shape index: {}]
  %s4 = inlined_call_operand.vmem [shape: f32[64,256], index: 4, kind: input, shape index: {}]
  %s5 = inlined_call_operand.vmem [shape: bf16[256,1024], index: 5, kind: input, shape index: {}]
  %s6 = inlined_call_operand.vmem [shape: bf16[4,16,8], index: 6, kind: input, shape index: {}]
  %s7 = inlined_call_operand.vmem [shape: f32[256,32], index: 7, kind: input, shape index: {}]
  %s8 = inlined_call_operand.vmem [shape: f32[32,256], index: 8, kind: input, shape index: {}]
  %s9 = inlined_call_operand.vmem [shape: bf16[256,1024], index: 9, kind: input, shape index: {}]
  %s10 = inlined_call_operand.vmem [shape: bf16[4,32,16], index: 10, kind: input, shape index: {}]
  %s11 = inlined_call_operand.vmem [shape: f32[256,16], index: 11, kind: input, shape index: {}]
  %s12 = inlined_call_operand.vmem [shape: f32[16,256], index: 12, kind: input, shape index: {}]
  %s13 = inlined_call_operand.vmem [shape: bf16[256,1024], index: 13, kind: input, shape index: {}]
  %s14 = inlined_call_operand.vmem [shape: bf16[4,64,32], index: 14, kind: input, shape index: {}]
  %s15 = inlined_call_operand.vmem [shape: f32[256,8], index: 15, kind: input, shape index: {}]
  %s16 = inlined_call_operand.vmem [shape: f32[8,256], index: 16, kind: input, shape index: {}]
  %s17 = inlined_call_operand.vmem [shape: bf16[256,1024], index: 17, kind: input, shape index: {}]
  %s18 = inlined_call_operand.vmem [shape: bf16[4,128,64], index: 18, kind: input, shape index: {}]
  %s19 = inlined_call_operand.vmem [shape: bf16[128,256], index: 19, kind: output, shape index: {}]
  %s20 = sld [smem:[#allocation0]]
  $region86: #{generator_forward_pallas.1} parent=0
    _
  %s22 = ssub.s32 1, %s20
  %s23 = scalar_select 0, %s22, %s20
  // Predicated region
  $region2: #{generator_forward_pallas.1} parent=0 // pred_check
    _
  $region3: #{generator_forward_pallas.1} parent=0 // pred_check_branch
    %25 = sbr.rel (0) target = $region5
  $region4: #{generator_forward_pallas.1} parent=0 // pred_region
    _
  $region5: #{generator_forward_pallas.1} parent=0 // pred_fallthru
    _
  // Predicated region
  $region6: #{generator_forward_pallas.1} parent=0 // pred_check
    _
  $region7: #{generator_forward_pallas.1} parent=0 // pred_check_branch
    %27 = sbr.rel (0) target = $region9
  $region8: #{generator_forward_pallas.1} parent=0 // pred_region
    _
  $region9: #{generator_forward_pallas.1} parent=0 // pred_fallthru
    _
  // Predicated region
  $region10: #{generator_forward_pallas.1} parent=0 // pred_check
    _
  $region11: #{generator_forward_pallas.1} parent=0 // pred_check_branch
    %29 = sbr.rel (0) target = $region13
  $region12: #{generator_forward_pallas.1} parent=0 // pred_region
    _
  $region13: #{generator_forward_pallas.1} parent=0 // pred_fallthru
    _
  // Predicated region
  $region14: #{generator_forward_pallas.1} parent=0 // pred_check
    _
  $region15: #{generator_forward_pallas.1} parent=0 // pred_check_branch
    %31 = sbr.rel (0) target = $region17
  $region16: #{generator_forward_pallas.1} parent=0 // pred_region
    _
  $region17: #{generator_forward_pallas.1} parent=0 // pred_fallthru
    _
  // Predicated region
  $region18: #{generator_forward_pallas.1} parent=0 // pred_check
    _
  $region19: #{generator_forward_pallas.1} parent=0 // pred_check_branch
    %33 = sbr.rel (0) target = $region21
  $region20: #{generator_forward_pallas.1} parent=0 // pred_region
    _
  $region21: #{generator_forward_pallas.1} parent=0 // pred_fallthru
    _
  // Predicated region
  $region22: #{generator_forward_pallas.1} parent=0 // pred_check
    _
  $region23: #{generator_forward_pallas.1} parent=0 // pred_check_branch
    %35 = sbr.rel (0) target = $region25
  $region24: #{generator_forward_pallas.1} parent=0 // pred_region
    _
  $region25: #{generator_forward_pallas.1} parent=0 // pred_fallthru
    _
  // Predicated region
  $region26: #{generator_forward_pallas.1} parent=0 // pred_check
    _
  $region27: #{generator_forward_pallas.1} parent=0 // pred_check_branch
    %37 = sbr.rel (0) target = $region29
  $region28: #{generator_forward_pallas.1} parent=0 // pred_region
    _
  $region29: #{generator_forward_pallas.1} parent=0 // pred_fallthru
    _
  // Predicated region
  $region30: #{generator_forward_pallas.1} parent=0 // pred_check
    _
  $region31: #{generator_forward_pallas.1} parent=0 // pred_check_branch
    %39 = sbr.rel (0) target = $region33
  $region32: #{generator_forward_pallas.1} parent=0 // pred_region
    _
  $region33: #{generator_forward_pallas.1} parent=0 // pred_fallthru
    _
  // Predicated region
  $region34: #{generator_forward_pallas.1} parent=0 // pred_check
    _
  $region35: #{generator_forward_pallas.1} parent=0 // pred_check_branch
    %41 = sbr.rel (0) target = $region37
  $region36: #{generator_forward_pallas.1} parent=0 // pred_region
    _
  $region37: #{generator_forward_pallas.1} parent=0 // pred_fallthru
    _
  // Predicated region
  $region38: #{generator_forward_pallas.1} parent=0 // pred_check
    _
  $region39: #{generator_forward_pallas.1} parent=0 // pred_check_branch
    %43 = sbr.rel (0) target = $region41
  $region40: #{generator_forward_pallas.1} parent=0 // pred_region
    _
  $region41: #{generator_forward_pallas.1} parent=0 // pred_fallthru
    _
  // Predicated region
  $region42: #{generator_forward_pallas.1} parent=0 // pred_check
    _
  $region43: #{generator_forward_pallas.1} parent=0 // pred_check_branch
    %45 = sbr.rel (0) target = $region45
  $region44: #{generator_forward_pallas.1} parent=0 // pred_region
    _
  $region45: #{generator_forward_pallas.1} parent=0 // pred_fallthru
    _
  // Predicated region
  $region46: #{generator_forward_pallas.1} parent=0 // pred_check
    _
  $region47: #{generator_forward_pallas.1} parent=0 // pred_check_branch
    %47 = sbr.rel (0) target = $region49
  $region48: #{generator_forward_pallas.1} parent=0 // pred_region
    _
  $region49: #{generator_forward_pallas.1} parent=0 // pred_fallthru
    _
  // Predicated region
  $region50: #{generator_forward_pallas.1} parent=0 // pred_check
    _
  $region51: #{generator_forward_pallas.1} parent=0 // pred_check_branch
    %49 = sbr.rel (0) target = $region53
  $region52: #{generator_forward_pallas.1} parent=0 // pred_region
    _
  $region53: #{generator_forward_pallas.1} parent=0 // pred_fallthru
    _
  // Predicated region
  $region54: #{generator_forward_pallas.1} parent=0 // pred_check
    _
  $region55: #{generator_forward_pallas.1} parent=0 // pred_check_branch
    %51 = sbr.rel (0) target = $region57
  $region56: #{generator_forward_pallas.1} parent=0 // pred_region
    _
  $region57: #{generator_forward_pallas.1} parent=0 // pred_fallthru
    _
  // Predicated region
  $region58: #{generator_forward_pallas.1} parent=0 // pred_check
    _
  $region59: #{generator_forward_pallas.1} parent=0 // pred_check_branch
    %53 = sbr.rel (0) target = $region61
  $region60: #{generator_forward_pallas.1} parent=0 // pred_region
    _
  $region61: #{generator_forward_pallas.1} parent=0 // pred_fallthru
    _
  // Predicated region
  $region62: #{generator_forward_pallas.1} parent=0 // pred_check
    _
  $region63: #{generator_forward_pallas.1} parent=0 // pred_check_branch
    %55 = sbr.rel (0) target = $region65
  $region64: #{generator_forward_pallas.1} parent=0 // pred_region
    _
  $region65: #{generator_forward_pallas.1} parent=0 // pred_fallthru
    _
  // Predicated region
  $region66: #{generator_forward_pallas.1} parent=0 // pred_check
    _
  $region67: #{generator_forward_pallas.1} parent=0 // pred_check_branch
    %57 = sbr.rel (0) target = $region69
  $region68: #{generator_forward_pallas.1} parent=0 // pred_region
    _
  $region69: #{generator_forward_pallas.1} parent=0 // pred_fallthru
    _
  // Predicated region
  $region70: #{generator_forward_pallas.1} parent=0 // pred_check
    _
  $region71: #{generator_forward_pallas.1} parent=0 // pred_check_branch
    %59 = sbr.rel (0) target = $region73
  $region72: #{generator_forward_pallas.1} parent=0 // pred_region
    _
  $region73: #{generator_forward_pallas.1} parent=0 // pred_fallthru
    _
  // Predicated region
  $region74: #{generator_forward_pallas.1} parent=0 // pred_check
    _
  $region75: #{generator_forward_pallas.1} parent=0 // pred_check_branch
    %61 = sbr.rel (0) target = $region77
  $region76: #{generator_forward_pallas.1} parent=0 // pred_region
    _
  $region77: #{generator_forward_pallas.1} parent=0 // pred_fallthru
    _
  %v63 = vld [vmem:[%s0] sm:$0x1]
  %v64 = vld [vmem:[%s1] sm:$0xff]
  %v65 = vld [vmem:[%s1 + $0x8] sm:$0xff]
  %v66 = vld [vmem:[%s1 + $0x10] sm:$0xff]
  %v67 = vld [vmem:[%s1 + $0x18] sm:$0xff]
  %v68 = vld [vmem:[%s1 + $0x20] sm:$0xff]
  %v69 = vld [vmem:[%s1 + $0x28] sm:$0xff]
  %v70 = vld [vmem:[%s1 + $0x30] sm:$0xff]
  %v71 = vld [vmem:[%s1 + $0x38] sm:$0xff]
  %v80 = vunpack.c.l.b16 %v64
  %v81 = vunpack.c.h.b16 %v64
  %v82 = vunpack.c.l.b16 %v65
  %v83 = vunpack.c.h.b16 %v65
  %v84 = vunpack.c.l.b16 %v66
  %v85 = vunpack.c.h.b16 %v66
  %v86 = vunpack.c.l.b16 %v67
  %v87 = vunpack.c.h.b16 %v67
  %v88 = vunpack.c.l.b16 %v68
  %v89 = vunpack.c.h.b16 %v68
  %v90 = vunpack.c.l.b16 %v69
  %v91 = vunpack.c.h.b16 %v69
  %v92 = vunpack.c.l.b16 %v70
  %v93 = vunpack.c.h.b16 %v70
  %v94 = vunpack.c.l.b16 %v71
  %v95 = vunpack.c.h.b16 %v71
  %v96 = vpack.c.b16 %v88, %v80
  %v97 = vpack.c.b16 %v89, %v81
  %v98 = vpack.c.b16 %v90, %v82
  %v99 = vpack.c.b16 %v91, %v83
  %v100 = vpack.c.b16 %v92, %v84
  %v101 = vpack.c.b16 %v93, %v85
  %v102 = vpack.c.b16 %v94, %v86
  %v103 = vpack.c.b16 %v95, %v87
  %vm112 = vcmask 130048
  %v114 = vsel %vm112, %v63, 0
  %116 = vmatprep.subr.bf16.mxu0 %v97
  %117 = vmatpush1.bf16.msra.mxu0 %v96
  %118 = vmatprep.subr.bf16.mxu0 0
  %119 = vmatpush1.bf16.msra.mxu0 0
  %120 = vmatprep.subr.bf16.mxu0 0
  %121 = vmatpush1.bf16.msra.mxu0 0
  %122 = vmatprep.subr.bf16.mxu0 0
  %123 = vmatpush1.bf16.msra.mxu0 0
  %124 = vmatprep.subr.bf16.mxu0 0
  %125 = vmatpush1.bf16.msra.mxu0 0
  %126 = vmatprep.subr.bf16.mxu0 0
  %127 = vmatpush1.bf16.msra.mxu0 0
  %128 = vmatprep.subr.bf16.mxu0 0
  %129 = vmatpush1.bf16.msra.mxu0 0
  %130 = vmatprep.subr.bf16.mxu0 0
  %131 = vmatpush1.bf16.msra.mxu0 0
  %132 = vmatprep.subr.bf16.mxu0 0
  %133 = vmatpush1.bf16.msra.mxu0 0
  %134 = vmatprep.subr.bf16.mxu0 0
  %135 = vmatpush1.bf16.msra.mxu0 0
  %136 = vmatprep.subr.bf16.mxu0 0
  %137 = vmatpush1.bf16.msra.mxu0 0
  %138 = vmatprep.subr.bf16.mxu0 0
  %139 = vmatpush1.bf16.msra.mxu0 0
  %140 = vmatprep.subr.bf16.mxu0 0
  %141 = vmatpush1.bf16.msra.mxu0 0
  %142 = vmatprep.subr.bf16.mxu0 0
  %143 = vmatpush1.bf16.msra.mxu0 0
  %144 = vmatprep.subr.bf16.mxu0 0
  %145 = vmatpush1.bf16.msra.mxu0 0
  %146 = vmatprep.subr.bf16.mxu0 0
  %147 = vmatpush1.bf16.msra.mxu0 0
  %148 = vmatprep.mubr.bf16.mxu0 0
  %149 = vmatmul.mubr.bf16.gmra.mrb[0].mxu0 %v114
  %v150 = vpop.f32.mrb[0].mxu0
  %v151 = vadd.f32 0.0, %v150
  %v152 = vpop.f32.mrb[0].mxu0
  %v153 = vadd.f32 0.0, %v152
  %v154 = vpop.f32.mrb[0].mxu0
  %v155 = vpop.f32.mrb[0].mxu0
  %156 = vdwg.mxu0
  %157 = vmatprep.subr.bf16.mxu0 %v99
  %158 = vmatpush1.bf16.msra.mxu0 %v98
  %159 = vmatprep.subr.bf16.mxu0 0
  %160 = vmatpush1.bf16.msra.mxu0 0
  %161 = vmatprep.subr.bf16.mxu0 0
  %162 = vmatpush1.bf16.msra.mxu0 0
  %163 = vmatprep.subr.bf16.mxu0 0
  %164 = vmatpush1.bf16.msra.mxu0 0
  %165 = vmatprep.subr.bf16.mxu0 0
  %166 = vmatpush1.bf16.msra.mxu0 0
  %167 = vmatprep.subr.bf16.mxu0 0
  %168 = vmatpush1.bf16.msra.mxu0 0
  %169 = vmatprep.subr.bf16.mxu0 0
  %170 = vmatpush1.bf16.msra.mxu0 0
  %171 = vmatprep.subr.bf16.mxu0 0
  %172 = vmatpush1.bf16.msra.mxu0 0
  %173 = vmatprep.subr.bf16.mxu0 0
  %174 = vmatpush1.bf16.msra.mxu0 0
  %175 = vmatprep.subr.bf16.mxu0 0
  %176 = vmatpush1.bf16.msra.mxu0 0
  %177 = vmatprep.subr.bf16.mxu0 0
  %178 = vmatpush1.bf16.msra.mxu0 0
  %179 = vmatprep.subr.bf16.mxu0 0
  %180 = vmatpush1.bf16.msra.mxu0 0
  %181 = vmatprep.subr.bf16.mxu0 0
  %182 = vmatpush1.bf16.msra.mxu0 0
  %183 = vmatprep.subr.bf16.mxu0 0
  %184 = vmatpush1.bf16.msra.mxu0 0
  %185 = vmatprep.subr.bf16.mxu0 0
  %186 = vmatpush1.bf16.msra.mxu0 0
  %187 = vmatprep.subr.bf16.mxu0 0
  %188 = vmatpush1.bf16.msra.mxu0 0
  %189 = vmatprep.mubr.bf16.mxu0 0
  %190 = vmatmul.mubr.bf16.gmra.mrb[0].mxu0 %v114
  %v191 = vpop.f32.mrb[0].mxu0
  %v192 = vadd.f32 0.0, %v191
  %v193 = vpop.f32.mrb[0].mxu0
  %v194 = vadd.f32 0.0, %v193
  %v195 = vpop.f32.mrb[0].mxu0
  %v196 = vpop.f32.mrb[0].mxu0
  %197 = vdwg.mxu0
  %198 = vmatprep.subr.bf16.mxu0 %v101
  %199 = vmatpush1.bf16.msra.mxu0 %v100
  %200 = vmatprep.subr.bf16.mxu0 0
  %201 = vmatpush1.bf16.msra.mxu0 0
  %202 = vmatprep.subr.bf16.mxu0 0
  %203 = vmatpush1.bf16.msra.mxu0 0
  %204 = vmatprep.subr.bf16.mxu0 0
  %205 = vmatpush1.bf16.msra.mxu0 0
  %206 = vmatprep.subr.bf16.mxu0 0
  %207 = vmatpush1.bf16.msra.mxu0 0
  %208 = vmatprep.subr.bf16.mxu0 0
  %209 = vmatpush1.bf16.msra.mxu0 0
  %210 = vmatprep.subr.bf16.mxu0 0
  %211 = vmatpush1.bf16.msra.mxu0 0
  %212 = vmatprep.subr.bf16.mxu0 0
  %213 = vmatpush1.bf16.msra.mxu0 0
  %214 = vmatprep.subr.bf16.mxu0 0
  %215 = vmatpush1.bf16.msra.mxu0 0
  %216 = vmatprep.subr.bf16.mxu0 0
  %217 = vmatpush1.bf16.msra.mxu0 0
  %218 = vmatprep.subr.bf16.mxu0 0
  %219 = vmatpush1.bf16.msra.mxu0 0
  %220 = vmatprep.subr.bf16.mxu0 0
  %221 = vmatpush1.bf16.msra.mxu0 0
  %222 = vmatprep.subr.bf16.mxu0 0
  %223 = vmatpush1.bf16.msra.mxu0 0
  %224 = vmatprep.subr.bf16.mxu0 0
  %225 = vmatpush1.bf16.msra.mxu0 0
  %226 = vmatprep.subr.bf16.mxu0 0
  %227 = vmatpush1.bf16.msra.mxu0 0
  %228 = vmatprep.subr.bf16.mxu0 0
  %229 = vmatpush1.bf16.msra.mxu0 0
  %230 = vmatprep.mubr.bf16.mxu0 0
  %231 = vmatmul.mubr.bf16.gmra.mrb[0].mxu0 %v114
  %v232 = vpop.f32.mrb[0].mxu0
  %v233 = vadd.f32 0.0, %v232
  %v234 = vpop.f32.mrb[0].mxu0
  %v235 = vadd.f32 0.0, %v234
  %v236 = vpop.f32.mrb[0].mxu0
  %v237 = vpop.f32.mrb[0].mxu0
  %238 = vdwg.mxu0
  %239 = vmatprep.subr.bf16.mxu0 %v103
  %240 = vmatpush1.bf16.msra.mxu0 %v102
  %241 = vmatprep.subr.bf16.mxu0 0
  %242 = vmatpush1.bf16.msra.mxu0 0
  %243 = vmatprep.subr.bf16.mxu0 0
  %244 = vmatpush1.bf16.msra.mxu0 0
  %245 = vmatprep.subr.bf16.mxu0 0
  %246 = vmatpush1.bf16.msra.mxu0 0
  %247 = vmatprep.subr.bf16.mxu0 0
  %248 = vmatpush1.bf16.msra.mxu0 0
  %249 = vmatprep.subr.bf16.mxu0 0
  %250 = vmatpush1.bf16.msra.mxu0 0
  %251 = vmatprep.subr.bf16.mxu0 0
  %252 = vmatpush1.bf16.msra.mxu0 0
  %253 = vmatprep.subr.bf16.mxu0 0
  %254 = vmatpush1.bf16.msra.mxu0 0
  %255 = vmatprep.subr.bf16.mxu0 0
  %256 = vmatpush1.bf16.msra.mxu0 0
  %257 = vmatprep.subr.bf16.mxu0 0
  %258 = vmatpush1.bf16.msra.mxu0 0
  %259 = vmatprep.subr.bf16.mxu0 0
  %260 = vmatpush1.bf16.msra.mxu0 0
  %261 = vmatprep.subr.bf16.mxu0 0
  %262 = vmatpush1.bf16.msra.mxu0 0
  %263 = vmatprep.subr.bf16.mxu0 0
  %264 = vmatpush1.bf16.msra.mxu0 0
  %265 = vmatprep.subr.bf16.mxu0 0
  %266 = vmatpush1.bf16.msra.mxu0 0
  %267 = vmatprep.subr.bf16.mxu0 0
  %268 = vmatpush1.bf16.msra.mxu0 0
  %269 = vmatprep.subr.bf16.mxu0 0
  %270 = vmatpush1.bf16.msra.mxu0 0
  %271 = vmatprep.mubr.bf16.mxu0 0
  %272 = vmatmul.mubr.bf16.gmra.mrb[0].mxu0 %v114
  %v273 = vpop.f32.mrb[0].mxu0
  %v274 = vadd.f32 0.0, %v273
  %v275 = vpop.f32.mrb[0].mxu0
  %v276 = vadd.f32 0.0, %v275
  %v277 = vpop.f32.mrb[0].mxu0
  %v278 = vpop.f32.mrb[0].mxu0
  %279 = vdwg.mxu0
  %v280 = vpack.c.bf16 %v151, %v151
  %v281 = vpack.c.bf16 %v153, %v153
  %v282 = vpack.c.bf16 %v192, %v192
  %v283 = vpack.c.bf16 %v194, %v194
  %v284 = vpack.c.bf16 %v233, %v233
  %v285 = vpack.c.bf16 %v235, %v235
  %v286 = vpack.c.bf16 %v274, %v274
  %v287 = vpack.c.bf16 %v276, %v276
  %v288 = vld [vmem:[%s2] sm:$0xf]
  %s289 = scalar_lea.vmem %s2, 4
  %v290 = vld [vmem:[%s289] sm:$0xf]
  %vm291 = vcmask 15360
  %v293 = vsel %vm291, %v290, 0
  %vm295 = vcmask 1040384
  %v297 = vsel %vm295, %v282, 0
  %v300 = vsel %vm295, %v283, 0
  %302 = vmatprep.subr.bf16.mxu0 %v300
  %303 = vmatpush1.bf16.msra.mxu0 %v297
  %304 = vmatprep.subr.bf16.mxu0 0
  %305 = vmatpush1.bf16.msra.mxu0 0
  %306 = vmatprep.subr.bf16.mxu0 0
  %307 = vmatpush1.bf16.msra.mxu0 0
  %308 = vmatprep.subr.bf16.mxu0 0
  %309 = vmatpush1.bf16.msra.mxu0 0
  %310 = vmatprep.subr.bf16.mxu0 0
  %311 = vmatpush1.bf16.msra.mxu0 0
  %312 = vmatprep.subr.bf16.mxu0 0
  %313 = vmatpush1.bf16.msra.mxu0 0
  %314 = vmatprep.subr.bf16.mxu0 0
  %315 = vmatpush1.bf16.msra.mxu0 0
  %316 = vmatprep.subr.bf16.mxu0 0
  %317 = vmatpush1.bf16.msra.mxu0 0
  %318 = vmatprep.subr.bf16.mxu0 0
  %319 = vmatpush1.bf16.msra.mxu0 0
  %320 = vmatprep.subr.bf16.mxu0 0
  %321 = vmatpush1.bf16.msra.mxu0 0
  %322 = vmatprep.subr.bf16.mxu0 0
  %323 = vmatpush1.bf16.msra.mxu0 0
  %324 = vmatprep.subr.bf16.mxu0 0
  %325 = vmatpush1.bf16.msra.mxu0 0
  %326 = vmatprep.subr.bf16.mxu0 0
  %327 = vmatpush1.bf16.msra.mxu0 0
  %328 = vmatprep.subr.bf16.mxu0 0
  %329 = vmatpush1.bf16.msra.mxu0 0
  %330 = vmatprep.subr.bf16.mxu0 0
  %331 = vmatpush1.bf16.msra.mxu0 0
  %332 = vmatprep.subr.bf16.mxu0 0
  %333 = vmatpush1.bf16.msra.mxu0 0
  %334 = vmatprep.mubr.bf16.mxu0 0
  %335 = vmatmul.mubr.bf16.gmra.mrb[0].mxu0 %v293
  %v336 = vpop.f32.mrb[0].mxu0
  %v337 = vadd.f32 0.0, %v336
  %v338 = vpop.f32.mrb[0].mxu0
  %v339 = vadd.f32 0.0, %v338
  %v340 = vpop.f32.mrb[0].mxu0
  %v341 = vpop.f32.mrb[0].mxu0
  %342 = vdwg.mxu0
  %v344 = vsel %vm291, %v288, 0
  %v347 = vsel %vm295, %v280, 0
  %v350 = vsel %vm295, %v281, 0
  %352 = vmatprep.subr.bf16.mxu0 %v350
  %353 = vmatpush1.bf16.msra.mxu0 %v347
  %354 = vmatprep.subr.bf16.mxu0 0
  %355 = vmatpush1.bf16.msra.mxu0 0
  %356 = vmatprep.subr.bf16.mxu0 0
  %357 = vmatpush1.bf16.msra.mxu0 0
  %358 = vmatprep.subr.bf16.mxu0 0
  %359 = vmatpush1.bf16.msra.mxu0 0
  %360 = vmatprep.subr.bf16.mxu0 0
  %361 = vmatpush1.bf16.msra.mxu0 0
  %362 = vmatprep.subr.bf16.mxu0 0
  %363 = vmatpush1.bf16.msra.mxu0 0
  %364 = vmatprep.subr.bf16.mxu0 0
  %365 = vmatpush1.bf16.msra.mxu0 0
  %366 = vmatprep.subr.bf16.mxu0 0
  %367 = vmatpush1.bf16.msra.mxu0 0
  %368 = vmatprep.subr.bf16.mxu0 0
  %369 = vmatpush1.bf16.msra.mxu0 0
  %370 = vmatprep.subr.bf16.mxu0 0
  %371 = vmatpush1.bf16.msra.mxu0 0
  %372 = vmatprep.subr.bf16.mxu0 0
  %373 = vmatpush1.bf16.msra.mxu0 0
  %374 = vmatprep.subr.bf16.mxu0 0
  %375 = vmatpush1.bf16.msra.mxu0 0
  %376 = vmatprep.subr.bf16.mxu0 0
  %377 = vmatpush1.bf16.msra.mxu0 0
  %378 = vmatprep.subr.bf16.mxu0 0
  %379 = vmatpush1.bf16.msra.mxu0 0
  %380 = vmatprep.subr.bf16.mxu0 0
  %381 = vmatpush1.bf16.msra.mxu0 0
  %382 = vmatprep.subr.bf16.mxu0 0
  %383 = vmatpush1.bf16.msra.mxu0 0
  %384 = vmatprep.mubr.bf16.mxu0 0
  %385 = vmatmul.mubr.bf16.gmra.mrb[0].mxu0 %v344
  %v386 = vpop.f32.mrb[0].mxu0
  %v387 = vadd.f32 %v337, %v386
  %v388 = vpop.f32.mrb[0].mxu0
  %v389 = vadd.f32 %v339, %v388
  %v390 = vpop.f32.mrb[0].mxu0
  %v391 = vpop.f32.mrb[0].mxu0
  %392 = vdwg.mxu0
  %s393 = scalar_lea.vmem %s2, 8
  %v394 = vld [vmem:[%s393] sm:$0xf]
  %v396 = vsel %vm291, %v394, 0
  %v399 = vsel %vm295, %v284, 0
  %v402 = vsel %vm295, %v285, 0
  %404 = vmatprep.subr.bf16.mxu0 %v402
  %405 = vmatpush1.bf16.msra.mxu0 %v399
  %406 = vmatprep.subr.bf16.mxu0 0
  %407 = vmatpush1.bf16.msra.mxu0 0
  %408 = vmatprep.subr.bf16.mxu0 0
  %409 = vmatpush1.bf16.msra.mxu0 0
  %410 = vmatprep.subr.bf16.mxu0 0
  %411 = vmatpush1.bf16.msra.mxu0 0
  %412 = vmatprep.subr.bf16.mxu0 0
  %413 = vmatpush1.bf16.msra.mxu0 0
  %414 = vmatprep.subr.bf16.mxu0 0
  %415 = vmatpush1.bf16.msra.mxu0 0
  %416 = vmatprep.subr.bf16.mxu0 0
  %417 = vmatpush1.bf16.msra.mxu0 0
  %418 = vmatprep.subr.bf16.mxu0 0
  %419 = vmatpush1.bf16.msra.mxu0 0
  %420 = vmatprep.subr.bf16.mxu0 0
  %421 = vmatpush1.bf16.msra.mxu0 0
  %422 = vmatprep.subr.bf16.mxu0 0
  %423 = vmatpush1.bf16.msra.mxu0 0
  %424 = vmatprep.subr.bf16.mxu0 0
  %425 = vmatpush1.bf16.msra.mxu0 0
  %426 = vmatprep.subr.bf16.mxu0 0
  %427 = vmatpush1.bf16.msra.mxu0 0
  %428 = vmatprep.subr.bf16.mxu0 0
  %429 = vmatpush1.bf16.msra.mxu0 0
  %430 = vmatprep.subr.bf16.mxu0 0
  %431 = vmatpush1.bf16.msra.mxu0 0
  %432 = vmatprep.subr.bf16.mxu0 0
  %433 = vmatpush1.bf16.msra.mxu0 0
  %434 = vmatprep.subr.bf16.mxu0 0
  %435 = vmatpush1.bf16.msra.mxu0 0
  %436 = vmatprep.mubr.bf16.mxu0 0
  %437 = vmatmul.mubr.bf16.gmra.mrb[0].mxu0 %v396
  %v438 = vpop.f32.mrb[0].mxu0
  %v439 = vadd.f32 0.0, %v438
  %v440 = vpop.f32.mrb[0].mxu0
  %v441 = vadd.f32 0.0, %v440
  %v442 = vpop.f32.mrb[0].mxu0
  %v443 = vpop.f32.mrb[0].mxu0
  %444 = vdwg.mxu0
  %v445 = vadd.f32 %v387, %v439
  %v446 = vadd.f32 %v389, %v441
  %s447 = scalar_lea.vmem %s2, 12
  %v448 = vld [vmem:[%s447] sm:$0xf]
  %v450 = vsel %vm291, %v448, 0
  %v453 = vsel %vm295, %v286, 0
  %v456 = vsel %vm295, %v287, 0
  %458 = vmatprep.subr.bf16.mxu0 %v456
  %459 = vmatpush1.bf16.msra.mxu0 %v453
  %460 = vmatprep.subr.bf16.mxu0 0
  %461 = vmatpush1.bf16.msra.mxu0 0
  %462 = vmatprep.subr.bf16.mxu0 0
  %463 = vmatpush1.bf16.msra.mxu0 0
  %464 = vmatprep.subr.bf16.mxu0 0
  %465 = vmatpush1.bf16.msra.mxu0 0
  %466 = vmatprep.subr.bf16.mxu0 0
  %467 = vmatpush1.bf16.msra.mxu0 0
  %468 = vmatprep.subr.bf16.mxu0 0
  %469 = vmatpush1.bf16.msra.mxu0 0
  %470 = vmatprep.subr.bf16.mxu0 0
  %471 = vmatpush1.bf16.msra.mxu0 0
  %472 = vmatprep.subr.bf16.mxu0 0
  %473 = vmatpush1.bf16.msra.mxu0 0
  %474 = vmatprep.subr.bf16.mxu0 0
  %475 = vmatpush1.bf16.msra.mxu0 0
  %476 = vmatprep.subr.bf16.mxu0 0
  %477 = vmatpush1.bf16.msra.mxu0 0
  %478 = vmatprep.subr.bf16.mxu0 0
  %479 = vmatpush1.bf16.msra.mxu0 0
  %480 = vmatprep.subr.bf16.mxu0 0
  %481 = vmatpush1.bf16.msra.mxu0 0
  %482 = vmatprep.subr.bf16.mxu0 0
  %483 = vmatpush1.bf16.msra.mxu0 0
  %484 = vmatprep.subr.bf16.mxu0 0
  %485 = vmatpush1.bf16.msra.mxu0 0
  %486 = vmatprep.subr.bf16.mxu0 0
  %487 = vmatpush1.bf16.msra.mxu0 0
  %488 = vmatprep.subr.bf16.mxu0 0
  %489 = vmatpush1.bf16.msra.mxu0 0
  %490 = vmatprep.mubr.bf16.mxu0 0
  %491 = vmatmul.mubr.bf16.gmra.mrb[0].mxu0 %v450
  %v492 = vpop.f32.mrb[0].mxu0
  %v493 = vadd.f32 0.0, %v492
  %v494 = vpop.f32.mrb[0].mxu0
  %v495 = vadd.f32 0.0, %v494
  %v496 = vpop.f32.mrb[0].mxu0
  %v497 = vpop.f32.mrb[0].mxu0
  %498 = vdwg.mxu0
  %v499 = vadd.f32 %v445, %v493
  %v500 = vadd.f32 %v446, %v495
  %v501 = vrot.slane %v499, 4
  %v502 = vadd.f32 %v499, %v501
  %v503 = vrot.slane %v502, 2
  %v504 = vadd.f32 %v502, %v503
  %v505 = vrot.slane %v504, 1
  %v506 = vadd.f32 %v504, %v505
  %v507 = vrot.slane %v500, 4
  %v508 = vadd.f32 %v500, %v507
  %v509 = vrot.slane %v508, 2
  %v510 = vadd.f32 %v508, %v509
  %v511 = vrot.slane %v510, 1
  %v512 = vadd.f32 %v510, %v511
  %v513 = vmul.f32 %v499, %v499
  %v514 = vmul.f32 %v500, %v500
  %v515 = vrot.slane %v513, 4
  %v516 = vadd.f32 %v513, %v515
  %v517 = vrot.slane %v516, 2
  %v518 = vadd.f32 %v516, %v517
  %v519 = vrot.slane %v518, 1
  %v520 = vadd.f32 %v518, %v519
  %v521 = vrot.slane %v514, 4
  %v522 = vadd.f32 %v514, %v521
  %v523 = vrot.slane %v522, 2
  %v524 = vadd.f32 %v522, %v523
  %v525 = vrot.slane %v524, 1
  %v526 = vadd.f32 %v524, %v525
  %v527 = vld [vmem:[%s3] sm:$0xff]
  %v528 = vld [vmem:[%s3 + $0x8] sm:$0xff]
  %v529 = vld [vmem:[%s3 + $0x10] sm:$0xff]
  %v530 = vld [vmem:[%s3 + $0x18] sm:$0xff]
  %v531 = vld [vmem:[%s3 + $0x20] sm:$0xff]
  %v532 = vld [vmem:[%s3 + $0x28] sm:$0xff]
  %v533 = vld [vmem:[%s3 + $0x30] sm:$0xff]
  %v534 = vld [vmem:[%s3 + $0x38] sm:$0xff]
  %v535 = vld [vmem:[%s3 + $0x40] sm:$0xff]
  %v536 = vld [vmem:[%s3 + $0x48] sm:$0xff]
  %v537 = vld [vmem:[%s3 + $0x50] sm:$0xff]
  %v538 = vld [vmem:[%s3 + $0x58] sm:$0xff]
  %v539 = vld [vmem:[%s3 + $0x60] sm:$0xff]
  %v540 = vld [vmem:[%s3 + $0x68] sm:$0xff]
  %v541 = vld [vmem:[%s3 + $0x70] sm:$0xff]
  %v542 = vld [vmem:[%s3 + $0x78] sm:$0xff]
  %v543 = vld [vmem:[%s3 + $0x80] sm:$0xff]
  %v544 = vld [vmem:[%s3 + $0x88] sm:$0xff]
  %v545 = vld [vmem:[%s3 + $0x90] sm:$0xff]
  %v546 = vld [vmem:[%s3 + $0x98] sm:$0xff]
  %v547 = vld [vmem:[%s3 + $0xa0] sm:$0xff]
  %v548 = vld [vmem:[%s3 + $0xa8] sm:$0xff]
  %v549 = vld [vmem:[%s3 + $0xb0] sm:$0xff]
  %v550 = vld [vmem:[%s3 + $0xb8] sm:$0xff]
  %v551 = vld [vmem:[%s3 + $0xc0] sm:$0xff]
  %v552 = vld [vmem:[%s3 + $0xc8] sm:$0xff]
  %v553 = vld [vmem:[%s3 + $0xd0] sm:$0xff]
  %v554 = vld [vmem:[%s3 + $0xd8] sm:$0xff]
  %v555 = vld [vmem:[%s3 + $0xe0] sm:$0xff]
  %v556 = vld [vmem:[%s3 + $0xe8] sm:$0xff]
  %v557 = vld [vmem:[%s3 + $0xf0] sm:$0xff]
  %v558 = vld [vmem:[%s3 + $0xf8] sm:$0xff]
  %559 = vmatprep.subr.mxu0 0.0
  %560 = vmatpush1.msra.mxu0 %v527
  %561 = vmatprep.subr.mxu0 0.0
  %562 = vmatpush1.msra.mxu0 %v528
  %563 = vmatprep.subr.mxu0 0.0
  %564 = vmatpush1.msra.mxu0 %v529
  %565 = vmatprep.subr.mxu0 0.0
  %566 = vmatpush1.msra.mxu0 %v530
  %567 = vmatprep.subr.mxu0 0.0
  %568 = vmatpush1.msra.mxu0 %v531
  %569 = vmatprep.subr.mxu0 0.0
  %570 = vmatpush1.msra.mxu0 %v532
  %571 = vmatprep.subr.mxu0 0.0
  %572 = vmatpush1.msra.mxu0 %v533
  %573 = vmatprep.subr.mxu0 0.0
  %574 = vmatpush1.msra.mxu0 %v534
  %575 = vmatprep.subr.mxu0 0.0
  %576 = vmatpush1.msra.mxu0 %v535
  %577 = vmatprep.subr.mxu0 0.0
  %578 = vmatpush1.msra.mxu0 %v536
  %579 = vmatprep.subr.mxu0 0.0
  %580 = vmatpush1.msra.mxu0 %v537
  %581 = vmatprep.subr.mxu0 0.0
  %582 = vmatpush1.msra.mxu0 %v538
  %583 = vmatprep.subr.mxu0 0.0
  %584 = vmatpush1.msra.mxu0 %v539
  %585 = vmatprep.subr.mxu0 0.0
  %586 = vmatpush1.msra.mxu0 %v540
  %587 = vmatprep.subr.mxu0 0.0
  %588 = vmatpush1.msra.mxu0 %v541
  %589 = vmatprep.subr.mxu0 0.0
  %590 = vmatpush1.msra.mxu0 %v542
  %591 = vmatprep.subr.mxu0 0.0
  %592 = vmatpush1.msra.mxu0 %v543
  %593 = vmatprep.subr.mxu0 0.0
  %594 = vmatpush1.msra.mxu0 %v544
  %595 = vmatprep.subr.mxu0 0.0
  %596 = vmatpush1.msra.mxu0 %v545
  %597 = vmatprep.subr.mxu0 0.0
  %598 = vmatpush1.msra.mxu0 %v546
  %599 = vmatprep.subr.mxu0 0.0
  %600 = vmatpush1.msra.mxu0 %v547
  %601 = vmatprep.subr.mxu0 0.0
  %602 = vmatpush1.msra.mxu0 %v548
  %603 = vmatprep.subr.mxu0 0.0
  %604 = vmatpush1.msra.mxu0 %v549
  %605 = vmatprep.subr.mxu0 0.0
  %606 = vmatpush1.msra.mxu0 %v550
  %607 = vmatprep.subr.mxu0 0.0
  %608 = vmatpush1.msra.mxu0 %v551
  %609 = vmatprep.subr.mxu0 0.0
  %610 = vmatpush1.msra.mxu0 %v552
  %611 = vmatprep.subr.mxu0 0.0
  %612 = vmatpush1.msra.mxu0 %v553
  %613 = vmatprep.subr.mxu0 0.0
  %614 = vmatpush1.msra.mxu0 %v554
  %615 = vmatprep.subr.mxu0 0.0
  %616 = vmatpush1.msra.mxu0 %v555
  %617 = vmatprep.subr.mxu0 0.0
  %618 = vmatpush1.msra.mxu0 %v556
  %619 = vmatprep.subr.mxu0 0.0
  %620 = vmatpush1.msra.mxu0 %v557
  %621 = vmatprep.subr.mxu0 0.0
  %622 = vmatpush1.msra.mxu0 %v558
  %623 = vmatprep.mubr.f32.mxu0 %v512
  %624 = vmatmul.mubr.f32.gmra.mrb[0].mxu0 %v506
  %v625 = vpop.f32.mrb[0].mxu0
  %v626 = vadd.f32 0.0, %v625
  %v627 = vpop.f32.mrb[0].mxu0
  %628 = vdwg.mxu0
  %629 = vmatprep.subr.mxu0 0.0
  %630 = vmatpush1.msra.mxu0 %v527
  %631 = vmatprep.subr.mxu0 0.0
  %632 = vmatpush1.msra.mxu0 %v528
  %633 = vmatprep.subr.mxu0 0.0
  %634 = vmatpush1.msra.mxu0 %v529
  %635 = vmatprep.subr.mxu0 0.0
  %636 = vmatpush1.msra.mxu0 %v530
  %637 = vmatprep.subr.mxu0 0.0
  %638 = vmatpush1.msra.mxu0 %v531
  %639 = vmatprep.subr.mxu0 0.0
  %640 = vmatpush1.msra.mxu0 %v532
  %641 = vmatprep.subr.mxu0 0.0
  %642 = vmatpush1.msra.mxu0 %v533
  %643 = vmatprep.subr.mxu0 0.0
  %644 = vmatpush1.msra.mxu0 %v534
  %645 = vmatprep.subr.mxu0 0.0
  %646 = vmatpush1.msra.mxu0 %v535
  %647 = vmatprep.subr.mxu0 0.0
  %648 = vmatpush1.msra.mxu0 %v536
  %649 = vmatprep.subr.mxu0 0.0
  %650 = vmatpush1.msra.mxu0 %v537
  %651 = vmatprep.subr.mxu0 0.0
  %652 = vmatpush1.msra.mxu0 %v538
  %653 = vmatprep.subr.mxu0 0.0
  %654 = vmatpush1.msra.mxu0 %v539
  %655 = vmatprep.subr.mxu0 0.0
  %656 = vmatpush1.msra.mxu0 %v540
  %657 = vmatprep.subr.mxu0 0.0
  %658 = vmatpush1.msra.mxu0 %v541
  %659 = vmatprep.subr.mxu0 0.0
  %660 = vmatpush1.msra.mxu0 %v542
  %661 = vmatprep.subr.mxu0 0.0
  %662 = vmatpush1.msra.mxu0 %v543
  %663 = vmatprep.subr.mxu0 0.0
  %664 = vmatpush1.msra.mxu0 %v544
  %665 = vmatprep.subr.mxu0 0.0
  %666 = vmatpush1.msra.mxu0 %v545
  %667 = vmatprep.subr.mxu0 0.0
  %668 = vmatpush1.msra.mxu0 %v546
  %669 = vmatprep.subr.mxu0 0.0
  %670 = vmatpush1.msra.mxu0 %v547
  %671 = vmatprep.subr.mxu0 0.0
  %672 = vmatpush1.msra.mxu0 %v548
  %673 = vmatprep.subr.mxu0 0.0
  %674 = vmatpush1.msra.mxu0 %v549
  %675 = vmatprep.subr.mxu0 0.0
  %676 = vmatpush1.msra.mxu0 %v550
  %677 = vmatprep.subr.mxu0 0.0
  %678 = vmatpush1.msra.mxu0 %v551
  %679 = vmatprep.subr.mxu0 0.0
  %680 = vmatpush1.msra.mxu0 %v552
  %681 = vmatprep.subr.mxu0 0.0
  %682 = vmatpush1.msra.mxu0 %v553
  %683 = vmatprep.subr.mxu0 0.0
  %684 = vmatpush1.msra.mxu0 %v554
  %685 = vmatprep.subr.mxu0 0.0
  %686 = vmatpush1.msra.mxu0 %v555
  %687 = vmatprep.subr.mxu0 0.0
  %688 = vmatpush1.msra.mxu0 %v556
  %689 = vmatprep.subr.mxu0 0.0
  %690 = vmatpush1.msra.mxu0 %v557
  %691 = vmatprep.subr.mxu0 0.0
  %692 = vmatpush1.msra.mxu0 %v558
  %693 = vmatprep.mubr.f32.mxu0 %v526
  %694 = vmatmul.mubr.f32.gmra.mrb[0].mxu0 %v520
  %v695 = vpop.f32.mrb[0].mxu0
  %v696 = vadd.f32 0.0, %v695
  %v697 = vpop.f32.mrb[0].mxu0
  %698 = vdwg.mxu0
  %v699 = vmul.f32 %v626, 0.03125
  %v700 = vmul.f32 %v696, 0.03125
  %v701 = vmul.f32 %v699, %v699
  %v702 = vsub.f32 %v700, %v701
  %v703 = vmax.f32 %v702, 0.0
  %v704 = vadd.f32 %v703, 1e-05
  %v705 = vrsqrt.pop %v704
  %v706 = vsub.f32 0.0, %v699
  %v707 = vmul.f32 %v706, %v705
  %v708 = vld [vmem:[%s4] sm:$0xff]
  %v709 = vld [vmem:[%s4 + $0x8] sm:$0xff]
  %v710 = vld [vmem:[%s4 + $0x10] sm:$0xff]
  %v711 = vld [vmem:[%s4 + $0x18] sm:$0xff]
  %v712 = vld [vmem:[%s4 + $0x20] sm:$0xff]
  %v713 = vld [vmem:[%s4 + $0x28] sm:$0xff]
  %v714 = vld [vmem:[%s4 + $0x30] sm:$0xff]
  %v715 = vld [vmem:[%s4 + $0x38] sm:$0xff]
  %v716 = vld [vmem:[%s4 + $0x40] sm:$0xff]
  %v717 = vld [vmem:[%s4 + $0x48] sm:$0xff]
  %v718 = vld [vmem:[%s4 + $0x50] sm:$0xff]
  %v719 = vld [vmem:[%s4 + $0x58] sm:$0xff]
  %v720 = vld [vmem:[%s4 + $0x60] sm:$0xff]
  %v721 = vld [vmem:[%s4 + $0x68] sm:$0xff]
  %v722 = vld [vmem:[%s4 + $0x70] sm:$0xff]
  %v723 = vld [vmem:[%s4 + $0x78] sm:$0xff]
  %vm724 = vcmask 523264
  %v726 = vsel %vm724, %v705, 0
  %728 = vmatprep.subr.mxu0 %v709
  %729 = vmatpush1.msra.mxu0 %v708
  %730 = vmatprep.subr.mxu0 %v711
  %731 = vmatpush1.msra.mxu0 %v710
  %732 = vmatprep.subr.mxu0 %v713
  %733 = vmatpush1.msra.mxu0 %v712
  %734 = vmatprep.subr.mxu0 %v715
  %735 = vmatpush1.msra.mxu0 %v714
  %736 = vmatprep.subr.mxu0 %v717
  %737 = vmatpush1.msra.mxu0 %v716
  %738 = vmatprep.subr.mxu0 %v719
  %739 = vmatpush1.msra.mxu0 %v718
  %740 = vmatprep.subr.mxu0 %v721
  %741 = vmatpush1.msra.mxu0 %v720
  %742 = vmatprep.subr.mxu0 %v723
  %743 = vmatpush1.msra.mxu0 %v722
  %744 = vmatprep.subr.mxu0 0.0
  %745 = vmatpush1.msra.mxu0 0.0
  %746 = vmatprep.subr.mxu0 0.0
  %747 = vmatpush1.msra.mxu0 0.0
  %748 = vmatprep.subr.mxu0 0.0
  %749 = vmatpush1.msra.mxu0 0.0
  %750 = vmatprep.subr.mxu0 0.0
  %751 = vmatpush1.msra.mxu0 0.0
  %752 = vmatprep.subr.mxu0 0.0
  %753 = vmatpush1.msra.mxu0 0.0
  %754 = vmatprep.subr.mxu0 0.0
  %755 = vmatpush1.msra.mxu0 0.0
  %756 = vmatprep.subr.mxu0 0.0
  %757 = vmatpush1.msra.mxu0 0.0
  %758 = vmatprep.subr.mxu0 0.0
  %759 = vmatpush1.msra.mxu0 0.0
  %760 = vmatprep.subr.mxu0 0.0
  %761 = vmatpush1.msra.mxu0 0.0
  %762 = vmatprep.subr.mxu0 0.0
  %763 = vmatpush1.msra.mxu0 0.0
  %764 = vmatprep.subr.mxu0 0.0
  %765 = vmatpush1.msra.mxu0 0.0
  %766 = vmatprep.subr.mxu0 0.0
  %767 = vmatpush1.msra.mxu0 0.0
  %768 = vmatprep.subr.mxu0 0.0
  %769 = vmatpush1.msra.mxu0 0.0
  %770 = vmatprep.subr.mxu0 0.0
  %771 = vmatpush1.msra.mxu0 0.0
  %772 = vmatprep.subr.mxu0 0.0
  %773 = vmatpush1.msra.mxu0 0.0
  %774 = vmatprep.subr.mxu0 0.0
  %775 = vmatpush1.msra.mxu0 0.0
  %776 = vmatprep.subr.mxu0 0.0
  %777 = vmatpush1.msra.mxu0 0.0
  %778 = vmatprep.subr.mxu0 0.0
  %779 = vmatpush1.msra.mxu0 0.0
  %780 = vmatprep.subr.mxu0 0.0
  %781 = vmatpush1.msra.mxu0 0.0
  %782 = vmatprep.subr.mxu0 0.0
  %783 = vmatpush1.msra.mxu0 0.0
  %784 = vmatprep.subr.mxu0 0.0
  %785 = vmatpush1.msra.mxu0 0.0
  %786 = vmatprep.subr.mxu0 0.0
  %787 = vmatpush1.msra.mxu0 0.0
  %788 = vmatprep.subr.mxu0 0.0
  %789 = vmatpush1.msra.mxu0 0.0
  %790 = vmatprep.subr.mxu0 0.0
  %791 = vmatpush1.msra.mxu0 0.0
  %792 = vmatprep.mubr.f32.mxu0 0.0
  %793 = vmatmul.mubr.f32.gmra.mrb[0].mxu0 %v726
  %v794 = vpop.f32.mrb[0].mxu0
  %v795 = vadd.f32 0.0, %v794
  %v796 = vpop.f32.mrb[0].mxu0
  %v797 = vadd.f32 0.0, %v796
  %798 = vdwg.mxu0
  %v800 = vsel %vm724, %v707, 0
  %802 = vmatprep.subr.mxu0 %v709
  %803 = vmatpush1.msra.mxu0 %v708
  %804 = vmatprep.subr.mxu0 %v711
  %805 = vmatpush1.msra.mxu0 %v710
  %806 = vmatprep.subr.mxu0 %v713
  %807 = vmatpush1.msra.mxu0 %v712
  %808 = vmatprep.subr.mxu0 %v715
  %809 = vmatpush1.msra.mxu0 %v714
  %810 = vmatprep.subr.mxu0 %v717
  %811 = vmatpush1.msra.mxu0 %v716
  %812 = vmatprep.subr.mxu0 %v719
  %813 = vmatpush1.msra.mxu0 %v718
  %814 = vmatprep.subr.mxu0 %v721
  %815 = vmatpush1.msra.mxu0 %v720
  %816 = vmatprep.subr.mxu0 %v723
  %817 = vmatpush1.msra.mxu0 %v722
  %818 = vmatprep.subr.mxu0 0.0
  %819 = vmatpush1.msra.mxu0 0.0
  %820 = vmatprep.subr.mxu0 0.0
  %821 = vmatpush1.msra.mxu0 0.0
  %822 = vmatprep.subr.mxu0 0.0
  %823 = vmatpush1.msra.mxu0 0.0
  %824 = vmatprep.subr.mxu0 0.0
  %825 = vmatpush1.msra.mxu0 0.0
  %826 = vmatprep.subr.mxu0 0.0
  %827 = vmatpush1.msra.mxu0 0.0
  %828 = vmatprep.subr.mxu0 0.0
  %829 = vmatpush1.msra.mxu0 0.0
  %830 = vmatprep.subr.mxu0 0.0
  %831 = vmatpush1.msra.mxu0 0.0
  %832 = vmatprep.subr.mxu0 0.0
  %833 = vmatpush1.msra.mxu0 0.0
  %834 = vmatprep.subr.mxu0 0.0
  %835 = vmatpush1.msra.mxu0 0.0
  %836 = vmatprep.subr.mxu0 0.0
  %837 = vmatpush1.msra.mxu0 0.0
  %838 = vmatprep.subr.mxu0 0.0
  %839 = vmatpush1.msra.mxu0 0.0
  %840 = vmatprep.subr.mxu0 0.0
  %841 = vmatpush1.msra.mxu0 0.0
  %842 = vmatprep.subr.mxu0 0.0
  %843 = vmatpush1.msra.mxu0 0.0
  %844 = vmatprep.subr.mxu0 0.0
  %845 = vmatpush1.msra.mxu0 0.0
  %846 = vmatprep.subr.mxu0 0.0
  %847 = vmatpush1.msra.mxu0 0.0
  %848 = vmatprep.subr.mxu0 0.0
  %849 = vmatpush1.msra.mxu0 0.0
  %850 = vmatprep.subr.mxu0 0.0
  %851 = vmatpush1.msra.mxu0 0.0
  %852 = vmatprep.subr.mxu0 0.0
  %853 = vmatpush1.msra.mxu0 0.0
  %854 = vmatprep.subr.mxu0 0.0
  %855 = vmatpush1.msra.mxu0 0.0
  %856 = vmatprep.subr.mxu0 0.0
  %857 = vmatpush1.msra.mxu0 0.0
  %858 = vmatprep.subr.mxu0 0.0
  %859 = vmatpush1.msra.mxu0 0.0
  %860 = vmatprep.subr.mxu0 0.0
  %861 = vmatpush1.msra.mxu0 0.0
  %862 = vmatprep.subr.mxu0 0.0
  %863 = vmatpush1.msra.mxu0 0.0
  %864 = vmatprep.subr.mxu0 0.0
  %865 = vmatpush1.msra.mxu0 0.0
  %866 = vmatprep.mubr.f32.mxu0 0.0
  %867 = vmatmul.mubr.f32.gmra.mrb[0].mxu0 %v800
  %v868 = vpop.f32.mrb[0].mxu0
  %v869 = vadd.f32 0.0, %v868
  %v870 = vpop.f32.mrb[0].mxu0
  %v871 = vadd.f32 0.0, %v870
  %872 = vdwg.mxu0
  %v873 = vlaneseq
  %v874 = vshrl.u32 %v873, 7
  %v875 = vsub.s32 0, %v874
  %v876 = vrot.slane %v795, %v875
  %v877 = vlaneseq
  %v878 = vshrl.u32 %v877, 7
  %v879 = vsub.s32 0, %v878
  %v880 = vrot.slane %v797, %v879
  %v881 = vmul.f32 %v499, %v876
  %v882 = vmul.f32 %v500, %v880
  %v883 = vlaneseq
  %v884 = vshrl.u32 %v883, 7
  %v885 = vsub.s32 0, %v884
  %v886 = vrot.slane %v869, %v885
  %v887 = vlaneseq
  %v888 = vshrl.u32 %v887, 7
  %v889 = vsub.s32 0, %v888
  %v890 = vrot.slane %v871, %v889
  %v891 = vadd.f32 %v881, %v886
  %v892 = vadd.f32 %v882, %v890
  %v893 = vmax.f32 %v891, 0.0
  %v894 = vmax.f32 %v892, 0.0
  %v895 = vpack.c.bf16 %v893, %v893
  %v896 = vpack.c.bf16 %v894, %v894
  %v897 = vld [vmem:[%s5] sm:$0xff]
  %v898 = vld [vmem:[%s5 + $0x8] sm:$0xff]
  %v899 = vld [vmem:[%s5 + $0x10] sm:$0xff]
  %v900 = vld [vmem:[%s5 + $0x18] sm:$0xff]
  %v901 = vld [vmem:[%s5 + $0x20] sm:$0xff]
  %v902 = vld [vmem:[%s5 + $0x28] sm:$0xff]
  %v903 = vld [vmem:[%s5 + $0x30] sm:$0xff]
  %v904 = vld [vmem:[%s5 + $0x38] sm:$0xff]
  %v905 = vld [vmem:[%s5 + $0x40] sm:$0xff]
  %v906 = vld [vmem:[%s5 + $0x48] sm:$0xff]
  %v907 = vld [vmem:[%s5 + $0x50] sm:$0xff]
  %v908 = vld [vmem:[%s5 + $0x58] sm:$0xff]
  %v909 = vld [vmem:[%s5 + $0x60] sm:$0xff]
  %v910 = vld [vmem:[%s5 + $0x68] sm:$0xff]
  %v911 = vld [vmem:[%s5 + $0x70] sm:$0xff]
  %v912 = vld [vmem:[%s5 + $0x78] sm:$0xff]
  %v913 = vld [vmem:[%s5 + $0x80] sm:$0xff]
  %v914 = vld [vmem:[%s5 + $0x88] sm:$0xff]
  %v915 = vld [vmem:[%s5 + $0x90] sm:$0xff]
  %v916 = vld [vmem:[%s5 + $0x98] sm:$0xff]
  %v917 = vld [vmem:[%s5 + $0xa0] sm:$0xff]
  %v918 = vld [vmem:[%s5 + $0xa8] sm:$0xff]
  %v919 = vld [vmem:[%s5 + $0xb0] sm:$0xff]
  %v920 = vld [vmem:[%s5 + $0xb8] sm:$0xff]
  %v921 = vld [vmem:[%s5 + $0xc0] sm:$0xff]
  %v922 = vld [vmem:[%s5 + $0xc8] sm:$0xff]
  %v923 = vld [vmem:[%s5 + $0xd0] sm:$0xff]
  %v924 = vld [vmem:[%s5 + $0xd8] sm:$0xff]
  %v925 = vld [vmem:[%s5 + $0xe0] sm:$0xff]
  %v926 = vld [vmem:[%s5 + $0xe8] sm:$0xff]
  %v927 = vld [vmem:[%s5 + $0xf0] sm:$0xff]
  %v928 = vld [vmem:[%s5 + $0xf8] sm:$0xff]
  %v929 = vld [vmem:[%s5 + $0x100] sm:$0xff]
  %v930 = vld [vmem:[%s5 + $0x108] sm:$0xff]
  %v931 = vld [vmem:[%s5 + $0x110] sm:$0xff]
  %v932 = vld [vmem:[%s5 + $0x118] sm:$0xff]
  %v933 = vld [vmem:[%s5 + $0x120] sm:$0xff]
  %v934 = vld [vmem:[%s5 + $0x128] sm:$0xff]
  %v935 = vld [vmem:[%s5 + $0x130] sm:$0xff]
  %v936 = vld [vmem:[%s5 + $0x138] sm:$0xff]
  %v937 = vld [vmem:[%s5 + $0x140] sm:$0xff]
  %v938 = vld [vmem:[%s5 + $0x148] sm:$0xff]
  %v939 = vld [vmem:[%s5 + $0x150] sm:$0xff]
  %v940 = vld [vmem:[%s5 + $0x158] sm:$0xff]
  %v941 = vld [vmem:[%s5 + $0x160] sm:$0xff]
  %v942 = vld [vmem:[%s5 + $0x168] sm:$0xff]
  %v943 = vld [vmem:[%s5 + $0x170] sm:$0xff]
  %v944 = vld [vmem:[%s5 + $0x178] sm:$0xff]
  %v945 = vld [vmem:[%s5 + $0x180] sm:$0xff]
  %v946 = vld [vmem:[%s5 + $0x188] sm:$0xff]
  %v947 = vld [vmem:[%s5 + $0x190] sm:$0xff]
  %v948 = vld [vmem:[%s5 + $0x198] sm:$0xff]
  %v949 = vld [vmem:[%s5 + $0x1a0] sm:$0xff]
  %v950 = vld [vmem:[%s5 + $0x1a8] sm:$0xff]
  %v951 = vld [vmem:[%s5 + $0x1b0] sm:$0xff]
  %v952 = vld [vmem:[%s5 + $0x1b8] sm:$0xff]
  %v953 = vld [vmem:[%s5 + $0x1c0] sm:$0xff]
  %v954 = vld [vmem:[%s5 + $0x1c8] sm:$0xff]
  %v955 = vld [vmem:[%s5 + $0x1d0] sm:$0xff]
  %v956 = vld [vmem:[%s5 + $0x1d8] sm:$0xff]
  %v957 = vld [vmem:[%s5 + $0x1e0] sm:$0xff]
  %v958 = vld [vmem:[%s5 + $0x1e8] sm:$0xff]
  %v959 = vld [vmem:[%s5 + $0x1f0] sm:$0xff]
  %v960 = vld [vmem:[%s5 + $0x1f8] sm:$0xff]
  %v961 = vld [vmem:[%s5 + $0x200] sm:$0xff]
  %v962 = vld [vmem:[%s5 + $0x208] sm:$0xff]
  %v963 = vld [vmem:[%s5 + $0x210] sm:$0xff]
  %v964 = vld [vmem:[%s5 + $0x218] sm:$0xff]
  %v965 = vld [vmem:[%s5 + $0x220] sm:$0xff]
  %v966 = vld [vmem:[%s5 + $0x228] sm:$0xff]
  %v967 = vld [vmem:[%s5 + $0x230] sm:$0xff]
  %v968 = vld [vmem:[%s5 + $0x238] sm:$0xff]
  %v969 = vld [vmem:[%s5 + $0x240] sm:$0xff]
  %v970 = vld [vmem:[%s5 + $0x248] sm:$0xff]
  %v971 = vld [vmem:[%s5 + $0x250] sm:$0xff]
  %v972 = vld [vmem:[%s5 + $0x258] sm:$0xff]
  %v973 = vld [vmem:[%s5 + $0x260] sm:$0xff]
  %v974 = vld [vmem:[%s5 + $0x268] sm:$0xff]
  %v975 = vld [vmem:[%s5 + $0x270] sm:$0xff]
  %v976 = vld [vmem:[%s5 + $0x278] sm:$0xff]
  %v977 = vld [vmem:[%s5 + $0x280] sm:$0xff]
  %v978 = vld [vmem:[%s5 + $0x288] sm:$0xff]
  %v979 = vld [vmem:[%s5 + $0x290] sm:$0xff]
  %v980 = vld [vmem:[%s5 + $0x298] sm:$0xff]
  %v981 = vld [vmem:[%s5 + $0x2a0] sm:$0xff]
  %v982 = vld [vmem:[%s5 + $0x2a8] sm:$0xff]
  %v983 = vld [vmem:[%s5 + $0x2b0] sm:$0xff]
  %v984 = vld [vmem:[%s5 + $0x2b8] sm:$0xff]
  %v985 = vld [vmem:[%s5 + $0x2c0] sm:$0xff]
  %v986 = vld [vmem:[%s5 + $0x2c8] sm:$0xff]
  %v987 = vld [vmem:[%s5 + $0x2d0] sm:$0xff]
  %v988 = vld [vmem:[%s5 + $0x2d8] sm:$0xff]
  %v989 = vld [vmem:[%s5 + $0x2e0] sm:$0xff]
  %v990 = vld [vmem:[%s5 + $0x2e8] sm:$0xff]
  %v991 = vld [vmem:[%s5 + $0x2f0] sm:$0xff]
  %v992 = vld [vmem:[%s5 + $0x2f8] sm:$0xff]
  %v993 = vld [vmem:[%s5 + $0x300] sm:$0xff]
  %v994 = vld [vmem:[%s5 + $0x308] sm:$0xff]
  %v995 = vld [vmem:[%s5 + $0x310] sm:$0xff]
  %v996 = vld [vmem:[%s5 + $0x318] sm:$0xff]
  %v997 = vld [vmem:[%s5 + $0x320] sm:$0xff]
  %v998 = vld [vmem:[%s5 + $0x328] sm:$0xff]
  %v999 = vld [vmem:[%s5 + $0x330] sm:$0xff]
  %v1000 = vld [vmem:[%s5 + $0x338] sm:$0xff]
  %v1001 = vld [vmem:[%s5 + $0x340] sm:$0xff]
  %v1002 = vld [vmem:[%s5 + $0x348] sm:$0xff]
  %v1003 = vld [vmem:[%s5 + $0x350] sm:$0xff]
  %v1004 = vld [vmem:[%s5 + $0x358] sm:$0xff]
  %v1005 = vld [vmem:[%s5 + $0x360] sm:$0xff]
  %v1006 = vld [vmem:[%s5 + $0x368] sm:$0xff]
  %v1007 = vld [vmem:[%s5 + $0x370] sm:$0xff]
  %v1008 = vld [vmem:[%s5 + $0x378] sm:$0xff]
  %v1009 = vld [vmem:[%s5 + $0x380] sm:$0xff]
  %v1010 = vld [vmem:[%s5 + $0x388] sm:$0xff]
  %v1011 = vld [vmem:[%s5 + $0x390] sm:$0xff]
  %v1012 = vld [vmem:[%s5 + $0x398] sm:$0xff]
  %v1013 = vld [vmem:[%s5 + $0x3a0] sm:$0xff]
  %v1014 = vld [vmem:[%s5 + $0x3a8] sm:$0xff]
  %v1015 = vld [vmem:[%s5 + $0x3b0] sm:$0xff]
  %v1016 = vld [vmem:[%s5 + $0x3b8] sm:$0xff]
  %v1017 = vld [vmem:[%s5 + $0x3c0] sm:$0xff]
  %v1018 = vld [vmem:[%s5 + $0x3c8] sm:$0xff]
  %v1019 = vld [vmem:[%s5 + $0x3d0] sm:$0xff]
  %v1020 = vld [vmem:[%s5 + $0x3d8] sm:$0xff]
  %v1021 = vld [vmem:[%s5 + $0x3e0] sm:$0xff]
  %v1022 = vld [vmem:[%s5 + $0x3e8] sm:$0xff]
  %v1023 = vld [vmem:[%s5 + $0x3f0] sm:$0xff]
  %v1024 = vld [vmem:[%s5 + $0x3f8] sm:$0xff]
  %v1153 = vunpack.c.l.b16 %v897
  %v1154 = vunpack.c.h.b16 %v897
  %v1155 = vunpack.c.l.b16 %v898
  %v1156 = vunpack.c.h.b16 %v898
  %v1157 = vunpack.c.l.b16 %v899
  %v1158 = vunpack.c.h.b16 %v899
  %v1159 = vunpack.c.l.b16 %v900
  %v1160 = vunpack.c.h.b16 %v900
  %v1161 = vunpack.c.l.b16 %v901
  %v1162 = vunpack.c.h.b16 %v901
  %v1163 = vunpack.c.l.b16 %v902
  %v1164 = vunpack.c.h.b16 %v902
  %v1165 = vunpack.c.l.b16 %v903
  %v1166 = vunpack.c.h.b16 %v903
  %v1167 = vunpack.c.l.b16 %v904
  %v1168 = vunpack.c.h.b16 %v904
  %v1169 = vunpack.c.l.b16 %v905
  %v1170 = vunpack.c.h.b16 %v905
  %v1171 = vunpack.c.l.b16 %v906
  %v1172 = vunpack.c.h.b16 %v906
  %v1173 = vunpack.c.l.b16 %v907
  %v1174 = vunpack.c.h.b16 %v907
  %v1175 = vunpack.c.l.b16 %v908
  %v1176 = vunpack.c.h.b16 %v908
  %v1177 = vunpack.c.l.b16 %v909
  %v1178 = vunpack.c.h.b16 %v909
  %v1179 = vunpack.c.l.b16 %v910
  %v1180 = vunpack.c.h.b16 %v910
  %v1181 = vunpack.c.l.b16 %v911
  %v1182 = vunpack.c.h.b16 %v911
  %v1183 = vunpack.c.l.b16 %v912
  %v1184 = vunpack.c.h.b16 %v912
  %v1185 = vunpack.c.l.b16 %v913
  %v1186 = vunpack.c.h.b16 %v913
  %v1187 = vunpack.c.l.b16 %v914
  %v1188 = vunpack.c.h.b16 %v914
  %v1189 = vunpack.c.l.b16 %v915
  %v1190 = vunpack.c.h.b16 %v915
  %v1191 = vunpack.c.l.b16 %v916
  %v1192 = vunpack.c.h.b16 %v916
  %v1193 = vunpack.c.l.b16 %v917
  %v1194 = vunpack.c.h.b16 %v917
  %v1195 = vunpack.c.l.b16 %v918
  %v1196 = vunpack.c.h.b16 %v918
  %v1197 = vunpack.c.l.b16 %v919
  %v1198 = vunpack.c.h.b16 %v919
  %v1199 = vunpack.c.l.b16 %v920
  %v1200 = vunpack.c.h.b16 %v920
  %v1201 = vunpack.c.l.b16 %v921
  %v1202 = vunpack.c.h.b16 %v921
  %v1203 = vunpack.c.l.b16 %v922
  %v1204 = vunpack.c.h.b16 %v922
  %v1205 = vunpack.c.l.b16 %v923
  %v1206 = vunpack.c.h.b16 %v923
  %v1207 = vunpack.c.l.b16 %v924
  %v1208 = vunpack.c.h.b16 %v924
  %v1209 = vunpack.c.l.b16 %v925
  %v1210 = vunpack.c.h.b16 %v925
  %v1211 = vunpack.c.l.b16 %v926
  %v1212 = vunpack.c.h.b16 %v926
  %v1213 = vunpack.c.l.b16 %v927
  %v1214 = vunpack.c.h.b16 %v927
  %v1215 = vunpack.c.l.b16 %v928
  %v1216 = vunpack.c.h.b16 %v928
  %v1217 = vunpack.c.l.b16 %v929
  %v1218 = vunpack.c.h.b16 %v929
  %v1219 = vunpack.c.l.b16 %v930
  %v1220 = vunpack.c.h.b16 %v930
  %v1221 = vunpack.c.l.b16 %v931
  %v1222 = vunpack.c.h.b16 %v931
  %v1223 = vunpack.c.l.b16 %v932
  %v1224 = vunpack.c.h.b16 %v932
  %v1225 = vunpack.c.l.b16 %v933
  %v1226 = vunpack.c.h.b16 %v933
  %v1227 = vunpack.c.l.b16 %v934
  %v1228 = vunpack.c.h.b16 %v934
  %v1229 = vunpack.c.l.b16 %v935
  %v1230 = vunpack.c.h.b16 %v935
  %v1231 = vunpack.c.l.b16 %v936
  %v1232 = vunpack.c.h.b16 %v936
  %v1233 = vunpack.c.l.b16 %v937
  %v1234 = vunpack.c.h.b16 %v937
  %v1235 = vunpack.c.l.b16 %v938
  %v1236 = vunpack.c.h.b16 %v938
  %v1237 = vunpack.c.l.b16 %v939
  %v1238 = vunpack.c.h.b16 %v939
  %v1239 = vunpack.c.l.b16 %v940
  %v1240 = vunpack.c.h.b16 %v940
  %v1241 = vunpack.c.l.b16 %v941
  %v1242 = vunpack.c.h.b16 %v941
  %v1243 = vunpack.c.l.b16 %v942
  %v1244 = vunpack.c.h.b16 %v942
  %v1245 = vunpack.c.l.b16 %v943
  %v1246 = vunpack.c.h.b16 %v943
  %v1247 = vunpack.c.l.b16 %v944
  %v1248 = vunpack.c.h.b16 %v944
  %v1249 = vunpack.c.l.b16 %v945
  %v1250 = vunpack.c.h.b16 %v945
  %v1251 = vunpack.c.l.b16 %v946
  %v1252 = vunpack.c.h.b16 %v946
  %v1253 = vunpack.c.l.b16 %v947
  %v1254 = vunpack.c.h.b16 %v947
  %v1255 = vunpack.c.l.b16 %v948
  %v1256 = vunpack.c.h.b16 %v948
  %v1257 = vunpack.c.l.b16 %v949
  %v1258 = vunpack.c.h.b16 %v949
  %v1259 = vunpack.c.l.b16 %v950
  %v1260 = vunpack.c.h.b16 %v950
  %v1261 = vunpack.c.l.b16 %v951
  %v1262 = vunpack.c.h.b16 %v951
  %v1263 = vunpack.c.l.b16 %v952
  %v1264 = vunpack.c.h.b16 %v952
  %v1265 = vunpack.c.l.b16 %v953
  %v1266 = vunpack.c.h.b16 %v953
  %v1267 = vunpack.c.l.b16 %v954
  %v1268 = vunpack.c.h.b16 %v954
  %v1269 = vunpack.c.l.b16 %v955
  %v1270 = vunpack.c.h.b16 %v955
  %v1271 = vunpack.c.l.b16 %v956
  %v1272 = vunpack.c.h.b16 %v956
  %v1273 = vunpack.c.l.b16 %v957
  %v1274 = vunpack.c.h.b16 %v957
  %v1275 = vunpack.c.l.b16 %v958
  %v1276 = vunpack.c.h.b16 %v958
  %v1277 = vunpack.c.l.b16 %v959
  %v1278 = vunpack.c.h.b16 %v959
  %v1279 = vunpack.c.l.b16 %v960
  %v1280 = vunpack.c.h.b16 %v960
  %v1281 = vunpack.c.l.b16 %v961
  %v1282 = vunpack.c.h.b16 %v961
  %v1283 = vunpack.c.l.b16 %v962
  %v1284 = vunpack.c.h.b16 %v962
  %v1285 = vunpack.c.l.b16 %v963
  %v1286 = vunpack.c.h.b16 %v963
  %v1287 = vunpack.c.l.b16 %v964
  %v1288 = vunpack.c.h.b16 %v964
  %v1289 = vunpack.c.l.b16 %v965
  %v1290 = vunpack.c.h.b16 %v965
  %v1291 = vunpack.c.l.b16 %v966
  %v1292 = vunpack.c.h.b16 %v966
  %v1293 = vunpack.c.l.b16 %v967
  %v1294 = vunpack.c.h.b16 %v967
  %v1295 = vunpack.c.l.b16 %v968
  %v1296 = vunpack.c.h.b16 %v968
  %v1297 = vunpack.c.l.b16 %v969
  %v1298 = vunpack.c.h.b16 %v969
  %v1299 = vunpack.c.l.b16 %v970
  %v1300 = vunpack.c.h.b16 %v970
  %v1301 = vunpack.c.l.b16 %v971
  %v1302 = vunpack.c.h.b16 %v971
  %v1303 = vunpack.c.l.b16 %v972
  %v1304 = vunpack.c.h.b16 %v972
  %v1305 = vunpack.c.l.b16 %v973
  %v1306 = vunpack.c.h.b16 %v973
  %v1307 = vunpack.c.l.b16 %v974
  %v1308 = vunpack.c.h.b16 %v974
  %v1309 = vunpack.c.l.b16 %v975
  %v1310 = vunpack.c.h.b16 %v975
  %v1311 = vunpack.c.l.b16 %v976
  %v1312 = vunpack.c.h.b16 %v976
  %v1313 = vunpack.c.l.b16 %v977
  %v1314 = vunpack.c.h.b16 %v977
  %v1315 = vunpack.c.l.b16 %v978
  %v1316 = vunpack.c.h.b16 %v978
  %v1317 = vunpack.c.l.b16 %v979
  %v1318 = vunpack.c.h.b16 %v979
  %v1319 = vunpack.c.l.b16 %v980
  %v1320 = vunpack.c.h.b16 %v980
  %v1321 = vunpack.c.l.b16 %v981
  %v1322 = vunpack.c.h.b16 %v981
  %v1323 = vunpack.c.l.b16 %v982
  %v1324 = vunpack.c.h.b16 %v982
  %v1325 = vunpack.c.l.b16 %v983
  %v1326 = vunpack.c.h.b16 %v983
  %v1327 = vunpack.c.l.b16 %v984
  %v1328 = vunpack.c.h.b16 %v984
  %v1329 = vunpack.c.l.b16 %v985
  %v1330 = vunpack.c.h.b16 %v985
  %v1331 = vunpack.c.l.b16 %v986
  %v1332 = vunpack.c.h.b16 %v986
  %v1333 = vunpack.c.l.b16 %v987
  %v1334 = vunpack.c.h.b16 %v987
  %v1335 = vunpack.c.l.b16 %v988
  %v1336 = vunpack.c.h.b16 %v988
  %v1337 = vunpack.c.l.b16 %v989
  %v1338 = vunpack.c.h.b16 %v989
  %v1339 = vunpack.c.l.b16 %v990
  %v1340 = vunpack.c.h.b16 %v990
  %v1341 = vunpack.c.l.b16 %v991
  %v1342 = vunpack.c.h.b16 %v991
  %v1343 = vunpack.c.l.b16 %v992
  %v1344 = vunpack.c.h.b16 %v992
  %v1345 = vunpack.c.l.b16 %v993
  %v1346 = vunpack.c.h.b16 %v993
  %v1347 = vunpack.c.l.b16 %v994
  %v1348 = vunpack.c.h.b16 %v994
  %v1349 = vunpack.c.l.b16 %v995
  %v1350 = vunpack.c.h.b16 %v995
  %v1351 = vunpack.c.l.b16 %v996
  %v1352 = vunpack.c.h.b16 %v996
  %v1353 = vunpack.c.l.b16 %v997
  %v1354 = vunpack.c.h.b16 %v997
  %v1355 = vunpack.c.l.b16 %v998
  %v1356 = vunpack.c.h.b16 %v998
  %v1357 = vunpack.c.l.b16 %v999
  %v1358 = vunpack.c.h.b16 %v999
  %v1359 = vunpack.c.l.b16 %v1000
  %v1360 = vunpack.c.h.b16 %v1000
  %v1361 = vunpack.c.l.b16 %v1001
  %v1362 = vunpack.c.h.b16 %v1001
  %v1363 = vunpack.c.l.b16 %v1002
  %v1364 = vunpack.c.h.b16 %v1002
  %v1365 = vunpack.c.l.b16 %v1003
  %v1366 = vunpack.c.h.b16 %v1003
  %v1367 = vunpack.c.l.b16 %v1004
  %v1368 = vunpack.c.h.b16 %v1004
  %v1369 = vunpack.c.l.b16 %v1005
  %v1370 = vunpack.c.h.b16 %v1005
  %v1371 = vunpack.c.l.b16 %v1006
  %v1372 = vunpack.c.h.b16 %v1006
  %v1373 = vunpack.c.l.b16 %v1007
  %v1374 = vunpack.c.h.b16 %v1007
  %v1375 = vunpack.c.l.b16 %v1008
  %v1376 = vunpack.c.h.b16 %v1008
  %v1377 = vunpack.c.l.b16 %v1009
  %v1378 = vunpack.c.h.b16 %v1009
  %v1379 = vunpack.c.l.b16 %v1010
  %v1380 = vunpack.c.h.b16 %v1010
  %v1381 = vunpack.c.l.b16 %v1011
  %v1382 = vunpack.c.h.b16 %v1011
  %v1383 = vunpack.c.l.b16 %v1012
  %v1384 = vunpack.c.h.b16 %v1012
  %v1385 = vunpack.c.l.b16 %v1013
  %v1386 = vunpack.c.h.b16 %v1013
  %v1387 = vunpack.c.l.b16 %v1014
  %v1388 = vunpack.c.h.b16 %v1014
  %v1389 = vunpack.c.l.b16 %v1015
  %v1390 = vunpack.c.h.b16 %v1015
  %v1391 = vunpack.c.l.b16 %v1016
  %v1392 = vunpack.c.h.b16 %v1016
  %v1393 = vunpack.c.l.b16 %v1017
  %v1394 = vunpack.c.h.b16 %v1017
  %v1395 = vunpack.c.l.b16 %v1018
  %v1396 = vunpack.c.h.b16 %v1018
  %v1397 = vunpack.c.l.b16 %v1019
  %v1398 = vunpack.c.h.b16 %v1019
  %v1399 = vunpack.c.l.b16 %v1020
  %v1400 = vunpack.c.h.b16 %v1020
  %v1401 = vunpack.c.l.b16 %v1021
  %v1402 = vunpack.c.h.b16 %v1021
  %v1403 = vunpack.c.l.b16 %v1022
  %v1404 = vunpack.c.h.b16 %v1022
  %v1405 = vunpack.c.l.b16 %v1023
  %v1406 = vunpack.c.h.b16 %v1023
  %v1407 = vunpack.c.l.b16 %v1024
  %v1408 = vunpack.c.h.b16 %v1024
  %v1409 = vpack.c.b16 %v1161, %v1153
  %v1410 = vpack.c.b16 %v1162, %v1154
  %v1411 = vpack.c.b16 %v1163, %v1155
  %v1412 = vpack.c.b16 %v1164, %v1156
  %v1413 = vpack.c.b16 %v1165, %v1157
  %v1414 = vpack.c.b16 %v1166, %v1158
  %v1415 = vpack.c.b16 %v1167, %v1159
  %v1416 = vpack.c.b16 %v1168, %v1160
  %v1417 = vpack.c.b16 %v1177, %v1169
  %v1418 = vpack.c.b16 %v1178, %v1170
  %v1419 = vpack.c.b16 %v1179, %v1171
  %v1420 = vpack.c.b16 %v1180, %v1172
  %v1421 = vpack.c.b16 %v1181, %v1173
  %v1422 = vpack.c.b16 %v1182, %v1174
  %v1423 = vpack.c.b16 %v1183, %v1175
  %v1424 = vpack.c.b16 %v1184, %v1176
  %v1425 = vpack.c.b16 %v1193, %v1185
  %v1426 = vpack.c.b16 %v1194, %v1186
  %v1427 = vpack.c.b16 %v1195, %v1187
  %v1428 = vpack.c.b16 %v1196, %v1188
  %v1429 = vpack.c.b16 %v1197, %v1189
  %v1430 = vpack.c.b16 %v1198, %v1190
  %v1431 = vpack.c.b16 %v1199, %v1191
  %v1432 = vpack.c.b16 %v1200, %v1192
  %v1433 = vpack.c.b16 %v1209, %v1201
  %v1434 = vpack.c.b16 %v1210, %v1202
  %v1435 = vpack.c.b16 %v1211, %v1203
  %v1436 = vpack.c.b16 %v1212, %v1204
  %v1437 = vpack.c.b16 %v1213, %v1205
  %v1438 = vpack.c.b16 %v1214, %v1206
  %v1439 = vpack.c.b16 %v1215, %v1207
  %v1440 = vpack.c.b16 %v1216, %v1208
  %v1441 = vpack.c.b16 %v1225, %v1217
  %v1442 = vpack.c.b16 %v1226, %v1218
  %v1443 = vpack.c.b16 %v1227, %v1219
  %v1444 = vpack.c.b16 %v1228, %v1220
  %v1445 = vpack.c.b16 %v1229, %v1221
  %v1446 = vpack.c.b16 %v1230, %v1222
  %v1447 = vpack.c.b16 %v1231, %v1223
  %v1448 = vpack.c.b16 %v1232, %v1224
  %v1449 = vpack.c.b16 %v1241, %v1233
  %v1450 = vpack.c.b16 %v1242, %v1234
  %v1451 = vpack.c.b16 %v1243, %v1235
  %v1452 = vpack.c.b16 %v1244, %v1236
  %v1453 = vpack.c.b16 %v1245, %v1237
  %v1454 = vpack.c.b16 %v1246, %v1238
  %v1455 = vpack.c.b16 %v1247, %v1239
  %v1456 = vpack.c.b16 %v1248, %v1240
  %v1457 = vpack.c.b16 %v1257, %v1249
  %v1458 = vpack.c.b16 %v1258, %v1250
  %v1459 = vpack.c.b16 %v1259, %v1251
  %v1460 = vpack.c.b16 %v1260, %v1252
  %v1461 = vpack.c.b16 %v1261, %v1253
  %v1462 = vpack.c.b16 %v1262, %v1254
  %v1463 = vpack.c.b16 %v1263, %v1255
  %v1464 = vpack.c.b16 %v1264, %v1256
  %v1465 = vpack.c.b16 %v1273, %v1265
  %v1466 = vpack.c.b16 %v1274, %v1266
  %v1467 = vpack.c.b16 %v1275, %v1267
  %v1468 = vpack.c.b16 %v1276, %v1268
  %v1469 = vpack.c.b16 %v1277, %v1269
  %v1470 = vpack.c.b16 %v1278, %v1270
  %v1471 = vpack.c.b16 %v1279, %v1271
  %v1472 = vpack.c.b16 %v1280, %v1272
  %v1473 = vpack.c.b16 %v1289, %v1281
  %v1474 = vpack.c.b16 %v1290, %v1282
  %v1475 = vpack.c.b16 %v1291, %v1283
  %v1476 = vpack.c.b16 %v1292, %v1284
  %v1477 = vpack.c.b16 %v1293, %v1285
  %v1478 = vpack.c.b16 %v1294, %v1286
  %v1479 = vpack.c.b16 %v1295, %v1287
  %v1480 = vpack.c.b16 %v1296, %v1288
  %v1481 = vpack.c.b16 %v1305, %v1297
  %v1482 = vpack.c.b16 %v1306, %v1298
  %v1483 = vpack.c.b16 %v1307, %v1299
  %v1484 = vpack.c.b16 %v1308, %v1300
  %v1485 = vpack.c.b16 %v1309, %v1301
  %v1486 = vpack.c.b16 %v1310, %v1302
  %v1487 = vpack.c.b16 %v1311, %v1303
  %v1488 = vpack.c.b16 %v1312, %v1304
  %v1489 = vpack.c.b16 %v1321, %v1313
  %v1490 = vpack.c.b16 %v1322, %v1314
  %v1491 = vpack.c.b16 %v1323, %v1315
  %v1492 = vpack.c.b16 %v1324, %v1316
  %v1493 = vpack.c.b16 %v1325, %v1317
  %v1494 = vpack.c.b16 %v1326, %v1318
  %v1495 = vpack.c.b16 %v1327, %v1319
  %v1496 = vpack.c.b16 %v1328, %v1320
  %v1497 = vpack.c.b16 %v1337, %v1329
  %v1498 = vpack.c.b16 %v1338, %v1330
  %v1499 = vpack.c.b16 %v1339, %v1331
  %v1500 = vpack.c.b16 %v1340, %v1332
  %v1501 = vpack.c.b16 %v1341, %v1333
  %v1502 = vpack.c.b16 %v1342, %v1334
  %v1503 = vpack.c.b16 %v1343, %v1335
  %v1504 = vpack.c.b16 %v1344, %v1336
  %v1505 = vpack.c.b16 %v1353, %v1345
  %v1506 = vpack.c.b16 %v1354, %v1346
  %v1507 = vpack.c.b16 %v1355, %v1347
  %v1508 = vpack.c.b16 %v1356, %v1348
  %v1509 = vpack.c.b16 %v1357, %v1349
  %v1510 = vpack.c.b16 %v1358, %v1350
  %v1511 = vpack.c.b16 %v1359, %v1351
  %v1512 = vpack.c.b16 %v1360, %v1352
  %v1513 = vpack.c.b16 %v1369, %v1361
  %v1514 = vpack.c.b16 %v1370, %v1362
  %v1515 = vpack.c.b16 %v1371, %v1363
  %v1516 = vpack.c.b16 %v1372, %v1364
  %v1517 = vpack.c.b16 %v1373, %v1365
  %v1518 = vpack.c.b16 %v1374, %v1366
  %v1519 = vpack.c.b16 %v1375, %v1367
  %v1520 = vpack.c.b16 %v1376, %v1368
  %v1521 = vpack.c.b16 %v1385, %v1377
  %v1522 = vpack.c.b16 %v1386, %v1378
  %v1523 = vpack.c.b16 %v1387, %v1379
  %v1524 = vpack.c.b16 %v1388, %v1380
  %v1525 = vpack.c.b16 %v1389, %v1381
  %v1526 = vpack.c.b16 %v1390, %v1382
  %v1527 = vpack.c.b16 %v1391, %v1383
  %v1528 = vpack.c.b16 %v1392, %v1384
  %v1529 = vpack.c.b16 %v1401, %v1393
  %v1530 = vpack.c.b16 %v1402, %v1394
  %v1531 = vpack.c.b16 %v1403, %v1395
  %v1532 = vpack.c.b16 %v1404, %v1396
  %v1533 = vpack.c.b16 %v1405, %v1397
  %v1534 = vpack.c.b16 %v1406, %v1398
  %v1535 = vpack.c.b16 %v1407, %v1399
  %v1536 = vpack.c.b16 %v1408, %v1400
  %1665 = vmatprep.subr.bf16.mxu0 %v1410
  %1666 = vmatpush1.bf16.msra.mxu0 %v1409
  %1667 = vmatprep.subr.bf16.mxu0 %v1418
  %1668 = vmatpush1.bf16.msra.mxu0 %v1417
  %1669 = vmatprep.subr.bf16.mxu0 %v1426
  %1670 = vmatpush1.bf16.msra.mxu0 %v1425
  %1671 = vmatprep.subr.bf16.mxu0 %v1434
  %1672 = vmatpush1.bf16.msra.mxu0 %v1433
  %1673 = vmatprep.subr.bf16.mxu0 %v1442
  %1674 = vmatpush1.bf16.msra.mxu0 %v1441
  %1675 = vmatprep.subr.bf16.mxu0 %v1450
  %1676 = vmatpush1.bf16.msra.mxu0 %v1449
  %1677 = vmatprep.subr.bf16.mxu0 %v1458
  %1678 = vmatpush1.bf16.msra.mxu0 %v1457
  %1679 = vmatprep.subr.bf16.mxu0 %v1466
  %1680 = vmatpush1.bf16.msra.mxu0 %v1465
  %1681 = vmatprep.subr.bf16.mxu0 %v1474
  %1682 = vmatpush1.bf16.msra.mxu0 %v1473
  %1683 = vmatprep.subr.bf16.mxu0 %v1482
  %1684 = vmatpush1.bf16.msra.mxu0 %v1481
  %1685 = vmatprep.subr.bf16.mxu0 %v1490
  %1686 = vmatpush1.bf16.msra.mxu0 %v1489
  %1687 = vmatprep.subr.bf16.mxu0 %v1498
  %1688 = vmatpush1.bf16.msra.mxu0 %v1497
  %1689 = vmatprep.subr.bf16.mxu0 %v1506
  %1690 = vmatpush1.bf16.msra.mxu0 %v1505
  %1691 = vmatprep.subr.bf16.mxu0 %v1514
  %1692 = vmatpush1.bf16.msra.mxu0 %v1513
  %1693 = vmatprep.subr.bf16.mxu0 %v1522
  %1694 = vmatpush1.bf16.msra.mxu0 %v1521
  %1695 = vmatprep.subr.bf16.mxu0 %v1530
  %1696 = vmatpush1.bf16.msra.mxu0 %v1529
  %1697 = vmatprep.mubr.bf16.mxu0 %v896
  %1698 = vmatmul.mubr.bf16.gmra.mrb[0].mxu0 %v895
  %v1699 = vpop.f32.mrb[0].mxu0
  %v1700 = vadd.f32 0.0, %v1699
  %v1701 = vpop.f32.mrb[0].mxu0
  %v1702 = vadd.f32 0.0, %v1701
  %v1703 = vpop.f32.mrb[0].mxu0
  %v1704 = vpop.f32.mrb[0].mxu0
  %1705 = vdwg.mxu0
  %1706 = vmatprep.subr.bf16.mxu0 %v1412
  %1707 = vmatpush1.bf16.msra.mxu0 %v1411
  %1708 = vmatprep.subr.bf16.mxu0 %v1420
  %1709 = vmatpush1.bf16.msra.mxu0 %v1419
  %1710 = vmatprep.subr.bf16.mxu0 %v1428
  %1711 = vmatpush1.bf16.msra.mxu0 %v1427
  %1712 = vmatprep.subr.bf16.mxu0 %v1436
  %1713 = vmatpush1.bf16.msra.mxu0 %v1435
  %1714 = vmatprep.subr.bf16.mxu0 %v1444
  %1715 = vmatpush1.bf16.msra.mxu0 %v1443
  %1716 = vmatprep.subr.bf16.mxu0 %v1452
  %1717 = vmatpush1.bf16.msra.mxu0 %v1451
  %1718 = vmatprep.subr.bf16.mxu0 %v1460
  %1719 = vmatpush1.bf16.msra.mxu0 %v1459
  %1720 = vmatprep.subr.bf16.mxu0 %v1468
  %1721 = vmatpush1.bf16.msra.mxu0 %v1467
  %1722 = vmatprep.subr.bf16.mxu0 %v1476
  %1723 = vmatpush1.bf16.msra.mxu0 %v1475
  %1724 = vmatprep.subr.bf16.mxu0 %v1484
  %1725 = vmatpush1.bf16.msra.mxu0 %v1483
  %1726 = vmatprep.subr.bf16.mxu0 %v1492
  %1727 = vmatpush1.bf16.msra.mxu0 %v1491
  %1728 = vmatprep.subr.bf16.mxu0 %v1500
  %1729 = vmatpush1.bf16.msra.mxu0 %v1499
  %1730 = vmatprep.subr.bf16.mxu0 %v1508
  %1731 = vmatpush1.bf16.msra.mxu0 %v1507
  %1732 = vmatprep.subr.bf16.mxu0 %v1516
  %1733 = vmatpush1.bf16.msra.mxu0 %v1515
  %1734 = vmatprep.subr.bf16.mxu0 %v1524
  %1735 = vmatpush1.bf16.msra.mxu0 %v1523
  %1736 = vmatprep.subr.bf16.mxu0 %v1532
  %1737 = vmatpush1.bf16.msra.mxu0 %v1531
  %1738 = vmatprep.mubr.bf16.mxu0 %v896
  %1739 = vmatmul.mubr.bf16.gmra.mrb[0].mxu0 %v895
  %v1740 = vpop.f32.mrb[0].mxu0
  %v1741 = vadd.f32 0.0, %v1740
  %v1742 = vpop.f32.mrb[0].mxu0
  %v1743 = vadd.f32 0.0, %v1742
  %v1744 = vpop.f32.mrb[0].mxu0
  %v1745 = vpop.f32.mrb[0].mxu0
  %1746 = vdwg.mxu0
  %1747 = vmatprep.subr.bf16.mxu0 %v1414
  %1748 = vmatpush1.bf16.msra.mxu0 %v1413
  %1749 = vmatprep.subr.bf16.mxu0 %v1422
  %1750 = vmatpush1.bf16.msra.mxu0 %v1421
  %1751 = vmatprep.subr.bf16.mxu0 %v1430
  %1752 = vmatpush1.bf16.msra.mxu0 %v1429
  %1753 = vmatprep.subr.bf16.mxu0 %v1438
  %1754 = vmatpush1.bf16.msra.mxu0 %v1437
  %1755 = vmatprep.subr.bf16.mxu0 %v1446
  %1756 = vmatpush1.bf16.msra.mxu0 %v1445
  %1757 = vmatprep.subr.bf16.mxu0 %v1454
  %1758 = vmatpush1.bf16.msra.mxu0 %v1453
  %1759 = vmatprep.subr.bf16.mxu0 %v1462
  %1760 = vmatpush1.bf16.msra.mxu0 %v1461
  %1761 = vmatprep.subr.bf16.mxu0 %v1470
  %1762 = vmatpush1.bf16.msra.mxu0 %v1469
  %1763 = vmatprep.subr.bf16.mxu0 %v1478
  %1764 = vmatpush1.bf16.msra.mxu0 %v1477
  %1765 = vmatprep.subr.bf16.mxu0 %v1486
  %1766 = vmatpush1.bf16.msra.mxu0 %v1485
  %1767 = vmatprep.subr.bf16.mxu0 %v1494
  %1768 = vmatpush1.bf16.msra.mxu0 %v1493
  %1769 = vmatprep.subr.bf16.mxu0 %v1502
  %1770 = vmatpush1.bf16.msra.mxu0 %v1501
  %1771 = vmatprep.subr.bf16.mxu0 %v1510
  %1772 = vmatpush1.bf16.msra.mxu0 %v1509
  %1773 = vmatprep.subr.bf16.mxu0 %v1518
  %1774 = vmatpush1.bf16.msra.mxu0 %v1517
  %1775 = vmatprep.subr.bf16.mxu0 %v1526
  %1776 = vmatpush1.bf16.msra.mxu0 %v1525
  %1777 = vmatprep.subr.bf16.mxu0 %v1534
  %1778 = vmatpush1.bf16.msra.mxu0 %v1533
  %1779 = vmatprep.mubr.bf16.mxu0 %v896
  %1780 = vmatmul.mubr.bf16.gmra.mrb[0].mxu0 %v895
  %v1781 = vpop.f32.mrb[0].mxu0
  %v1782 = vadd.f32 0.0, %v1781
  %v1783 = vpop.f32.mrb[0].mxu0
  %v1784 = vadd.f32 0.0, %v1783
  %v1785 = vpop.f32.mrb[0].mxu0
  %v1786 = vpop.f32.mrb[0].mxu0
  %1787 = vdwg.mxu0
  %1788 = vmatprep.subr.bf16.mxu0 %v1416
  %1789 = vmatpush1.bf16.msra.mxu0 %v1415
  %1790 = vmatprep.subr.bf16.mxu0 %v1424
  %1791 = vmatpush1.bf16.msra.mxu0 %v1423
  %1792 = vmatprep.subr.bf16.mxu0 %v1432
  %1793 = vmatpush1.bf16.msra.mxu0 %v1431
  %1794 = vmatprep.subr.bf16.mxu0 %v1440
  %1795 = vmatpush1.bf16.msra.mxu0 %v1439
  %1796 = vmatprep.subr.bf16.mxu0 %v1448
  %1797 = vmatpush1.bf16.msra.mxu0 %v1447
  %1798 = vmatprep.subr.bf16.mxu0 %v1456
  %1799 = vmatpush1.bf16.msra.mxu0 %v1455
  %1800 = vmatprep.subr.bf16.mxu0 %v1464
  %1801 = vmatpush1.bf16.msra.mxu0 %v1463
  %1802 = vmatprep.subr.bf16.mxu0 %v1472
  %1803 = vmatpush1.bf16.msra.mxu0 %v1471
  %1804 = vmatprep.subr.bf16.mxu0 %v1480
  %1805 = vmatpush1.bf16.msra.mxu0 %v1479
  %1806 = vmatprep.subr.bf16.mxu0 %v1488
  %1807 = vmatpush1.bf16.msra.mxu0 %v1487
  %1808 = vmatprep.subr.bf16.mxu0 %v1496
  %1809 = vmatpush1.bf16.msra.mxu0 %v1495
  %1810 = vmatprep.subr.bf16.mxu0 %v1504
  %1811 = vmatpush1.bf16.msra.mxu0 %v1503
  %1812 = vmatprep.subr.bf16.mxu0 %v1512
  %1813 = vmatpush1.bf16.msra.mxu0 %v1511
  %1814 = vmatprep.subr.bf16.mxu0 %v1520
  %1815 = vmatpush1.bf16.msra.mxu0 %v1519
  %1816 = vmatprep.subr.bf16.mxu0 %v1528
  %1817 = vmatpush1.bf16.msra.mxu0 %v1527
  %1818 = vmatprep.subr.bf16.mxu0 %v1536
  %1819 = vmatpush1.bf16.msra.mxu0 %v1535
  %1820 = vmatprep.mubr.bf16.mxu0 %v896
  %1821 = vmatmul.mubr.bf16.gmra.mrb[0].mxu0 %v895
  %v1822 = vpop.f32.mrb[0].mxu0
  %v1823 = vadd.f32 0.0, %v1822
  %v1824 = vpop.f32.mrb[0].mxu0
  %v1825 = vadd.f32 0.0, %v1824
  %v1826 = vpop.f32.mrb[0].mxu0
  %v1827 = vpop.f32.mrb[0].mxu0
  %1828 = vdwg.mxu0
  %v1829 = vpack.c.bf16 %v1700, %v1700
  %v1830 = vpack.c.bf16 %v1702, %v1702
  %v1831 = vpack.c.bf16 %v1741, %v1741
  %v1832 = vpack.c.bf16 %v1743, %v1743
  %v1833 = vpack.c.bf16 %v1782, %v1782
  %v1834 = vpack.c.bf16 %v1784, %v1784
  %v1835 = vpack.c.bf16 %v1823, %v1823
  %v1836 = vpack.c.bf16 %v1825, %v1825
  %v1837 = vld [vmem:[%s6] sm:$0xf]
  %v1838 = vld [vmem:[%s6 + $0x4] sm:$0xf]
  %s1839 = scalar_lea.vmem %s6, 8
  %v1840 = vld [vmem:[%s1839] sm:$0xf]
  %v1841 = vld [vmem:[%s1839 + $0x4] sm:$0xf]
  %v1844 = vunpack.c.l.b16 %v1840
  %v1845 = vunpack.c.l.b16 %v1841
  %v1846 = vpack.c.b16 %v1845, %v1844
  %vm1847 = vcmask 64512
  %v1849 = vsel %vm1847, %v1846, 0
  %vm1851 = vcmask 1043456
  %v1853 = vsel %vm1851, %v1831, 0
  %v1856 = vsel %vm1851, %v1832, 0
  %1858 = vmatprep.subr.bf16.mxu0 %v1856
  %1859 = vmatpush1.bf16.msra.mxu0 %v1853
  %1860 = vmatprep.subr.bf16.mxu0 0
  %1861 = vmatpush1.bf16.msra.mxu0 0
  %1862 = vmatprep.subr.bf16.mxu0 0
  %1863 = vmatpush1.bf16.msra.mxu0 0
  %1864 = vmatprep.subr.bf16.mxu0 0
  %1865 = vmatpush1.bf16.msra.mxu0 0
  %1866 = vmatprep.subr.bf16.mxu0 0
  %1867 = vmatpush1.bf16.msra.mxu0 0
  %1868 = vmatprep.subr.bf16.mxu0 0
  %1869 = vmatpush1.bf16.msra.mxu0 0
  %1870 = vmatprep.subr.bf16.mxu0 0
  %1871 = vmatpush1.bf16.msra.mxu0 0
  %1872 = vmatprep.subr.bf16.mxu0 0
  %1873 = vmatpush1.bf16.msra.mxu0 0
  %1874 = vmatprep.subr.bf16.mxu0 0
  %1875 = vmatpush1.bf16.msra.mxu0 0
  %1876 = vmatprep.subr.bf16.mxu0 0
  %1877 = vmatpush1.bf16.msra.mxu0 0
  %1878 = vmatprep.subr.bf16.mxu0 0
  %1879 = vmatpush1.bf16.msra.mxu0 0
  %1880 = vmatprep.subr.bf16.mxu0 0
  %1881 = vmatpush1.bf16.msra.mxu0 0
  %1882 = vmatprep.subr.bf16.mxu0 0
  %1883 = vmatpush1.bf16.msra.mxu0 0
  %1884 = vmatprep.subr.bf16.mxu0 0
  %1885 = vmatpush1.bf16.msra.mxu0 0
  %1886 = vmatprep.subr.bf16.mxu0 0
  %1887 = vmatpush1.bf16.msra.mxu0 0
  %1888 = vmatprep.subr.bf16.mxu0 0
  %1889 = vmatpush1.bf16.msra.mxu0 0
  %1890 = vmatprep.mubr.bf16.mxu0 0
  %1891 = vmatmul.mubr.bf16.gmra.mrb[0].mxu0 %v1849
  %v1892 = vpop.f32.mrb[0].mxu0
  %v1893 = vadd.f32 0.0, %v1892
  %v1894 = vpop.f32.mrb[0].mxu0
  %v1895 = vadd.f32 0.0, %v1894
  %v1896 = vpop.f32.mrb[0].mxu0
  %v1897 = vadd.f32 0.0, %v1896
  %v1898 = vpop.f32.mrb[0].mxu0
  %v1899 = vadd.f32 0.0, %v1898
  %1900 = vdwg.mxu0
  %v1903 = vunpack.c.l.b16 %v1837
  %v1904 = vunpack.c.l.b16 %v1838
  %v1905 = vpack.c.b16 %v1904, %v1903
  %v1907 = vsel %vm1847, %v1905, 0
  %v1910 = vsel %vm1851, %v1829, 0
  %v1913 = vsel %vm1851, %v1830, 0
  %1915 = vmatprep.subr.bf16.mxu0 %v1913
  %1916 = vmatpush1.bf16.msra.mxu0 %v1910
  %1917 = vmatprep.subr.bf16.mxu0 0
  %1918 = vmatpush1.bf16.msra.mxu0 0
  %1919 = vmatprep.subr.bf16.mxu0 0
  %1920 = vmatpush1.bf16.msra.mxu0 0
  %1921 = vmatprep.subr.bf16.mxu0 0
  %1922 = vmatpush1.bf16.msra.mxu0 0
  %1923 = vmatprep.subr.bf16.mxu0 0
  %1924 = vmatpush1.bf16.msra.mxu0 0
  %1925 = vmatprep.subr.bf16.mxu0 0
  %1926 = vmatpush1.bf16.msra.mxu0 0
  %1927 = vmatprep.subr.bf16.mxu0 0
  %1928 = vmatpush1.bf16.msra.mxu0 0
  %1929 = vmatprep.subr.bf16.mxu0 0
  %1930 = vmatpush1.bf16.msra.mxu0 0
  %1931 = vmatprep.subr.bf16.mxu0 0
  %1932 = vmatpush1.bf16.msra.mxu0 0
  %1933 = vmatprep.subr.bf16.mxu0 0
  %1934 = vmatpush1.bf16.msra.mxu0 0
  %1935 = vmatprep.subr.bf16.mxu0 0
  %1936 = vmatpush1.bf16.msra.mxu0 0
  %1937 = vmatprep.subr.bf16.mxu0 0
  %1938 = vmatpush1.bf16.msra.mxu0 0
  %1939 = vmatprep.subr.bf16.mxu0 0
  %1940 = vmatpush1.bf16.msra.mxu0 0
  %1941 = vmatprep.subr.bf16.mxu0 0
  %1942 = vmatpush1.bf16.msra.mxu0 0
  %1943 = vmatprep.subr.bf16.mxu0 0
  %1944 = vmatpush1.bf16.msra.mxu0 0
  %1945 = vmatprep.subr.bf16.mxu0 0
  %1946 = vmatpush1.bf16.msra.mxu0 0
  %1947 = vmatprep.mubr.bf16.mxu0 0
  %1948 = vmatmul.mubr.bf16.gmra.mrb[0].mxu0 %v1907
  %v1949 = vpop.f32.mrb[0].mxu0
  %v1950 = vadd.f32 %v1893, %v1949
  %v1951 = vpop.f32.mrb[0].mxu0
  %v1952 = vadd.f32 %v1895, %v1951
  %v1953 = vpop.f32.mrb[0].mxu0
  %v1954 = vadd.f32 %v1897, %v1953
  %v1955 = vpop.f32.mrb[0].mxu0
  %v1956 = vadd.f32 %v1899, %v1955
  %1957 = vdwg.mxu0
  %s1958 = scalar_lea.vmem %s6, 16
  %v1959 = vld [vmem:[%s1958] sm:$0xf]
  %v1960 = vld [vmem:[%s1958 + $0x4] sm:$0xf]
  %v1963 = vunpack.c.l.b16 %v1959
  %v1964 = vunpack.c.l.b16 %v1960
  %v1965 = vpack.c.b16 %v1964, %v1963
  %v1967 = vsel %vm1847, %v1965, 0
  %v1970 = vsel %vm1851, %v1833, 0
  %v1973 = vsel %vm1851, %v1834, 0
  %1975 = vmatprep.subr.bf16.mxu0 %v1973
  %1976 = vmatpush1.bf16.msra.mxu0 %v1970
  %1977 = vmatprep.subr.bf16.mxu0 0
  %1978 = vmatpush1.bf16.msra.mxu0 0
  %1979 = vmatprep.subr.bf16.mxu0 0
  %1980 = vmatpush1.bf16.msra.mxu0 0
  %1981 = vmatprep.subr.bf16.mxu0 0
  %1982 = vmatpush1.bf16.msra.mxu0 0
  %1983 = vmatprep.subr.bf16.mxu0 0
  %1984 = vmatpush1.bf16.msra.mxu0 0
  %1985 = vmatprep.subr.bf16.mxu0 0
  %1986 = vmatpush1.bf16.msra.mxu0 0
  %1987 = vmatprep.subr.bf16.mxu0 0
  %1988 = vmatpush1.bf16.msra.mxu0 0
  %1989 = vmatprep.subr.bf16.mxu0 0
  %1990 = vmatpush1.bf16.msra.mxu0 0
  %1991 = vmatprep.subr.bf16.mxu0 0
  %1992 = vmatpush1.bf16.msra.mxu0 0
  %1993 = vmatprep.subr.bf16.mxu0 0
  %1994 = vmatpush1.bf16.msra.mxu0 0
  %1995 = vmatprep.subr.bf16.mxu0 0
  %1996 = vmatpush1.bf16.msra.mxu0 0
  %1997 = vmatprep.subr.bf16.mxu0 0
  %1998 = vmatpush1.bf16.msra.mxu0 0
  %1999 = vmatprep.subr.bf16.mxu0 0
  %2000 = vmatpush1.bf16.msra.mxu0 0
  %2001 = vmatprep.subr.bf16.mxu0 0
  %2002 = vmatpush1.bf16.msra.mxu0 0
  %2003 = vmatprep.subr.bf16.mxu0 0
  %2004 = vmatpush1.bf16.msra.mxu0 0
  %2005 = vmatprep.subr.bf16.mxu0 0
  %2006 = vmatpush1.bf16.msra.mxu0 0
  %2007 = vmatprep.mubr.bf16.mxu0 0
  %2008 = vmatmul.mubr.bf16.gmra.mrb[0].mxu0 %v1967
  %v2009 = vpop.f32.mrb[0].mxu0
  %v2010 = vadd.f32 0.0, %v2009
  %v2011 = vpop.f32.mrb[0].mxu0
  %v2012 = vadd.f32 0.0, %v2011
  %v2013 = vpop.f32.mrb[0].mxu0
  %v2014 = vadd.f32 0.0, %v2013
  %v2015 = vpop.f32.mrb[0].mxu0
  %v2016 = vadd.f32 0.0, %v2015
  %2017 = vdwg.mxu0
  %v2018 = vadd.f32 %v1950, %v2010
  %v2019 = vadd.f32 %v1952, %v2012
  %v2020 = vadd.f32 %v1954, %v2014
  %v2021 = vadd.f32 %v1956, %v2016
  %s2022 = scalar_lea.vmem %s6, 24
  %v2023 = vld [vmem:[%s2022] sm:$0xf]
  %v2024 = vld [vmem:[%s2022 + $0x4] sm:$0xf]
  %v2027 = vunpack.c.l.b16 %v2023
  %v2028 = vunpack.c.l.b16 %v2024
  %v2029 = vpack.c.b16 %v2028, %v2027
  %v2031 = vsel %vm1847, %v2029, 0
  %v2034 = vsel %vm1851, %v1835, 0
  %v2037 = vsel %vm1851, %v1836, 0
  %2039 = vmatprep.subr.bf16.mxu0 %v2037
  %2040 = vmatpush1.bf16.msra.mxu0 %v2034
  %2041 = vmatprep.subr.bf16.mxu0 0
  %2042 = vmatpush1.bf16.msra.mxu0 0
  %2043 = vmatprep.subr.bf16.mxu0 0
  %2044 = vmatpush1.bf16.msra.mxu0 0
  %2045 = vmatprep.subr.bf16.mxu0 0
  %2046 = vmatpush1.bf16.msra.mxu0 0
  %2047 = vmatprep.subr.bf16.mxu0 0
  %2048 = vmatpush1.bf16.msra.mxu0 0
  %2049 = vmatprep.subr.bf16.mxu0 0
  %2050 = vmatpush1.bf16.msra.mxu0 0
  %2051 = vmatprep.subr.bf16.mxu0 0
  %2052 = vmatpush1.bf16.msra.mxu0 0
  %2053 = vmatprep.subr.bf16.mxu0 0
  %2054 = vmatpush1.bf16.msra.mxu0 0
  %2055 = vmatprep.subr.bf16.mxu0 0
  %2056 = vmatpush1.bf16.msra.mxu0 0
  %2057 = vmatprep.subr.bf16.mxu0 0
  %2058 = vmatpush1.bf16.msra.mxu0 0
  %2059 = vmatprep.subr.bf16.mxu0 0
  %2060 = vmatpush1.bf16.msra.mxu0 0
  %2061 = vmatprep.subr.bf16.mxu0 0
  %2062 = vmatpush1.bf16.msra.mxu0 0
  %2063 = vmatprep.subr.bf16.mxu0 0
  %2064 = vmatpush1.bf16.msra.mxu0 0
  %2065 = vmatprep.subr.bf16.mxu0 0
  %2066 = vmatpush1.bf16.msra.mxu0 0
  %2067 = vmatprep.subr.bf16.mxu0 0
  %2068 = vmatpush1.bf16.msra.mxu0 0
  %2069 = vmatprep.subr.bf16.mxu0 0
  %2070 = vmatpush1.bf16.msra.mxu0 0
  %2071 = vmatprep.mubr.bf16.mxu0 0
  %2072 = vmatmul.mubr.bf16.gmra.mrb[0].mxu0 %v2031
  %v2073 = vpop.f32.mrb[0].mxu0
  %v2074 = vadd.f32 0.0, %v2073
  %v2075 = vpop.f32.mrb[0].mxu0
  %v2076 = vadd.f32 0.0, %v2075
  %v2077 = vpop.f32.mrb[0].mxu0
  %v2078 = vadd.f32 0.0, %v2077
  %v2079 = vpop.f32.mrb[0].mxu0
  %v2080 = vadd.f32 0.0, %v2079
  %2081 = vdwg.mxu0
  %v2082 = vadd.f32 %v2018, %v2074
  %v2083 = vadd.f32 %v2019, %v2076
  %v2084 = vadd.f32 %v2020, %v2078
  %v2085 = vadd.f32 %v2021, %v2080
  %v2086 = vadd.f32 %v2082, %v2084
  %v2087 = vrot.slane %v2086, 4
  %v2088 = vadd.f32 %v2086, %v2087
  %v2089 = vrot.slane %v2088, 2
  %v2090 = vadd.f32 %v2088, %v2089
  %v2091 = vrot.slane %v2090, 1
  %v2092 = vadd.f32 %v2090, %v2091
  %v2093 = vadd.f32 %v2083, %v2085
  %v2094 = vrot.slane %v2093, 4
  %v2095 = vadd.f32 %v2093, %v2094
  %v2096 = vrot.slane %v2095, 2
  %v2097 = vadd.f32 %v2095, %v2096
  %v2098 = vrot.slane %v2097, 1
  %v2099 = vadd.f32 %v2097, %v2098
  %v2100 = vmul.f32 %v2082, %v2082
  %v2101 = vmul.f32 %v2083, %v2083
  %v2102 = vmul.f32 %v2084, %v2084
  %v2103 = vmul.f32 %v2085, %v2085
  %v2104 = vadd.f32 %v2100, %v2102
  %v2105 = vrot.slane %v2104, 4
  %v2106 = vadd.f32 %v2104, %v2105
  %v2107 = vrot.slane %v2106, 2
  %v2108 = vadd.f32 %v2106, %v2107
  %v2109 = vrot.slane %v2108, 1
  %v2110 = vadd.f32 %v2108, %v2109
  %v2111 = vadd.f32 %v2101, %v2103
  %v2112 = vrot.slane %v2111, 4
  %v2113 = vadd.f32 %v2111, %v2112
  %v2114 = vrot.slane %v2113, 2
  %v2115 = vadd.f32 %v2113, %v2114
  %v2116 = vrot.slane %v2115, 1
  %v2117 = vadd.f32 %v2115, %v2116
  %v2118 = vld [vmem:[%s7] sm:$0xff]
  %v2119 = vld [vmem:[%s7 + $0x8] sm:$0xff]
  %v2120 = vld [vmem:[%s7 + $0x10] sm:$0xff]
  %v2121 = vld [vmem:[%s7 + $0x18] sm:$0xff]
  %v2122 = vld [vmem:[%s7 + $0x20] sm:$0xff]
  %v2123 = vld [vmem:[%s7 + $0x28] sm:$0xff]
  %v2124 = vld [vmem:[%s7 + $0x30] sm:$0xff]
  %v2125 = vld [vmem:[%s7 + $0x38] sm:$0xff]
  %v2126 = vld [vmem:[%s7 + $0x40] sm:$0xff]
  %v2127 = vld [vmem:[%s7 + $0x48] sm:$0xff]
  %v2128 = vld [vmem:[%s7 + $0x50] sm:$0xff]
  %v2129 = vld [vmem:[%s7 + $0x58] sm:$0xff]
  %v2130 = vld [vmem:[%s7 + $0x60] sm:$0xff]
  %v2131 = vld [vmem:[%s7 + $0x68] sm:$0xff]
  %v2132 = vld [vmem:[%s7 + $0x70] sm:$0xff]
  %v2133 = vld [vmem:[%s7 + $0x78] sm:$0xff]
  %v2134 = vld [vmem:[%s7 + $0x80] sm:$0xff]
  %v2135 = vld [vmem:[%s7 + $0x88] sm:$0xff]
  %v2136 = vld [vmem:[%s7 + $0x90] sm:$0xff]
  %v2137 = vld [vmem:[%s7 + $0x98] sm:$0xff]
  %v2138 = vld [vmem:[%s7 + $0xa0] sm:$0xff]
  %v2139 = vld [vmem:[%s7 + $0xa8] sm:$0xff]
  %v2140 = vld [vmem:[%s7 + $0xb0] sm:$0xff]
  %v2141 = vld [vmem:[%s7 + $0xb8] sm:$0xff]
  %v2142 = vld [vmem:[%s7 + $0xc0] sm:$0xff]
  %v2143 = vld [vmem:[%s7 + $0xc8] sm:$0xff]
  %v2144 = vld [vmem:[%s7 + $0xd0] sm:$0xff]
  %v2145 = vld [vmem:[%s7 + $0xd8] sm:$0xff]
  %v2146 = vld [vmem:[%s7 + $0xe0] sm:$0xff]
  %v2147 = vld [vmem:[%s7 + $0xe8] sm:$0xff]
  %v2148 = vld [vmem:[%s7 + $0xf0] sm:$0xff]
  %v2149 = vld [vmem:[%s7 + $0xf8] sm:$0xff]
  %2150 = vmatprep.subr.mxu0 0.0
  %2151 = vmatpush1.msra.mxu0 %v2118
  %2152 = vmatprep.subr.mxu0 0.0
  %2153 = vmatpush1.msra.mxu0 %v2119
  %2154 = vmatprep.subr.mxu0 0.0
  %2155 = vmatpush1.msra.mxu0 %v2120
  %2156 = vmatprep.subr.mxu0 0.0
  %2157 = vmatpush1.msra.mxu0 %v2121
  %2158 = vmatprep.subr.mxu0 0.0
  %2159 = vmatpush1.msra.mxu0 %v2122
  %2160 = vmatprep.subr.mxu0 0.0
  %2161 = vmatpush1.msra.mxu0 %v2123
  %2162 = vmatprep.subr.mxu0 0.0
  %2163 = vmatpush1.msra.mxu0 %v2124
  %2164 = vmatprep.subr.mxu0 0.0
  %2165 = vmatpush1.msra.mxu0 %v2125
  %2166 = vmatprep.subr.mxu0 0.0
  %2167 = vmatpush1.msra.mxu0 %v2126
  %2168 = vmatprep.subr.mxu0 0.0
  %2169 = vmatpush1.msra.mxu0 %v2127
  %2170 = vmatprep.subr.mxu0 0.0
  %2171 = vmatpush1.msra.mxu0 %v2128
  %2172 = vmatprep.subr.mxu0 0.0
  %2173 = vmatpush1.msra.mxu0 %v2129
  %2174 = vmatprep.subr.mxu0 0.0
  %2175 = vmatpush1.msra.mxu0 %v2130
  %2176 = vmatprep.subr.mxu0 0.0
  %2177 = vmatpush1.msra.mxu0 %v2131
  %2178 = vmatprep.subr.mxu0 0.0
  %2179 = vmatpush1.msra.mxu0 %v2132
  %2180 = vmatprep.subr.mxu0 0.0
  %2181 = vmatpush1.msra.mxu0 %v2133
  %2182 = vmatprep.subr.mxu0 0.0
  %2183 = vmatpush1.msra.mxu0 %v2134
  %2184 = vmatprep.subr.mxu0 0.0
  %2185 = vmatpush1.msra.mxu0 %v2135
  %2186 = vmatprep.subr.mxu0 0.0
  %2187 = vmatpush1.msra.mxu0 %v2136
  %2188 = vmatprep.subr.mxu0 0.0
  %2189 = vmatpush1.msra.mxu0 %v2137
  %2190 = vmatprep.subr.mxu0 0.0
  %2191 = vmatpush1.msra.mxu0 %v2138
  %2192 = vmatprep.subr.mxu0 0.0
  %2193 = vmatpush1.msra.mxu0 %v2139
  %2194 = vmatprep.subr.mxu0 0.0
  %2195 = vmatpush1.msra.mxu0 %v2140
  %2196 = vmatprep.subr.mxu0 0.0
  %2197 = vmatpush1.msra.mxu0 %v2141
  %2198 = vmatprep.subr.mxu0 0.0
  %2199 = vmatpush1.msra.mxu0 %v2142
  %2200 = vmatprep.subr.mxu0 0.0
  %2201 = vmatpush1.msra.mxu0 %v2143
  %2202 = vmatprep.subr.mxu0 0.0
  %2203 = vmatpush1.msra.mxu0 %v2144
  %2204 = vmatprep.subr.mxu0 0.0
  %2205 = vmatpush1.msra.mxu0 %v2145
  %2206 = vmatprep.subr.mxu0 0.0
  %2207 = vmatpush1.msra.mxu0 %v2146
  %2208 = vmatprep.subr.mxu0 0.0
  %2209 = vmatpush1.msra.mxu0 %v2147
  %2210 = vmatprep.subr.mxu0 0.0
  %2211 = vmatpush1.msra.mxu0 %v2148
  %2212 = vmatprep.subr.mxu0 0.0
  %2213 = vmatpush1.msra.mxu0 %v2149
  %2214 = vmatprep.mubr.f32.mxu0 %v2099
  %2215 = vmatmul.mubr.f32.gmra.mrb[0].mxu0 %v2092
  %v2216 = vpop.f32.mrb[0].mxu0
  %v2217 = vadd.f32 0.0, %v2216
  %v2218 = vpop.f32.mrb[0].mxu0
  %2219 = vdwg.mxu0
  %2220 = vmatprep.subr.mxu0 0.0
  %2221 = vmatpush1.msra.mxu0 %v2118
  %2222 = vmatprep.subr.mxu0 0.0
  %2223 = vmatpush1.msra.mxu0 %v2119
  %2224 = vmatprep.subr.mxu0 0.0
  %2225 = vmatpush1.msra.mxu0 %v2120
  %2226 = vmatprep.subr.mxu0 0.0
  %2227 = vmatpush1.msra.mxu0 %v2121
  %2228 = vmatprep.subr.mxu0 0.0
  %2229 = vmatpush1.msra.mxu0 %v2122
  %2230 = vmatprep.subr.mxu0 0.0
  %2231 = vmatpush1.msra.mxu0 %v2123
  %2232 = vmatprep.subr.mxu0 0.0
  %2233 = vmatpush1.msra.mxu0 %v2124
  %2234 = vmatprep.subr.mxu0 0.0
  %2235 = vmatpush1.msra.mxu0 %v2125
  %2236 = vmatprep.subr.mxu0 0.0
  %2237 = vmatpush1.msra.mxu0 %v2126
  %2238 = vmatprep.subr.mxu0 0.0
  %2239 = vmatpush1.msra.mxu0 %v2127
  %2240 = vmatprep.subr.mxu0 0.0
  %2241 = vmatpush1.msra.mxu0 %v2128
  %2242 = vmatprep.subr.mxu0 0.0
  %2243 = vmatpush1.msra.mxu0 %v2129
  %2244 = vmatprep.subr.mxu0 0.0
  %2245 = vmatpush1.msra.mxu0 %v2130
  %2246 = vmatprep.subr.mxu0 0.0
  %2247 = vmatpush1.msra.mxu0 %v2131
  %2248 = vmatprep.subr.mxu0 0.0
  %2249 = vmatpush1.msra.mxu0 %v2132
  %2250 = vmatprep.subr.mxu0 0.0
  %2251 = vmatpush1.msra.mxu0 %v2133
  %2252 = vmatprep.subr.mxu0 0.0
  %2253 = vmatpush1.msra.mxu0 %v2134
  %2254 = vmatprep.subr.mxu0 0.0
  %2255 = vmatpush1.msra.mxu0 %v2135
  %2256 = vmatprep.subr.mxu0 0.0
  %2257 = vmatpush1.msra.mxu0 %v2136
  %2258 = vmatprep.subr.mxu0 0.0
  %2259 = vmatpush1.msra.mxu0 %v2137
  %2260 = vmatprep.subr.mxu0 0.0
  %2261 = vmatpush1.msra.mxu0 %v2138
  %2262 = vmatprep.subr.mxu0 0.0
  %2263 = vmatpush1.msra.mxu0 %v2139
  %2264 = vmatprep.subr.mxu0 0.0
  %2265 = vmatpush1.msra.mxu0 %v2140
  %2266 = vmatprep.subr.mxu0 0.0
  %2267 = vmatpush1.msra.mxu0 %v2141
  %2268 = vmatprep.subr.mxu0 0.0
  %2269 = vmatpush1.msra.mxu0 %v2142
  %2270 = vmatprep.subr.mxu0 0.0
  %2271 = vmatpush1.msra.mxu0 %v2143
  %2272 = vmatprep.subr.mxu0 0.0
  %2273 = vmatpush1.msra.mxu0 %v2144
  %2274 = vmatprep.subr.mxu0 0.0
  %2275 = vmatpush1.msra.mxu0 %v2145
  %2276 = vmatprep.subr.mxu0 0.0
  %2277 = vmatpush1.msra.mxu0 %v2146
  %2278 = vmatprep.subr.mxu0 0.0
  %2279 = vmatpush1.msra.mxu0 %v2147
  %2280 = vmatprep.subr.mxu0 0.0
  %2281 = vmatpush1.msra.mxu0 %v2148
  %2282 = vmatprep.subr.mxu0 0.0
  %2283 = vmatpush1.msra.mxu0 %v2149
  %2284 = vmatprep.mubr.f32.mxu0 %v2117
  %2285 = vmatmul.mubr.f32.gmra.mrb[0].mxu0 %v2110
  %v2286 = vpop.f32.mrb[0].mxu0
  %v2287 = vadd.f32 0.0, %v2286
  %v2288 = vpop.f32.mrb[0].mxu0
  %2289 = vdwg.mxu0
  %v2290 = vmul.f32 %v2217, 0.0078125
  %v2291 = vmul.f32 %v2287, 0.0078125
  %v2292 = vmul.f32 %v2290, %v2290
  %v2293 = vsub.f32 %v2291, %v2292
  %v2294 = vmax.f32 %v2293, 0.0
  %v2295 = vadd.f32 %v2294, 1e-05
  %v2296 = vrsqrt.pop %v2295
  %v2297 = vsub.f32 0.0, %v2290
  %v2298 = vmul.f32 %v2297, %v2296
  %v2299 = vld [vmem:[%s8] sm:$0xff]
  %v2300 = vld [vmem:[%s8 + $0x8] sm:$0xff]
  %v2301 = vld [vmem:[%s8 + $0x10] sm:$0xff]
  %v2302 = vld [vmem:[%s8 + $0x18] sm:$0xff]
  %v2303 = vld [vmem:[%s8 + $0x20] sm:$0xff]
  %v2304 = vld [vmem:[%s8 + $0x28] sm:$0xff]
  %v2305 = vld [vmem:[%s8 + $0x30] sm:$0xff]
  %v2306 = vld [vmem:[%s8 + $0x38] sm:$0xff]
  %vm2307 = vcmask 261120
  %v2309 = vsel %vm2307, %v2296, 0
  %2311 = vmatprep.subr.mxu0 %v2300
  %2312 = vmatpush1.msra.mxu0 %v2299
  %2313 = vmatprep.subr.mxu0 %v2302
  %2314 = vmatpush1.msra.mxu0 %v2301
  %2315 = vmatprep.subr.mxu0 %v2304
  %2316 = vmatpush1.msra.mxu0 %v2303
  %2317 = vmatprep.subr.mxu0 %v2306
  %2318 = vmatpush1.msra.mxu0 %v2305
  %2319 = vmatprep.subr.mxu0 0.0
  %2320 = vmatpush1.msra.mxu0 0.0
  %2321 = vmatprep.subr.mxu0 0.0
  %2322 = vmatpush1.msra.mxu0 0.0
  %2323 = vmatprep.subr.mxu0 0.0
  %2324 = vmatpush1.msra.mxu0 0.0
  %2325 = vmatprep.subr.mxu0 0.0
  %2326 = vmatpush1.msra.mxu0 0.0
  %2327 = vmatprep.subr.mxu0 0.0
  %2328 = vmatpush1.msra.mxu0 0.0
  %2329 = vmatprep.subr.mxu0 0.0
  %2330 = vmatpush1.msra.mxu0 0.0
  %2331 = vmatprep.subr.mxu0 0.0
  %2332 = vmatpush1.msra.mxu0 0.0
  %2333 = vmatprep.subr.mxu0 0.0
  %2334 = vmatpush1.msra.mxu0 0.0
  %2335 = vmatprep.subr.mxu0 0.0
  %2336 = vmatpush1.msra.mxu0 0.0
  %2337 = vmatprep.subr.mxu0 0.0
  %2338 = vmatpush1.msra.mxu0 0.0
  %2339 = vmatprep.subr.mxu0 0.0
  %2340 = vmatpush1.msra.mxu0 0.0
  %2341 = vmatprep.subr.mxu0 0.0
  %2342 = vmatpush1.msra.mxu0 0.0
  %2343 = vmatprep.subr.mxu0 0.0
  %2344 = vmatpush1.msra.mxu0 0.0
  %2345 = vmatprep.subr.mxu0 0.0
  %2346 = vmatpush1.msra.mxu0 0.0
  %2347 = vmatprep.subr.mxu0 0.0
  %2348 = vmatpush1.msra.mxu0 0.0
  %2349 = vmatprep.subr.mxu0 0.0
  %2350 = vmatpush1.msra.mxu0 0.0
  %2351 = vmatprep.subr.mxu0 0.0
  %2352 = vmatpush1.msra.mxu0 0.0
  %2353 = vmatprep.subr.mxu0 0.0
  %2354 = vmatpush1.msra.mxu0 0.0
  %2355 = vmatprep.subr.mxu0 0.0
  %2356 = vmatpush1.msra.mxu0 0.0
  %2357 = vmatprep.subr.mxu0 0.0
  %2358 = vmatpush1.msra.mxu0 0.0
  %2359 = vmatprep.subr.mxu0 0.0
  %2360 = vmatpush1.msra.mxu0 0.0
  %2361 = vmatprep.subr.mxu0 0.0
  %2362 = vmatpush1.msra.mxu0 0.0
  %2363 = vmatprep.subr.mxu0 0.0
  %2364 = vmatpush1.msra.mxu0 0.0
  %2365 = vmatprep.subr.mxu0 0.0
  %2366 = vmatpush1.msra.mxu0 0.0
  %2367 = vmatprep.subr.mxu0 0.0
  %2368 = vmatpush1.msra.mxu0 0.0
  %2369 = vmatprep.subr.mxu0 0.0
  %2370 = vmatpush1.msra.mxu0 0.0
  %2371 = vmatprep.subr.mxu0 0.0
  %2372 = vmatpush1.msra.mxu0 0.0
  %2373 = vmatprep.subr.mxu0 0.0
  %2374 = vmatpush1.msra.mxu0 0.0
  %2375 = vmatprep.mubr.f32.mxu0 0.0
  %2376 = vmatmul.mubr.f32.gmra.mrb[0].mxu0 %v2309
  %v2377 = vpop.f32.mrb[0].mxu0
  %v2378 = vadd.f32 0.0, %v2377
  %v2379 = vpop.f32.mrb[0].mxu0
  %v2380 = vadd.f32 0.0, %v2379
  %2381 = vdwg.mxu0
  %v2383 = vsel %vm2307, %v2298, 0
  %2385 = vmatprep.subr.mxu0 %v2300
  %2386 = vmatpush1.msra.mxu0 %v2299
  %2387 = vmatprep.subr.mxu0 %v2302
  %2388 = vmatpush1.msra.mxu0 %v2301
  %2389 = vmatprep.subr.mxu0 %v2304
  %2390 = vmatpush1.msra.mxu0 %v2303
  %2391 = vmatprep.subr.mxu0 %v2306
  %2392 = vmatpush1.msra.mxu0 %v2305
  %2393 = vmatprep.subr.mxu0 0.0
  %2394 = vmatpush1.msra.mxu0 0.0
  %2395 = vmatprep.subr.mxu0 0.0
  %2396 = vmatpush1.msra.mxu0 0.0
  %2397 = vmatprep.subr.mxu0 0.0
  %2398 = vmatpush1.msra.mxu0 0.0
  %2399 = vmatprep.subr.mxu0 0.0
  %2400 = vmatpush1.msra.mxu0 0.0
  %2401 = vmatprep.subr.mxu0 0.0
  %2402 = vmatpush1.msra.mxu0 0.0
  %2403 = vmatprep.subr.mxu0 0.0
  %2404 = vmatpush1.msra.mxu0 0.0
  %2405 = vmatprep.subr.mxu0 0.0
  %2406 = vmatpush1.msra.mxu0 0.0
  %2407 = vmatprep.subr.mxu0 0.0
  %2408 = vmatpush1.msra.mxu0 0.0
  %2409 = vmatprep.subr.mxu0 0.0
  %2410 = vmatpush1.msra.mxu0 0.0
  %2411 = vmatprep.subr.mxu0 0.0
  %2412 = vmatpush1.msra.mxu0 0.0
  %2413 = vmatprep.subr.mxu0 0.0
  %2414 = vmatpush1.msra.mxu0 0.0
  %2415 = vmatprep.subr.mxu0 0.0
  %2416 = vmatpush1.msra.mxu0 0.0
  %2417 = vmatprep.subr.mxu0 0.0
  %2418 = vmatpush1.msra.mxu0 0.0
  %2419 = vmatprep.subr.mxu0 0.0
  %2420 = vmatpush1.msra.mxu0 0.0
  %2421 = vmatprep.subr.mxu0 0.0
  %2422 = vmatpush1.msra.mxu0 0.0
  %2423 = vmatprep.subr.mxu0 0.0
  %2424 = vmatpush1.msra.mxu0 0.0
  %2425 = vmatprep.subr.mxu0 0.0
  %2426 = vmatpush1.msra.mxu0 0.0
  %2427 = vmatprep.subr.mxu0 0.0
  %2428 = vmatpush1.msra.mxu0 0.0
  %2429 = vmatprep.subr.mxu0 0.0
  %2430 = vmatpush1.msra.mxu0 0.0
  %2431 = vmatprep.subr.mxu0 0.0
  %2432 = vmatpush1.msra.mxu0 0.0
  %2433 = vmatprep.subr.mxu0 0.0
  %2434 = vmatpush1.msra.mxu0 0.0
  %2435 = vmatprep.subr.mxu0 0.0
  %2436 = vmatpush1.msra.mxu0 0.0
  %2437 = vmatprep.subr.mxu0 0.0
  %2438 = vmatpush1.msra.mxu0 0.0
  %2439 = vmatprep.subr.mxu0 0.0
  %2440 = vmatpush1.msra.mxu0 0.0
  %2441 = vmatprep.subr.mxu0 0.0
  %2442 = vmatpush1.msra.mxu0 0.0
  %2443 = vmatprep.subr.mxu0 0.0
  %2444 = vmatpush1.msra.mxu0 0.0
  %2445 = vmatprep.subr.mxu0 0.0
  %2446 = vmatpush1.msra.mxu0 0.0
  %2447 = vmatprep.subr.mxu0 0.0
  %2448 = vmatpush1.msra.mxu0 0.0
  %2449 = vmatprep.mubr.f32.mxu0 0.0
  %2450 = vmatmul.mubr.f32.gmra.mrb[0].mxu0 %v2383
  %v2451 = vpop.f32.mrb[0].mxu0
  %v2452 = vadd.f32 0.0, %v2451
  %v2453 = vpop.f32.mrb[0].mxu0
  %v2454 = vadd.f32 0.0, %v2453
  %2455 = vdwg.mxu0
  %v2456 = vlaneseq
  %v2457 = vshrl.u32 %v2456, 7
  %v2458 = vsub.s32 0, %v2457
  %v2459 = vrot.slane %v2378, %v2458
  %v2460 = vlaneseq
  %v2461 = vshrl.u32 %v2460, 7
  %v2462 = vsub.s32 0, %v2461
  %v2463 = vrot.slane %v2380, %v2462
  %v2464 = vmul.f32 %v2082, %v2459
  %v2465 = vmul.f32 %v2083, %v2463
  %v2466 = vmul.f32 %v2084, %v2459
  %v2467 = vmul.f32 %v2085, %v2463
  %v2468 = vlaneseq
  %v2469 = vshrl.u32 %v2468, 7
  %v2470 = vsub.s32 0, %v2469
  %v2471 = vrot.slane %v2452, %v2470
  %v2472 = vlaneseq
  %v2473 = vshrl.u32 %v2472, 7
  %v2474 = vsub.s32 0, %v2473
  %v2475 = vrot.slane %v2454, %v2474
  %v2476 = vadd.f32 %v2464, %v2471
  %v2477 = vadd.f32 %v2465, %v2475
  %v2478 = vadd.f32 %v2466, %v2471
  %v2479 = vadd.f32 %v2467, %v2475
  %v2480 = vmax.f32 %v2476, 0.0
  %v2481 = vmax.f32 %v2477, 0.0
  %v2482 = vmax.f32 %v2478, 0.0
  %v2483 = vmax.f32 %v2479, 0.0
  %v2484 = vpack.c.bf16 %v2482, %v2480
  %v2485 = vpack.c.bf16 %v2483, %v2481
  %v2486 = vld [vmem:[%s9] sm:$0xff]
  %v2487 = vld [vmem:[%s9 + $0x8] sm:$0xff]
  %v2488 = vld [vmem:[%s9 + $0x10] sm:$0xff]
  %v2489 = vld [vmem:[%s9 + $0x18] sm:$0xff]
  %v2490 = vld [vmem:[%s9 + $0x20] sm:$0xff]
  %v2491 = vld [vmem:[%s9 + $0x28] sm:$0xff]
  %v2492 = vld [vmem:[%s9 + $0x30] sm:$0xff]
  %v2493 = vld [vmem:[%s9 + $0x38] sm:$0xff]
  %v2494 = vld [vmem:[%s9 + $0x40] sm:$0xff]
  %v2495 = vld [vmem:[%s9 + $0x48] sm:$0xff]
  %v2496 = vld [vmem:[%s9 + $0x50] sm:$0xff]
  %v2497 = vld [vmem:[%s9 + $0x58] sm:$0xff]
  %v2498 = vld [vmem:[%s9 + $0x60] sm:$0xff]
  %v2499 = vld [vmem:[%s9 + $0x68] sm:$0xff]
  %v2500 = vld [vmem:[%s9 + $0x70] sm:$0xff]
  %v2501 = vld [vmem:[%s9 + $0x78] sm:$0xff]
  %v2502 = vld [vmem:[%s9 + $0x80] sm:$0xff]
  %v2503 = vld [vmem:[%s9 + $0x88] sm:$0xff]
  %v2504 = vld [vmem:[%s9 + $0x90] sm:$0xff]
  %v2505 = vld [vmem:[%s9 + $0x98] sm:$0xff]
  %v2506 = vld [vmem:[%s9 + $0xa0] sm:$0xff]
  %v2507 = vld [vmem:[%s9 + $0xa8] sm:$0xff]
  %v2508 = vld [vmem:[%s9 + $0xb0] sm:$0xff]
  %v2509 = vld [vmem:[%s9 + $0xb8] sm:$0xff]
  %v2510 = vld [vmem:[%s9 + $0xc0] sm:$0xff]
  %v2511 = vld [vmem:[%s9 + $0xc8] sm:$0xff]
  %v2512 = vld [vmem:[%s9 + $0xd0] sm:$0xff]
  %v2513 = vld [vmem:[%s9 + $0xd8] sm:$0xff]
  %v2514 = vld [vmem:[%s9 + $0xe0] sm:$0xff]
  %v2515 = vld [vmem:[%s9 + $0xe8] sm:$0xff]
  %v2516 = vld [vmem:[%s9 + $0xf0] sm:$0xff]
  %v2517 = vld [vmem:[%s9 + $0xf8] sm:$0xff]
  %v2518 = vld [vmem:[%s9 + $0x100] sm:$0xff]
  %v2519 = vld [vmem:[%s9 + $0x108] sm:$0xff]
  %v2520 = vld [vmem:[%s9 + $0x110] sm:$0xff]
  %v2521 = vld [vmem:[%s9 + $0x118] sm:$0xff]
  %v2522 = vld [vmem:[%s9 + $0x120] sm:$0xff]
  %v2523 = vld [vmem:[%s9 + $0x128] sm:$0xff]
  %v2524 = vld [vmem:[%s9 + $0x130] sm:$0xff]
  %v2525 = vld [vmem:[%s9 + $0x138] sm:$0xff]
  %v2526 = vld [vmem:[%s9 + $0x140] sm:$0xff]
  %v2527 = vld [vmem:[%s9 + $0x148] sm:$0xff]
  %v2528 = vld [vmem:[%s9 + $0x150] sm:$0xff]
  %v2529 = vld [vmem:[%s9 + $0x158] sm:$0xff]
  %v2530 = vld [vmem:[%s9 + $0x160] sm:$0xff]
  %v2531 = vld [vmem:[%s9 + $0x168] sm:$0xff]
  %v2532 = vld [vmem:[%s9 + $0x170] sm:$0xff]
  %v2533 = vld [vmem:[%s9 + $0x178] sm:$0xff]
  %v2534 = vld [vmem:[%s9 + $0x180] sm:$0xff]
  %v2535 = vld [vmem:[%s9 + $0x188] sm:$0xff]
  %v2536 = vld [vmem:[%s9 + $0x190] sm:$0xff]
  %v2537 = vld [vmem:[%s9 + $0x198] sm:$0xff]
  %v2538 = vld [vmem:[%s9 + $0x1a0] sm:$0xff]
  %v2539 = vld [vmem:[%s9 + $0x1a8] sm:$0xff]
  %v2540 = vld [vmem:[%s9 + $0x1b0] sm:$0xff]
  %v2541 = vld [vmem:[%s9 + $0x1b8] sm:$0xff]
  %v2542 = vld [vmem:[%s9 + $0x1c0] sm:$0xff]
  %v2543 = vld [vmem:[%s9 + $0x1c8] sm:$0xff]
  %v2544 = vld [vmem:[%s9 + $0x1d0] sm:$0xff]
  %v2545 = vld [vmem:[%s9 + $0x1d8] sm:$0xff]
  %v2546 = vld [vmem:[%s9 + $0x1e0] sm:$0xff]
  %v2547 = vld [vmem:[%s9 + $0x1e8] sm:$0xff]
  %v2548 = vld [vmem:[%s9 + $0x1f0] sm:$0xff]
  %v2549 = vld [vmem:[%s9 + $0x1f8] sm:$0xff]
  %v2550 = vld [vmem:[%s9 + $0x200] sm:$0xff]
  %v2551 = vld [vmem:[%s9 + $0x208] sm:$0xff]
  %v2552 = vld [vmem:[%s9 + $0x210] sm:$0xff]
  %v2553 = vld [vmem:[%s9 + $0x218] sm:$0xff]
  %v2554 = vld [vmem:[%s9 + $0x220] sm:$0xff]
  %v2555 = vld [vmem:[%s9 + $0x228] sm:$0xff]
  %v2556 = vld [vmem:[%s9 + $0x230] sm:$0xff]
  %v2557 = vld [vmem:[%s9 + $0x238] sm:$0xff]
  %v2558 = vld [vmem:[%s9 + $0x240] sm:$0xff]
  %v2559 = vld [vmem:[%s9 + $0x248] sm:$0xff]
  %v2560 = vld [vmem:[%s9 + $0x250] sm:$0xff]
  %v2561 = vld [vmem:[%s9 + $0x258] sm:$0xff]
  %v2562 = vld [vmem:[%s9 + $0x260] sm:$0xff]
  %v2563 = vld [vmem:[%s9 + $0x268] sm:$0xff]
  %v2564 = vld [vmem:[%s9 + $0x270] sm:$0xff]
  %v2565 = vld [vmem:[%s9 + $0x278] sm:$0xff]
  %v2566 = vld [vmem:[%s9 + $0x280] sm:$0xff]
  %v2567 = vld [vmem:[%s9 + $0x288] sm:$0xff]
  %v2568 = vld [vmem:[%s9 + $0x290] sm:$0xff]
  %v2569 = vld [vmem:[%s9 + $0x298] sm:$0xff]
  %v2570 = vld [vmem:[%s9 + $0x2a0] sm:$0xff]
  %v2571 = vld [vmem:[%s9 + $0x2a8] sm:$0xff]
  %v2572 = vld [vmem:[%s9 + $0x2b0] sm:$0xff]
  %v2573 = vld [vmem:[%s9 + $0x2b8] sm:$0xff]
  %v2574 = vld [vmem:[%s9 + $0x2c0] sm:$0xff]
  %v2575 = vld [vmem:[%s9 + $0x2c8] sm:$0xff]
  %v2576 = vld [vmem:[%s9 + $0x2d0] sm:$0xff]
  %v2577 = vld [vmem:[%s9 + $0x2d8] sm:$0xff]
  %v2578 = vld [vmem:[%s9 + $0x2e0] sm:$0xff]
  %v2579 = vld [vmem:[%s9 + $0x2e8] sm:$0xff]
  %v2580 = vld [vmem:[%s9 + $0x2f0] sm:$0xff]
  %v2581 = vld [vmem:[%s9 + $0x2f8] sm:$0xff]
  %v2582 = vld [vmem:[%s9 + $0x300] sm:$0xff]
  %v2583 = vld [vmem:[%s9 + $0x308] sm:$0xff]
  %v2584 = vld [vmem:[%s9 + $0x310] sm:$0xff]
  %v2585 = vld [vmem:[%s9 + $0x318] sm:$0xff]
  %v2586 = vld [vmem:[%s9 + $0x320] sm:$0xff]
  %v2587 = vld [vmem:[%s9 + $0x328] sm:$0xff]
  %v2588 = vld [vmem:[%s9 + $0x330] sm:$0xff]
  %v2589 = vld [vmem:[%s9 + $0x338] sm:$0xff]
  %v2590 = vld [vmem:[%s9 + $0x340] sm:$0xff]
  %v2591 = vld [vmem:[%s9 + $0x348] sm:$0xff]
  %v2592 = vld [vmem:[%s9 + $0x350] sm:$0xff]
  %v2593 = vld [vmem:[%s9 + $0x358] sm:$0xff]
  %v2594 = vld [vmem:[%s9 + $0x360] sm:$0xff]
  %v2595 = vld [vmem:[%s9 + $0x368] sm:$0xff]
  %v2596 = vld [vmem:[%s9 + $0x370] sm:$0xff]
  %v2597 = vld [vmem:[%s9 + $0x378] sm:$0xff]
  %v2598 = vld [vmem:[%s9 + $0x380] sm:$0xff]
  %v2599 = vld [vmem:[%s9 + $0x388] sm:$0xff]
  %v2600 = vld [vmem:[%s9 + $0x390] sm:$0xff]
  %v2601 = vld [vmem:[%s9 + $0x398] sm:$0xff]
  %v2602 = vld [vmem:[%s9 + $0x3a0] sm:$0xff]
  %v2603 = vld [vmem:[%s9 + $0x3a8] sm:$0xff]
  %v2604 = vld [vmem:[%s9 + $0x3b0] sm:$0xff]
  %v2605 = vld [vmem:[%s9 + $0x3b8] sm:$0xff]
  %v2606 = vld [vmem:[%s9 + $0x3c0] sm:$0xff]
  %v2607 = vld [vmem:[%s9 + $0x3c8] sm:$0xff]
  %v2608 = vld [vmem:[%s9 + $0x3d0] sm:$0xff]
  %v2609 = vld [vmem:[%s9 + $0x3d8] sm:$0xff]
  %v2610 = vld [vmem:[%s9 + $0x3e0] sm:$0xff]
  %v2611 = vld [vmem:[%s9 + $0x3e8] sm:$0xff]
  %v2612 = vld [vmem:[%s9 + $0x3f0] sm:$0xff]
  %v2613 = vld [vmem:[%s9 + $0x3f8] sm:$0xff]
  %v2742 = vunpack.c.l.b16 %v2486
  %v2743 = vunpack.c.h.b16 %v2486
  %v2744 = vunpack.c.l.b16 %v2487
  %v2745 = vunpack.c.h.b16 %v2487
  %v2746 = vunpack.c.l.b16 %v2488
  %v2747 = vunpack.c.h.b16 %v2488
  %v2748 = vunpack.c.l.b16 %v2489
  %v2749 = vunpack.c.h.b16 %v2489
  %v2750 = vunpack.c.l.b16 %v2490
  %v2751 = vunpack.c.h.b16 %v2490
  %v2752 = vunpack.c.l.b16 %v2491
  %v2753 = vunpack.c.h.b16 %v2491
  %v2754 = vunpack.c.l.b16 %v2492
  %v2755 = vunpack.c.h.b16 %v2492
  %v2756 = vunpack.c.l.b16 %v2493
  %v2757 = vunpack.c.h.b16 %v2493
  %v2758 = vunpack.c.l.b16 %v2494
  %v2759 = vunpack.c.h.b16 %v2494
  %v2760 = vunpack.c.l.b16 %v2495
  %v2761 = vunpack.c.h.b16 %v2495
  %v2762 = vunpack.c.l.b16 %v2496
  %v2763 = vunpack.c.h.b16 %v2496
  %v2764 = vunpack.c.l.b16 %v2497
  %v2765 = vunpack.c.h.b16 %v2497
  %v2766 = vunpack.c.l.b16 %v2498
  %v2767 = vunpack.c.h.b16 %v2498
  %v2768 = vunpack.c.l.b16 %v2499
  %v2769 = vunpack.c.h.b16 %v2499
  %v2770 = vunpack.c.l.b16 %v2500
  %v2771 = vunpack.c.h.b16 %v2500
  %v2772 = vunpack.c.l.b16 %v2501
  %v2773 = vunpack.c.h.b16 %v2501
  %v2774 = vunpack.c.l.b16 %v2502
  %v2775 = vunpack.c.h.b16 %v2502
  %v2776 = vunpack.c.l.b16 %v2503
  %v2777 = vunpack.c.h.b16 %v2503
  %v2778 = vunpack.c.l.b16 %v2504
  %v2779 = vunpack.c.h.b16 %v2504
  %v2780 = vunpack.c.l.b16 %v2505
  %v2781 = vunpack.c.h.b16 %v2505
  %v2782 = vunpack.c.l.b16 %v2506
  %v2783 = vunpack.c.h.b16 %v2506
  %v2784 = vunpack.c.l.b16 %v2507
  %v2785 = vunpack.c.h.b16 %v2507
  %v2786 = vunpack.c.l.b16 %v2508
  %v2787 = vunpack.c.h.b16 %v2508
  %v2788 = vunpack.c.l.b16 %v2509
  %v2789 = vunpack.c.h.b16 %v2509
  %v2790 = vunpack.c.l.b16 %v2510
  %v2791 = vunpack.c.h.b16 %v2510
  %v2792 = vunpack.c.l.b16 %v2511
  %v2793 = vunpack.c.h.b16 %v2511
  %v2794 = vunpack.c.l.b16 %v2512
  %v2795 = vunpack.c.h.b16 %v2512
  %v2796 = vunpack.c.l.b16 %v2513
  %v2797 = vunpack.c.h.b16 %v2513
  %v2798 = vunpack.c.l.b16 %v2514
  %v2799 = vunpack.c.h.b16 %v2514
  %v2800 = vunpack.c.l.b16 %v2515
  %v2801 = vunpack.c.h.b16 %v2515
  %v2802 = vunpack.c.l.b16 %v2516
  %v2803 = vunpack.c.h.b16 %v2516
  %v2804 = vunpack.c.l.b16 %v2517
  %v2805 = vunpack.c.h.b16 %v2517
  %v2806 = vunpack.c.l.b16 %v2518
  %v2807 = vunpack.c.h.b16 %v2518
  %v2808 = vunpack.c.l.b16 %v2519
  %v2809 = vunpack.c.h.b16 %v2519
  %v2810 = vunpack.c.l.b16 %v2520
  %v2811 = vunpack.c.h.b16 %v2520
  %v2812 = vunpack.c.l.b16 %v2521
  %v2813 = vunpack.c.h.b16 %v2521
  %v2814 = vunpack.c.l.b16 %v2522
  %v2815 = vunpack.c.h.b16 %v2522
  %v2816 = vunpack.c.l.b16 %v2523
  %v2817 = vunpack.c.h.b16 %v2523
  %v2818 = vunpack.c.l.b16 %v2524
  %v2819 = vunpack.c.h.b16 %v2524
  %v2820 = vunpack.c.l.b16 %v2525
  %v2821 = vunpack.c.h.b16 %v2525
  %v2822 = vunpack.c.l.b16 %v2526
  %v2823 = vunpack.c.h.b16 %v2526
  %v2824 = vunpack.c.l.b16 %v2527
  %v2825 = vunpack.c.h.b16 %v2527
  %v2826 = vunpack.c.l.b16 %v2528
  %v2827 = vunpack.c.h.b16 %v2528
  %v2828 = vunpack.c.l.b16 %v2529
  %v2829 = vunpack.c.h.b16 %v2529
  %v2830 = vunpack.c.l.b16 %v2530
  %v2831 = vunpack.c.h.b16 %v2530
  %v2832 = vunpack.c.l.b16 %v2531
  %v2833 = vunpack.c.h.b16 %v2531
  %v2834 = vunpack.c.l.b16 %v2532
  %v2835 = vunpack.c.h.b16 %v2532
  %v2836 = vunpack.c.l.b16 %v2533
  %v2837 = vunpack.c.h.b16 %v2533
  %v2838 = vunpack.c.l.b16 %v2534
  %v2839 = vunpack.c.h.b16 %v2534
  %v2840 = vunpack.c.l.b16 %v2535
  %v2841 = vunpack.c.h.b16 %v2535
  %v2842 = vunpack.c.l.b16 %v2536
  %v2843 = vunpack.c.h.b16 %v2536
  %v2844 = vunpack.c.l.b16 %v2537
  %v2845 = vunpack.c.h.b16 %v2537
  %v2846 = vunpack.c.l.b16 %v2538
  %v2847 = vunpack.c.h.b16 %v2538
  %v2848 = vunpack.c.l.b16 %v2539
  %v2849 = vunpack.c.h.b16 %v2539
  %v2850 = vunpack.c.l.b16 %v2540
  %v2851 = vunpack.c.h.b16 %v2540
  %v2852 = vunpack.c.l.b16 %v2541
  %v2853 = vunpack.c.h.b16 %v2541
  %v2854 = vunpack.c.l.b16 %v2542
  %v2855 = vunpack.c.h.b16 %v2542
  %v2856 = vunpack.c.l.b16 %v2543
  %v2857 = vunpack.c.h.b16 %v2543
  %v2858 = vunpack.c.l.b16 %v2544
  %v2859 = vunpack.c.h.b16 %v2544
  %v2860 = vunpack.c.l.b16 %v2545
  %v2861 = vunpack.c.h.b16 %v2545
  %v2862 = vunpack.c.l.b16 %v2546
  %v2863 = vunpack.c.h.b16 %v2546
  %v2864 = vunpack.c.l.b16 %v2547
  %v2865 = vunpack.c.h.b16 %v2547
  %v2866 = vunpack.c.l.b16 %v2548
  %v2867 = vunpack.c.h.b16 %v2548
  %v2868 = vunpack.c.l.b16 %v2549
  %v2869 = vunpack.c.h.b16 %v2549
  %v2870 = vunpack.c.l.b16 %v2550
  %v2871 = vunpack.c.h.b16 %v2550
  %v2872 = vunpack.c.l.b16 %v2551
  %v2873 = vunpack.c.h.b16 %v2551
  %v2874 = vunpack.c.l.b16 %v2552
  %v2875 = vunpack.c.h.b16 %v2552
  %v2876 = vunpack.c.l.b16 %v2553
  %v2877 = vunpack.c.h.b16 %v2553
  %v2878 = vunpack.c.l.b16 %v2554
  %v2879 = vunpack.c.h.b16 %v2554
  %v2880 = vunpack.c.l.b16 %v2555
  %v2881 = vunpack.c.h.b16 %v2555
  %v2882 = vunpack.c.l.b16 %v2556
  %v2883 = vunpack.c.h.b16 %v2556
  %v2884 = vunpack.c.l.b16 %v2557
  %v2885 = vunpack.c.h.b16 %v2557
  %v2886 = vunpack.c.l.b16 %v2558
  %v2887 = vunpack.c.h.b16 %v2558
  %v2888 = vunpack.c.l.b16 %v2559
  %v2889 = vunpack.c.h.b16 %v2559
  %v2890 = vunpack.c.l.b16 %v2560
  %v2891 = vunpack.c.h.b16 %v2560
  %v2892 = vunpack.c.l.b16 %v2561
  %v2893 = vunpack.c.h.b16 %v2561
  %v2894 = vunpack.c.l.b16 %v2562
  %v2895 = vunpack.c.h.b16 %v2562
  %v2896 = vunpack.c.l.b16 %v2563
  %v2897 = vunpack.c.h.b16 %v2563
  %v2898 = vunpack.c.l.b16 %v2564
  %v2899 = vunpack.c.h.b16 %v2564
  %v2900 = vunpack.c.l.b16 %v2565
  %v2901 = vunpack.c.h.b16 %v2565
  %v2902 = vunpack.c.l.b16 %v2566
  %v2903 = vunpack.c.h.b16 %v2566
  %v2904 = vunpack.c.l.b16 %v2567
  %v2905 = vunpack.c.h.b16 %v2567
  %v2906 = vunpack.c.l.b16 %v2568
  %v2907 = vunpack.c.h.b16 %v2568
  %v2908 = vunpack.c.l.b16 %v2569
  %v2909 = vunpack.c.h.b16 %v2569
  %v2910 = vunpack.c.l.b16 %v2570
  %v2911 = vunpack.c.h.b16 %v2570
  %v2912 = vunpack.c.l.b16 %v2571
  %v2913 = vunpack.c.h.b16 %v2571
  %v2914 = vunpack.c.l.b16 %v2572
  %v2915 = vunpack.c.h.b16 %v2572
  %v2916 = vunpack.c.l.b16 %v2573
  %v2917 = vunpack.c.h.b16 %v2573
  %v2918 = vunpack.c.l.b16 %v2574
  %v2919 = vunpack.c.h.b16 %v2574
  %v2920 = vunpack.c.l.b16 %v2575
  %v2921 = vunpack.c.h.b16 %v2575
  %v2922 = vunpack.c.l.b16 %v2576
  %v2923 = vunpack.c.h.b16 %v2576
  %v2924 = vunpack.c.l.b16 %v2577
  %v2925 = vunpack.c.h.b16 %v2577
  %v2926 = vunpack.c.l.b16 %v2578
  %v2927 = vunpack.c.h.b16 %v2578
  %v2928 = vunpack.c.l.b16 %v2579
  %v2929 = vunpack.c.h.b16 %v2579
  %v2930 = vunpack.c.l.b16 %v2580
  %v2931 = vunpack.c.h.b16 %v2580
  %v2932 = vunpack.c.l.b16 %v2581
  %v2933 = vunpack.c.h.b16 %v2581
  %v2934 = vunpack.c.l.b16 %v2582
  %v2935 = vunpack.c.h.b16 %v2582
  %v2936 = vunpack.c.l.b16 %v2583
  %v2937 = vunpack.c.h.b16 %v2583
  %v2938 = vunpack.c.l.b16 %v2584
  %v2939 = vunpack.c.h.b16 %v2584
  %v2940 = vunpack.c.l.b16 %v2585
  %v2941 = vunpack.c.h.b16 %v2585
  %v2942 = vunpack.c.l.b16 %v2586
  %v2943 = vunpack.c.h.b16 %v2586
  %v2944 = vunpack.c.l.b16 %v2587
  %v2945 = vunpack.c.h.b16 %v2587
  %v2946 = vunpack.c.l.b16 %v2588
  %v2947 = vunpack.c.h.b16 %v2588
  %v2948 = vunpack.c.l.b16 %v2589
  %v2949 = vunpack.c.h.b16 %v2589
  %v2950 = vunpack.c.l.b16 %v2590
  %v2951 = vunpack.c.h.b16 %v2590
  %v2952 = vunpack.c.l.b16 %v2591
  %v2953 = vunpack.c.h.b16 %v2591
  %v2954 = vunpack.c.l.b16 %v2592
  %v2955 = vunpack.c.h.b16 %v2592
  %v2956 = vunpack.c.l.b16 %v2593
  %v2957 = vunpack.c.h.b16 %v2593
  %v2958 = vunpack.c.l.b16 %v2594
  %v2959 = vunpack.c.h.b16 %v2594
  %v2960 = vunpack.c.l.b16 %v2595
  %v2961 = vunpack.c.h.b16 %v2595
  %v2962 = vunpack.c.l.b16 %v2596
  %v2963 = vunpack.c.h.b16 %v2596
  %v2964 = vunpack.c.l.b16 %v2597
  %v2965 = vunpack.c.h.b16 %v2597
  %v2966 = vunpack.c.l.b16 %v2598
  %v2967 = vunpack.c.h.b16 %v2598
  %v2968 = vunpack.c.l.b16 %v2599
  %v2969 = vunpack.c.h.b16 %v2599
  %v2970 = vunpack.c.l.b16 %v2600
  %v2971 = vunpack.c.h.b16 %v2600
  %v2972 = vunpack.c.l.b16 %v2601
  %v2973 = vunpack.c.h.b16 %v2601
  %v2974 = vunpack.c.l.b16 %v2602
  %v2975 = vunpack.c.h.b16 %v2602
  %v2976 = vunpack.c.l.b16 %v2603
  %v2977 = vunpack.c.h.b16 %v2603
  %v2978 = vunpack.c.l.b16 %v2604
  %v2979 = vunpack.c.h.b16 %v2604
  %v2980 = vunpack.c.l.b16 %v2605
  %v2981 = vunpack.c.h.b16 %v2605
  %v2982 = vunpack.c.l.b16 %v2606
  %v2983 = vunpack.c.h.b16 %v2606
  %v2984 = vunpack.c.l.b16 %v2607
  %v2985 = vunpack.c.h.b16 %v2607
  %v2986 = vunpack.c.l.b16 %v2608
  %v2987 = vunpack.c.h.b16 %v2608
  %v2988 = vunpack.c.l.b16 %v2609
  %v2989 = vunpack.c.h.b16 %v2609
  %v2990 = vunpack.c.l.b16 %v2610
  %v2991 = vunpack.c.h.b16 %v2610
  %v2992 = vunpack.c.l.b16 %v2611
  %v2993 = vunpack.c.h.b16 %v2611
  %v2994 = vunpack.c.l.b16 %v2612
  %v2995 = vunpack.c.h.b16 %v2612
  %v2996 = vunpack.c.l.b16 %v2613
  %v2997 = vunpack.c.h.b16 %v2613
  %v2998 = vpack.c.b16 %v2750, %v2742
  %v2999 = vpack.c.b16 %v2751, %v2743
  %v3000 = vpack.c.b16 %v2752, %v2744
  %v3001 = vpack.c.b16 %v2753, %v2745
  %v3002 = vpack.c.b16 %v2754, %v2746
  %v3003 = vpack.c.b16 %v2755, %v2747
  %v3004 = vpack.c.b16 %v2756, %v2748
  %v3005 = vpack.c.b16 %v2757, %v2749
  %v3006 = vpack.c.b16 %v2766, %v2758
  %v3007 = vpack.c.b16 %v2767, %v2759
  %v3008 = vpack.c.b16 %v2768, %v2760
  %v3009 = vpack.c.b16 %v2769, %v2761
  %v3010 = vpack.c.b16 %v2770, %v2762
  %v3011 = vpack.c.b16 %v2771, %v2763
  %v3012 = vpack.c.b16 %v2772, %v2764
  %v3013 = vpack.c.b16 %v2773, %v2765
  %v3014 = vpack.c.b16 %v2782, %v2774
  %v3015 = vpack.c.b16 %v2783, %v2775
  %v3016 = vpack.c.b16 %v2784, %v2776
  %v3017 = vpack.c.b16 %v2785, %v2777
  %v3018 = vpack.c.b16 %v2786, %v2778
  %v3019 = vpack.c.b16 %v2787, %v2779
  %v3020 = vpack.c.b16 %v2788, %v2780
  %v3021 = vpack.c.b16 %v2789, %v2781
  %v3022 = vpack.c.b16 %v2798, %v2790
  %v3023 = vpack.c.b16 %v2799, %v2791
  %v3024 = vpack.c.b16 %v2800, %v2792
  %v3025 = vpack.c.b16 %v2801, %v2793
  %v3026 = vpack.c.b16 %v2802, %v2794
  %v3027 = vpack.c.b16 %v2803, %v2795
  %v3028 = vpack.c.b16 %v2804, %v2796
  %v3029 = vpack.c.b16 %v2805, %v2797
  %v3030 = vpack.c.b16 %v2814, %v2806
  %v3031 = vpack.c.b16 %v2815, %v2807
  %v3032 = vpack.c.b16 %v2816, %v2808
  %v3033 = vpack.c.b16 %v2817, %v2809
  %v3034 = vpack.c.b16 %v2818, %v2810
  %v3035 = vpack.c.b16 %v2819, %v2811
  %v3036 = vpack.c.b16 %v2820, %v2812
  %v3037 = vpack.c.b16 %v2821, %v2813
  %v3038 = vpack.c.b16 %v2830, %v2822
  %v3039 = vpack.c.b16 %v2831, %v2823
  %v3040 = vpack.c.b16 %v2832, %v2824
  %v3041 = vpack.c.b16 %v2833, %v2825
  %v3042 = vpack.c.b16 %v2834, %v2826
  %v3043 = vpack.c.b16 %v2835, %v2827
  %v3044 = vpack.c.b16 %v2836, %v2828
  %v3045 = vpack.c.b16 %v2837, %v2829
  %v3046 = vpack.c.b16 %v2846, %v2838
  %v3047 = vpack.c.b16 %v2847, %v2839
  %v3048 = vpack.c.b16 %v2848, %v2840
  %v3049 = vpack.c.b16 %v2849, %v2841
  %v3050 = vpack.c.b16 %v2850, %v2842
  %v3051 = vpack.c.b16 %v2851, %v2843
  %v3052 = vpack.c.b16 %v2852, %v2844
  %v3053 = vpack.c.b16 %v2853, %v2845
  %v3054 = vpack.c.b16 %v2862, %v2854
  %v3055 = vpack.c.b16 %v2863, %v2855
  %v3056 = vpack.c.b16 %v2864, %v2856
  %v3057 = vpack.c.b16 %v2865, %v2857
  %v3058 = vpack.c.b16 %v2866, %v2858
  %v3059 = vpack.c.b16 %v2867, %v2859
  %v3060 = vpack.c.b16 %v2868, %v2860
  %v3061 = vpack.c.b16 %v2869, %v2861
  %v3062 = vpack.c.b16 %v2878, %v2870
  %v3063 = vpack.c.b16 %v2879, %v2871
  %v3064 = vpack.c.b16 %v2880, %v2872
  %v3065 = vpack.c.b16 %v2881, %v2873
  %v3066 = vpack.c.b16 %v2882, %v2874
  %v3067 = vpack.c.b16 %v2883, %v2875
  %v3068 = vpack.c.b16 %v2884, %v2876
  %v3069 = vpack.c.b16 %v2885, %v2877
  %v3070 = vpack.c.b16 %v2894, %v2886
  %v3071 = vpack.c.b16 %v2895, %v2887
  %v3072 = vpack.c.b16 %v2896, %v2888
  %v3073 = vpack.c.b16 %v2897, %v2889
  %v3074 = vpack.c.b16 %v2898, %v2890
  %v3075 = vpack.c.b16 %v2899, %v2891
  %v3076 = vpack.c.b16 %v2900, %v2892
  %v3077 = vpack.c.b16 %v2901, %v2893
  %v3078 = vpack.c.b16 %v2910, %v2902
  %v3079 = vpack.c.b16 %v2911, %v2903
  %v3080 = vpack.c.b16 %v2912, %v2904
  %v3081 = vpack.c.b16 %v2913, %v2905
  %v3082 = vpack.c.b16 %v2914, %v2906
  %v3083 = vpack.c.b16 %v2915, %v2907
  %v3084 = vpack.c.b16 %v2916, %v2908
  %v3085 = vpack.c.b16 %v2917, %v2909
  %v3086 = vpack.c.b16 %v2926, %v2918
  %v3087 = vpack.c.b16 %v2927, %v2919
  %v3088 = vpack.c.b16 %v2928, %v2920
  %v3089 = vpack.c.b16 %v2929, %v2921
  %v3090 = vpack.c.b16 %v2930, %v2922
  %v3091 = vpack.c.b16 %v2931, %v2923
  %v3092 = vpack.c.b16 %v2932, %v2924
  %v3093 = vpack.c.b16 %v2933, %v2925
  %v3094 = vpack.c.b16 %v2942, %v2934
  %v3095 = vpack.c.b16 %v2943, %v2935
  %v3096 = vpack.c.b16 %v2944, %v2936
  %v3097 = vpack.c.b16 %v2945, %v2937
  %v3098 = vpack.c.b16 %v2946, %v2938
  %v3099 = vpack.c.b16 %v2947, %v2939
  %v3100 = vpack.c.b16 %v2948, %v2940
  %v3101 = vpack.c.b16 %v2949, %v2941
  %v3102 = vpack.c.b16 %v2958, %v2950
  %v3103 = vpack.c.b16 %v2959, %v2951
  %v3104 = vpack.c.b16 %v2960, %v2952
  %v3105 = vpack.c.b16 %v2961, %v2953
  %v3106 = vpack.c.b16 %v2962, %v2954
  %v3107 = vpack.c.b16 %v2963, %v2955
  %v3108 = vpack.c.b16 %v2964, %v2956
  %v3109 = vpack.c.b16 %v2965, %v2957
  %v3110 = vpack.c.b16 %v2974, %v2966
  %v3111 = vpack.c.b16 %v2975, %v2967
  %v3112 = vpack.c.b16 %v2976, %v2968
  %v3113 = vpack.c.b16 %v2977, %v2969
  %v3114 = vpack.c.b16 %v2978, %v2970
  %v3115 = vpack.c.b16 %v2979, %v2971
  %v3116 = vpack.c.b16 %v2980, %v2972
  %v3117 = vpack.c.b16 %v2981, %v2973
  %v3118 = vpack.c.b16 %v2990, %v2982
  %v3119 = vpack.c.b16 %v2991, %v2983
  %v3120 = vpack.c.b16 %v2992, %v2984
  %v3121 = vpack.c.b16 %v2993, %v2985
  %v3122 = vpack.c.b16 %v2994, %v2986
  %v3123 = vpack.c.b16 %v2995, %v2987
  %v3124 = vpack.c.b16 %v2996, %v2988
  %v3125 = vpack.c.b16 %v2997, %v2989
  %3254 = vmatprep.subr.bf16.mxu0 %v2999
  %3255 = vmatpush1.bf16.msra.mxu0 %v2998
  %3256 = vmatprep.subr.bf16.mxu0 %v3007
  %3257 = vmatpush1.bf16.msra.mxu0 %v3006
  %3258 = vmatprep.subr.bf16.mxu0 %v3015
  %3259 = vmatpush1.bf16.msra.mxu0 %v3014
  %3260 = vmatprep.subr.bf16.mxu0 %v3023
  %3261 = vmatpush1.bf16.msra.mxu0 %v3022
  %3262 = vmatprep.subr.bf16.mxu0 %v3031
  %3263 = vmatpush1.bf16.msra.mxu0 %v3030
  %3264 = vmatprep.subr.bf16.mxu0 %v3039
  %3265 = vmatpush1.bf16.msra.mxu0 %v3038
  %3266 = vmatprep.subr.bf16.mxu0 %v3047
  %3267 = vmatpush1.bf16.msra.mxu0 %v3046
  %3268 = vmatprep.subr.bf16.mxu0 %v3055
  %3269 = vmatpush1.bf16.msra.mxu0 %v3054
  %3270 = vmatprep.subr.bf16.mxu0 %v3063
  %3271 = vmatpush1.bf16.msra.mxu0 %v3062
  %3272 = vmatprep.subr.bf16.mxu0 %v3071
  %3273 = vmatpush1.bf16.msra.mxu0 %v3070
  %3274 = vmatprep.subr.bf16.mxu0 %v3079
  %3275 = vmatpush1.bf16.msra.mxu0 %v3078
  %3276 = vmatprep.subr.bf16.mxu0 %v3087
  %3277 = vmatpush1.bf16.msra.mxu0 %v3086
  %3278 = vmatprep.subr.bf16.mxu0 %v3095
  %3279 = vmatpush1.bf16.msra.mxu0 %v3094
  %3280 = vmatprep.subr.bf16.mxu0 %v3103
  %3281 = vmatpush1.bf16.msra.mxu0 %v3102
  %3282 = vmatprep.subr.bf16.mxu0 %v3111
  %3283 = vmatpush1.bf16.msra.mxu0 %v3110
  %3284 = vmatprep.subr.bf16.mxu0 %v3119
  %3285 = vmatpush1.bf16.msra.mxu0 %v3118
  %3286 = vmatprep.mubr.bf16.mxu0 %v2485
  %3287 = vmatmul.mubr.bf16.gmra.mrb[0].mxu0 %v2484
  %v3288 = vpop.f32.mrb[0].mxu0
  %v3289 = vadd.f32 0.0, %v3288
  %v3290 = vpop.f32.mrb[0].mxu0
  %v3291 = vadd.f32 0.0, %v3290
  %v3292 = vpop.f32.mrb[0].mxu0
  %v3293 = vadd.f32 0.0, %v3292
  %v3294 = vpop.f32.mrb[0].mxu0
  %v3295 = vadd.f32 0.0, %v3294
  %3296 = vdwg.mxu0
  %3297 = vmatprep.subr.bf16.mxu0 %v3001
  %3298 = vmatpush1.bf16.msra.mxu0 %v3000
  %3299 = vmatprep.subr.bf16.mxu0 %v3009
  %3300 = vmatpush1.bf16.msra.mxu0 %v3008
  %3301 = vmatprep.subr.bf16.mxu0 %v3017
  %3302 = vmatpush1.bf16.msra.mxu0 %v3016
  %3303 = vmatprep.subr.bf16.mxu0 %v3025
  %3304 = vmatpush1.bf16.msra.mxu0 %v3024
  %3305 = vmatprep.subr.bf16.mxu0 %v3033
  %3306 = vmatpush1.bf16.msra.mxu0 %v3032
  %3307 = vmatprep.subr.bf16.mxu0 %v3041
  %3308 = vmatpush1.bf16.msra.mxu0 %v3040
  %3309 = vmatprep.subr.bf16.mxu0 %v3049
  %3310 = vmatpush1.bf16.msra.mxu0 %v3048
  %3311 = vmatprep.subr.bf16.mxu0 %v3057
  %3312 = vmatpush1.bf16.msra.mxu0 %v3056
  %3313 = vmatprep.subr.bf16.mxu0 %v3065
  %3314 = vmatpush1.bf16.msra.mxu0 %v3064
  %3315 = vmatprep.subr.bf16.mxu0 %v3073
  %3316 = vmatpush1.bf16.msra.mxu0 %v3072
  %3317 = vmatprep.subr.bf16.mxu0 %v3081
  %3318 = vmatpush1.bf16.msra.mxu0 %v3080
  %3319 = vmatprep.subr.bf16.mxu0 %v3089
  %3320 = vmatpush1.bf16.msra.mxu0 %v3088
  %3321 = vmatprep.subr.bf16.mxu0 %v3097
  %3322 = vmatpush1.bf16.msra.mxu0 %v3096
  %3323 = vmatprep.subr.bf16.mxu0 %v3105
  %3324 = vmatpush1.bf16.msra.mxu0 %v3104
  %3325 = vmatprep.subr.bf16.mxu0 %v3113
  %3326 = vmatpush1.bf16.msra.mxu0 %v3112
  %3327 = vmatprep.subr.bf16.mxu0 %v3121
  %3328 = vmatpush1.bf16.msra.mxu0 %v3120
  %3329 = vmatprep.mubr.bf16.mxu0 %v2485
  %3330 = vmatmul.mubr.bf16.gmra.mrb[0].mxu0 %v2484
  %v3331 = vpop.f32.mrb[0].mxu0
  %v3332 = vadd.f32 0.0, %v3331
  %v3333 = vpop.f32.mrb[0].mxu0
  %v3334 = vadd.f32 0.0, %v3333
  %v3335 = vpop.f32.mrb[0].mxu0
  %v3336 = vadd.f32 0.0, %v3335
  %v3337 = vpop.f32.mrb[0].mxu0
  %v3338 = vadd.f32 0.0, %v3337
  %3339 = vdwg.mxu0
  %3340 = vmatprep.subr.bf16.mxu0 %v3003
  %3341 = vmatpush1.bf16.msra.mxu0 %v3002
  %3342 = vmatprep.subr.bf16.mxu0 %v3011
  %3343 = vmatpush1.bf16.msra.mxu0 %v3010
  %3344 = vmatprep.subr.bf16.mxu0 %v3019
  %3345 = vmatpush1.bf16.msra.mxu0 %v3018
  %3346 = vmatprep.subr.bf16.mxu0 %v3027
  %3347 = vmatpush1.bf16.msra.mxu0 %v3026
  %3348 = vmatprep.subr.bf16.mxu0 %v3035
  %3349 = vmatpush1.bf16.msra.mxu0 %v3034
  %3350 = vmatprep.subr.bf16.mxu0 %v3043
  %3351 = vmatpush1.bf16.msra.mxu0 %v3042
  %3352 = vmatprep.subr.bf16.mxu0 %v3051
  %3353 = vmatpush1.bf16.msra.mxu0 %v3050
  %3354 = vmatprep.subr.bf16.mxu0 %v3059
  %3355 = vmatpush1.bf16.msra.mxu0 %v3058
  %3356 = vmatprep.subr.bf16.mxu0 %v3067
  %3357 = vmatpush1.bf16.msra.mxu0 %v3066
  %3358 = vmatprep.subr.bf16.mxu0 %v3075
  %3359 = vmatpush1.bf16.msra.mxu0 %v3074
  %3360 = vmatprep.subr.bf16.mxu0 %v3083
  %3361 = vmatpush1.bf16.msra.mxu0 %v3082
  %3362 = vmatprep.subr.bf16.mxu0 %v3091
  %3363 = vmatpush1.bf16.msra.mxu0 %v3090
  %3364 = vmatprep.subr.bf16.mxu0 %v3099
  %3365 = vmatpush1.bf16.msra.mxu0 %v3098
  %3366 = vmatprep.subr.bf16.mxu0 %v3107
  %3367 = vmatpush1.bf16.msra.mxu0 %v3106
  %3368 = vmatprep.subr.bf16.mxu0 %v3115
  %3369 = vmatpush1.bf16.msra.mxu0 %v3114
  %3370 = vmatprep.subr.bf16.mxu0 %v3123
  %3371 = vmatpush1.bf16.msra.mxu0 %v3122
  %3372 = vmatprep.mubr.bf16.mxu0 %v2485
  %3373 = vmatmul.mubr.bf16.gmra.mrb[0].mxu0 %v2484
  %v3374 = vpop.f32.mrb[0].mxu0
  %v3375 = vadd.f32 0.0, %v3374
  %v3376 = vpop.f32.mrb[0].mxu0
  %v3377 = vadd.f32 0.0, %v3376
  %v3378 = vpop.f32.mrb[0].mxu0
  %v3379 = vadd.f32 0.0, %v3378
  %v3380 = vpop.f32.mrb[0].mxu0
  %v3381 = vadd.f32 0.0, %v3380
  %3382 = vdwg.mxu0
  %3383 = vmatprep.subr.bf16.mxu0 %v3005
  %3384 = vmatpush1.bf16.msra.mxu0 %v3004
  %3385 = vmatprep.subr.bf16.mxu0 %v3013
  %3386 = vmatpush1.bf16.msra.mxu0 %v3012
  %3387 = vmatprep.subr.bf16.mxu0 %v3021
  %3388 = vmatpush1.bf16.msra.mxu0 %v3020
  %3389 = vmatprep.subr.bf16.mxu0 %v3029
  %3390 = vmatpush1.bf16.msra.mxu0 %v3028
  %3391 = vmatprep.subr.bf16.mxu0 %v3037
  %3392 = vmatpush1.bf16.msra.mxu0 %v3036
  %3393 = vmatprep.subr.bf16.mxu0 %v3045
  %3394 = vmatpush1.bf16.msra.mxu0 %v3044
  %3395 = vmatprep.subr.bf16.mxu0 %v3053
  %3396 = vmatpush1.bf16.msra.mxu0 %v3052
  %3397 = vmatprep.subr.bf16.mxu0 %v3061
  %3398 = vmatpush1.bf16.msra.mxu0 %v3060
  %3399 = vmatprep.subr.bf16.mxu0 %v3069
  %3400 = vmatpush1.bf16.msra.mxu0 %v3068
  %3401 = vmatprep.subr.bf16.mxu0 %v3077
  %3402 = vmatpush1.bf16.msra.mxu0 %v3076
  %3403 = vmatprep.subr.bf16.mxu0 %v3085
  %3404 = vmatpush1.bf16.msra.mxu0 %v3084
  %3405 = vmatprep.subr.bf16.mxu0 %v3093
  %3406 = vmatpush1.bf16.msra.mxu0 %v3092
  %3407 = vmatprep.subr.bf16.mxu0 %v3101
  %3408 = vmatpush1.bf16.msra.mxu0 %v3100
  %3409 = vmatprep.subr.bf16.mxu0 %v3109
  %3410 = vmatpush1.bf16.msra.mxu0 %v3108
  %3411 = vmatprep.subr.bf16.mxu0 %v3117
  %3412 = vmatpush1.bf16.msra.mxu0 %v3116
  %3413 = vmatprep.subr.bf16.mxu0 %v3125
  %3414 = vmatpush1.bf16.msra.mxu0 %v3124
  %3415 = vmatprep.mubr.bf16.mxu0 %v2485
  %3416 = vmatmul.mubr.bf16.gmra.mrb[0].mxu0 %v2484
  %v3417 = vpop.f32.mrb[0].mxu0
  %v3418 = vadd.f32 0.0, %v3417
  %v3419 = vpop.f32.mrb[0].mxu0
  %v3420 = vadd.f32 0.0, %v3419
  %v3421 = vpop.f32.mrb[0].mxu0
  %v3422 = vadd.f32 0.0, %v3421
  %v3423 = vpop.f32.mrb[0].mxu0
  %v3424 = vadd.f32 0.0, %v3423
  %3425 = vdwg.mxu0
  %v3426 = vpack.c.bf16 %v3293, %v3289
  %v3427 = vpack.c.bf16 %v3295, %v3291
  %v3428 = vpack.c.bf16 %v3336, %v3332
  %v3429 = vpack.c.bf16 %v3338, %v3334
  %v3430 = vpack.c.bf16 %v3379, %v3375
  %v3431 = vpack.c.bf16 %v3381, %v3377
  %v3432 = vpack.c.bf16 %v3422, %v3418
  %v3433 = vpack.c.bf16 %v3424, %v3420
  %v3434 = vld [vmem:[%s10] sm:$0xf]
  %v3435 = vld [vmem:[%s10 + $0x4] sm:$0xf]
  %v3436 = vld [vmem:[%s10 + $0x8] sm:$0xf]
  %v3437 = vld [vmem:[%s10 + $0xc] sm:$0xf]
  %s3438 = scalar_lea.vmem %s10, 16
  %v3439 = vld [vmem:[%s3438] sm:$0xf]
  %v3440 = vld [vmem:[%s3438 + $0x4] sm:$0xf]
  %v3441 = vld [vmem:[%s3438 + $0x8] sm:$0xf]
  %v3442 = vld [vmem:[%s3438 + $0xc] sm:$0xf]
  %v3447 = vunpack.c.l.b16 %v3439
  %v3448 = vunpack.c.l.b16 %v3440
  %v3449 = vunpack.c.l.b16 %v3441
  %v3450 = vunpack.c.l.b16 %v3442
  %v3451 = vpack.c.b16 %v3448, %v3447
  %v3452 = vpack.c.b16 %v3450, %v3449
  %v3454 = vsel %vm112, %v3451, 0
  %v3457 = vsel %vm112, %v3452, 0
  %3459 = vmatprep.subr.bf16.mxu0 %v3429
  %3460 = vmatpush1.bf16.msra.mxu0 %v3428
  %3461 = vmatprep.subr.bf16.mxu0 0
  %3462 = vmatpush1.bf16.msra.mxu0 0
  %3463 = vmatprep.subr.bf16.mxu0 0
  %3464 = vmatpush1.bf16.msra.mxu0 0
  %3465 = vmatprep.subr.bf16.mxu0 0
  %3466 = vmatpush1.bf16.msra.mxu0 0
  %3467 = vmatprep.subr.bf16.mxu0 0
  %3468 = vmatpush1.bf16.msra.mxu0 0
  %3469 = vmatprep.subr.bf16.mxu0 0
  %3470 = vmatpush1.bf16.msra.mxu0 0
  %3471 = vmatprep.subr.bf16.mxu0 0
  %3472 = vmatpush1.bf16.msra.mxu0 0
  %3473 = vmatprep.subr.bf16.mxu0 0
  %3474 = vmatpush1.bf16.msra.mxu0 0
  %3475 = vmatprep.subr.bf16.mxu0 0
  %3476 = vmatpush1.bf16.msra.mxu0 0
  %3477 = vmatprep.subr.bf16.mxu0 0
  %3478 = vmatpush1.bf16.msra.mxu0 0
  %3479 = vmatprep.subr.bf16.mxu0 0
  %3480 = vmatpush1.bf16.msra.mxu0 0
  %3481 = vmatprep.subr.bf16.mxu0 0
  %3482 = vmatpush1.bf16.msra.mxu0 0
  %3483 = vmatprep.subr.bf16.mxu0 0
  %3484 = vmatpush1.bf16.msra.mxu0 0
  %3485 = vmatprep.subr.bf16.mxu0 0
  %3486 = vmatpush1.bf16.msra.mxu0 0
  %3487 = vmatprep.subr.bf16.mxu0 0
  %3488 = vmatpush1.bf16.msra.mxu0 0
  %3489 = vmatprep.subr.bf16.mxu0 0
  %3490 = vmatpush1.bf16.msra.mxu0 0
  %3491 = vmatprep.mubr.bf16.mxu0 0
  %3492 = vmatmul.mubr.bf16.gmra.mrb[0].mxu0 %v3454
  %v3493 = vpop.f32.mrb[0].mxu0
  %v3494 = vadd.f32 0.0, %v3493
  %v3495 = vpop.f32.mrb[0].mxu0
  %v3496 = vadd.f32 0.0, %v3495
  %v3497 = vpop.f32.mrb[0].mxu0
  %v3498 = vadd.f32 0.0, %v3497
  %v3499 = vpop.f32.mrb[0].mxu0
  %v3500 = vadd.f32 0.0, %v3499
  %3501 = vmatprep.mubr.bf16.mxu0 0
  %3502 = vmatmul.mubr.bf16.gmra.mrb[0].mxu0 %v3457
  %v3503 = vpop.f32.mrb[0].mxu0
  %v3504 = vadd.f32 0.0, %v3503
  %v3505 = vpop.f32.mrb[0].mxu0
  %v3506 = vadd.f32 0.0, %v3505
  %v3507 = vpop.f32.mrb[0].mxu0
  %v3508 = vadd.f32 0.0, %v3507
  %v3509 = vpop.f32.mrb[0].mxu0
  %v3510 = vadd.f32 0.0, %v3509
  %3511 = vdwg.mxu0
  %v3516 = vunpack.c.l.b16 %v3434
  %v3517 = vunpack.c.l.b16 %v3435
  %v3518 = vunpack.c.l.b16 %v3436
  %v3519 = vunpack.c.l.b16 %v3437
  %v3520 = vpack.c.b16 %v3517, %v3516
  %v3521 = vpack.c.b16 %v3519, %v3518
  %v3523 = vsel %vm112, %v3520, 0
  %v3526 = vsel %vm112, %v3521, 0
  %3528 = vmatprep.subr.bf16.mxu0 %v3427
  %3529 = vmatpush1.bf16.msra.mxu0 %v3426
  %3530 = vmatprep.subr.bf16.mxu0 0
  %3531 = vmatpush1.bf16.msra.mxu0 0
  %3532 = vmatprep.subr.bf16.mxu0 0
  %3533 = vmatpush1.bf16.msra.mxu0 0
  %3534 = vmatprep.subr.bf16.mxu0 0
  %3535 = vmatpush1.bf16.msra.mxu0 0
  %3536 = vmatprep.subr.bf16.mxu0 0
  %3537 = vmatpush1.bf16.msra.mxu0 0
  %3538 = vmatprep.subr.bf16.mxu0 0
  %3539 = vmatpush1.bf16.msra.mxu0 0
  %3540 = vmatprep.subr.bf16.mxu0 0
  %3541 = vmatpush1.bf16.msra.mxu0 0
  %3542 = vmatprep.subr.bf16.mxu0 0
  %3543 = vmatpush1.bf16.msra.mxu0 0
  %3544 = vmatprep.subr.bf16.mxu0 0
  %3545 = vmatpush1.bf16.msra.mxu0 0
  %3546 = vmatprep.subr.bf16.mxu0 0
  %3547 = vmatpush1.bf16.msra.mxu0 0
  %3548 = vmatprep.subr.bf16.mxu0 0
  %3549 = vmatpush1.bf16.msra.mxu0 0
  %3550 = vmatprep.subr.bf16.mxu0 0
  %3551 = vmatpush1.bf16.msra.mxu0 0
  %3552 = vmatprep.subr.bf16.mxu0 0
  %3553 = vmatpush1.bf16.msra.mxu0 0
  %3554 = vmatprep.subr.bf16.mxu0 0
  %3555 = vmatpush1.bf16.msra.mxu0 0
  %3556 = vmatprep.subr.bf16.mxu0 0
  %3557 = vmatpush1.bf16.msra.mxu0 0
  %3558 = vmatprep.subr.bf16.mxu0 0
  %3559 = vmatpush1.bf16.msra.mxu0 0
  %3560 = vmatprep.mubr.bf16.mxu0 0
  %3561 = vmatmul.mubr.bf16.gmra.mrb[0].mxu0 %v3523
  %v3562 = vpop.f32.mrb[0].mxu0
  %v3563 = vadd.f32 %v3494, %v3562
  %v3564 = vpop.f32.mrb[0].mxu0
  %v3565 = vadd.f32 %v3496, %v3564
  %v3566 = vpop.f32.mrb[0].mxu0
  %v3567 = vadd.f32 %v3498, %v3566
  %v3568 = vpop.f32.mrb[0].mxu0
  %v3569 = vadd.f32 %v3500, %v3568
  %3570 = vmatprep.mubr.bf16.mxu0 0
  %3571 = vmatmul.mubr.bf16.gmra.mrb[0].mxu0 %v3526
  %v3572 = vpop.f32.mrb[0].mxu0
  %v3573 = vadd.f32 %v3504, %v3572
  %v3574 = vpop.f32.mrb[0].mxu0
  %v3575 = vadd.f32 %v3506, %v3574
  %v3576 = vpop.f32.mrb[0].mxu0
  %v3577 = vadd.f32 %v3508, %v3576
  %v3578 = vpop.f32.mrb[0].mxu0
  %v3579 = vadd.f32 %v3510, %v3578
  %3580 = vdwg.mxu0
  %s3581 = scalar_lea.vmem %s10, 32
  %v3582 = vld [vmem:[%s3581] sm:$0xf]
  %v3583 = vld [vmem:[%s3581 + $0x4] sm:$0xf]
  %v3584 = vld [vmem:[%s3581 + $0x8] sm:$0xf]
  %v3585 = vld [vmem:[%s3581 + $0xc] sm:$0xf]
  %v3590 = vunpack.c.l.b16 %v3582
  %v3591 = vunpack.c.l.b16 %v3583
  %v3592 = vunpack.c.l.b16 %v3584
  %v3593 = vunpack.c.l.b16 %v3585
  %v3594 = vpack.c.b16 %v3591, %v3590
  %v3595 = vpack.c.b16 %v3593, %v3592
  %v3597 = vsel %vm112, %v3594, 0
  %v3600 = vsel %vm112, %v3595, 0
  %3602 = vmatprep.subr.bf16.mxu0 %v3431
  %3603 = vmatpush1.bf16.msra.mxu0 %v3430
  %3604 = vmatprep.subr.bf16.mxu0 0
  %3605 = vmatpush1.bf16.msra.mxu0 0
  %3606 = vmatprep.subr.bf16.mxu0 0
  %3607 = vmatpush1.bf16.msra.mxu0 0
  %3608 = vmatprep.subr.bf16.mxu0 0
  %3609 = vmatpush1.bf16.msra.mxu0 0
  %3610 = vmatprep.subr.bf16.mxu0 0
  %3611 = vmatpush1.bf16.msra.mxu0 0
  %3612 = vmatprep.subr.bf16.mxu0 0
  %3613 = vmatpush1.bf16.msra.mxu0 0
  %3614 = vmatprep.subr.bf16.mxu0 0
  %3615 = vmatpush1.bf16.msra.mxu0 0
  %3616 = vmatprep.subr.bf16.mxu0 0
  %3617 = vmatpush1.bf16.msra.mxu0 0
  %3618 = vmatprep.subr.bf16.mxu0 0
  %3619 = vmatpush1.bf16.msra.mxu0 0
  %3620 = vmatprep.subr.bf16.mxu0 0
  %3621 = vmatpush1.bf16.msra.mxu0 0
  %3622 = vmatprep.subr.bf16.mxu0 0
  %3623 = vmatpush1.bf16.msra.mxu0 0
  %3624 = vmatprep.subr.bf16.mxu0 0
  %3625 = vmatpush1.bf16.msra.mxu0 0
  %3626 = vmatprep.subr.bf16.mxu0 0
  %3627 = vmatpush1.bf16.msra.mxu0 0
  %3628 = vmatprep.subr.bf16.mxu0 0
  %3629 = vmatpush1.bf16.msra.mxu0 0
  %3630 = vmatprep.subr.bf16.mxu0 0
  %3631 = vmatpush1.bf16.msra.mxu0 0
  %3632 = vmatprep.subr.bf16.mxu0 0
  %3633 = vmatpush1.bf16.msra.mxu0 0
  %3634 = vmatprep.mubr.bf16.mxu0 0
  %3635 = vmatmul.mubr.bf16.gmra.mrb[0].mxu0 %v3597
  %v3636 = vpop.f32.mrb[0].mxu0
  %v3637 = vadd.f32 0.0, %v3636
  %v3638 = vpop.f32.mrb[0].mxu0
  %v3639 = vadd.f32 0.0, %v3638
  %v3640 = vpop.f32.mrb[0].mxu0
  %v3641 = vadd.f32 0.0, %v3640
  %v3642 = vpop.f32.mrb[0].mxu0
  %v3643 = vadd.f32 0.0, %v3642
  %3644 = vmatprep.mubr.bf16.mxu0 0
  %3645 = vmatmul.mubr.bf16.gmra.mrb[0].mxu0 %v3600
  %v3646 = vpop.f32.mrb[0].mxu0
  %v3647 = vadd.f32 0.0, %v3646
  %v3648 = vpop.f32.mrb[0].mxu0
  %v3649 = vadd.f32 0.0, %v3648
  %v3650 = vpop.f32.mrb[0].mxu0
  %v3651 = vadd.f32 0.0, %v3650
  %v3652 = vpop.f32.mrb[0].mxu0
  %v3653 = vadd.f32 0.0, %v3652
  %3654 = vdwg.mxu0
  %v3655 = vadd.f32 %v3563, %v3637
  %v3656 = vadd.f32 %v3565, %v3639
  %v3657 = vadd.f32 %v3567, %v3641
  %v3658 = vadd.f32 %v3569, %v3643
  %v3659 = vadd.f32 %v3573, %v3647
  %v3660 = vadd.f32 %v3575, %v3649
  %v3661 = vadd.f32 %v3577, %v3651
  %v3662 = vadd.f32 %v3579, %v3653
  %s3663 = scalar_lea.vmem %s10, 48
  %v3664 = vld [vmem:[%s3663] sm:$0xf]
  %v3665 = vld [vmem:[%s3663 + $0x4] sm:$0xf]
  %v3666 = vld [vmem:[%s3663 + $0x8] sm:$0xf]
  %v3667 = vld [vmem:[%s3663 + $0xc] sm:$0xf]
  %v3672 = vunpack.c.l.b16 %v3664
  %v3673 = vunpack.c.l.b16 %v3665
  %v3674 = vunpack.c.l.b16 %v3666
  %v3675 = vunpack.c.l.b16 %v3667
  %v3676 = vpack.c.b16 %v3673, %v3672
  %v3677 = vpack.c.b16 %v3675, %v3674
  %v3679 = vsel %vm112, %v3676, 0
  %v3682 = vsel %vm112, %v3677, 0
  %3684 = vmatprep.subr.bf16.mxu0 %v3433
  %3685 = vmatpush1.bf16.msra.mxu0 %v3432
  %3686 = vmatprep.subr.bf16.mxu0 0
  %3687 = vmatpush1.bf16.msra.mxu0 0
  %3688 = vmatprep.subr.bf16.mxu0 0
  %3689 = vmatpush1.bf16.msra.mxu0 0
  %3690 = vmatprep.subr.bf16.mxu0 0
  %3691 = vmatpush1.bf16.msra.mxu0 0
  %3692 = vmatprep.subr.bf16.mxu0 0
  %3693 = vmatpush1.bf16.msra.mxu0 0
  %3694 = vmatprep.subr.bf16.mxu0 0
  %3695 = vmatpush1.bf16.msra.mxu0 0
  %3696 = vmatprep.subr.bf16.mxu0 0
  %3697 = vmatpush1.bf16.msra.mxu0 0
  %3698 = vmatprep.subr.bf16.mxu0 0
  %3699 = vmatpush1.bf16.msra.mxu0 0
  %3700 = vmatprep.subr.bf16.mxu0 0
  %3701 = vmatpush1.bf16.msra.mxu0 0
  %3702 = vmatprep.subr.bf16.mxu0 0
  %3703 = vmatpush1.bf16.msra.mxu0 0
  %3704 = vmatprep.subr.bf16.mxu0 0
  %3705 = vmatpush1.bf16.msra.mxu0 0
  %3706 = vmatprep.subr.bf16.mxu0 0
  %3707 = vmatpush1.bf16.msra.mxu0 0
  %3708 = vmatprep.subr.bf16.mxu0 0
  %3709 = vmatpush1.bf16.msra.mxu0 0
  %3710 = vmatprep.subr.bf16.mxu0 0
  %3711 = vmatpush1.bf16.msra.mxu0 0
  %3712 = vmatprep.subr.bf16.mxu0 0
  %3713 = vmatpush1.bf16.msra.mxu0 0
  %3714 = vmatprep.subr.bf16.mxu0 0
  %3715 = vmatpush1.bf16.msra.mxu0 0
  %3716 = vmatprep.mubr.bf16.mxu0 0
  %3717 = vmatmul.mubr.bf16.gmra.mrb[0].mxu0 %v3679
  %v3718 = vpop.f32.mrb[0].mxu0
  %v3719 = vadd.f32 0.0, %v3718
  %v3720 = vpop.f32.mrb[0].mxu0
  %v3721 = vadd.f32 0.0, %v3720
  %v3722 = vpop.f32.mrb[0].mxu0
  %v3723 = vadd.f32 0.0, %v3722
  %v3724 = vpop.f32.mrb[0].mxu0
  %v3725 = vadd.f32 0.0, %v3724
  %3726 = vmatprep.mubr.bf16.mxu0 0
  %3727 = vmatmul.mubr.bf16.gmra.mrb[0].mxu0 %v3682
  %v3728 = vpop.f32.mrb[0].mxu0
  %v3729 = vadd.f32 0.0, %v3728
  %v3730 = vpop.f32.mrb[0].mxu0
  %v3731 = vadd.f32 0.0, %v3730
  %v3732 = vpop.f32.mrb[0].mxu0
  %v3733 = vadd.f32 0.0, %v3732
  %v3734 = vpop.f32.mrb[0].mxu0
  %v3735 = vadd.f32 0.0, %v3734
  %3736 = vdwg.mxu0
  %v3737 = vadd.f32 %v3655, %v3719
  %v3738 = vadd.f32 %v3656, %v3721
  %v3739 = vadd.f32 %v3657, %v3723
  %v3740 = vadd.f32 %v3658, %v3725
  %v3741 = vadd.f32 %v3659, %v3729
  %v3742 = vadd.f32 %v3660, %v3731
  %v3743 = vadd.f32 %v3661, %v3733
  %v3744 = vadd.f32 %v3662, %v3735
  %v3745 = vadd.f32 %v3737, %v3739
  %v3746 = vadd.f32 %v3745, %v3741
  %v3747 = vadd.f32 %v3746, %v3743
  %v3748 = vrot.slane %v3747, 4
  %v3749 = vadd.f32 %v3747, %v3748
  %v3750 = vrot.slane %v3749, 2
  %v3751 = vadd.f32 %v3749, %v3750
  %v3752 = vrot.slane %v3751, 1
  %v3753 = vadd.f32 %v3751, %v3752
  %v3754 = vadd.f32 %v3738, %v3740
  %v3755 = vadd.f32 %v3754, %v3742
  %v3756 = vadd.f32 %v3755, %v3744
  %v3757 = vrot.slane %v3756, 4
  %v3758 = vadd.f32 %v3756, %v3757
  %v3759 = vrot.slane %v3758, 2
  %v3760 = vadd.f32 %v3758, %v3759
  %v3761 = vrot.slane %v3760, 1
  %v3762 = vadd.f32 %v3760, %v3761
  %v3763 = vmul.f32 %v3737, %v3737
  %v3764 = vmul.f32 %v3738, %v3738
  %v3765 = vmul.f32 %v3739, %v3739
  %v3766 = vmul.f32 %v3740, %v3740
  %v3767 = vmul.f32 %v3741, %v3741
  %v3768 = vmul.f32 %v3742, %v3742
  %v3769 = vmul.f32 %v3743, %v3743
  %v3770 = vmul.f32 %v3744, %v3744
  %v3771 = vadd.f32 %v3763, %v3765
  %v3772 = vadd.f32 %v3771, %v3767
  %v3773 = vadd.f32 %v3772, %v3769
  %v3774 = vrot.slane %v3773, 4
  %v3775 = vadd.f32 %v3773, %v3774
  %v3776 = vrot.slane %v3775, 2
  %v3777 = vadd.f32 %v3775, %v3776
  %v3778 = vrot.slane %v3777, 1
  %v3779 = vadd.f32 %v3777, %v3778
  %v3780 = vadd.f32 %v3764, %v3766
  %v3781 = vadd.f32 %v3780, %v3768
  %v3782 = vadd.f32 %v3781, %v3770
  %v3783 = vrot.slane %v3782, 4
  %v3784 = vadd.f32 %v3782, %v3783
  %v3785 = vrot.slane %v3784, 2
  %v3786 = vadd.f32 %v3784, %v3785
  %v3787 = vrot.slane %v3786, 1
  %v3788 = vadd.f32 %v3786, %v3787
  %v3789 = vld [vmem:[%s11] sm:$0xff]
  %v3790 = vld [vmem:[%s11 + $0x8] sm:$0xff]
  %v3791 = vld [vmem:[%s11 + $0x10] sm:$0xff]
  %v3792 = vld [vmem:[%s11 + $0x18] sm:$0xff]
  %v3793 = vld [vmem:[%s11 + $0x20] sm:$0xff]
  %v3794 = vld [vmem:[%s11 + $0x28] sm:$0xff]
  %v3795 = vld [vmem:[%s11 + $0x30] sm:$0xff]
  %v3796 = vld [vmem:[%s11 + $0x38] sm:$0xff]
  %v3797 = vld [vmem:[%s11 + $0x40] sm:$0xff]
  %v3798 = vld [vmem:[%s11 + $0x48] sm:$0xff]
  %v3799 = vld [vmem:[%s11 + $0x50] sm:$0xff]
  %v3800 = vld [vmem:[%s11 + $0x58] sm:$0xff]
  %v3801 = vld [vmem:[%s11 + $0x60] sm:$0xff]
  %v3802 = vld [vmem:[%s11 + $0x68] sm:$0xff]
  %v3803 = vld [vmem:[%s11 + $0x70] sm:$0xff]
  %v3804 = vld [vmem:[%s11 + $0x78] sm:$0xff]
  %v3805 = vld [vmem:[%s11 + $0x80] sm:$0xff]
  %v3806 = vld [vmem:[%s11 + $0x88] sm:$0xff]
  %v3807 = vld [vmem:[%s11 + $0x90] sm:$0xff]
  %v3808 = vld [vmem:[%s11 + $0x98] sm:$0xff]
  %v3809 = vld [vmem:[%s11 + $0xa0] sm:$0xff]
  %v3810 = vld [vmem:[%s11 + $0xa8] sm:$0xff]
  %v3811 = vld [vmem:[%s11 + $0xb0] sm:$0xff]
  %v3812 = vld [vmem:[%s11 + $0xb8] sm:$0xff]
  %v3813 = vld [vmem:[%s11 + $0xc0] sm:$0xff]
  %v3814 = vld [vmem:[%s11 + $0xc8] sm:$0xff]
  %v3815 = vld [vmem:[%s11 + $0xd0] sm:$0xff]
  %v3816 = vld [vmem:[%s11 + $0xd8] sm:$0xff]
  %v3817 = vld [vmem:[%s11 + $0xe0] sm:$0xff]
  %v3818 = vld [vmem:[%s11 + $0xe8] sm:$0xff]
  %v3819 = vld [vmem:[%s11 + $0xf0] sm:$0xff]
  %v3820 = vld [vmem:[%s11 + $0xf8] sm:$0xff]
  %3821 = vmatprep.subr.mxu0 0.0
  %3822 = vmatpush1.msra.mxu0 %v3789
  %3823 = vmatprep.subr.mxu0 0.0
  %3824 = vmatpush1.msra.mxu0 %v3790
  %3825 = vmatprep.subr.mxu0 0.0
  %3826 = vmatpush1.msra.mxu0 %v3791
  %3827 = vmatprep.subr.mxu0 0.0
  %3828 = vmatpush1.msra.mxu0 %v3792
  %3829 = vmatprep.subr.mxu0 0.0
  %3830 = vmatpush1.msra.mxu0 %v3793
  %3831 = vmatprep.subr.mxu0 0.0
  %3832 = vmatpush1.msra.mxu0 %v3794
  %3833 = vmatprep.subr.mxu0 0.0
  %3834 = vmatpush1.msra.mxu0 %v3795
  %3835 = vmatprep.subr.mxu0 0.0
  %3836 = vmatpush1.msra.mxu0 %v3796
  %3837 = vmatprep.subr.mxu0 0.0
  %3838 = vmatpush1.msra.mxu0 %v3797
  %3839 = vmatprep.subr.mxu0 0.0
  %3840 = vmatpush1.msra.mxu0 %v3798
  %3841 = vmatprep.subr.mxu0 0.0
  %3842 = vmatpush1.msra.mxu0 %v3799
  %3843 = vmatprep.subr.mxu0 0.0
  %3844 = vmatpush1.msra.mxu0 %v3800
  %3845 = vmatprep.subr.mxu0 0.0
  %3846 = vmatpush1.msra.mxu0 %v3801
  %3847 = vmatprep.subr.mxu0 0.0
  %3848 = vmatpush1.msra.mxu0 %v3802
  %3849 = vmatprep.subr.mxu0 0.0
  %3850 = vmatpush1.msra.mxu0 %v3803
  %3851 = vmatprep.subr.mxu0 0.0
  %3852 = vmatpush1.msra.mxu0 %v3804
  %3853 = vmatprep.subr.mxu0 0.0
  %3854 = vmatpush1.msra.mxu0 %v3805
  %3855 = vmatprep.subr.mxu0 0.0
  %3856 = vmatpush1.msra.mxu0 %v3806
  %3857 = vmatprep.subr.mxu0 0.0
  %3858 = vmatpush1.msra.mxu0 %v3807
  %3859 = vmatprep.subr.mxu0 0.0
  %3860 = vmatpush1.msra.mxu0 %v3808
  %3861 = vmatprep.subr.mxu0 0.0
  %3862 = vmatpush1.msra.mxu0 %v3809
  %3863 = vmatprep.subr.mxu0 0.0
  %3864 = vmatpush1.msra.mxu0 %v3810
  %3865 = vmatprep.subr.mxu0 0.0
  %3866 = vmatpush1.msra.mxu0 %v3811
  %3867 = vmatprep.subr.mxu0 0.0
  %3868 = vmatpush1.msra.mxu0 %v3812
  %3869 = vmatprep.subr.mxu0 0.0
  %3870 = vmatpush1.msra.mxu0 %v3813
  %3871 = vmatprep.subr.mxu0 0.0
  %3872 = vmatpush1.msra.mxu0 %v3814
  %3873 = vmatprep.subr.mxu0 0.0
  %3874 = vmatpush1.msra.mxu0 %v3815
  %3875 = vmatprep.subr.mxu0 0.0
  %3876 = vmatpush1.msra.mxu0 %v3816
  %3877 = vmatprep.subr.mxu0 0.0
  %3878 = vmatpush1.msra.mxu0 %v3817
  %3879 = vmatprep.subr.mxu0 0.0
  %3880 = vmatpush1.msra.mxu0 %v3818
  %3881 = vmatprep.subr.mxu0 0.0
  %3882 = vmatpush1.msra.mxu0 %v3819
  %3883 = vmatprep.subr.mxu0 0.0
  %3884 = vmatpush1.msra.mxu0 %v3820
  %3885 = vmatprep.mubr.f32.mxu0 %v3762
  %3886 = vmatmul.mubr.f32.gmra.mrb[0].mxu0 %v3753
  %v3887 = vpop.f32.mrb[0].mxu0
  %v3888 = vadd.f32 0.0, %v3887
  %v3889 = vpop.f32.mrb[0].mxu0
  %3890 = vdwg.mxu0
  %3891 = vmatprep.subr.mxu0 0.0
  %3892 = vmatpush1.msra.mxu0 %v3789
  %3893 = vmatprep.subr.mxu0 0.0
  %3894 = vmatpush1.msra.mxu0 %v3790
  %3895 = vmatprep.subr.mxu0 0.0
  %3896 = vmatpush1.msra.mxu0 %v3791
  %3897 = vmatprep.subr.mxu0 0.0
  %3898 = vmatpush1.msra.mxu0 %v3792
  %3899 = vmatprep.subr.mxu0 0.0
  %3900 = vmatpush1.msra.mxu0 %v3793
  %3901 = vmatprep.subr.mxu0 0.0
  %3902 = vmatpush1.msra.mxu0 %v3794
  %3903 = vmatprep.subr.mxu0 0.0
  %3904 = vmatpush1.msra.mxu0 %v3795
  %3905 = vmatprep.subr.mxu0 0.0
  %3906 = vmatpush1.msra.mxu0 %v3796
  %3907 = vmatprep.subr.mxu0 0.0
  %3908 = vmatpush1.msra.mxu0 %v3797
  %3909 = vmatprep.subr.mxu0 0.0
  %3910 = vmatpush1.msra.mxu0 %v3798
  %3911 = vmatprep.subr.mxu0 0.0
  %3912 = vmatpush1.msra.mxu0 %v3799
  %3913 = vmatprep.subr.mxu0 0.0
  %3914 = vmatpush1.msra.mxu0 %v3800
  %3915 = vmatprep.subr.mxu0 0.0
  %3916 = vmatpush1.msra.mxu0 %v3801
  %3917 = vmatprep.subr.mxu0 0.0
  %3918 = vmatpush1.msra.mxu0 %v3802
  %3919 = vmatprep.subr.mxu0 0.0
  %3920 = vmatpush1.msra.mxu0 %v3803
  %3921 = vmatprep.subr.mxu0 0.0
  %3922 = vmatpush1.msra.mxu0 %v3804
  %3923 = vmatprep.subr.mxu0 0.0
  %3924 = vmatpush1.msra.mxu0 %v3805
  %3925 = vmatprep.subr.mxu0 0.0
  %3926 = vmatpush1.msra.mxu0 %v3806
  %3927 = vmatprep.subr.mxu0 0.0
  %3928 = vmatpush1.msra.mxu0 %v3807
  %3929 = vmatprep.subr.mxu0 0.0
  %3930 = vmatpush1.msra.mxu0 %v3808
  %3931 = vmatprep.subr.mxu0 0.0
  %3932 = vmatpush1.msra.mxu0 %v3809
  %3933 = vmatprep.subr.mxu0 0.0
  %3934 = vmatpush1.msra.mxu0 %v3810
  %3935 = vmatprep.subr.mxu0 0.0
  %3936 = vmatpush1.msra.mxu0 %v3811
  %3937 = vmatprep.subr.mxu0 0.0
  %3938 = vmatpush1.msra.mxu0 %v3812
  %3939 = vmatprep.subr.mxu0 0.0
  %3940 = vmatpush1.msra.mxu0 %v3813
  %3941 = vmatprep.subr.mxu0 0.0
  %3942 = vmatpush1.msra.mxu0 %v3814
  %3943 = vmatprep.subr.mxu0 0.0
  %3944 = vmatpush1.msra.mxu0 %v3815
  %3945 = vmatprep.subr.mxu0 0.0
  %3946 = vmatpush1.msra.mxu0 %v3816
  %3947 = vmatprep.subr.mxu0 0.0
  %3948 = vmatpush1.msra.mxu0 %v3817
  %3949 = vmatprep.subr.mxu0 0.0
  %3950 = vmatpush1.msra.mxu0 %v3818
  %3951 = vmatprep.subr.mxu0 0.0
  %3952 = vmatpush1.msra.mxu0 %v3819
  %3953 = vmatprep.subr.mxu0 0.0
  %3954 = vmatpush1.msra.mxu0 %v3820
  %3955 = vmatprep.mubr.f32.mxu0 %v3788
  %3956 = vmatmul.mubr.f32.gmra.mrb[0].mxu0 %v3779
  %v3957 = vpop.f32.mrb[0].mxu0
  %v3958 = vadd.f32 0.0, %v3957
  %v3959 = vpop.f32.mrb[0].mxu0
  %3960 = vdwg.mxu0
  %v3961 = vmul.f32 %v3888, 0.001953125
  %v3962 = vmul.f32 %v3958, 0.001953125
  %v3963 = vmul.f32 %v3961, %v3961
  %v3964 = vsub.f32 %v3962, %v3963
  %v3965 = vmax.f32 %v3964, 0.0
  %v3966 = vadd.f32 %v3965, 1e-05
  %v3967 = vrsqrt.pop %v3966
  %v3968 = vsub.f32 0.0, %v3961
  %v3969 = vmul.f32 %v3968, %v3967
  %v3970 = vld [vmem:[%s12] sm:$0xff]
  %v3971 = vld [vmem:[%s12 + $0x8] sm:$0xff]
  %v3972 = vld [vmem:[%s12 + $0x10] sm:$0xff]
  %v3973 = vld [vmem:[%s12 + $0x18] sm:$0xff]
  %v3975 = vsel %vm112, %v3967, 0
  %3977 = vmatprep.subr.mxu0 %v3971
  %3978 = vmatpush1.msra.mxu0 %v3970
  %3979 = vmatprep.subr.mxu0 %v3973
  %3980 = vmatpush1.msra.mxu0 %v3972
  %3981 = vmatprep.subr.mxu0 0.0
  %3982 = vmatpush1.msra.mxu0 0.0
  %3983 = vmatprep.subr.mxu0 0.0
  %3984 = vmatpush1.msra.mxu0 0.0
  %3985 = vmatprep.subr.mxu0 0.0
  %3986 = vmatpush1.msra.mxu0 0.0
  %3987 = vmatprep.subr.mxu0 0.0
  %3988 = vmatpush1.msra.mxu0 0.0
  %3989 = vmatprep.subr.mxu0 0.0
  %3990 = vmatpush1.msra.mxu0 0.0
  %3991 = vmatprep.subr.mxu0 0.0
  %3992 = vmatpush1.msra.mxu0 0.0
  %3993 = vmatprep.subr.mxu0 0.0
  %3994 = vmatpush1.msra.mxu0 0.0
  %3995 = vmatprep.subr.mxu0 0.0
  %3996 = vmatpush1.msra.mxu0 0.0
  %3997 = vmatprep.subr.mxu0 0.0
  %3998 = vmatpush1.msra.mxu0 0.0
  %3999 = vmatprep.subr.mxu0 0.0
  %4000 = vmatpush1.msra.mxu0 0.0
  %4001 = vmatprep.subr.mxu0 0.0
  %4002 = vmatpush1.msra.mxu0 0.0
  %4003 = vmatprep.subr.mxu0 0.0
  %4004 = vmatpush1.msra.mxu0 0.0
  %4005 = vmatprep.subr.mxu0 0.0
  %4006 = vmatpush1.msra.mxu0 0.0
  %4007 = vmatprep.subr.mxu0 0.0
  %4008 = vmatpush1.msra.mxu0 0.0
  %4009 = vmatprep.subr.mxu0 0.0
  %4010 = vmatpush1.msra.mxu0 0.0
  %4011 = vmatprep.subr.mxu0 0.0
  %4012 = vmatpush1.msra.mxu0 0.0
  %4013 = vmatprep.subr.mxu0 0.0
  %4014 = vmatpush1.msra.mxu0 0.0
  %4015 = vmatprep.subr.mxu0 0.0
  %4016 = vmatpush1.msra.mxu0 0.0
  %4017 = vmatprep.subr.mxu0 0.0
  %4018 = vmatpush1.msra.mxu0 0.0
  %4019 = vmatprep.subr.mxu0 0.0
  %4020 = vmatpush1.msra.mxu0 0.0
  %4021 = vmatprep.subr.mxu0 0.0
  %4022 = vmatpush1.msra.mxu0 0.0
  %4023 = vmatprep.subr.mxu0 0.0
  %4024 = vmatpush1.msra.mxu0 0.0
  %4025 = vmatprep.subr.mxu0 0.0
  %4026 = vmatpush1.msra.mxu0 0.0
  %4027 = vmatprep.subr.mxu0 0.0
  %4028 = vmatpush1.msra.mxu0 0.0
  %4029 = vmatprep.subr.mxu0 0.0
  %4030 = vmatpush1.msra.mxu0 0.0
  %4031 = vmatprep.subr.mxu0 0.0
  %4032 = vmatpush1.msra.mxu0 0.0
  %4033 = vmatprep.subr.mxu0 0.0
  %4034 = vmatpush1.msra.mxu0 0.0
  %4035 = vmatprep.subr.mxu0 0.0
  %4036 = vmatpush1.msra.mxu0 0.0
  %4037 = vmatprep.subr.mxu0 0.0
  %4038 = vmatpush1.msra.mxu0 0.0
  %4039 = vmatprep.subr.mxu0 0.0
  %4040 = vmatpush1.msra.mxu0 0.0
  %4041 = vmatprep.mubr.f32.mxu0 0.0
  %4042 = vmatmul.mubr.f32.gmra.mrb[0].mxu0 %v3975
  %v4043 = vpop.f32.mrb[0].mxu0
  %v4044 = vadd.f32 0.0, %v4043
  %v4045 = vpop.f32.mrb[0].mxu0
  %v4046 = vadd.f32 0.0, %v4045
  %4047 = vdwg.mxu0
  %v4049 = vsel %vm112, %v3969, 0
  %4051 = vmatprep.subr.mxu0 %v3971
  %4052 = vmatpush1.msra.mxu0 %v3970
  %4053 = vmatprep.subr.mxu0 %v3973
  %4054 = vmatpush1.msra.mxu0 %v3972
  %4055 = vmatprep.subr.mxu0 0.0
  %4056 = vmatpush1.msra.mxu0 0.0
  %4057 = vmatprep.subr.mxu0 0.0
  %4058 = vmatpush1.msra.mxu0 0.0
  %4059 = vmatprep.subr.mxu0 0.0
  %4060 = vmatpush1.msra.mxu0 0.0
  %4061 = vmatprep.subr.mxu0 0.0
  %4062 = vmatpush1.msra.mxu0 0.0
  %4063 = vmatprep.subr.mxu0 0.0
  %4064 = vmatpush1.msra.mxu0 0.0
  %4065 = vmatprep.subr.mxu0 0.0
  %4066 = vmatpush1.msra.mxu0 0.0
  %4067 = vmatprep.subr.mxu0 0.0
  %4068 = vmatpush1.msra.mxu0 0.0
  %4069 = vmatprep.subr.mxu0 0.0
  %4070 = vmatpush1.msra.mxu0 0.0
  %4071 = vmatprep.subr.mxu0 0.0
  %4072 = vmatpush1.msra.mxu0 0.0
  %4073 = vmatprep.subr.mxu0 0.0
  %4074 = vmatpush1.msra.mxu0 0.0
  %4075 = vmatprep.subr.mxu0 0.0
  %4076 = vmatpush1.msra.mxu0 0.0
  %4077 = vmatprep.subr.mxu0 0.0
  %4078 = vmatpush1.msra.mxu0 0.0
  %4079 = vmatprep.subr.mxu0 0.0
  %4080 = vmatpush1.msra.mxu0 0.0
  %4081 = vmatprep.subr.mxu0 0.0
  %4082 = vmatpush1.msra.mxu0 0.0
  %4083 = vmatprep.subr.mxu0 0.0
  %4084 = vmatpush1.msra.mxu0 0.0
  %4085 = vmatprep.subr.mxu0 0.0
  %4086 = vmatpush1.msra.mxu0 0.0
  %4087 = vmatprep.subr.mxu0 0.0
  %4088 = vmatpush1.msra.mxu0 0.0
  %4089 = vmatprep.subr.mxu0 0.0
  %4090 = vmatpush1.msra.mxu0 0.0
  %4091 = vmatprep.subr.mxu0 0.0
  %4092 = vmatpush1.msra.mxu0 0.0
  %4093 = vmatprep.subr.mxu0 0.0
  %4094 = vmatpush1.msra.mxu0 0.0
  %4095 = vmatprep.subr.mxu0 0.0
  %4096 = vmatpush1.msra.mxu0 0.0
  %4097 = vmatprep.subr.mxu0 0.0
  %4098 = vmatpush1.msra.mxu0 0.0
  %4099 = vmatprep.subr.mxu0 0.0
  %4100 = vmatpush1.msra.mxu0 0.0
  %4101 = vmatprep.subr.mxu0 0.0
  %4102 = vmatpush1.msra.mxu0 0.0
  %4103 = vmatprep.subr.mxu0 0.0
  %4104 = vmatpush1.msra.mxu0 0.0
  %4105 = vmatprep.subr.mxu0 0.0
  %4106 = vmatpush1.msra.mxu0 0.0
  %4107 = vmatprep.subr.mxu0 0.0
  %4108 = vmatpush1.msra.mxu0 0.0
  %4109 = vmatprep.subr.mxu0 0.0
  %4110 = vmatpush1.msra.mxu0 0.0
  %4111 = vmatprep.subr.mxu0 0.0
  %4112 = vmatpush1.msra.mxu0 0.0
  %4113 = vmatprep.subr.mxu0 0.0
  %4114 = vmatpush1.msra.mxu0 0.0
  %4115 = vmatprep.mubr.f32.mxu0 0.0
  %4116 = vmatmul.mubr.f32.gmra.mrb[0].mxu0 %v4049
  %v4117 = vpop.f32.mrb[0].mxu0
  %v4118 = vadd.f32 0.0, %v4117
  %v4119 = vpop.f32.mrb[0].mxu0
  %v4120 = vadd.f32 0.0, %v4119
  %4121 = vdwg.mxu0
  %v4122 = vlaneseq
  %v4123 = vshrl.u32 %v4122, 7
  %v4124 = vsub.s32 0, %v4123
  %v4125 = vrot.slane %v4044, %v4124
  %v4126 = vlaneseq
  %v4127 = vshrl.u32 %v4126, 7
  %v4128 = vsub.s32 0, %v4127
  %v4129 = vrot.slane %v4046, %v4128
  %v4130 = vmul.f32 %v3737, %v4125
  %v4131 = vmul.f32 %v3738, %v4129
  %v4132 = vmul.f32 %v3739, %v4125
  %v4133 = vmul.f32 %v3740, %v4129
  %v4134 = vmul.f32 %v3741, %v4125
  %v4135 = vmul.f32 %v3742, %v4129
  %v4136 = vmul.f32 %v3743, %v4125
  %v4137 = vmul.f32 %v3744, %v4129
  %v4138 = vlaneseq
  %v4139 = vshrl.u32 %v4138, 7
  %v4140 = vsub.s32 0, %v4139
  %v4141 = vrot.slane %v4118, %v4140
  %v4142 = vlaneseq
  %v4143 = vshrl.u32 %v4142, 7
  %v4144 = vsub.s32 0, %v4143
  %v4145 = vrot.slane %v4120, %v4144
  %v4146 = vadd.f32 %v4130, %v4141
  %v4147 = vadd.f32 %v4131, %v4145
  %v4148 = vadd.f32 %v4132, %v4141
  %v4149 = vadd.f32 %v4133, %v4145
  %v4150 = vadd.f32 %v4134, %v4141
  %v4151 = vadd.f32 %v4135, %v4145
  %v4152 = vadd.f32 %v4136, %v4141
  %v4153 = vadd.f32 %v4137, %v4145
  %v4154 = vmax.f32 %v4146, 0.0
  %v4155 = vmax.f32 %v4147, 0.0
  %v4156 = vmax.f32 %v4148, 0.0
  %v4157 = vmax.f32 %v4149, 0.0
  %v4158 = vmax.f32 %v4150, 0.0
  %v4159 = vmax.f32 %v4151, 0.0
  %v4160 = vmax.f32 %v4152, 0.0
  %v4161 = vmax.f32 %v4153, 0.0
  %v4162 = vpack.c.bf16 %v4156, %v4154
  %v4163 = vpack.c.bf16 %v4157, %v4155
  %v4164 = vpack.c.bf16 %v4160, %v4158
  %v4165 = vpack.c.bf16 %v4161, %v4159
  %v4166 = vld [vmem:[%s13] sm:$0xff]
  %v4167 = vld [vmem:[%s13 + $0x8] sm:$0xff]
  %v4168 = vld [vmem:[%s13 + $0x10] sm:$0xff]
  %v4169 = vld [vmem:[%s13 + $0x18] sm:$0xff]
  %v4170 = vld [vmem:[%s13 + $0x20] sm:$0xff]
  %v4171 = vld [vmem:[%s13 + $0x28] sm:$0xff]
  %v4172 = vld [vmem:[%s13 + $0x30] sm:$0xff]
  %v4173 = vld [vmem:[%s13 + $0x38] sm:$0xff]
  %v4174 = vld [vmem:[%s13 + $0x40] sm:$0xff]
  %v4175 = vld [vmem:[%s13 + $0x48] sm:$0xff]
  %v4176 = vld [vmem:[%s13 + $0x50] sm:$0xff]
  %v4177 = vld [vmem:[%s13 + $0x58] sm:$0xff]
  %v4178 = vld [vmem:[%s13 + $0x60] sm:$0xff]
  %v4179 = vld [vmem:[%s13 + $0x68] sm:$0xff]
  %v4180 = vld [vmem:[%s13 + $0x70] sm:$0xff]
  %v4181 = vld [vmem:[%s13 + $0x78] sm:$0xff]
  %v4182 = vld [vmem:[%s13 + $0x80] sm:$0xff]
  %v4183 = vld [vmem:[%s13 + $0x88] sm:$0xff]
  %v4184 = vld [vmem:[%s13 + $0x90] sm:$0xff]
  %v4185 = vld [vmem:[%s13 + $0x98] sm:$0xff]
  %v4186 = vld [vmem:[%s13 + $0xa0] sm:$0xff]
  %v4187 = vld [vmem:[%s13 + $0xa8] sm:$0xff]
  %v4188 = vld [vmem:[%s13 + $0xb0] sm:$0xff]
  %v4189 = vld [vmem:[%s13 + $0xb8] sm:$0xff]
  %v4190 = vld [vmem:[%s13 + $0xc0] sm:$0xff]
  %v4191 = vld [vmem:[%s13 + $0xc8] sm:$0xff]
  %v4192 = vld [vmem:[%s13 + $0xd0] sm:$0xff]
  %v4193 = vld [vmem:[%s13 + $0xd8] sm:$0xff]
  %v4194 = vld [vmem:[%s13 + $0xe0] sm:$0xff]
  %v4195 = vld [vmem:[%s13 + $0xe8] sm:$0xff]
  %v4196 = vld [vmem:[%s13 + $0xf0] sm:$0xff]
  %v4197 = vld [vmem:[%s13 + $0xf8] sm:$0xff]
  %v4198 = vld [vmem:[%s13 + $0x100] sm:$0xff]
  %v4199 = vld [vmem:[%s13 + $0x108] sm:$0xff]
  %v4200 = vld [vmem:[%s13 + $0x110] sm:$0xff]
  %v4201 = vld [vmem:[%s13 + $0x118] sm:$0xff]
  %v4202 = vld [vmem:[%s13 + $0x120] sm:$0xff]
  %v4203 = vld [vmem:[%s13 + $0x128] sm:$0xff]
  %v4204 = vld [vmem:[%s13 + $0x130] sm:$0xff]
  %v4205 = vld [vmem:[%s13 + $0x138] sm:$0xff]
  %v4206 = vld [vmem:[%s13 + $0x140] sm:$0xff]
  %v4207 = vld [vmem:[%s13 + $0x148] sm:$0xff]
  %v4208 = vld [vmem:[%s13 + $0x150] sm:$0xff]
  %v4209 = vld [vmem:[%s13 + $0x158] sm:$0xff]
  %v4210 = vld [vmem:[%s13 + $0x160] sm:$0xff]
  %v4211 = vld [vmem:[%s13 + $0x168] sm:$0xff]
  %v4212 = vld [vmem:[%s13 + $0x170] sm:$0xff]
  %v4213 = vld [vmem:[%s13 + $0x178] sm:$0xff]
  %v4214 = vld [vmem:[%s13 + $0x180] sm:$0xff]
  %v4215 = vld [vmem:[%s13 + $0x188] sm:$0xff]
  %v4216 = vld [vmem:[%s13 + $0x190] sm:$0xff]
  %v4217 = vld [vmem:[%s13 + $0x198] sm:$0xff]
  %v4218 = vld [vmem:[%s13 + $0x1a0] sm:$0xff]
  %v4219 = vld [vmem:[%s13 + $0x1a8] sm:$0xff]
  %v4220 = vld [vmem:[%s13 + $0x1b0] sm:$0xff]
  %v4221 = vld [vmem:[%s13 + $0x1b8] sm:$0xff]
  %v4222 = vld [vmem:[%s13 + $0x1c0] sm:$0xff]
  %v4223 = vld [vmem:[%s13 + $0x1c8] sm:$0xff]
  %v4224 = vld [vmem:[%s13 + $0x1d0] sm:$0xff]
  %v4225 = vld [vmem:[%s13 + $0x1d8] sm:$0xff]
  %v4226 = vld [vmem:[%s13 + $0x1e0] sm:$0xff]
  %v4227 = vld [vmem:[%s13 + $0x1e8] sm:$0xff]
  %v4228 = vld [vmem:[%s13 + $0x1f0] sm:$0xff]
  %v4229 = vld [vmem:[%s13 + $0x1f8] sm:$0xff]
  %v4230 = vld [vmem:[%s13 + $0x200] sm:$0xff]
  %v4231 = vld [vmem:[%s13 + $0x208] sm:$0xff]
  %v4232 = vld [vmem:[%s13 + $0x210] sm:$0xff]
  %v4233 = vld [vmem:[%s13 + $0x218] sm:$0xff]
  %v4234 = vld [vmem:[%s13 + $0x220] sm:$0xff]
  %v4235 = vld [vmem:[%s13 + $0x228] sm:$0xff]
  %v4236 = vld [vmem:[%s13 + $0x230] sm:$0xff]
  %v4237 = vld [vmem:[%s13 + $0x238] sm:$0xff]
  %v4238 = vld [vmem:[%s13 + $0x240] sm:$0xff]
  %v4239 = vld [vmem:[%s13 + $0x248] sm:$0xff]
  %v4240 = vld [vmem:[%s13 + $0x250] sm:$0xff]
  %v4241 = vld [vmem:[%s13 + $0x258] sm:$0xff]
  %v4242 = vld [vmem:[%s13 + $0x260] sm:$0xff]
  %v4243 = vld [vmem:[%s13 + $0x268] sm:$0xff]
  %v4244 = vld [vmem:[%s13 + $0x270] sm:$0xff]
  %v4245 = vld [vmem:[%s13 + $0x278] sm:$0xff]
  %v4246 = vld [vmem:[%s13 + $0x280] sm:$0xff]
  %v4247 = vld [vmem:[%s13 + $0x288] sm:$0xff]
  %v4248 = vld [vmem:[%s13 + $0x290] sm:$0xff]
  %v4249 = vld [vmem:[%s13 + $0x298] sm:$0xff]
  %v4250 = vld [vmem:[%s13 + $0x2a0] sm:$0xff]
  %v4251 = vld [vmem:[%s13 + $0x2a8] sm:$0xff]
  %v4252 = vld [vmem:[%s13 + $0x2b0] sm:$0xff]
  %v4253 = vld [vmem:[%s13 + $0x2b8] sm:$0xff]
  %v4254 = vld [vmem:[%s13 + $0x2c0] sm:$0xff]
  %v4255 = vld [vmem:[%s13 + $0x2c8] sm:$0xff]
  %v4256 = vld [vmem:[%s13 + $0x2d0] sm:$0xff]
  %v4257 = vld [vmem:[%s13 + $0x2d8] sm:$0xff]
  %v4258 = vld [vmem:[%s13 + $0x2e0] sm:$0xff]
  %v4259 = vld [vmem:[%s13 + $0x2e8] sm:$0xff]
  %v4260 = vld [vmem:[%s13 + $0x2f0] sm:$0xff]
  %v4261 = vld [vmem:[%s13 + $0x2f8] sm:$0xff]
  %v4262 = vld [vmem:[%s13 + $0x300] sm:$0xff]
  %v4263 = vld [vmem:[%s13 + $0x308] sm:$0xff]
  %v4264 = vld [vmem:[%s13 + $0x310] sm:$0xff]
  %v4265 = vld [vmem:[%s13 + $0x318] sm:$0xff]
  %v4266 = vld [vmem:[%s13 + $0x320] sm:$0xff]
  %v4267 = vld [vmem:[%s13 + $0x328] sm:$0xff]
  %v4268 = vld [vmem:[%s13 + $0x330] sm:$0xff]
  %v4269 = vld [vmem:[%s13 + $0x338] sm:$0xff]
  %v4270 = vld [vmem:[%s13 + $0x340] sm:$0xff]
  %v4271 = vld [vmem:[%s13 + $0x348] sm:$0xff]
  %v4272 = vld [vmem:[%s13 + $0x350] sm:$0xff]
  %v4273 = vld [vmem:[%s13 + $0x358] sm:$0xff]
  %v4274 = vld [vmem:[%s13 + $0x360] sm:$0xff]
  %v4275 = vld [vmem:[%s13 + $0x368] sm:$0xff]
  %v4276 = vld [vmem:[%s13 + $0x370] sm:$0xff]
  %v4277 = vld [vmem:[%s13 + $0x378] sm:$0xff]
  %v4278 = vld [vmem:[%s13 + $0x380] sm:$0xff]
  %v4279 = vld [vmem:[%s13 + $0x388] sm:$0xff]
  %v4280 = vld [vmem:[%s13 + $0x390] sm:$0xff]
  %v4281 = vld [vmem:[%s13 + $0x398] sm:$0xff]
  %v4282 = vld [vmem:[%s13 + $0x3a0] sm:$0xff]
  %v4283 = vld [vmem:[%s13 + $0x3a8] sm:$0xff]
  %v4284 = vld [vmem:[%s13 + $0x3b0] sm:$0xff]
  %v4285 = vld [vmem:[%s13 + $0x3b8] sm:$0xff]
  %v4286 = vld [vmem:[%s13 + $0x3c0] sm:$0xff]
  %v4287 = vld [vmem:[%s13 + $0x3c8] sm:$0xff]
  %v4288 = vld [vmem:[%s13 + $0x3d0] sm:$0xff]
  %v4289 = vld [vmem:[%s13 + $0x3d8] sm:$0xff]
  %v4290 = vld [vmem:[%s13 + $0x3e0] sm:$0xff]
  %v4291 = vld [vmem:[%s13 + $0x3e8] sm:$0xff]
  %v4292 = vld [vmem:[%s13 + $0x3f0] sm:$0xff]
  %v4293 = vld [vmem:[%s13 + $0x3f8] sm:$0xff]
  %v4422 = vunpack.c.l.b16 %v4166
  %v4423 = vunpack.c.h.b16 %v4166
  %v4424 = vunpack.c.l.b16 %v4167
  %v4425 = vunpack.c.h.b16 %v4167
  %v4426 = vunpack.c.l.b16 %v4168
  %v4427 = vunpack.c.h.b16 %v4168
  %v4428 = vunpack.c.l.b16 %v4169
  %v4429 = vunpack.c.h.b16 %v4169
  %v4430 = vunpack.c.l.b16 %v4170
  %v4431 = vunpack.c.h.b16 %v4170
  %v4432 = vunpack.c.l.b16 %v4171
  %v4433 = vunpack.c.h.b16 %v4171
  %v4434 = vunpack.c.l.b16 %v4172
  %v4435 = vunpack.c.h.b16 %v4172
  %v4436 = vunpack.c.l.b16 %v4173
  %v4437 = vunpack.c.h.b16 %v4173
  %v4438 = vunpack.c.l.b16 %v4174
  %v4439 = vunpack.c.h.b16 %v4174
  %v4440 = vunpack.c.l.b16 %v4175
  %v4441 = vunpack.c.h.b16 %v4175
  %v4442 = vunpack.c.l.b16 %v4176
  %v4443 = vunpack.c.h.b16 %v4176
  %v4444 = vunpack.c.l.b16 %v4177
  %v4445 = vunpack.c.h.b16 %v4177
  %v4446 = vunpack.c.l.b16 %v4178
  %v4447 = vunpack.c.h.b16 %v4178
  %v4448 = vunpack.c.l.b16 %v4179
  %v4449 = vunpack.c.h.b16 %v4179
  %v4450 = vunpack.c.l.b16 %v4180
  %v4451 = vunpack.c.h.b16 %v4180
  %v4452 = vunpack.c.l.b16 %v4181
  %v4453 = vunpack.c.h.b16 %v4181
  %v4454 = vunpack.c.l.b16 %v4182
  %v4455 = vunpack.c.h.b16 %v4182
  %v4456 = vunpack.c.l.b16 %v4183
  %v4457 = vunpack.c.h.b16 %v4183
  %v4458 = vunpack.c.l.b16 %v4184
  %v4459 = vunpack.c.h.b16 %v4184
  %v4460 = vunpack.c.l.b16 %v4185
  %v4461 = vunpack.c.h.b16 %v4185
  %v4462 = vunpack.c.l.b16 %v4186
  %v4463 = vunpack.c.h.b16 %v4186
  %v4464 = vunpack.c.l.b16 %v4187
  %v4465 = vunpack.c.h.b16 %v4187
  %v4466 = vunpack.c.l.b16 %v4188
  %v4467 = vunpack.c.h.b16 %v4188
  %v4468 = vunpack.c.l.b16 %v4189
  %v4469 = vunpack.c.h.b16 %v4189
  %v4470 = vunpack.c.l.b16 %v4190
  %v4471 = vunpack.c.h.b16 %v4190
  %v4472 = vunpack.c.l.b16 %v4191
  %v4473 = vunpack.c.h.b16 %v4191
  %v4474 = vunpack.c.l.b16 %v4192
  %v4475 = vunpack.c.h.b16 %v4192
  %v4476 = vunpack.c.l.b16 %v4193
  %v4477 = vunpack.c.h.b16 %v4193
  %v4478 = vunpack.c.l.b16 %v4194
  %v4479 = vunpack.c.h.b16 %v4194
  %v4480 = vunpack.c.l.b16 %v4195
  %v4481 = vunpack.c.h.b16 %v4195
  %v4482 = vunpack.c.l.b16 %v4196
  %v4483 = vunpack.c.h.b16 %v4196
  %v4484 = vunpack.c.l.b16 %v4197
  %v4485 = vunpack.c.h.b16 %v4197
  %v4486 = vunpack.c.l.b16 %v4198
  %v4487 = vunpack.c.h.b16 %v4198
  %v4488 = vunpack.c.l.b16 %v4199
  %v4489 = vunpack.c.h.b16 %v4199
  %v4490 = vunpack.c.l.b16 %v4200
  %v4491 = vunpack.c.h.b16 %v4200
  %v4492 = vunpack.c.l.b16 %v4201
  %v4493 = vunpack.c.h.b16 %v4201
  %v4494 = vunpack.c.l.b16 %v4202
  %v4495 = vunpack.c.h.b16 %v4202
  %v4496 = vunpack.c.l.b16 %v4203
  %v4497 = vunpack.c.h.b16 %v4203
  %v4498 = vunpack.c.l.b16 %v4204
  %v4499 = vunpack.c.h.b16 %v4204
  %v4500 = vunpack.c.l.b16 %v4205
  %v4501 = vunpack.c.h.b16 %v4205
  %v4502 = vunpack.c.l.b16 %v4206
  %v4503 = vunpack.c.h.b16 %v4206
  %v4504 = vunpack.c.l.b16 %v4207
  %v4505 = vunpack.c.h.b16 %v4207
  %v4506 = vunpack.c.l.b16 %v4208
  %v4507 = vunpack.c.h.b16 %v4208
  %v4508 = vunpack.c.l.b16 %v4209
  %v4509 = vunpack.c.h.b16 %v4209
  %v4510 = vunpack.c.l.b16 %v4210
  %v4511 = vunpack.c.h.b16 %v4210
  %v4512 = vunpack.c.l.b16 %v4211
  %v4513 = vunpack.c.h.b16 %v4211
  %v4514 = vunpack.c.l.b16 %v4212
  %v4515 = vunpack.c.h.b16 %v4212
  %v4516 = vunpack.c.l.b16 %v4213
  %v4517 = vunpack.c.h.b16 %v4213
  %v4518 = vunpack.c.l.b16 %v4214
  %v4519 = vunpack.c.h.b16 %v4214
  %v4520 = vunpack.c.l.b16 %v4215
  %v4521 = vunpack.c.h.b16 %v4215
  %v4522 = vunpack.c.l.b16 %v4216
  %v4523 = vunpack.c.h.b16 %v4216
  %v4524 = vunpack.c.l.b16 %v4217
  %v4525 = vunpack.c.h.b16 %v4217
  %v4526 = vunpack.c.l.b16 %v4218
  %v4527 = vunpack.c.h.b16 %v4218
  %v4528 = vunpack.c.l.b16 %v4219
  %v4529 = vunpack.c.h.b16 %v4219
  %v4530 = vunpack.c.l.b16 %v4220
  %v4531 = vunpack.c.h.b16 %v4220
  %v4532 = vunpack.c.l.b16 %v4221
  %v4533 = vunpack.c.h.b16 %v4221
  %v4534 = vunpack.c.l.b16 %v4222
  %v4535 = vunpack.c.h.b16 %v4222
  %v4536 = vunpack.c.l.b16 %v4223
  %v4537 = vunpack.c.h.b16 %v4223
  %v4538 = vunpack.c.l.b16 %v4224
  %v4539 = vunpack.c.h.b16 %v4224
  %v4540 = vunpack.c.l.b16 %v4225
  %v4541 = vunpack.c.h.b16 %v4225
  %v4542 = vunpack.c.l.b16 %v4226
  %v4543 = vunpack.c.h.b16 %v4226
  %v4544 = vunpack.c.l.b16 %v4227
  %v4545 = vunpack.c.h.b16 %v4227
  %v4546 = vunpack.c.l.b16 %v4228
  %v4547 = vunpack.c.h.b16 %v4228
  %v4548 = vunpack.c.l.b16 %v4229
  %v4549 = vunpack.c.h.b16 %v4229
  %v4550 = vunpack.c.l.b16 %v4230
  %v4551 = vunpack.c.h.b16 %v4230
  %v4552 = vunpack.c.l.b16 %v4231
  %v4553 = vunpack.c.h.b16 %v4231
  %v4554 = vunpack.c.l.b16 %v4232
  %v4555 = vunpack.c.h.b16 %v4232
  %v4556 = vunpack.c.l.b16 %v4233
  %v4557 = vunpack.c.h.b16 %v4233
  %v4558 = vunpack.c.l.b16 %v4234
  %v4559 = vunpack.c.h.b16 %v4234
  %v4560 = vunpack.c.l.b16 %v4235
  %v4561 = vunpack.c.h.b16 %v4235
  %v4562 = vunpack.c.l.b16 %v4236
  %v4563 = vunpack.c.h.b16 %v4236
  %v4564 = vunpack.c.l.b16 %v4237
  %v4565 = vunpack.c.h.b16 %v4237
  %v4566 = vunpack.c.l.b16 %v4238
  %v4567 = vunpack.c.h.b16 %v4238
  %v4568 = vunpack.c.l.b16 %v4239
  %v4569 = vunpack.c.h.b16 %v4239
  %v4570 = vunpack.c.l.b16 %v4240
  %v4571 = vunpack.c.h.b16 %v4240
  %v4572 = vunpack.c.l.b16 %v4241
  %v4573 = vunpack.c.h.b16 %v4241
  %v4574 = vunpack.c.l.b16 %v4242
  %v4575 = vunpack.c.h.b16 %v4242
  %v4576 = vunpack.c.l.b16 %v4243
  %v4577 = vunpack.c.h.b16 %v4243
  %v4578 = vunpack.c.l.b16 %v4244
  %v4579 = vunpack.c.h.b16 %v4244
  %v4580 = vunpack.c.l.b16 %v4245
  %v4581 = vunpack.c.h.b16 %v4245
  %v4582 = vunpack.c.l.b16 %v4246
  %v4583 = vunpack.c.h.b16 %v4246
  %v4584 = vunpack.c.l.b16 %v4247
  %v4585 = vunpack.c.h.b16 %v4247
  %v4586 = vunpack.c.l.b16 %v4248
  %v4587 = vunpack.c.h.b16 %v4248
  %v4588 = vunpack.c.l.b16 %v4249
  %v4589 = vunpack.c.h.b16 %v4249
  %v4590 = vunpack.c.l.b16 %v4250
  %v4591 = vunpack.c.h.b16 %v4250
  %v4592 = vunpack.c.l.b16 %v4251
  %v4593 = vunpack.c.h.b16 %v4251
  %v4594 = vunpack.c.l.b16 %v4252
  %v4595 = vunpack.c.h.b16 %v4252
  %v4596 = vunpack.c.l.b16 %v4253
  %v4597 = vunpack.c.h.b16 %v4253
  %v4598 = vunpack.c.l.b16 %v4254
  %v4599 = vunpack.c.h.b16 %v4254
  %v4600 = vunpack.c.l.b16 %v4255
  %v4601 = vunpack.c.h.b16 %v4255
  %v4602 = vunpack.c.l.b16 %v4256
  %v4603 = vunpack.c.h.b16 %v4256
  %v4604 = vunpack.c.l.b16 %v4257
  %v4605 = vunpack.c.h.b16 %v4257
  %v4606 = vunpack.c.l.b16 %v4258
  %v4607 = vunpack.c.h.b16 %v4258
  %v4608 = vunpack.c.l.b16 %v4259
  %v4609 = vunpack.c.h.b16 %v4259
  %v4610 = vunpack.c.l.b16 %v4260
  %v4611 = vunpack.c.h.b16 %v4260
  %v4612 = vunpack.c.l.b16 %v4261
  %v4613 = vunpack.c.h.b16 %v4261
  %v4614 = vunpack.c.l.b16 %v4262
  %v4615 = vunpack.c.h.b16 %v4262
  %v4616 = vunpack.c.l.b16 %v4263
  %v4617 = vunpack.c.h.b16 %v4263
  %v4618 = vunpack.c.l.b16 %v4264
  %v4619 = vunpack.c.h.b16 %v4264
  %v4620 = vunpack.c.l.b16 %v4265
  %v4621 = vunpack.c.h.b16 %v4265
  %v4622 = vunpack.c.l.b16 %v4266
  %v4623 = vunpack.c.h.b16 %v4266
  %v4624 = vunpack.c.l.b16 %v4267
  %v4625 = vunpack.c.h.b16 %v4267
  %v4626 = vunpack.c.l.b16 %v4268
  %v4627 = vunpack.c.h.b16 %v4268
  %v4628 = vunpack.c.l.b16 %v4269
  %v4629 = vunpack.c.h.b16 %v4269
  %v4630 = vunpack.c.l.b16 %v4270
  %v4631 = vunpack.c.h.b16 %v4270
  %v4632 = vunpack.c.l.b16 %v4271
  %v4633 = vunpack.c.h.b16 %v4271
  %v4634 = vunpack.c.l.b16 %v4272
  %v4635 = vunpack.c.h.b16 %v4272
  %v4636 = vunpack.c.l.b16 %v4273
  %v4637 = vunpack.c.h.b16 %v4273
  %v4638 = vunpack.c.l.b16 %v4274
  %v4639 = vunpack.c.h.b16 %v4274
  %v4640 = vunpack.c.l.b16 %v4275
  %v4641 = vunpack.c.h.b16 %v4275
  %v4642 = vunpack.c.l.b16 %v4276
  %v4643 = vunpack.c.h.b16 %v4276
  %v4644 = vunpack.c.l.b16 %v4277
  %v4645 = vunpack.c.h.b16 %v4277
  %v4646 = vunpack.c.l.b16 %v4278
  %v4647 = vunpack.c.h.b16 %v4278
  %v4648 = vunpack.c.l.b16 %v4279
  %v4649 = vunpack.c.h.b16 %v4279
  %v4650 = vunpack.c.l.b16 %v4280
  %v4651 = vunpack.c.h.b16 %v4280
  %v4652 = vunpack.c.l.b16 %v4281
  %v4653 = vunpack.c.h.b16 %v4281
  %v4654 = vunpack.c.l.b16 %v4282
  %v4655 = vunpack.c.h.b16 %v4282
  %v4656 = vunpack.c.l.b16 %v4283
  %v4657 = vunpack.c.h.b16 %v4283
  %v4658 = vunpack.c.l.b16 %v4284
  %v4659 = vunpack.c.h.b16 %v4284
  %v4660 = vunpack.c.l.b16 %v4285
  %v4661 = vunpack.c.h.b16 %v4285
  %v4662 = vunpack.c.l.b16 %v4286
  %v4663 = vunpack.c.h.b16 %v4286
  %v4664 = vunpack.c.l.b16 %v4287
  %v4665 = vunpack.c.h.b16 %v4287
  %v4666 = vunpack.c.l.b16 %v4288
  %v4667 = vunpack.c.h.b16 %v4288
  %v4668 = vunpack.c.l.b16 %v4289
  %v4669 = vunpack.c.h.b16 %v4289
  %v4670 = vunpack.c.l.b16 %v4290
  %v4671 = vunpack.c.h.b16 %v4290
  %v4672 = vunpack.c.l.b16 %v4291
  %v4673 = vunpack.c.h.b16 %v4291
  %v4674 = vunpack.c.l.b16 %v4292
  %v4675 = vunpack.c.h.b16 %v4292
  %v4676 = vunpack.c.l.b16 %v4293
  %v4677 = vunpack.c.h.b16 %v4293
  %v4678 = vpack.c.b16 %v4430, %v4422
  %v4679 = vpack.c.b16 %v4431, %v4423
  %v4680 = vpack.c.b16 %v4432, %v4424
  %v4681 = vpack.c.b16 %v4433, %v4425
  %v4682 = vpack.c.b16 %v4434, %v4426
  %v4683 = vpack.c.b16 %v4435, %v4427
  %v4684 = vpack.c.b16 %v4436, %v4428
  %v4685 = vpack.c.b16 %v4437, %v4429
  %v4686 = vpack.c.b16 %v4446, %v4438
  %v4687 = vpack.c.b16 %v4447, %v4439
  %v4688 = vpack.c.b16 %v4448, %v4440
  %v4689 = vpack.c.b16 %v4449, %v4441
  %v4690 = vpack.c.b16 %v4450, %v4442
  %v4691 = vpack.c.b16 %v4451, %v4443
  %v4692 = vpack.c.b16 %v4452, %v4444
  %v4693 = vpack.c.b16 %v4453, %v4445
  %v4694 = vpack.c.b16 %v4462, %v4454
  %v4695 = vpack.c.b16 %v4463, %v4455
  %v4696 = vpack.c.b16 %v4464, %v4456
  %v4697 = vpack.c.b16 %v4465, %v4457
  %v4698 = vpack.c.b16 %v4466, %v4458
  %v4699 = vpack.c.b16 %v4467, %v4459
  %v4700 = vpack.c.b16 %v4468, %v4460
  %v4701 = vpack.c.b16 %v4469, %v4461
  %v4702 = vpack.c.b16 %v4478, %v4470
  %v4703 = vpack.c.b16 %v4479, %v4471
  %v4704 = vpack.c.b16 %v4480, %v4472
  %v4705 = vpack.c.b16 %v4481, %v4473
  %v4706 = vpack.c.b16 %v4482, %v4474
  %v4707 = vpack.c.b16 %v4483, %v4475
  %v4708 = vpack.c.b16 %v4484, %v4476
  %v4709 = vpack.c.b16 %v4485, %v4477
  %v4710 = vpack.c.b16 %v4494, %v4486
  %v4711 = vpack.c.b16 %v4495, %v4487
  %v4712 = vpack.c.b16 %v4496, %v4488
  %v4713 = vpack.c.b16 %v4497, %v4489
  %v4714 = vpack.c.b16 %v4498, %v4490
  %v4715 = vpack.c.b16 %v4499, %v4491
  %v4716 = vpack.c.b16 %v4500, %v4492
  %v4717 = vpack.c.b16 %v4501, %v4493
  %v4718 = vpack.c.b16 %v4510, %v4502
  %v4719 = vpack.c.b16 %v4511, %v4503
  %v4720 = vpack.c.b16 %v4512, %v4504
  %v4721 = vpack.c.b16 %v4513, %v4505
  %v4722 = vpack.c.b16 %v4514, %v4506
  %v4723 = vpack.c.b16 %v4515, %v4507
  %v4724 = vpack.c.b16 %v4516, %v4508
  %v4725 = vpack.c.b16 %v4517, %v4509
  %v4726 = vpack.c.b16 %v4526, %v4518
  %v4727 = vpack.c.b16 %v4527, %v4519
  %v4728 = vpack.c.b16 %v4528, %v4520
  %v4729 = vpack.c.b16 %v4529, %v4521
  %v4730 = vpack.c.b16 %v4530, %v4522
  %v4731 = vpack.c.b16 %v4531, %v4523
  %v4732 = vpack.c.b16 %v4532, %v4524
  %v4733 = vpack.c.b16 %v4533, %v4525
  %v4734 = vpack.c.b16 %v4542, %v4534
  %v4735 = vpack.c.b16 %v4543, %v4535
  %v4736 = vpack.c.b16 %v4544, %v4536
  %v4737 = vpack.c.b16 %v4545, %v4537
  %v4738 = vpack.c.b16 %v4546, %v4538
  %v4739 = vpack.c.b16 %v4547, %v4539
  %v4740 = vpack.c.b16 %v4548, %v4540
  %v4741 = vpack.c.b16 %v4549, %v4541
  %v4742 = vpack.c.b16 %v4558, %v4550
  %v4743 = vpack.c.b16 %v4559, %v4551
  %v4744 = vpack.c.b16 %v4560, %v4552
  %v4745 = vpack.c.b16 %v4561, %v4553
  %v4746 = vpack.c.b16 %v4562, %v4554
  %v4747 = vpack.c.b16 %v4563, %v4555
  %v4748 = vpack.c.b16 %v4564, %v4556
  %v4749 = vpack.c.b16 %v4565, %v4557
  %v4750 = vpack.c.b16 %v4574, %v4566
  %v4751 = vpack.c.b16 %v4575, %v4567
  %v4752 = vpack.c.b16 %v4576, %v4568
  %v4753 = vpack.c.b16 %v4577, %v4569
  %v4754 = vpack.c.b16 %v4578, %v4570
  %v4755 = vpack.c.b16 %v4579, %v4571
  %v4756 = vpack.c.b16 %v4580, %v4572
  %v4757 = vpack.c.b16 %v4581, %v4573
  %v4758 = vpack.c.b16 %v4590, %v4582
  %v4759 = vpack.c.b16 %v4591, %v4583
  %v4760 = vpack.c.b16 %v4592, %v4584
  %v4761 = vpack.c.b16 %v4593, %v4585
  %v4762 = vpack.c.b16 %v4594, %v4586
  %v4763 = vpack.c.b16 %v4595, %v4587
  %v4764 = vpack.c.b16 %v4596, %v4588
  %v4765 = vpack.c.b16 %v4597, %v4589
  %v4766 = vpack.c.b16 %v4606, %v4598
  %v4767 = vpack.c.b16 %v4607, %v4599
  %v4768 = vpack.c.b16 %v4608, %v4600
  %v4769 = vpack.c.b16 %v4609, %v4601
  %v4770 = vpack.c.b16 %v4610, %v4602
  %v4771 = vpack.c.b16 %v4611, %v4603
  %v4772 = vpack.c.b16 %v4612, %v4604
  %v4773 = vpack.c.b16 %v4613, %v4605
  %v4774 = vpack.c.b16 %v4622, %v4614
  %v4775 = vpack.c.b16 %v4623, %v4615
  %v4776 = vpack.c.b16 %v4624, %v4616
  %v4777 = vpack.c.b16 %v4625, %v4617
  %v4778 = vpack.c.b16 %v4626, %v4618
  %v4779 = vpack.c.b16 %v4627, %v4619
  %v4780 = vpack.c.b16 %v4628, %v4620
  %v4781 = vpack.c.b16 %v4629, %v4621
  %v4782 = vpack.c.b16 %v4638, %v4630
  %v4783 = vpack.c.b16 %v4639, %v4631
  %v4784 = vpack.c.b16 %v4640, %v4632
  %v4785 = vpack.c.b16 %v4641, %v4633
  %v4786 = vpack.c.b16 %v4642, %v4634
  %v4787 = vpack.c.b16 %v4643, %v4635
  %v4788 = vpack.c.b16 %v4644, %v4636
  %v4789 = vpack.c.b16 %v4645, %v4637
  %v4790 = vpack.c.b16 %v4654, %v4646
  %v4791 = vpack.c.b16 %v4655, %v4647
  %v4792 = vpack.c.b16 %v4656, %v4648
  %v4793 = vpack.c.b16 %v4657, %v4649
  %v4794 = vpack.c.b16 %v4658, %v4650
  %v4795 = vpack.c.b16 %v4659, %v4651
  %v4796 = vpack.c.b16 %v4660, %v4652
  %v4797 = vpack.c.b16 %v4661, %v4653
  %v4798 = vpack.c.b16 %v4670, %v4662
  %v4799 = vpack.c.b16 %v4671, %v4663
  %v4800 = vpack.c.b16 %v4672, %v4664
  %v4801 = vpack.c.b16 %v4673, %v4665
  %v4802 = vpack.c.b16 %v4674, %v4666
  %v4803 = vpack.c.b16 %v4675, %v4667
  %v4804 = vpack.c.b16 %v4676, %v4668
  %v4805 = vpack.c.b16 %v4677, %v4669
  %4934 = vmatprep.subr.bf16.mxu0 %v4679
  %4935 = vmatpush1.bf16.msra.mxu0 %v4678
  %4936 = vmatprep.subr.bf16.mxu0 %v4687
  %4937 = vmatpush1.bf16.msra.mxu0 %v4686
  %4938 = vmatprep.subr.bf16.mxu0 %v4695
  %4939 = vmatpush1.bf16.msra.mxu0 %v4694
  %4940 = vmatprep.subr.bf16.mxu0 %v4703
  %4941 = vmatpush1.bf16.msra.mxu0 %v4702
  %4942 = vmatprep.subr.bf16.mxu0 %v4711
  %4943 = vmatpush1.bf16.msra.mxu0 %v4710
  %4944 = vmatprep.subr.bf16.mxu0 %v4719
  %4945 = vmatpush1.bf16.msra.mxu0 %v4718
  %4946 = vmatprep.subr.bf16.mxu0 %v4727
  %4947 = vmatpush1.bf16.msra.mxu0 %v4726
  %4948 = vmatprep.subr.bf16.mxu0 %v4735
  %4949 = vmatpush1.bf16.msra.mxu0 %v4734
  %4950 = vmatprep.subr.bf16.mxu0 %v4743
  %4951 = vmatpush1.bf16.msra.mxu0 %v4742
  %4952 = vmatprep.subr.bf16.mxu0 %v4751
  %4953 = vmatpush1.bf16.msra.mxu0 %v4750
  %4954 = vmatprep.subr.bf16.mxu0 %v4759
  %4955 = vmatpush1.bf16.msra.mxu0 %v4758
  %4956 = vmatprep.subr.bf16.mxu0 %v4767
  %4957 = vmatpush1.bf16.msra.mxu0 %v4766
  %4958 = vmatprep.subr.bf16.mxu0 %v4775
  %4959 = vmatpush1.bf16.msra.mxu0 %v4774
  %4960 = vmatprep.subr.bf16.mxu0 %v4783
  %4961 = vmatpush1.bf16.msra.mxu0 %v4782
  %4962 = vmatprep.subr.bf16.mxu0 %v4791
  %4963 = vmatpush1.bf16.msra.mxu0 %v4790
  %4964 = vmatprep.subr.bf16.mxu0 %v4799
  %4965 = vmatpush1.bf16.msra.mxu0 %v4798
  %4966 = vmatprep.mubr.bf16.mxu0 %v4163
  %4967 = vmatmul.mubr.bf16.gmra.mrb[0].mxu0 %v4162
  %v4968 = vpop.f32.mrb[0].mxu0
  %v4969 = vadd.f32 0.0, %v4968
  %v4970 = vpop.f32.mrb[0].mxu0
  %v4971 = vadd.f32 0.0, %v4970
  %v4972 = vpop.f32.mrb[0].mxu0
  %v4973 = vadd.f32 0.0, %v4972
  %v4974 = vpop.f32.mrb[0].mxu0
  %v4975 = vadd.f32 0.0, %v4974
  %4976 = vmatprep.mubr.bf16.mxu0 %v4165
  %4977 = vmatmul.mubr.bf16.gmra.mrb[0].mxu0 %v4164
  %v4978 = vpop.f32.mrb[0].mxu0
  %v4979 = vadd.f32 0.0, %v4978
  %v4980 = vpop.f32.mrb[0].mxu0
  %v4981 = vadd.f32 0.0, %v4980
  %v4982 = vpop.f32.mrb[0].mxu0
  %v4983 = vadd.f32 0.0, %v4982
  %v4984 = vpop.f32.mrb[0].mxu0
  %v4985 = vadd.f32 0.0, %v4984
  %4986 = vdwg.mxu0
  %4987 = vmatprep.subr.bf16.mxu0 %v4681
  %4988 = vmatpush1.bf16.msra.mxu0 %v4680
  %4989 = vmatprep.subr.bf16.mxu0 %v4689
  %4990 = vmatpush1.bf16.msra.mxu0 %v4688
  %4991 = vmatprep.subr.bf16.mxu0 %v4697
  %4992 = vmatpush1.bf16.msra.mxu0 %v4696
  %4993 = vmatprep.subr.bf16.mxu0 %v4705
  %4994 = vmatpush1.bf16.msra.mxu0 %v4704
  %4995 = vmatprep.subr.bf16.mxu0 %v4713
  %4996 = vmatpush1.bf16.msra.mxu0 %v4712
  %4997 = vmatprep.subr.bf16.mxu0 %v4721
  %4998 = vmatpush1.bf16.msra.mxu0 %v4720
  %4999 = vmatprep.subr.bf16.mxu0 %v4729
  %5000 = vmatpush1.bf16.msra.mxu0 %v4728
  %5001 = vmatprep.subr.bf16.mxu0 %v4737
  %5002 = vmatpush1.bf16.msra.mxu0 %v4736
  %5003 = vmatprep.subr.bf16.mxu0 %v4745
  %5004 = vmatpush1.bf16.msra.mxu0 %v4744
  %5005 = vmatprep.subr.bf16.mxu0 %v4753
  %5006 = vmatpush1.bf16.msra.mxu0 %v4752
  %5007 = vmatprep.subr.bf16.mxu0 %v4761
  %5008 = vmatpush1.bf16.msra.mxu0 %v4760
  %5009 = vmatprep.subr.bf16.mxu0 %v4769
  %5010 = vmatpush1.bf16.msra.mxu0 %v4768
  %5011 = vmatprep.subr.bf16.mxu0 %v4777
  %5012 = vmatpush1.bf16.msra.mxu0 %v4776
  %5013 = vmatprep.subr.bf16.mxu0 %v4785
  %5014 = vmatpush1.bf16.msra.mxu0 %v4784
  %5015 = vmatprep.subr.bf16.mxu0 %v4793
  %5016 = vmatpush1.bf16.msra.mxu0 %v4792
  %5017 = vmatprep.subr.bf16.mxu0 %v4801
  %5018 = vmatpush1.bf16.msra.mxu0 %v4800
  %5019 = vmatprep.mubr.bf16.mxu0 %v4163
  %5020 = vmatmul.mubr.bf16.gmra.mrb[0].mxu0 %v4162
  %v5021 = vpop.f32.mrb[0].mxu0
  %v5022 = vadd.f32 0.0, %v5021
  %v5023 = vpop.f32.mrb[0].mxu0
  %v5024 = vadd.f32 0.0, %v5023
  %v5025 = vpop.f32.mrb[0].mxu0
  %v5026 = vadd.f32 0.0, %v5025
  %v5027 = vpop.f32.mrb[0].mxu0
  %v5028 = vadd.f32 0.0, %v5027
  %5029 = vmatprep.mubr.bf16.mxu0 %v4165
  %5030 = vmatmul.mubr.bf16.gmra.mrb[0].mxu0 %v4164
  %v5031 = vpop.f32.mrb[0].mxu0
  %v5032 = vadd.f32 0.0, %v5031
  %v5033 = vpop.f32.mrb[0].mxu0
  %v5034 = vadd.f32 0.0, %v5033
  %v5035 = vpop.f32.mrb[0].mxu0
  %v5036 = vadd.f32 0.0, %v5035
  %v5037 = vpop.f32.mrb[0].mxu0
  %v5038 = vadd.f32 0.0, %v5037
  %5039 = vdwg.mxu0
  %5040 = vmatprep.subr.bf16.mxu0 %v4683
  %5041 = vmatpush1.bf16.msra.mxu0 %v4682
  %5042 = vmatprep.subr.bf16.mxu0 %v4691
  %5043 = vmatpush1.bf16.msra.mxu0 %v4690
  %5044 = vmatprep.subr.bf16.mxu0 %v4699
  %5045 = vmatpush1.bf16.msra.mxu0 %v4698
  %5046 = vmatprep.subr.bf16.mxu0 %v4707
  %5047 = vmatpush1.bf16.msra.mxu0 %v4706
  %5048 = vmatprep.subr.bf16.mxu0 %v4715
  %5049 = vmatpush1.bf16.msra.mxu0 %v4714
  %5050 = vmatprep.subr.bf16.mxu0 %v4723
  %5051 = vmatpush1.bf16.msra.mxu0 %v4722
  %5052 = vmatprep.subr.bf16.mxu0 %v4731
  %5053 = vmatpush1.bf16.msra.mxu0 %v4730
  %5054 = vmatprep.subr.bf16.mxu0 %v4739
  %5055 = vmatpush1.bf16.msra.mxu0 %v4738
  %5056 = vmatprep.subr.bf16.mxu0 %v4747
  %5057 = vmatpush1.bf16.msra.mxu0 %v4746
  %5058 = vmatprep.subr.bf16.mxu0 %v4755
  %5059 = vmatpush1.bf16.msra.mxu0 %v4754
  %5060 = vmatprep.subr.bf16.mxu0 %v4763
  %5061 = vmatpush1.bf16.msra.mxu0 %v4762
  %5062 = vmatprep.subr.bf16.mxu0 %v4771
  %5063 = vmatpush1.bf16.msra.mxu0 %v4770
  %5064 = vmatprep.subr.bf16.mxu0 %v4779
  %5065 = vmatpush1.bf16.msra.mxu0 %v4778
  %5066 = vmatprep.subr.bf16.mxu0 %v4787
  %5067 = vmatpush1.bf16.msra.mxu0 %v4786
  %5068 = vmatprep.subr.bf16.mxu0 %v4795
  %5069 = vmatpush1.bf16.msra.mxu0 %v4794
  %5070 = vmatprep.subr.bf16.mxu0 %v4803
  %5071 = vmatpush1.bf16.msra.mxu0 %v4802
  %5072 = vmatprep.mubr.bf16.mxu0 %v4163
  %5073 = vmatmul.mubr.bf16.gmra.mrb[0].mxu0 %v4162
  %v5074 = vpop.f32.mrb[0].mxu0
  %v5075 = vadd.f32 0.0, %v5074
  %v5076 = vpop.f32.mrb[0].mxu0
  %v5077 = vadd.f32 0.0, %v5076
  %v5078 = vpop.f32.mrb[0].mxu0
  %v5079 = vadd.f32 0.0, %v5078
  %v5080 = vpop.f32.mrb[0].mxu0
  %v5081 = vadd.f32 0.0, %v5080
  %5082 = vmatprep.mubr.bf16.mxu0 %v4165
  %5083 = vmatmul.mubr.bf16.gmra.mrb[0].mxu0 %v4164
  %v5084 = vpop.f32.mrb[0].mxu0
  %v5085 = vadd.f32 0.0, %v5084
  %v5086 = vpop.f32.mrb[0].mxu0
  %v5087 = vadd.f32 0.0, %v5086
  %v5088 = vpop.f32.mrb[0].mxu0
  %v5089 = vadd.f32 0.0, %v5088
  %v5090 = vpop.f32.mrb[0].mxu0
  %v5091 = vadd.f32 0.0, %v5090
  %5092 = vdwg.mxu0
  %5093 = vmatprep.subr.bf16.mxu0 %v4685
  %5094 = vmatpush1.bf16.msra.mxu0 %v4684
  %5095 = vmatprep.subr.bf16.mxu0 %v4693
  %5096 = vmatpush1.bf16.msra.mxu0 %v4692
  %5097 = vmatprep.subr.bf16.mxu0 %v4701
  %5098 = vmatpush1.bf16.msra.mxu0 %v4700
  %5099 = vmatprep.subr.bf16.mxu0 %v4709
  %5100 = vmatpush1.bf16.msra.mxu0 %v4708
  %5101 = vmatprep.subr.bf16.mxu0 %v4717
  %5102 = vmatpush1.bf16.msra.mxu0 %v4716
  %5103 = vmatprep.subr.bf16.mxu0 %v4725
  %5104 = vmatpush1.bf16.msra.mxu0 %v4724
  %5105 = vmatprep.subr.bf16.mxu0 %v4733
  %5106 = vmatpush1.bf16.msra.mxu0 %v4732
  %5107 = vmatprep.subr.bf16.mxu0 %v4741
  %5108 = vmatpush1.bf16.msra.mxu0 %v4740
  %5109 = vmatprep.subr.bf16.mxu0 %v4749
  %5110 = vmatpush1.bf16.msra.mxu0 %v4748
  %5111 = vmatprep.subr.bf16.mxu0 %v4757
  %5112 = vmatpush1.bf16.msra.mxu0 %v4756
  %5113 = vmatprep.subr.bf16.mxu0 %v4765
  %5114 = vmatpush1.bf16.msra.mxu0 %v4764
  %5115 = vmatprep.subr.bf16.mxu0 %v4773
  %5116 = vmatpush1.bf16.msra.mxu0 %v4772
  %5117 = vmatprep.subr.bf16.mxu0 %v4781
  %5118 = vmatpush1.bf16.msra.mxu0 %v4780
  %5119 = vmatprep.subr.bf16.mxu0 %v4789
  %5120 = vmatpush1.bf16.msra.mxu0 %v4788
  %5121 = vmatprep.subr.bf16.mxu0 %v4797
  %5122 = vmatpush1.bf16.msra.mxu0 %v4796
  %5123 = vmatprep.subr.bf16.mxu0 %v4805
  %5124 = vmatpush1.bf16.msra.mxu0 %v4804
  %5125 = vmatprep.mubr.bf16.mxu0 %v4163
  %5126 = vmatmul.mubr.bf16.gmra.mrb[0].mxu0 %v4162
  %v5127 = vpop.f32.mrb[0].mxu0
  %v5128 = vadd.f32 0.0, %v5127
  %v5129 = vpop.f32.mrb[0].mxu0
  %v5130 = vadd.f32 0.0, %v5129
  %v5131 = vpop.f32.mrb[0].mxu0
  %v5132 = vadd.f32 0.0, %v5131
  %v5133 = vpop.f32.mrb[0].mxu0
  %v5134 = vadd.f32 0.0, %v5133
  %5135 = vmatprep.mubr.bf16.mxu0 %v4165
  %5136 = vmatmul.mubr.bf16.gmra.mrb[0].mxu0 %v4164
  %v5137 = vpop.f32.mrb[0].mxu0
  %v5138 = vadd.f32 0.0, %v5137
  %v5139 = vpop.f32.mrb[0].mxu0
  %v5140 = vadd.f32 0.0, %v5139
  %v5141 = vpop.f32.mrb[0].mxu0
  %v5142 = vadd.f32 0.0, %v5141
  %v5143 = vpop.f32.mrb[0].mxu0
  %v5144 = vadd.f32 0.0, %v5143
  %5145 = vdwg.mxu0
  %v5146 = vpack.c.bf16 %v4973, %v4969
  %v5147 = vpack.c.bf16 %v4975, %v4971
  %v5148 = vpack.c.bf16 %v5026, %v5022
  %v5149 = vpack.c.bf16 %v5028, %v5024
  %v5150 = vpack.c.bf16 %v5079, %v5075
  %v5151 = vpack.c.bf16 %v5081, %v5077
  %v5152 = vpack.c.bf16 %v5132, %v5128
  %v5153 = vpack.c.bf16 %v5134, %v5130
  %v5154 = vpack.c.bf16 %v4983, %v4979
  %v5155 = vpack.c.bf16 %v4985, %v4981
  %v5156 = vpack.c.bf16 %v5036, %v5032
  %v5157 = vpack.c.bf16 %v5038, %v5034
  %v5158 = vpack.c.bf16 %v5089, %v5085
  %v5159 = vpack.c.bf16 %v5091, %v5087
  %v5160 = vpack.c.bf16 %v5142, %v5138
  %v5161 = vpack.c.bf16 %v5144, %v5140
  %v5162 = vld [vmem:[%s14] sm:$0xf]
  %v5163 = vld [vmem:[%s14 + $0x4] sm:$0xf]
  %v5164 = vld [vmem:[%s14 + $0x8] sm:$0xf]
  %v5165 = vld [vmem:[%s14 + $0xc] sm:$0xf]
  %v5166 = vld [vmem:[%s14 + $0x10] sm:$0xf]
  %v5167 = vld [vmem:[%s14 + $0x14] sm:$0xf]
  %v5168 = vld [vmem:[%s14 + $0x18] sm:$0xf]
  %v5169 = vld [vmem:[%s14 + $0x1c] sm:$0xf]
  %s5170 = scalar_lea.vmem %s14, 32
  %v5171 = vld [vmem:[%s5170] sm:$0xf]
  %v5172 = vld [vmem:[%s5170 + $0x4] sm:$0xf]
  %v5173 = vld [vmem:[%s5170 + $0x8] sm:$0xf]
  %v5174 = vld [vmem:[%s5170 + $0xc] sm:$0xf]
  %v5175 = vld [vmem:[%s5170 + $0x10] sm:$0xf]
  %v5176 = vld [vmem:[%s5170 + $0x14] sm:$0xf]
  %v5177 = vld [vmem:[%s5170 + $0x18] sm:$0xf]
  %v5178 = vld [vmem:[%s5170 + $0x1c] sm:$0xf]
  %v5187 = vunpack.c.l.b16 %v5171
  %v5188 = vunpack.c.l.b16 %v5172
  %v5189 = vunpack.c.l.b16 %v5173
  %v5190 = vunpack.c.l.b16 %v5174
  %v5191 = vunpack.c.l.b16 %v5175
  %v5192 = vunpack.c.l.b16 %v5176
  %v5193 = vunpack.c.l.b16 %v5177
  %v5194 = vunpack.c.l.b16 %v5178
  %v5195 = vpack.c.b16 %v5188, %v5187
  %v5196 = vpack.c.b16 %v5190, %v5189
  %v5197 = vpack.c.b16 %v5192, %v5191
  %v5198 = vpack.c.b16 %v5194, %v5193
  %v5200 = vsel %vm2307, %v5195, 0
  %v5203 = vsel %vm2307, %v5196, 0
  %v5206 = vsel %vm2307, %v5197, 0
  %v5209 = vsel %vm2307, %v5198, 0
  %5211 = vmatprep.subr.bf16.mxu0 %v5149
  %5212 = vmatpush1.bf16.msra.mxu0 %v5148
  %5213 = vmatprep.subr.bf16.mxu0 %v5157
  %5214 = vmatpush1.bf16.msra.mxu0 %v5156
  %5215 = vmatprep.subr.bf16.mxu0 0
  %5216 = vmatpush1.bf16.msra.mxu0 0
  %5217 = vmatprep.subr.bf16.mxu0 0
  %5218 = vmatpush1.bf16.msra.mxu0 0
  %5219 = vmatprep.subr.bf16.mxu0 0
  %5220 = vmatpush1.bf16.msra.mxu0 0
  %5221 = vmatprep.subr.bf16.mxu0 0
  %5222 = vmatpush1.bf16.msra.mxu0 0
  %5223 = vmatprep.subr.bf16.mxu0 0
  %5224 = vmatpush1.bf16.msra.mxu0 0
  %5225 = vmatprep.subr.bf16.mxu0 0
  %5226 = vmatpush1.bf16.msra.mxu0 0
  %5227 = vmatprep.subr.bf16.mxu0 0
  %5228 = vmatpush1.bf16.msra.mxu0 0
  %5229 = vmatprep.subr.bf16.mxu0 0
  %5230 = vmatpush1.bf16.msra.mxu0 0
  %5231 = vmatprep.subr.bf16.mxu0 0
  %5232 = vmatpush1.bf16.msra.mxu0 0
  %5233 = vmatprep.subr.bf16.mxu0 0
  %5234 = vmatpush1.bf16.msra.mxu0 0
  %5235 = vmatprep.subr.bf16.mxu0 0
  %5236 = vmatpush1.bf16.msra.mxu0 0
  %5237 = vmatprep.subr.bf16.mxu0 0
  %5238 = vmatpush1.bf16.msra.mxu0 0
  %5239 = vmatprep.subr.bf16.mxu0 0
  %5240 = vmatpush1.bf16.msra.mxu0 0
  %5241 = vmatprep.subr.bf16.mxu0 0
  %5242 = vmatpush1.bf16.msra.mxu0 0
  %5243 = vmatprep.mubr.bf16.mxu0 0
  %5244 = vmatmul.mubr.bf16.gmra.mrb[0].mxu0 %v5200
  %v5245 = vpop.f32.mrb[0].mxu0
  %v5246 = vadd.f32 0.0, %v5245
  %v5247 = vpop.f32.mrb[0].mxu0
  %v5248 = vadd.f32 0.0, %v5247
  %v5249 = vpop.f32.mrb[0].mxu0
  %v5250 = vadd.f32 0.0, %v5249
  %v5251 = vpop.f32.mrb[0].mxu0
  %v5252 = vadd.f32 0.0, %v5251
  %5253 = vmatprep.mubr.bf16.mxu0 0
  %5254 = vmatmul.mubr.bf16.gmra.mrb[0].mxu0 %v5203
  %v5255 = vpop.f32.mrb[0].mxu0
  %v5256 = vadd.f32 0.0, %v5255
  %v5257 = vpop.f32.mrb[0].mxu0
  %v5258 = vadd.f32 0.0, %v5257
  %v5259 = vpop.f32.mrb[0].mxu0
  %v5260 = vadd.f32 0.0, %v5259
  %v5261 = vpop.f32.mrb[0].mxu0
  %v5262 = vadd.f32 0.0, %v5261
  %5263 = vmatprep.mubr.bf16.mxu0 0
  %5264 = vmatmul.mubr.bf16.gmra.mrb[0].mxu0 %v5206
  %v5265 = vpop.f32.mrb[0].mxu0
  %v5266 = vadd.f32 0.0, %v5265
  %v5267 = vpop.f32.mrb[0].mxu0
  %v5268 = vadd.f32 0.0, %v5267
  %v5269 = vpop.f32.mrb[0].mxu0
  %v5270 = vadd.f32 0.0, %v5269
  %v5271 = vpop.f32.mrb[0].mxu0
  %v5272 = vadd.f32 0.0, %v5271
  %5273 = vmatprep.mubr.bf16.mxu0 0
  %5274 = vmatmul.mubr.bf16.gmra.mrb[0].mxu0 %v5209
  %v5275 = vpop.f32.mrb[0].mxu0
  %v5276 = vadd.f32 0.0, %v5275
  %v5277 = vpop.f32.mrb[0].mxu0
  %v5278 = vadd.f32 0.0, %v5277
  %v5279 = vpop.f32.mrb[0].mxu0
  %v5280 = vadd.f32 0.0, %v5279
  %v5281 = vpop.f32.mrb[0].mxu0
  %v5282 = vadd.f32 0.0, %v5281
  %5283 = vdwg.mxu0
  %v5292 = vunpack.c.l.b16 %v5162
  %v5293 = vunpack.c.l.b16 %v5163
  %v5294 = vunpack.c.l.b16 %v5164
  %v5295 = vunpack.c.l.b16 %v5165
  %v5296 = vunpack.c.l.b16 %v5166
  %v5297 = vunpack.c.l.b16 %v5167
  %v5298 = vunpack.c.l.b16 %v5168
  %v5299 = vunpack.c.l.b16 %v5169
  %v5300 = vpack.c.b16 %v5293, %v5292
  %v5301 = vpack.c.b16 %v5295, %v5294
  %v5302 = vpack.c.b16 %v5297, %v5296
  %v5303 = vpack.c.b16 %v5299, %v5298
  %v5305 = vsel %vm2307, %v5300, 0
  %v5308 = vsel %vm2307, %v5301, 0
  %v5311 = vsel %vm2307, %v5302, 0
  %v5314 = vsel %vm2307, %v5303, 0
  %5316 = vmatprep.subr.bf16.mxu0 %v5147
  %5317 = vmatpush1.bf16.msra.mxu0 %v5146
  %5318 = vmatprep.subr.bf16.mxu0 %v5155
  %5319 = vmatpush1.bf16.msra.mxu0 %v5154
  %5320 = vmatprep.subr.bf16.mxu0 0
  %5321 = vmatpush1.bf16.msra.mxu0 0
  %5322 = vmatprep.subr.bf16.mxu0 0
  %5323 = vmatpush1.bf16.msra.mxu0 0
  %5324 = vmatprep.subr.bf16.mxu0 0
  %5325 = vmatpush1.bf16.msra.mxu0 0
  %5326 = vmatprep.subr.bf16.mxu0 0
  %5327 = vmatpush1.bf16.msra.mxu0 0
  %5328 = vmatprep.subr.bf16.mxu0 0
  %5329 = vmatpush1.bf16.msra.mxu0 0
  %5330 = vmatprep.subr.bf16.mxu0 0
  %5331 = vmatpush1.bf16.msra.mxu0 0
  %5332 = vmatprep.subr.bf16.mxu0 0
  %5333 = vmatpush1.bf16.msra.mxu0 0
  %5334 = vmatprep.subr.bf16.mxu0 0
  %5335 = vmatpush1.bf16.msra.mxu0 0
  %5336 = vmatprep.subr.bf16.mxu0 0
  %5337 = vmatpush1.bf16.msra.mxu0 0
  %5338 = vmatprep.subr.bf16.mxu0 0
  %5339 = vmatpush1.bf16.msra.mxu0 0
  %5340 = vmatprep.subr.bf16.mxu0 0
  %5341 = vmatpush1.bf16.msra.mxu0 0
  %5342 = vmatprep.subr.bf16.mxu0 0
  %5343 = vmatpush1.bf16.msra.mxu0 0
  %5344 = vmatprep.subr.bf16.mxu0 0
  %5345 = vmatpush1.bf16.msra.mxu0 0
  %5346 = vmatprep.subr.bf16.mxu0 0
  %5347 = vmatpush1.bf16.msra.mxu0 0
  %5348 = vmatprep.mubr.bf16.mxu0 0
  %5349 = vmatmul.mubr.bf16.gmra.mrb[0].mxu0 %v5305
  %v5350 = vpop.f32.mrb[0].mxu0
  %v5351 = vadd.f32 %v5246, %v5350
  %v5352 = vpop.f32.mrb[0].mxu0
  %v5353 = vadd.f32 %v5248, %v5352
  %v5354 = vpop.f32.mrb[0].mxu0
  %v5355 = vadd.f32 %v5250, %v5354
  %v5356 = vpop.f32.mrb[0].mxu0
  %v5357 = vadd.f32 %v5252, %v5356
  %5358 = vmatprep.mubr.bf16.mxu0 0
  %5359 = vmatmul.mubr.bf16.gmra.mrb[0].mxu0 %v5308
  %v5360 = vpop.f32.mrb[0].mxu0
  %v5361 = vadd.f32 %v5256, %v5360
  %v5362 = vpop.f32.mrb[0].mxu0
  %v5363 = vadd.f32 %v5258, %v5362
  %v5364 = vpop.f32.mrb[0].mxu0
  %v5365 = vadd.f32 %v5260, %v5364
  %v5366 = vpop.f32.mrb[0].mxu0
  %v5367 = vadd.f32 %v5262, %v5366
  %5368 = vmatprep.mubr.bf16.mxu0 0
  %5369 = vmatmul.mubr.bf16.gmra.mrb[0].mxu0 %v5311
  %v5370 = vpop.f32.mrb[0].mxu0
  %v5371 = vadd.f32 %v5266, %v5370
  %v5372 = vpop.f32.mrb[0].mxu0
  %v5373 = vadd.f32 %v5268, %v5372
  %v5374 = vpop.f32.mrb[0].mxu0
  %v5375 = vadd.f32 %v5270, %v5374
  %v5376 = vpop.f32.mrb[0].mxu0
  %v5377 = vadd.f32 %v5272, %v5376
  %5378 = vmatprep.mubr.bf16.mxu0 0
  %5379 = vmatmul.mubr.bf16.gmra.mrb[0].mxu0 %v5314
  %v5380 = vpop.f32.mrb[0].mxu0
  %v5381 = vadd.f32 %v5276, %v5380
  %v5382 = vpop.f32.mrb[0].mxu0
  %v5383 = vadd.f32 %v5278, %v5382
  %v5384 = vpop.f32.mrb[0].mxu0
  %v5385 = vadd.f32 %v5280, %v5384
  %v5386 = vpop.f32.mrb[0].mxu0
  %v5387 = vadd.f32 %v5282, %v5386
  %5388 = vdwg.mxu0
  %s5389 = scalar_lea.vmem %s14, 64
  %v5390 = vld [vmem:[%s5389] sm:$0xf]
  %v5391 = vld [vmem:[%s5389 + $0x4] sm:$0xf]
  %v5392 = vld [vmem:[%s5389 + $0x8] sm:$0xf]
  %v5393 = vld [vmem:[%s5389 + $0xc] sm:$0xf]
  %v5394 = vld [vmem:[%s5389 + $0x10] sm:$0xf]
  %v5395 = vld [vmem:[%s5389 + $0x14] sm:$0xf]
  %v5396 = vld [vmem:[%s5389 + $0x18] sm:$0xf]
  %v5397 = vld [vmem:[%s5389 + $0x1c] sm:$0xf]
  %v5406 = vunpack.c.l.b16 %v5390
  %v5407 = vunpack.c.l.b16 %v5391
  %v5408 = vunpack.c.l.b16 %v5392
  %v5409 = vunpack.c.l.b16 %v5393
  %v5410 = vunpack.c.l.b16 %v5394
  %v5411 = vunpack.c.l.b16 %v5395
  %v5412 = vunpack.c.l.b16 %v5396
  %v5413 = vunpack.c.l.b16 %v5397
  %v5414 = vpack.c.b16 %v5407, %v5406
  %v5415 = vpack.c.b16 %v5409, %v5408
  %v5416 = vpack.c.b16 %v5411, %v5410
  %v5417 = vpack.c.b16 %v5413, %v5412
  %v5419 = vsel %vm2307, %v5414, 0
  %v5422 = vsel %vm2307, %v5415, 0
  %v5425 = vsel %vm2307, %v5416, 0
  %v5428 = vsel %vm2307, %v5417, 0
  %5430 = vmatprep.subr.bf16.mxu0 %v5151
  %5431 = vmatpush1.bf16.msra.mxu0 %v5150
  %5432 = vmatprep.subr.bf16.mxu0 %v5159
  %5433 = vmatpush1.bf16.msra.mxu0 %v5158
  %5434 = vmatprep.subr.bf16.mxu0 0
  %5435 = vmatpush1.bf16.msra.mxu0 0
  %5436 = vmatprep.subr.bf16.mxu0 0
  %5437 = vmatpush1.bf16.msra.mxu0 0
  %5438 = vmatprep.subr.bf16.mxu0 0
  %5439 = vmatpush1.bf16.msra.mxu0 0
  %5440 = vmatprep.subr.bf16.mxu0 0
  %5441 = vmatpush1.bf16.msra.mxu0 0
  %5442 = vmatprep.subr.bf16.mxu0 0
  %5443 = vmatpush1.bf16.msra.mxu0 0
  %5444 = vmatprep.subr.bf16.mxu0 0
  %5445 = vmatpush1.bf16.msra.mxu0 0
  %5446 = vmatprep.subr.bf16.mxu0 0
  %5447 = vmatpush1.bf16.msra.mxu0 0
  %5448 = vmatprep.subr.bf16.mxu0 0
  %5449 = vmatpush1.bf16.msra.mxu0 0
  %5450 = vmatprep.subr.bf16.mxu0 0
  %5451 = vmatpush1.bf16.msra.mxu0 0
  %5452 = vmatprep.subr.bf16.mxu0 0
  %5453 = vmatpush1.bf16.msra.mxu0 0
  %5454 = vmatprep.subr.bf16.mxu0 0
  %5455 = vmatpush1.bf16.msra.mxu0 0
  %5456 = vmatprep.subr.bf16.mxu0 0
  %5457 = vmatpush1.bf16.msra.mxu0 0
  %5458 = vmatprep.subr.bf16.mxu0 0
  %5459 = vmatpush1.bf16.msra.mxu0 0
  %5460 = vmatprep.subr.bf16.mxu0 0
  %5461 = vmatpush1.bf16.msra.mxu0 0
  %5462 = vmatprep.mubr.bf16.mxu0 0
  %5463 = vmatmul.mubr.bf16.gmra.mrb[0].mxu0 %v5419
  %v5464 = vpop.f32.mrb[0].mxu0
  %v5465 = vadd.f32 0.0, %v5464
  %v5466 = vpop.f32.mrb[0].mxu0
  %v5467 = vadd.f32 0.0, %v5466
  %v5468 = vpop.f32.mrb[0].mxu0
  %v5469 = vadd.f32 0.0, %v5468
  %v5470 = vpop.f32.mrb[0].mxu0
  %v5471 = vadd.f32 0.0, %v5470
  %5472 = vmatprep.mubr.bf16.mxu0 0
  %5473 = vmatmul.mubr.bf16.gmra.mrb[0].mxu0 %v5422
  %v5474 = vpop.f32.mrb[0].mxu0
  %v5475 = vadd.f32 0.0, %v5474
  %v5476 = vpop.f32.mrb[0].mxu0
  %v5477 = vadd.f32 0.0, %v5476
  %v5478 = vpop.f32.mrb[0].mxu0
  %v5479 = vadd.f32 0.0, %v5478
  %v5480 = vpop.f32.mrb[0].mxu0
  %v5481 = vadd.f32 0.0, %v5480
  %5482 = vmatprep.mubr.bf16.mxu0 0
  %5483 = vmatmul.mubr.bf16.gmra.mrb[0].mxu0 %v5425
  %v5484 = vpop.f32.mrb[0].mxu0
  %v5485 = vadd.f32 0.0, %v5484
  %v5486 = vpop.f32.mrb[0].mxu0
  %v5487 = vadd.f32 0.0, %v5486
  %v5488 = vpop.f32.mrb[0].mxu0
  %v5489 = vadd.f32 0.0, %v5488
  %v5490 = vpop.f32.mrb[0].mxu0
  %v5491 = vadd.f32 0.0, %v5490
  %5492 = vmatprep.mubr.bf16.mxu0 0
  %5493 = vmatmul.mubr.bf16.gmra.mrb[0].mxu0 %v5428
  %v5494 = vpop.f32.mrb[0].mxu0
  %v5495 = vadd.f32 0.0, %v5494
  %v5496 = vpop.f32.mrb[0].mxu0
  %v5497 = vadd.f32 0.0, %v5496
  %v5498 = vpop.f32.mrb[0].mxu0
  %v5499 = vadd.f32 0.0, %v5498
  %v5500 = vpop.f32.mrb[0].mxu0
  %v5501 = vadd.f32 0.0, %v5500
  %5502 = vdwg.mxu0
  %v5503 = vadd.f32 %v5351, %v5465
  %v5504 = vadd.f32 %v5353, %v5467
  %v5505 = vadd.f32 %v5355, %v5469
  %v5506 = vadd.f32 %v5357, %v5471
  %v5507 = vadd.f32 %v5361, %v5475
  %v5508 = vadd.f32 %v5363, %v5477
  %v5509 = vadd.f32 %v5365, %v5479
  %v5510 = vadd.f32 %v5367, %v5481
  %v5511 = vadd.f32 %v5371, %v5485
  %v5512 = vadd.f32 %v5373, %v5487
  %v5513 = vadd.f32 %v5375, %v5489
  %v5514 = vadd.f32 %v5377, %v5491
  %v5515 = vadd.f32 %v5381, %v5495
  %v5516 = vadd.f32 %v5383, %v5497
  %v5517 = vadd.f32 %v5385, %v5499
  %v5518 = vadd.f32 %v5387, %v5501
  %s5519 = scalar_lea.vmem %s14, 96
  %v5520 = vld [vmem:[%s5519] sm:$0xf]
  %v5521 = vld [vmem:[%s5519 + $0x4] sm:$0xf]
  %v5522 = vld [vmem:[%s5519 + $0x8] sm:$0xf]
  %v5523 = vld [vmem:[%s5519 + $0xc] sm:$0xf]
  %v5524 = vld [vmem:[%s5519 + $0x10] sm:$0xf]
  %v5525 = vld [vmem:[%s5519 + $0x14] sm:$0xf]
  %v5526 = vld [vmem:[%s5519 + $0x18] sm:$0xf]
  %v5527 = vld [vmem:[%s5519 + $0x1c] sm:$0xf]
  %v5536 = vunpack.c.l.b16 %v5520
  %v5537 = vunpack.c.l.b16 %v5521
  %v5538 = vunpack.c.l.b16 %v5522
  %v5539 = vunpack.c.l.b16 %v5523
  %v5540 = vunpack.c.l.b16 %v5524
  %v5541 = vunpack.c.l.b16 %v5525
  %v5542 = vunpack.c.l.b16 %v5526
  %v5543 = vunpack.c.l.b16 %v5527
  %v5544 = vpack.c.b16 %v5537, %v5536
  %v5545 = vpack.c.b16 %v5539, %v5538
  %v5546 = vpack.c.b16 %v5541, %v5540
  %v5547 = vpack.c.b16 %v5543, %v5542
  %v5549 = vsel %vm2307, %v5544, 0
  %v5552 = vsel %vm2307, %v5545, 0
  %v5555 = vsel %vm2307, %v5546, 0
  %v5558 = vsel %vm2307, %v5547, 0
  %5560 = vmatprep.subr.bf16.mxu0 %v5153
  %5561 = vmatpush1.bf16.msra.mxu0 %v5152
  %5562 = vmatprep.subr.bf16.mxu0 %v5161
  %5563 = vmatpush1.bf16.msra.mxu0 %v5160
  %5564 = vmatprep.subr.bf16.mxu0 0
  %5565 = vmatpush1.bf16.msra.mxu0 0
  %5566 = vmatprep.subr.bf16.mxu0 0
  %5567 = vmatpush1.bf16.msra.mxu0 0
  %5568 = vmatprep.subr.bf16.mxu0 0
  %5569 = vmatpush1.bf16.msra.mxu0 0
  %5570 = vmatprep.subr.bf16.mxu0 0
  %5571 = vmatpush1.bf16.msra.mxu0 0
  %5572 = vmatprep.subr.bf16.mxu0 0
  %5573 = vmatpush1.bf16.msra.mxu0 0
  %5574 = vmatprep.subr.bf16.mxu0 0
  %5575 = vmatpush1.bf16.msra.mxu0 0
  %5576 = vmatprep.subr.bf16.mxu0 0
  %5577 = vmatpush1.bf16.msra.mxu0 0
  %5578 = vmatprep.subr.bf16.mxu0 0
  %5579 = vmatpush1.bf16.msra.mxu0 0
  %5580 = vmatprep.subr.bf16.mxu0 0
  %5581 = vmatpush1.bf16.msra.mxu0 0
  %5582 = vmatprep.subr.bf16.mxu0 0
  %5583 = vmatpush1.bf16.msra.mxu0 0
  %5584 = vmatprep.subr.bf16.mxu0 0
  %5585 = vmatpush1.bf16.msra.mxu0 0
  %5586 = vmatprep.subr.bf16.mxu0 0
  %5587 = vmatpush1.bf16.msra.mxu0 0
  %5588 = vmatprep.subr.bf16.mxu0 0
  %5589 = vmatpush1.bf16.msra.mxu0 0
  %5590 = vmatprep.subr.bf16.mxu0 0
  %5591 = vmatpush1.bf16.msra.mxu0 0
  %5592 = vmatprep.mubr.bf16.mxu0 0
  %5593 = vmatmul.mubr.bf16.gmra.mrb[0].mxu0 %v5549
  %v5594 = vpop.f32.mrb[0].mxu0
  %v5595 = vadd.f32 0.0, %v5594
  %v5596 = vpop.f32.mrb[0].mxu0
  %v5597 = vadd.f32 0.0, %v5596
  %v5598 = vpop.f32.mrb[0].mxu0
  %v5599 = vadd.f32 0.0, %v5598
  %v5600 = vpop.f32.mrb[0].mxu0
  %v5601 = vadd.f32 0.0, %v5600
  %5602 = vmatprep.mubr.bf16.mxu0 0
  %5603 = vmatmul.mubr.bf16.gmra.mrb[0].mxu0 %v5552
  %v5604 = vpop.f32.mrb[0].mxu0
  %v5605 = vadd.f32 0.0, %v5604
  %v5606 = vpop.f32.mrb[0].mxu0
  %v5607 = vadd.f32 0.0, %v5606
  %v5608 = vpop.f32.mrb[0].mxu0
  %v5609 = vadd.f32 0.0, %v5608
  %v5610 = vpop.f32.mrb[0].mxu0
  %v5611 = vadd.f32 0.0, %v5610
  %5612 = vmatprep.mubr.bf16.mxu0 0
  %5613 = vmatmul.mubr.bf16.gmra.mrb[0].mxu0 %v5555
  %v5614 = vpop.f32.mrb[0].mxu0
  %v5615 = vadd.f32 0.0, %v5614
  %v5616 = vpop.f32.mrb[0].mxu0
  %v5617 = vadd.f32 0.0, %v5616
  %v5618 = vpop.f32.mrb[0].mxu0
  %v5619 = vadd.f32 0.0, %v5618
  %v5620 = vpop.f32.mrb[0].mxu0
  %v5621 = vadd.f32 0.0, %v5620
  %5622 = vmatprep.mubr.bf16.mxu0 0
  %5623 = vmatmul.mubr.bf16.gmra.mrb[0].mxu0 %v5558
  %v5624 = vpop.f32.mrb[0].mxu0
  %v5625 = vadd.f32 0.0, %v5624
  %v5626 = vpop.f32.mrb[0].mxu0
  %v5627 = vadd.f32 0.0, %v5626
  %v5628 = vpop.f32.mrb[0].mxu0
  %v5629 = vadd.f32 0.0, %v5628
  %v5630 = vpop.f32.mrb[0].mxu0
  %v5631 = vadd.f32 0.0, %v5630
  %5632 = vdwg.mxu0
  %v5633 = vadd.f32 %v5503, %v5595
  %v5634 = vadd.f32 %v5504, %v5597
  %v5635 = vadd.f32 %v5505, %v5599
  %v5636 = vadd.f32 %v5506, %v5601
  %v5637 = vadd.f32 %v5507, %v5605
  %v5638 = vadd.f32 %v5508, %v5607
  %v5639 = vadd.f32 %v5509, %v5609
  %v5640 = vadd.f32 %v5510, %v5611
  %v5641 = vadd.f32 %v5511, %v5615
  %v5642 = vadd.f32 %v5512, %v5617
  %v5643 = vadd.f32 %v5513, %v5619
  %v5644 = vadd.f32 %v5514, %v5621
  %v5645 = vadd.f32 %v5515, %v5625
  %v5646 = vadd.f32 %v5516, %v5627
  %v5647 = vadd.f32 %v5517, %v5629
  %v5648 = vadd.f32 %v5518, %v5631
  %v5649 = vadd.f32 %v5633, %v5635
  %v5650 = vadd.f32 %v5649, %v5637
  %v5651 = vadd.f32 %v5650, %v5639
  %v5652 = vadd.f32 %v5651, %v5641
  %v5653 = vadd.f32 %v5652, %v5643
  %v5654 = vadd.f32 %v5653, %v5645
  %v5655 = vadd.f32 %v5654, %v5647
  %v5656 = vrot.slane %v5655, 4
  %v5657 = vadd.f32 %v5655, %v5656
  %v5658 = vrot.slane %v5657, 2
  %v5659 = vadd.f32 %v5657, %v5658
  %v5660 = vrot.slane %v5659, 1
  %v5661 = vadd.f32 %v5659, %v5660
  %v5662 = vadd.f32 %v5634, %v5636
  %v5663 = vadd.f32 %v5662, %v5638
  %v5664 = vadd.f32 %v5663, %v5640
  %v5665 = vadd.f32 %v5664, %v5642
  %v5666 = vadd.f32 %v5665, %v5644
  %v5667 = vadd.f32 %v5666, %v5646
  %v5668 = vadd.f32 %v5667, %v5648
  %v5669 = vrot.slane %v5668, 4
  %v5670 = vadd.f32 %v5668, %v5669
  %v5671 = vrot.slane %v5670, 2
  %v5672 = vadd.f32 %v5670, %v5671
  %v5673 = vrot.slane %v5672, 1
  %v5674 = vadd.f32 %v5672, %v5673
  %v5675 = vmul.f32 %v5633, %v5633
  %v5676 = vmul.f32 %v5634, %v5634
  %v5677 = vmul.f32 %v5635, %v5635
  %v5678 = vmul.f32 %v5636, %v5636
  %v5679 = vmul.f32 %v5637, %v5637
  %v5680 = vmul.f32 %v5638, %v5638
  %v5681 = vmul.f32 %v5639, %v5639
  %v5682 = vmul.f32 %v5640, %v5640
  %v5683 = vmul.f32 %v5641, %v5641
  %v5684 = vmul.f32 %v5642, %v5642
  %v5685 = vmul.f32 %v5643, %v5643
  %v5686 = vmul.f32 %v5644, %v5644
  %v5687 = vmul.f32 %v5645, %v5645
  %v5688 = vmul.f32 %v5646, %v5646
  %v5689 = vmul.f32 %v5647, %v5647
  %v5690 = vmul.f32 %v5648, %v5648
  %v5691 = vadd.f32 %v5675, %v5677
  %v5692 = vadd.f32 %v5691, %v5679
  %v5693 = vadd.f32 %v5692, %v5681
  %v5694 = vadd.f32 %v5693, %v5683
  %v5695 = vadd.f32 %v5694, %v5685
  %v5696 = vadd.f32 %v5695, %v5687
  %v5697 = vadd.f32 %v5696, %v5689
  %v5698 = vrot.slane %v5697, 4
  %v5699 = vadd.f32 %v5697, %v5698
  %v5700 = vrot.slane %v5699, 2
  %v5701 = vadd.f32 %v5699, %v5700
  %v5702 = vrot.slane %v5701, 1
  %v5703 = vadd.f32 %v5701, %v5702
  %v5704 = vadd.f32 %v5676, %v5678
  %v5705 = vadd.f32 %v5704, %v5680
  %v5706 = vadd.f32 %v5705, %v5682
  %v5707 = vadd.f32 %v5706, %v5684
  %v5708 = vadd.f32 %v5707, %v5686
  %v5709 = vadd.f32 %v5708, %v5688
  %v5710 = vadd.f32 %v5709, %v5690
  %v5711 = vrot.slane %v5710, 4
  %v5712 = vadd.f32 %v5710, %v5711
  %v5713 = vrot.slane %v5712, 2
  %v5714 = vadd.f32 %v5712, %v5713
  %v5715 = vrot.slane %v5714, 1
  %v5716 = vadd.f32 %v5714, %v5715
  %v5717 = vld [vmem:[%s15] sm:$0xff]
  %v5718 = vld [vmem:[%s15 + $0x8] sm:$0xff]
  %v5719 = vld [vmem:[%s15 + $0x10] sm:$0xff]
  %v5720 = vld [vmem:[%s15 + $0x18] sm:$0xff]
  %v5721 = vld [vmem:[%s15 + $0x20] sm:$0xff]
  %v5722 = vld [vmem:[%s15 + $0x28] sm:$0xff]
  %v5723 = vld [vmem:[%s15 + $0x30] sm:$0xff]
  %v5724 = vld [vmem:[%s15 + $0x38] sm:$0xff]
  %v5725 = vld [vmem:[%s15 + $0x40] sm:$0xff]
  %v5726 = vld [vmem:[%s15 + $0x48] sm:$0xff]
  %v5727 = vld [vmem:[%s15 + $0x50] sm:$0xff]
  %v5728 = vld [vmem:[%s15 + $0x58] sm:$0xff]
  %v5729 = vld [vmem:[%s15 + $0x60] sm:$0xff]
  %v5730 = vld [vmem:[%s15 + $0x68] sm:$0xff]
  %v5731 = vld [vmem:[%s15 + $0x70] sm:$0xff]
  %v5732 = vld [vmem:[%s15 + $0x78] sm:$0xff]
  %v5733 = vld [vmem:[%s15 + $0x80] sm:$0xff]
  %v5734 = vld [vmem:[%s15 + $0x88] sm:$0xff]
  %v5735 = vld [vmem:[%s15 + $0x90] sm:$0xff]
  %v5736 = vld [vmem:[%s15 + $0x98] sm:$0xff]
  %v5737 = vld [vmem:[%s15 + $0xa0] sm:$0xff]
  %v5738 = vld [vmem:[%s15 + $0xa8] sm:$0xff]
  %v5739 = vld [vmem:[%s15 + $0xb0] sm:$0xff]
  %v5740 = vld [vmem:[%s15 + $0xb8] sm:$0xff]
  %v5741 = vld [vmem:[%s15 + $0xc0] sm:$0xff]
  %v5742 = vld [vmem:[%s15 + $0xc8] sm:$0xff]
  %v5743 = vld [vmem:[%s15 + $0xd0] sm:$0xff]
  %v5744 = vld [vmem:[%s15 + $0xd8] sm:$0xff]
  %v5745 = vld [vmem:[%s15 + $0xe0] sm:$0xff]
  %v5746 = vld [vmem:[%s15 + $0xe8] sm:$0xff]
  %v5747 = vld [vmem:[%s15 + $0xf0] sm:$0xff]
  %v5748 = vld [vmem:[%s15 + $0xf8] sm:$0xff]
  %5749 = vmatprep.subr.mxu0 0.0
  %5750 = vmatpush1.msra.mxu0 %v5717
  %5751 = vmatprep.subr.mxu0 0.0
  %5752 = vmatpush1.msra.mxu0 %v5718
  %5753 = vmatprep.subr.mxu0 0.0
  %5754 = vmatpush1.msra.mxu0 %v5719
  %5755 = vmatprep.subr.mxu0 0.0
  %5756 = vmatpush1.msra.mxu0 %v5720
  %5757 = vmatprep.subr.mxu0 0.0
  %5758 = vmatpush1.msra.mxu0 %v5721
  %5759 = vmatprep.subr.mxu0 0.0
  %5760 = vmatpush1.msra.mxu0 %v5722
  %5761 = vmatprep.subr.mxu0 0.0
  %5762 = vmatpush1.msra.mxu0 %v5723
  %5763 = vmatprep.subr.mxu0 0.0
  %5764 = vmatpush1.msra.mxu0 %v5724
  %5765 = vmatprep.subr.mxu0 0.0
  %5766 = vmatpush1.msra.mxu0 %v5725
  %5767 = vmatprep.subr.mxu0 0.0
  %5768 = vmatpush1.msra.mxu0 %v5726
  %5769 = vmatprep.subr.mxu0 0.0
  %5770 = vmatpush1.msra.mxu0 %v5727
  %5771 = vmatprep.subr.mxu0 0.0
  %5772 = vmatpush1.msra.mxu0 %v5728
  %5773 = vmatprep.subr.mxu0 0.0
  %5774 = vmatpush1.msra.mxu0 %v5729
  %5775 = vmatprep.subr.mxu0 0.0
  %5776 = vmatpush1.msra.mxu0 %v5730
  %5777 = vmatprep.subr.mxu0 0.0
  %5778 = vmatpush1.msra.mxu0 %v5731
  %5779 = vmatprep.subr.mxu0 0.0
  %5780 = vmatpush1.msra.mxu0 %v5732
  %5781 = vmatprep.subr.mxu0 0.0
  %5782 = vmatpush1.msra.mxu0 %v5733
  %5783 = vmatprep.subr.mxu0 0.0
  %5784 = vmatpush1.msra.mxu0 %v5734
  %5785 = vmatprep.subr.mxu0 0.0
  %5786 = vmatpush1.msra.mxu0 %v5735
  %5787 = vmatprep.subr.mxu0 0.0
  %5788 = vmatpush1.msra.mxu0 %v5736
  %5789 = vmatprep.subr.mxu0 0.0
  %5790 = vmatpush1.msra.mxu0 %v5737
  %5791 = vmatprep.subr.mxu0 0.0
  %5792 = vmatpush1.msra.mxu0 %v5738
  %5793 = vmatprep.subr.mxu0 0.0
  %5794 = vmatpush1.msra.mxu0 %v5739
  %5795 = vmatprep.subr.mxu0 0.0
  %5796 = vmatpush1.msra.mxu0 %v5740
  %5797 = vmatprep.subr.mxu0 0.0
  %5798 = vmatpush1.msra.mxu0 %v5741
  %5799 = vmatprep.subr.mxu0 0.0
  %5800 = vmatpush1.msra.mxu0 %v5742
  %5801 = vmatprep.subr.mxu0 0.0
  %5802 = vmatpush1.msra.mxu0 %v5743
  %5803 = vmatprep.subr.mxu0 0.0
  %5804 = vmatpush1.msra.mxu0 %v5744
  %5805 = vmatprep.subr.mxu0 0.0
  %5806 = vmatpush1.msra.mxu0 %v5745
  %5807 = vmatprep.subr.mxu0 0.0
  %5808 = vmatpush1.msra.mxu0 %v5746
  %5809 = vmatprep.subr.mxu0 0.0
  %5810 = vmatpush1.msra.mxu0 %v5747
  %5811 = vmatprep.subr.mxu0 0.0
  %5812 = vmatpush1.msra.mxu0 %v5748
  %5813 = vmatprep.mubr.f32.mxu0 %v5674
  %5814 = vmatmul.mubr.f32.gmra.mrb[0].mxu0 %v5661
  %v5815 = vpop.f32.mrb[0].mxu0
  %v5816 = vadd.f32 0.0, %v5815
  %v5817 = vpop.f32.mrb[0].mxu0
  %5818 = vdwg.mxu0
  %5819 = vmatprep.subr.mxu0 0.0
  %5820 = vmatpush1.msra.mxu0 %v5717
  %5821 = vmatprep.subr.mxu0 0.0
  %5822 = vmatpush1.msra.mxu0 %v5718
  %5823 = vmatprep.subr.mxu0 0.0
  %5824 = vmatpush1.msra.mxu0 %v5719
  %5825 = vmatprep.subr.mxu0 0.0
  %5826 = vmatpush1.msra.mxu0 %v5720
  %5827 = vmatprep.subr.mxu0 0.0
  %5828 = vmatpush1.msra.mxu0 %v5721
  %5829 = vmatprep.subr.mxu0 0.0
  %5830 = vmatpush1.msra.mxu0 %v5722
  %5831 = vmatprep.subr.mxu0 0.0
  %5832 = vmatpush1.msra.mxu0 %v5723
  %5833 = vmatprep.subr.mxu0 0.0
  %5834 = vmatpush1.msra.mxu0 %v5724
  %5835 = vmatprep.subr.mxu0 0.0
  %5836 = vmatpush1.msra.mxu0 %v5725
  %5837 = vmatprep.subr.mxu0 0.0
  %5838 = vmatpush1.msra.mxu0 %v5726
  %5839 = vmatprep.subr.mxu0 0.0
  %5840 = vmatpush1.msra.mxu0 %v5727
  %5841 = vmatprep.subr.mxu0 0.0
  %5842 = vmatpush1.msra.mxu0 %v5728
  %5843 = vmatprep.subr.mxu0 0.0
  %5844 = vmatpush1.msra.mxu0 %v5729
  %5845 = vmatprep.subr.mxu0 0.0
  %5846 = vmatpush1.msra.mxu0 %v5730
  %5847 = vmatprep.subr.mxu0 0.0
  %5848 = vmatpush1.msra.mxu0 %v5731
  %5849 = vmatprep.subr.mxu0 0.0
  %5850 = vmatpush1.msra.mxu0 %v5732
  %5851 = vmatprep.subr.mxu0 0.0
  %5852 = vmatpush1.msra.mxu0 %v5733
  %5853 = vmatprep.subr.mxu0 0.0
  %5854 = vmatpush1.msra.mxu0 %v5734
  %5855 = vmatprep.subr.mxu0 0.0
  %5856 = vmatpush1.msra.mxu0 %v5735
  %5857 = vmatprep.subr.mxu0 0.0
  %5858 = vmatpush1.msra.mxu0 %v5736
  %5859 = vmatprep.subr.mxu0 0.0
  %5860 = vmatpush1.msra.mxu0 %v5737
  %5861 = vmatprep.subr.mxu0 0.0
  %5862 = vmatpush1.msra.mxu0 %v5738
  %5863 = vmatprep.subr.mxu0 0.0
  %5864 = vmatpush1.msra.mxu0 %v5739
  %5865 = vmatprep.subr.mxu0 0.0
  %5866 = vmatpush1.msra.mxu0 %v5740
  %5867 = vmatprep.subr.mxu0 0.0
  %5868 = vmatpush1.msra.mxu0 %v5741
  %5869 = vmatprep.subr.mxu0 0.0
  %5870 = vmatpush1.msra.mxu0 %v5742
  %5871 = vmatprep.subr.mxu0 0.0
  %5872 = vmatpush1.msra.mxu0 %v5743
  %5873 = vmatprep.subr.mxu0 0.0
  %5874 = vmatpush1.msra.mxu0 %v5744
  %5875 = vmatprep.subr.mxu0 0.0
  %5876 = vmatpush1.msra.mxu0 %v5745
  %5877 = vmatprep.subr.mxu0 0.0
  %5878 = vmatpush1.msra.mxu0 %v5746
  %5879 = vmatprep.subr.mxu0 0.0
  %5880 = vmatpush1.msra.mxu0 %v5747
  %5881 = vmatprep.subr.mxu0 0.0
  %5882 = vmatpush1.msra.mxu0 %v5748
  %5883 = vmatprep.mubr.f32.mxu0 %v5716
  %5884 = vmatmul.mubr.f32.gmra.mrb[0].mxu0 %v5703
  %v5885 = vpop.f32.mrb[0].mxu0
  %v5886 = vadd.f32 0.0, %v5885
  %v5887 = vpop.f32.mrb[0].mxu0
  %5888 = vdwg.mxu0
  %v5889 = vmul.f32 %v5816, 0.00048828125
  %v5890 = vmul.f32 %v5886, 0.00048828125
  %v5891 = vmul.f32 %v5889, %v5889
  %v5892 = vsub.f32 %v5890, %v5891
  %v5893 = vmax.f32 %v5892, 0.0
  %v5894 = vadd.f32 %v5893, 1e-05
  %v5895 = vrsqrt.pop %v5894
  %v5896 = vsub.f32 0.0, %v5889
  %v5897 = vmul.f32 %v5896, %v5895
  %v5898 = vld [vmem:[%s16] sm:$0xff]
  %v5899 = vld [vmem:[%s16 + $0x8] sm:$0xff]
  %v5901 = vsel %vm1847, %v5895, 0
  %5903 = vmatprep.subr.mxu0 %v5899
  %5904 = vmatpush1.msra.mxu0 %v5898
  %5905 = vmatprep.subr.mxu0 0.0
  %5906 = vmatpush1.msra.mxu0 0.0
  %5907 = vmatprep.subr.mxu0 0.0
  %5908 = vmatpush1.msra.mxu0 0.0
  %5909 = vmatprep.subr.mxu0 0.0
  %5910 = vmatpush1.msra.mxu0 0.0
  %5911 = vmatprep.subr.mxu0 0.0
  %5912 = vmatpush1.msra.mxu0 0.0
  %5913 = vmatprep.subr.mxu0 0.0
  %5914 = vmatpush1.msra.mxu0 0.0
  %5915 = vmatprep.subr.mxu0 0.0
  %5916 = vmatpush1.msra.mxu0 0.0
  %5917 = vmatprep.subr.mxu0 0.0
  %5918 = vmatpush1.msra.mxu0 0.0
  %5919 = vmatprep.subr.mxu0 0.0
  %5920 = vmatpush1.msra.mxu0 0.0
  %5921 = vmatprep.subr.mxu0 0.0
  %5922 = vmatpush1.msra.mxu0 0.0
  %5923 = vmatprep.subr.mxu0 0.0
  %5924 = vmatpush1.msra.mxu0 0.0
  %5925 = vmatprep.subr.mxu0 0.0
  %5926 = vmatpush1.msra.mxu0 0.0
  %5927 = vmatprep.subr.mxu0 0.0
  %5928 = vmatpush1.msra.mxu0 0.0
  %5929 = vmatprep.subr.mxu0 0.0
  %5930 = vmatpush1.msra.mxu0 0.0
  %5931 = vmatprep.subr.mxu0 0.0
  %5932 = vmatpush1.msra.mxu0 0.0
  %5933 = vmatprep.subr.mxu0 0.0
  %5934 = vmatpush1.msra.mxu0 0.0
  %5935 = vmatprep.subr.mxu0 0.0
  %5936 = vmatpush1.msra.mxu0 0.0
  %5937 = vmatprep.subr.mxu0 0.0
  %5938 = vmatpush1.msra.mxu0 0.0
  %5939 = vmatprep.subr.mxu0 0.0
  %5940 = vmatpush1.msra.mxu0 0.0
  %5941 = vmatprep.subr.mxu0 0.0
  %5942 = vmatpush1.msra.mxu0 0.0
  %5943 = vmatprep.subr.mxu0 0.0
  %5944 = vmatpush1.msra.mxu0 0.0
  %5945 = vmatprep.subr.mxu0 0.0
  %5946 = vmatpush1.msra.mxu0 0.0
  %5947 = vmatprep.subr.mxu0 0.0
  %5948 = vmatpush1.msra.mxu0 0.0
  %5949 = vmatprep.subr.mxu0 0.0
  %5950 = vmatpush1.msra.mxu0 0.0
  %5951 = vmatprep.subr.mxu0 0.0
  %5952 = vmatpush1.msra.mxu0 0.0
  %5953 = vmatprep.subr.mxu0 0.0
  %5954 = vmatpush1.msra.mxu0 0.0
  %5955 = vmatprep.subr.mxu0 0.0
  %5956 = vmatpush1.msra.mxu0 0.0
  %5957 = vmatprep.subr.mxu0 0.0
  %5958 = vmatpush1.msra.mxu0 0.0
  %5959 = vmatprep.subr.mxu0 0.0
  %5960 = vmatpush1.msra.mxu0 0.0
  %5961 = vmatprep.subr.mxu0 0.0
  %5962 = vmatpush1.msra.mxu0 0.0
  %5963 = vmatprep.subr.mxu0 0.0
  %5964 = vmatpush1.msra.mxu0 0.0
  %5965 = vmatprep.subr.mxu0 0.0
  %5966 = vmatpush1.msra.mxu0 0.0
  %5967 = vmatprep.mubr.f32.mxu0 0.0
  %5968 = vmatmul.mubr.f32.gmra.mrb[0].mxu0 %v5901
  %v5969 = vpop.f32.mrb[0].mxu0
  %v5970 = vadd.f32 0.0, %v5969
  %v5971 = vpop.f32.mrb[0].mxu0
  %v5972 = vadd.f32 0.0, %v5971
  %5973 = vdwg.mxu0
  %v5975 = vsel %vm1847, %v5897, 0
  %5977 = vmatprep.subr.mxu0 %v5899
  %5978 = vmatpush1.msra.mxu0 %v5898
  %5979 = vmatprep.subr.mxu0 0.0
  %5980 = vmatpush1.msra.mxu0 0.0
  %5981 = vmatprep.subr.mxu0 0.0
  %5982 = vmatpush1.msra.mxu0 0.0
  %5983 = vmatprep.subr.mxu0 0.0
  %5984 = vmatpush1.msra.mxu0 0.0
  %5985 = vmatprep.subr.mxu0 0.0
  %5986 = vmatpush1.msra.mxu0 0.0
  %5987 = vmatprep.subr.mxu0 0.0
  %5988 = vmatpush1.msra.mxu0 0.0
  %5989 = vmatprep.subr.mxu0 0.0
  %5990 = vmatpush1.msra.mxu0 0.0
  %5991 = vmatprep.subr.mxu0 0.0
  %5992 = vmatpush1.msra.mxu0 0.0
  %5993 = vmatprep.subr.mxu0 0.0
  %5994 = vmatpush1.msra.mxu0 0.0
  %5995 = vmatprep.subr.mxu0 0.0
  %5996 = vmatpush1.msra.mxu0 0.0
  %5997 = vmatprep.subr.mxu0 0.0
  %5998 = vmatpush1.msra.mxu0 0.0
  %5999 = vmatprep.subr.mxu0 0.0
  %6000 = vmatpush1.msra.mxu0 0.0
  %6001 = vmatprep.subr.mxu0 0.0
  %6002 = vmatpush1.msra.mxu0 0.0
  %6003 = vmatprep.subr.mxu0 0.0
  %6004 = vmatpush1.msra.mxu0 0.0
  %6005 = vmatprep.subr.mxu0 0.0
  %6006 = vmatpush1.msra.mxu0 0.0
  %6007 = vmatprep.subr.mxu0 0.0
  %6008 = vmatpush1.msra.mxu0 0.0
  %6009 = vmatprep.subr.mxu0 0.0
  %6010 = vmatpush1.msra.mxu0 0.0
  %6011 = vmatprep.subr.mxu0 0.0
  %6012 = vmatpush1.msra.mxu0 0.0
  %6013 = vmatprep.subr.mxu0 0.0
  %6014 = vmatpush1.msra.mxu0 0.0
  %6015 = vmatprep.subr.mxu0 0.0
  %6016 = vmatpush1.msra.mxu0 0.0
  %6017 = vmatprep.subr.mxu0 0.0
  %6018 = vmatpush1.msra.mxu0 0.0
  %6019 = vmatprep.subr.mxu0 0.0
  %6020 = vmatpush1.msra.mxu0 0.0
  %6021 = vmatprep.subr.mxu0 0.0
  %6022 = vmatpush1.msra.mxu0 0.0
  %6023 = vmatprep.subr.mxu0 0.0
  %6024 = vmatpush1.msra.mxu0 0.0
  %6025 = vmatprep.subr.mxu0 0.0
  %6026 = vmatpush1.msra.mxu0 0.0
  %6027 = vmatprep.subr.mxu0 0.0
  %6028 = vmatpush1.msra.mxu0 0.0
  %6029 = vmatprep.subr.mxu0 0.0
  %6030 = vmatpush1.msra.mxu0 0.0
  %6031 = vmatprep.subr.mxu0 0.0
  %6032 = vmatpush1.msra.mxu0 0.0
  %6033 = vmatprep.subr.mxu0 0.0
  %6034 = vmatpush1.msra.mxu0 0.0
  %6035 = vmatprep.subr.mxu0 0.0
  %6036 = vmatpush1.msra.mxu0 0.0
  %6037 = vmatprep.subr.mxu0 0.0
  %6038 = vmatpush1.msra.mxu0 0.0
  %6039 = vmatprep.subr.mxu0 0.0
  %6040 = vmatpush1.msra.mxu0 0.0
  %6041 = vmatprep.mubr.f32.mxu0 0.0
  %6042 = vmatmul.mubr.f32.gmra.mrb[0].mxu0 %v5975
  %v6043 = vpop.f32.mrb[0].mxu0
  %v6044 = vadd.f32 0.0, %v6043
  %v6045 = vpop.f32.mrb[0].mxu0
  %v6046 = vadd.f32 0.0, %v6045
  %6047 = vdwg.mxu0
  %v6048 = vlaneseq
  %v6049 = vshrl.u32 %v6048, 7
  %v6050 = vsub.s32 0, %v6049
  %v6051 = vrot.slane %v5970, %v6050
  %v6052 = vlaneseq
  %v6053 = vshrl.u32 %v6052, 7
  %v6054 = vsub.s32 0, %v6053
  %v6055 = vrot.slane %v5972, %v6054
  %v6056 = vmul.f32 %v5633, %v6051
  %v6057 = vmul.f32 %v5634, %v6055
  %v6058 = vmul.f32 %v5635, %v6051
  %v6059 = vmul.f32 %v5636, %v6055
  %v6060 = vmul.f32 %v5637, %v6051
  %v6061 = vmul.f32 %v5638, %v6055
  %v6062 = vmul.f32 %v5639, %v6051
  %v6063 = vmul.f32 %v5640, %v6055
  %v6064 = vmul.f32 %v5641, %v6051
  %v6065 = vmul.f32 %v5642, %v6055
  %v6066 = vmul.f32 %v5643, %v6051
  %v6067 = vmul.f32 %v5644, %v6055
  %v6068 = vmul.f32 %v5645, %v6051
  %v6069 = vmul.f32 %v5646, %v6055
  %v6070 = vmul.f32 %v5647, %v6051
  %v6071 = vmul.f32 %v5648, %v6055
  %v6072 = vlaneseq
  %v6073 = vshrl.u32 %v6072, 7
  %v6074 = vsub.s32 0, %v6073
  %v6075 = vrot.slane %v6044, %v6074
  %v6076 = vlaneseq
  %v6077 = vshrl.u32 %v6076, 7
  %v6078 = vsub.s32 0, %v6077
  %v6079 = vrot.slane %v6046, %v6078
  %v6080 = vadd.f32 %v6056, %v6075
  %v6081 = vadd.f32 %v6057, %v6079
  %v6082 = vadd.f32 %v6058, %v6075
  %v6083 = vadd.f32 %v6059, %v6079
  %v6084 = vadd.f32 %v6060, %v6075
  %v6085 = vadd.f32 %v6061, %v6079
  %v6086 = vadd.f32 %v6062, %v6075
  %v6087 = vadd.f32 %v6063, %v6079
  %v6088 = vadd.f32 %v6064, %v6075
  %v6089 = vadd.f32 %v6065, %v6079
  %v6090 = vadd.f32 %v6066, %v6075
  %v6091 = vadd.f32 %v6067, %v6079
  %v6092 = vadd.f32 %v6068, %v6075
  %v6093 = vadd.f32 %v6069, %v6079
  %v6094 = vadd.f32 %v6070, %v6075
  %v6095 = vadd.f32 %v6071, %v6079
  %v6096 = vmax.f32 %v6080, 0.0
  %v6097 = vmax.f32 %v6081, 0.0
  %v6098 = vmax.f32 %v6082, 0.0
  %v6099 = vmax.f32 %v6083, 0.0
  %v6100 = vmax.f32 %v6084, 0.0
  %v6101 = vmax.f32 %v6085, 0.0
  %v6102 = vmax.f32 %v6086, 0.0
  %v6103 = vmax.f32 %v6087, 0.0
  %v6104 = vmax.f32 %v6088, 0.0
  %v6105 = vmax.f32 %v6089, 0.0
  %v6106 = vmax.f32 %v6090, 0.0
  %v6107 = vmax.f32 %v6091, 0.0
  %v6108 = vmax.f32 %v6092, 0.0
  %v6109 = vmax.f32 %v6093, 0.0
  %v6110 = vmax.f32 %v6094, 0.0
  %v6111 = vmax.f32 %v6095, 0.0
  %v6112 = vpack.c.bf16 %v6098, %v6096
  %v6113 = vpack.c.bf16 %v6099, %v6097
  %v6114 = vpack.c.bf16 %v6102, %v6100
  %v6115 = vpack.c.bf16 %v6103, %v6101
  %v6116 = vpack.c.bf16 %v6106, %v6104
  %v6117 = vpack.c.bf16 %v6107, %v6105
  %v6118 = vpack.c.bf16 %v6110, %v6108
  %v6119 = vpack.c.bf16 %v6111, %v6109
  %v6120 = vld [vmem:[%s17] sm:$0xff]
  %v6121 = vld [vmem:[%s17 + $0x8] sm:$0xff]
  %v6122 = vld [vmem:[%s17 + $0x10] sm:$0xff]
  %v6123 = vld [vmem:[%s17 + $0x18] sm:$0xff]
  %v6124 = vld [vmem:[%s17 + $0x20] sm:$0xff]
  %v6125 = vld [vmem:[%s17 + $0x28] sm:$0xff]
  %v6126 = vld [vmem:[%s17 + $0x30] sm:$0xff]
  %v6127 = vld [vmem:[%s17 + $0x38] sm:$0xff]
  %v6128 = vld [vmem:[%s17 + $0x40] sm:$0xff]
  %v6129 = vld [vmem:[%s17 + $0x48] sm:$0xff]
  %v6130 = vld [vmem:[%s17 + $0x50] sm:$0xff]
  %v6131 = vld [vmem:[%s17 + $0x58] sm:$0xff]
  %v6132 = vld [vmem:[%s17 + $0x60] sm:$0xff]
  %v6133 = vld [vmem:[%s17 + $0x68] sm:$0xff]
  %v6134 = vld [vmem:[%s17 + $0x70] sm:$0xff]
  %v6135 = vld [vmem:[%s17 + $0x78] sm:$0xff]
  %v6136 = vld [vmem:[%s17 + $0x80] sm:$0xff]
  %v6137 = vld [vmem:[%s17 + $0x88] sm:$0xff]
  %v6138 = vld [vmem:[%s17 + $0x90] sm:$0xff]
  %v6139 = vld [vmem:[%s17 + $0x98] sm:$0xff]
  %v6140 = vld [vmem:[%s17 + $0xa0] sm:$0xff]
  %v6141 = vld [vmem:[%s17 + $0xa8] sm:$0xff]
  %v6142 = vld [vmem:[%s17 + $0xb0] sm:$0xff]
  %v6143 = vld [vmem:[%s17 + $0xb8] sm:$0xff]
  %v6144 = vld [vmem:[%s17 + $0xc0] sm:$0xff]
  %v6145 = vld [vmem:[%s17 + $0xc8] sm:$0xff]
  %v6146 = vld [vmem:[%s17 + $0xd0] sm:$0xff]
  %v6147 = vld [vmem:[%s17 + $0xd8] sm:$0xff]
  %v6148 = vld [vmem:[%s17 + $0xe0] sm:$0xff]
  %v6149 = vld [vmem:[%s17 + $0xe8] sm:$0xff]
  %v6150 = vld [vmem:[%s17 + $0xf0] sm:$0xff]
  %v6151 = vld [vmem:[%s17 + $0xf8] sm:$0xff]
  %v6152 = vld [vmem:[%s17 + $0x100] sm:$0xff]
  %v6153 = vld [vmem:[%s17 + $0x108] sm:$0xff]
  %v6154 = vld [vmem:[%s17 + $0x110] sm:$0xff]
  %v6155 = vld [vmem:[%s17 + $0x118] sm:$0xff]
  %v6156 = vld [vmem:[%s17 + $0x120] sm:$0xff]
  %v6157 = vld [vmem:[%s17 + $0x128] sm:$0xff]
  %v6158 = vld [vmem:[%s17 + $0x130] sm:$0xff]
  %v6159 = vld [vmem:[%s17 + $0x138] sm:$0xff]
  %v6160 = vld [vmem:[%s17 + $0x140] sm:$0xff]
  %v6161 = vld [vmem:[%s17 + $0x148] sm:$0xff]
  %v6162 = vld [vmem:[%s17 + $0x150] sm:$0xff]
  %v6163 = vld [vmem:[%s17 + $0x158] sm:$0xff]
  %v6164 = vld [vmem:[%s17 + $0x160] sm:$0xff]
  %v6165 = vld [vmem:[%s17 + $0x168] sm:$0xff]
  %v6166 = vld [vmem:[%s17 + $0x170] sm:$0xff]
  %v6167 = vld [vmem:[%s17 + $0x178] sm:$0xff]
  %v6168 = vld [vmem:[%s17 + $0x180] sm:$0xff]
  %v6169 = vld [vmem:[%s17 + $0x188] sm:$0xff]
  %v6170 = vld [vmem:[%s17 + $0x190] sm:$0xff]
  %v6171 = vld [vmem:[%s17 + $0x198] sm:$0xff]
  %v6172 = vld [vmem:[%s17 + $0x1a0] sm:$0xff]
  %v6173 = vld [vmem:[%s17 + $0x1a8] sm:$0xff]
  %v6174 = vld [vmem:[%s17 + $0x1b0] sm:$0xff]
  %v6175 = vld [vmem:[%s17 + $0x1b8] sm:$0xff]
  %v6176 = vld [vmem:[%s17 + $0x1c0] sm:$0xff]
  %v6177 = vld [vmem:[%s17 + $0x1c8] sm:$0xff]
  %v6178 = vld [vmem:[%s17 + $0x1d0] sm:$0xff]
  %v6179 = vld [vmem:[%s17 + $0x1d8] sm:$0xff]
  %v6180 = vld [vmem:[%s17 + $0x1e0] sm:$0xff]
  %v6181 = vld [vmem:[%s17 + $0x1e8] sm:$0xff]
  %v6182 = vld [vmem:[%s17 + $0x1f0] sm:$0xff]
  %v6183 = vld [vmem:[%s17 + $0x1f8] sm:$0xff]
  %v6184 = vld [vmem:[%s17 + $0x200] sm:$0xff]
  %v6185 = vld [vmem:[%s17 + $0x208] sm:$0xff]
  %v6186 = vld [vmem:[%s17 + $0x210] sm:$0xff]
  %v6187 = vld [vmem:[%s17 + $0x218] sm:$0xff]
  %v6188 = vld [vmem:[%s17 + $0x220] sm:$0xff]
  %v6189 = vld [vmem:[%s17 + $0x228] sm:$0xff]
  %v6190 = vld [vmem:[%s17 + $0x230] sm:$0xff]
  %v6191 = vld [vmem:[%s17 + $0x238] sm:$0xff]
  %v6192 = vld [vmem:[%s17 + $0x240] sm:$0xff]
  %v6193 = vld [vmem:[%s17 + $0x248] sm:$0xff]
  %v6194 = vld [vmem:[%s17 + $0x250] sm:$0xff]
  %v6195 = vld [vmem:[%s17 + $0x258] sm:$0xff]
  %v6196 = vld [vmem:[%s17 + $0x260] sm:$0xff]
  %v6197 = vld [vmem:[%s17 + $0x268] sm:$0xff]
  %v6198 = vld [vmem:[%s17 + $0x270] sm:$0xff]
  %v6199 = vld [vmem:[%s17 + $0x278] sm:$0xff]
  %v6200 = vld [vmem:[%s17 + $0x280] sm:$0xff]
  %v6201 = vld [vmem:[%s17 + $0x288] sm:$0xff]
  %v6202 = vld [vmem:[%s17 + $0x290] sm:$0xff]
  %v6203 = vld [vmem:[%s17 + $0x298] sm:$0xff]
  %v6204 = vld [vmem:[%s17 + $0x2a0] sm:$0xff]
  %v6205 = vld [vmem:[%s17 + $0x2a8] sm:$0xff]
  %v6206 = vld [vmem:[%s17 + $0x2b0] sm:$0xff]
  %v6207 = vld [vmem:[%s17 + $0x2b8] sm:$0xff]
  %v6208 = vld [vmem:[%s17 + $0x2c0] sm:$0xff]
  %v6209 = vld [vmem:[%s17 + $0x2c8] sm:$0xff]
  %v6210 = vld [vmem:[%s17 + $0x2d0] sm:$0xff]
  %v6211 = vld [vmem:[%s17 + $0x2d8] sm:$0xff]
  %v6212 = vld [vmem:[%s17 + $0x2e0] sm:$0xff]
  %v6213 = vld [vmem:[%s17 + $0x2e8] sm:$0xff]
  %v6214 = vld [vmem:[%s17 + $0x2f0] sm:$0xff]
  %v6215 = vld [vmem:[%s17 + $0x2f8] sm:$0xff]
  %v6216 = vld [vmem:[%s17 + $0x300] sm:$0xff]
  %v6217 = vld [vmem:[%s17 + $0x308] sm:$0xff]
  %v6218 = vld [vmem:[%s17 + $0x310] sm:$0xff]
  %v6219 = vld [vmem:[%s17 + $0x318] sm:$0xff]
  %v6220 = vld [vmem:[%s17 + $0x320] sm:$0xff]
  %v6221 = vld [vmem:[%s17 + $0x328] sm:$0xff]
  %v6222 = vld [vmem:[%s17 + $0x330] sm:$0xff]
  %v6223 = vld [vmem:[%s17 + $0x338] sm:$0xff]
  %v6224 = vld [vmem:[%s17 + $0x340] sm:$0xff]
  %v6225 = vld [vmem:[%s17 + $0x348] sm:$0xff]
  %v6226 = vld [vmem:[%s17 + $0x350] sm:$0xff]
  %v6227 = vld [vmem:[%s17 + $0x358] sm:$0xff]
  %v6228 = vld [vmem:[%s17 + $0x360] sm:$0xff]
  %v6229 = vld [vmem:[%s17 + $0x368] sm:$0xff]
  %v6230 = vld [vmem:[%s17 + $0x370] sm:$0xff]
  %v6231 = vld [vmem:[%s17 + $0x378] sm:$0xff]
  %v6232 = vld [vmem:[%s17 + $0x380] sm:$0xff]
  %v6233 = vld [vmem:[%s17 + $0x388] sm:$0xff]
  %v6234 = vld [vmem:[%s17 + $0x390] sm:$0xff]
  %v6235 = vld [vmem:[%s17 + $0x398] sm:$0xff]
  %v6236 = vld [vmem:[%s17 + $0x3a0] sm:$0xff]
  %v6237 = vld [vmem:[%s17 + $0x3a8] sm:$0xff]
  %v6238 = vld [vmem:[%s17 + $0x3b0] sm:$0xff]
  %v6239 = vld [vmem:[%s17 + $0x3b8] sm:$0xff]
  %v6240 = vld [vmem:[%s17 + $0x3c0] sm:$0xff]
  %v6241 = vld [vmem:[%s17 + $0x3c8] sm:$0xff]
  %v6242 = vld [vmem:[%s17 + $0x3d0] sm:$0xff]
  %v6243 = vld [vmem:[%s17 + $0x3d8] sm:$0xff]
  %v6244 = vld [vmem:[%s17 + $0x3e0] sm:$0xff]
  %v6245 = vld [vmem:[%s17 + $0x3e8] sm:$0xff]
  %v6246 = vld [vmem:[%s17 + $0x3f0] sm:$0xff]
  %v6247 = vld [vmem:[%s17 + $0x3f8] sm:$0xff]
  %v6376 = vunpack.c.l.b16 %v6120
  %v6377 = vunpack.c.h.b16 %v6120
  %v6378 = vunpack.c.l.b16 %v6121
  %v6379 = vunpack.c.h.b16 %v6121
  %v6380 = vunpack.c.l.b16 %v6122
  %v6381 = vunpack.c.h.b16 %v6122
  %v6382 = vunpack.c.l.b16 %v6123
  %v6383 = vunpack.c.h.b16 %v6123
  %v6384 = vunpack.c.l.b16 %v6124
  %v6385 = vunpack.c.h.b16 %v6124
  %v6386 = vunpack.c.l.b16 %v6125
  %v6387 = vunpack.c.h.b16 %v6125
  %v6388 = vunpack.c.l.b16 %v6126
  %v6389 = vunpack.c.h.b16 %v6126
  %v6390 = vunpack.c.l.b16 %v6127
  %v6391 = vunpack.c.h.b16 %v6127
  %v6392 = vunpack.c.l.b16 %v6128
  %v6393 = vunpack.c.h.b16 %v6128
  %v6394 = vunpack.c.l.b16 %v6129
  %v6395 = vunpack.c.h.b16 %v6129
  %v6396 = vunpack.c.l.b16 %v6130
  %v6397 = vunpack.c.h.b16 %v6130
  %v6398 = vunpack.c.l.b16 %v6131
  %v6399 = vunpack.c.h.b16 %v6131
  %v6400 = vunpack.c.l.b16 %v6132
  %v6401 = vunpack.c.h.b16 %v6132
  %v6402 = vunpack.c.l.b16 %v6133
  %v6403 = vunpack.c.h.b16 %v6133
  %v6404 = vunpack.c.l.b16 %v6134
  %v6405 = vunpack.c.h.b16 %v6134
  %v6406 = vunpack.c.l.b16 %v6135
  %v6407 = vunpack.c.h.b16 %v6135
  %v6408 = vunpack.c.l.b16 %v6136
  %v6409 = vunpack.c.h.b16 %v6136
  %v6410 = vunpack.c.l.b16 %v6137
  %v6411 = vunpack.c.h.b16 %v6137
  %v6412 = vunpack.c.l.b16 %v6138
  %v6413 = vunpack.c.h.b16 %v6138
  %v6414 = vunpack.c.l.b16 %v6139
  %v6415 = vunpack.c.h.b16 %v6139
  %v6416 = vunpack.c.l.b16 %v6140
  %v6417 = vunpack.c.h.b16 %v6140
  %v6418 = vunpack.c.l.b16 %v6141
  %v6419 = vunpack.c.h.b16 %v6141
  %v6420 = vunpack.c.l.b16 %v6142
  %v6421 = vunpack.c.h.b16 %v6142
  %v6422 = vunpack.c.l.b16 %v6143
  %v6423 = vunpack.c.h.b16 %v6143
  %v6424 = vunpack.c.l.b16 %v6144
  %v6425 = vunpack.c.h.b16 %v6144
  %v6426 = vunpack.c.l.b16 %v6145
  %v6427 = vunpack.c.h.b16 %v6145
  %v6428 = vunpack.c.l.b16 %v6146
  %v6429 = vunpack.c.h.b16 %v6146
  %v6430 = vunpack.c.l.b16 %v6147
  %v6431 = vunpack.c.h.b16 %v6147
  %v6432 = vunpack.c.l.b16 %v6148
  %v6433 = vunpack.c.h.b16 %v6148
  %v6434 = vunpack.c.l.b16 %v6149
  %v6435 = vunpack.c.h.b16 %v6149
  %v6436 = vunpack.c.l.b16 %v6150
  %v6437 = vunpack.c.h.b16 %v6150
  %v6438 = vunpack.c.l.b16 %v6151
  %v6439 = vunpack.c.h.b16 %v6151
  %v6440 = vunpack.c.l.b16 %v6152
  %v6441 = vunpack.c.h.b16 %v6152
  %v6442 = vunpack.c.l.b16 %v6153
  %v6443 = vunpack.c.h.b16 %v6153
  %v6444 = vunpack.c.l.b16 %v6154
  %v6445 = vunpack.c.h.b16 %v6154
  %v6446 = vunpack.c.l.b16 %v6155
  %v6447 = vunpack.c.h.b16 %v6155
  %v6448 = vunpack.c.l.b16 %v6156
  %v6449 = vunpack.c.h.b16 %v6156
  %v6450 = vunpack.c.l.b16 %v6157
  %v6451 = vunpack.c.h.b16 %v6157
  %v6452 = vunpack.c.l.b16 %v6158
  %v6453 = vunpack.c.h.b16 %v6158
  %v6454 = vunpack.c.l.b16 %v6159
  %v6455 = vunpack.c.h.b16 %v6159
  %v6456 = vunpack.c.l.b16 %v6160
  %v6457 = vunpack.c.h.b16 %v6160
  %v6458 = vunpack.c.l.b16 %v6161
  %v6459 = vunpack.c.h.b16 %v6161
  %v6460 = vunpack.c.l.b16 %v6162
  %v6461 = vunpack.c.h.b16 %v6162
  %v6462 = vunpack.c.l.b16 %v6163
  %v6463 = vunpack.c.h.b16 %v6163
  %v6464 = vunpack.c.l.b16 %v6164
  %v6465 = vunpack.c.h.b16 %v6164
  %v6466 = vunpack.c.l.b16 %v6165
  %v6467 = vunpack.c.h.b16 %v6165
  %v6468 = vunpack.c.l.b16 %v6166
  %v6469 = vunpack.c.h.b16 %v6166
  %v6470 = vunpack.c.l.b16 %v6167
  %v6471 = vunpack.c.h.b16 %v6167
  %v6472 = vunpack.c.l.b16 %v6168
  %v6473 = vunpack.c.h.b16 %v6168
  %v6474 = vunpack.c.l.b16 %v6169
  %v6475 = vunpack.c.h.b16 %v6169
  %v6476 = vunpack.c.l.b16 %v6170
  %v6477 = vunpack.c.h.b16 %v6170
  %v6478 = vunpack.c.l.b16 %v6171
  %v6479 = vunpack.c.h.b16 %v6171
  %v6480 = vunpack.c.l.b16 %v6172
  %v6481 = vunpack.c.h.b16 %v6172
  %v6482 = vunpack.c.l.b16 %v6173
  %v6483 = vunpack.c.h.b16 %v6173
  %v6484 = vunpack.c.l.b16 %v6174
  %v6485 = vunpack.c.h.b16 %v6174
  %v6486 = vunpack.c.l.b16 %v6175
  %v6487 = vunpack.c.h.b16 %v6175
  %v6488 = vunpack.c.l.b16 %v6176
  %v6489 = vunpack.c.h.b16 %v6176
  %v6490 = vunpack.c.l.b16 %v6177
  %v6491 = vunpack.c.h.b16 %v6177
  %v6492 = vunpack.c.l.b16 %v6178
  %v6493 = vunpack.c.h.b16 %v6178
  %v6494 = vunpack.c.l.b16 %v6179
  %v6495 = vunpack.c.h.b16 %v6179
  %v6496 = vunpack.c.l.b16 %v6180
  %v6497 = vunpack.c.h.b16 %v6180
  %v6498 = vunpack.c.l.b16 %v6181
  %v6499 = vunpack.c.h.b16 %v6181
  %v6500 = vunpack.c.l.b16 %v6182
  %v6501 = vunpack.c.h.b16 %v6182
  %v6502 = vunpack.c.l.b16 %v6183
  %v6503 = vunpack.c.h.b16 %v6183
  %v6504 = vunpack.c.l.b16 %v6184
  %v6505 = vunpack.c.h.b16 %v6184
  %v6506 = vunpack.c.l.b16 %v6185
  %v6507 = vunpack.c.h.b16 %v6185
  %v6508 = vunpack.c.l.b16 %v6186
  %v6509 = vunpack.c.h.b16 %v6186
  %v6510 = vunpack.c.l.b16 %v6187
  %v6511 = vunpack.c.h.b16 %v6187
  %v6512 = vunpack.c.l.b16 %v6188
  %v6513 = vunpack.c.h.b16 %v6188
  %v6514 = vunpack.c.l.b16 %v6189
  %v6515 = vunpack.c.h.b16 %v6189
  %v6516 = vunpack.c.l.b16 %v6190
  %v6517 = vunpack.c.h.b16 %v6190
  %v6518 = vunpack.c.l.b16 %v6191
  %v6519 = vunpack.c.h.b16 %v6191
  %v6520 = vunpack.c.l.b16 %v6192
  %v6521 = vunpack.c.h.b16 %v6192
  %v6522 = vunpack.c.l.b16 %v6193
  %v6523 = vunpack.c.h.b16 %v6193
  %v6524 = vunpack.c.l.b16 %v6194
  %v6525 = vunpack.c.h.b16 %v6194
  %v6526 = vunpack.c.l.b16 %v6195
  %v6527 = vunpack.c.h.b16 %v6195
  %v6528 = vunpack.c.l.b16 %v6196
  %v6529 = vunpack.c.h.b16 %v6196
  %v6530 = vunpack.c.l.b16 %v6197
  %v6531 = vunpack.c.h.b16 %v6197
  %v6532 = vunpack.c.l.b16 %v6198
  %v6533 = vunpack.c.h.b16 %v6198
  %v6534 = vunpack.c.l.b16 %v6199
  %v6535 = vunpack.c.h.b16 %v6199
  %v6536 = vunpack.c.l.b16 %v6200
  %v6537 = vunpack.c.h.b16 %v6200
  %v6538 = vunpack.c.l.b16 %v6201
  %v6539 = vunpack.c.h.b16 %v6201
  %v6540 = vunpack.c.l.b16 %v6202
  %v6541 = vunpack.c.h.b16 %v6202
  %v6542 = vunpack.c.l.b16 %v6203
  %v6543 = vunpack.c.h.b16 %v6203
  %v6544 = vunpack.c.l.b16 %v6204
  %v6545 = vunpack.c.h.b16 %v6204
  %v6546 = vunpack.c.l.b16 %v6205
  %v6547 = vunpack.c.h.b16 %v6205
  %v6548 = vunpack.c.l.b16 %v6206
  %v6549 = vunpack.c.h.b16 %v6206
  %v6550 = vunpack.c.l.b16 %v6207
  %v6551 = vunpack.c.h.b16 %v6207
  %v6552 = vunpack.c.l.b16 %v6208
  %v6553 = vunpack.c.h.b16 %v6208
  %v6554 = vunpack.c.l.b16 %v6209
  %v6555 = vunpack.c.h.b16 %v6209
  %v6556 = vunpack.c.l.b16 %v6210
  %v6557 = vunpack.c.h.b16 %v6210
  %v6558 = vunpack.c.l.b16 %v6211
  %v6559 = vunpack.c.h.b16 %v6211
  %v6560 = vunpack.c.l.b16 %v6212
  %v6561 = vunpack.c.h.b16 %v6212
  %v6562 = vunpack.c.l.b16 %v6213
  %v6563 = vunpack.c.h.b16 %v6213
  %v6564 = vunpack.c.l.b16 %v6214
  %v6565 = vunpack.c.h.b16 %v6214
  %v6566 = vunpack.c.l.b16 %v6215
  %v6567 = vunpack.c.h.b16 %v6215
  %v6568 = vunpack.c.l.b16 %v6216
  %v6569 = vunpack.c.h.b16 %v6216
  %v6570 = vunpack.c.l.b16 %v6217
  %v6571 = vunpack.c.h.b16 %v6217
  %v6572 = vunpack.c.l.b16 %v6218
  %v6573 = vunpack.c.h.b16 %v6218
  %v6574 = vunpack.c.l.b16 %v6219
  %v6575 = vunpack.c.h.b16 %v6219
  %v6576 = vunpack.c.l.b16 %v6220
  %v6577 = vunpack.c.h.b16 %v6220
  %v6578 = vunpack.c.l.b16 %v6221
  %v6579 = vunpack.c.h.b16 %v6221
  %v6580 = vunpack.c.l.b16 %v6222
  %v6581 = vunpack.c.h.b16 %v6222
  %v6582 = vunpack.c.l.b16 %v6223
  %v6583 = vunpack.c.h.b16 %v6223
  %v6584 = vunpack.c.l.b16 %v6224
  %v6585 = vunpack.c.h.b16 %v6224
  %v6586 = vunpack.c.l.b16 %v6225
  %v6587 = vunpack.c.h.b16 %v6225
  %v6588 = vunpack.c.l.b16 %v6226
  %v6589 = vunpack.c.h.b16 %v6226
  %v6590 = vunpack.c.l.b16 %v6227
  %v6591 = vunpack.c.h.b16 %v6227
  %v6592 = vunpack.c.l.b16 %v6228
  %v6593 = vunpack.c.h.b16 %v6228
  %v6594 = vunpack.c.l.b16 %v6229
  %v6595 = vunpack.c.h.b16 %v6229
  %v6596 = vunpack.c.l.b16 %v6230
  %v6597 = vunpack.c.h.b16 %v6230
  %v6598 = vunpack.c.l.b16 %v6231
  %v6599 = vunpack.c.h.b16 %v6231
  %v6600 = vunpack.c.l.b16 %v6232
  %v6601 = vunpack.c.h.b16 %v6232
  %v6602 = vunpack.c.l.b16 %v6233
  %v6603 = vunpack.c.h.b16 %v6233
  %v6604 = vunpack.c.l.b16 %v6234
  %v6605 = vunpack.c.h.b16 %v6234
  %v6606 = vunpack.c.l.b16 %v6235
  %v6607 = vunpack.c.h.b16 %v6235
  %v6608 = vunpack.c.l.b16 %v6236
  %v6609 = vunpack.c.h.b16 %v6236
  %v6610 = vunpack.c.l.b16 %v6237
  %v6611 = vunpack.c.h.b16 %v6237
  %v6612 = vunpack.c.l.b16 %v6238
  %v6613 = vunpack.c.h.b16 %v6238
  %v6614 = vunpack.c.l.b16 %v6239
  %v6615 = vunpack.c.h.b16 %v6239
  %v6616 = vunpack.c.l.b16 %v6240
  %v6617 = vunpack.c.h.b16 %v6240
  %v6618 = vunpack.c.l.b16 %v6241
  %v6619 = vunpack.c.h.b16 %v6241
  %v6620 = vunpack.c.l.b16 %v6242
  %v6621 = vunpack.c.h.b16 %v6242
  %v6622 = vunpack.c.l.b16 %v6243
  %v6623 = vunpack.c.h.b16 %v6243
  %v6624 = vunpack.c.l.b16 %v6244
  %v6625 = vunpack.c.h.b16 %v6244
  %v6626 = vunpack.c.l.b16 %v6245
  %v6627 = vunpack.c.h.b16 %v6245
  %v6628 = vunpack.c.l.b16 %v6246
  %v6629 = vunpack.c.h.b16 %v6246
  %v6630 = vunpack.c.l.b16 %v6247
  %v6631 = vunpack.c.h.b16 %v6247
  %v6632 = vpack.c.b16 %v6384, %v6376
  %v6633 = vpack.c.b16 %v6385, %v6377
  %v6634 = vpack.c.b16 %v6386, %v6378
  %v6635 = vpack.c.b16 %v6387, %v6379
  %v6636 = vpack.c.b16 %v6388, %v6380
  %v6637 = vpack.c.b16 %v6389, %v6381
  %v6638 = vpack.c.b16 %v6390, %v6382
  %v6639 = vpack.c.b16 %v6391, %v6383
  %v6640 = vpack.c.b16 %v6400, %v6392
  %v6641 = vpack.c.b16 %v6401, %v6393
  %v6642 = vpack.c.b16 %v6402, %v6394
  %v6643 = vpack.c.b16 %v6403, %v6395
  %v6644 = vpack.c.b16 %v6404, %v6396
  %v6645 = vpack.c.b16 %v6405, %v6397
  %v6646 = vpack.c.b16 %v6406, %v6398
  %v6647 = vpack.c.b16 %v6407, %v6399
  %v6648 = vpack.c.b16 %v6416, %v6408
  %v6649 = vpack.c.b16 %v6417, %v6409
  %v6650 = vpack.c.b16 %v6418, %v6410
  %v6651 = vpack.c.b16 %v6419, %v6411
  %v6652 = vpack.c.b16 %v6420, %v6412
  %v6653 = vpack.c.b16 %v6421, %v6413
  %v6654 = vpack.c.b16 %v6422, %v6414
  %v6655 = vpack.c.b16 %v6423, %v6415
  %v6656 = vpack.c.b16 %v6432, %v6424
  %v6657 = vpack.c.b16 %v6433, %v6425
  %v6658 = vpack.c.b16 %v6434, %v6426
  %v6659 = vpack.c.b16 %v6435, %v6427
  %v6660 = vpack.c.b16 %v6436, %v6428
  %v6661 = vpack.c.b16 %v6437, %v6429
  %v6662 = vpack.c.b16 %v6438, %v6430
  %v6663 = vpack.c.b16 %v6439, %v6431
  %v6664 = vpack.c.b16 %v6448, %v6440
  %v6665 = vpack.c.b16 %v6449, %v6441
  %v6666 = vpack.c.b16 %v6450, %v6442
  %v6667 = vpack.c.b16 %v6451, %v6443
  %v6668 = vpack.c.b16 %v6452, %v6444
  %v6669 = vpack.c.b16 %v6453, %v6445
  %v6670 = vpack.c.b16 %v6454, %v6446
  %v6671 = vpack.c.b16 %v6455, %v6447
  %v6672 = vpack.c.b16 %v6464, %v6456
  %v6673 = vpack.c.b16 %v6465, %v6457
  %v6674 = vpack.c.b16 %v6466, %v6458
  %v6675 = vpack.c.b16 %v6467, %v6459
  %v6676 = vpack.c.b16 %v6468, %v6460
  %v6677 = vpack.c.b16 %v6469, %v6461
  %v6678 = vpack.c.b16 %v6470, %v6462
  %v6679 = vpack.c.b16 %v6471, %v6463
  %v6680 = vpack.c.b16 %v6480, %v6472
  %v6681 = vpack.c.b16 %v6481, %v6473
  %v6682 = vpack.c.b16 %v6482, %v6474
  %v6683 = vpack.c.b16 %v6483, %v6475
  %v6684 = vpack.c.b16 %v6484, %v6476
  %v6685 = vpack.c.b16 %v6485, %v6477
  %v6686 = vpack.c.b16 %v6486, %v6478
  %v6687 = vpack.c.b16 %v6487, %v6479
  %v6688 = vpack.c.b16 %v6496, %v6488
  %v6689 = vpack.c.b16 %v6497, %v6489
  %v6690 = vpack.c.b16 %v6498, %v6490
  %v6691 = vpack.c.b16 %v6499, %v6491
  %v6692 = vpack.c.b16 %v6500, %v6492
  %v6693 = vpack.c.b16 %v6501, %v6493
  %v6694 = vpack.c.b16 %v6502, %v6494
  %v6695 = vpack.c.b16 %v6503, %v6495
  %v6696 = vpack.c.b16 %v6512, %v6504
  %v6697 = vpack.c.b16 %v6513, %v6505
  %v6698 = vpack.c.b16 %v6514, %v6506
  %v6699 = vpack.c.b16 %v6515, %v6507
  %v6700 = vpack.c.b16 %v6516, %v6508
  %v6701 = vpack.c.b16 %v6517, %v6509
  %v6702 = vpack.c.b16 %v6518, %v6510
  %v6703 = vpack.c.b16 %v6519, %v6511
  %v6704 = vpack.c.b16 %v6528, %v6520
  %v6705 = vpack.c.b16 %v6529, %v6521
  %v6706 = vpack.c.b16 %v6530, %v6522
  %v6707 = vpack.c.b16 %v6531, %v6523
  %v6708 = vpack.c.b16 %v6532, %v6524
  %v6709 = vpack.c.b16 %v6533, %v6525
  %v6710 = vpack.c.b16 %v6534, %v6526
  %v6711 = vpack.c.b16 %v6535, %v6527
  %v6712 = vpack.c.b16 %v6544, %v6536
  %v6713 = vpack.c.b16 %v6545, %v6537
  %v6714 = vpack.c.b16 %v6546, %v6538
  %v6715 = vpack.c.b16 %v6547, %v6539
  %v6716 = vpack.c.b16 %v6548, %v6540
  %v6717 = vpack.c.b16 %v6549, %v6541
  %v6718 = vpack.c.b16 %v6550, %v6542
  %v6719 = vpack.c.b16 %v6551, %v6543
  %v6720 = vpack.c.b16 %v6560, %v6552
  %v6721 = vpack.c.b16 %v6561, %v6553
  %v6722 = vpack.c.b16 %v6562, %v6554
  %v6723 = vpack.c.b16 %v6563, %v6555
  %v6724 = vpack.c.b16 %v6564, %v6556
  %v6725 = vpack.c.b16 %v6565, %v6557
  %v6726 = vpack.c.b16 %v6566, %v6558
  %v6727 = vpack.c.b16 %v6567, %v6559
  %v6728 = vpack.c.b16 %v6576, %v6568
  %v6729 = vpack.c.b16 %v6577, %v6569
  %v6730 = vpack.c.b16 %v6578, %v6570
  %v6731 = vpack.c.b16 %v6579, %v6571
  %v6732 = vpack.c.b16 %v6580, %v6572
  %v6733 = vpack.c.b16 %v6581, %v6573
  %v6734 = vpack.c.b16 %v6582, %v6574
  %v6735 = vpack.c.b16 %v6583, %v6575
  %v6736 = vpack.c.b16 %v6592, %v6584
  %v6737 = vpack.c.b16 %v6593, %v6585
  %v6738 = vpack.c.b16 %v6594, %v6586
  %v6739 = vpack.c.b16 %v6595, %v6587
  %v6740 = vpack.c.b16 %v6596, %v6588
  %v6741 = vpack.c.b16 %v6597, %v6589
  %v6742 = vpack.c.b16 %v6598, %v6590
  %v6743 = vpack.c.b16 %v6599, %v6591
  %v6744 = vpack.c.b16 %v6608, %v6600
  %v6745 = vpack.c.b16 %v6609, %v6601
  %v6746 = vpack.c.b16 %v6610, %v6602
  %v6747 = vpack.c.b16 %v6611, %v6603
  %v6748 = vpack.c.b16 %v6612, %v6604
  %v6749 = vpack.c.b16 %v6613, %v6605
  %v6750 = vpack.c.b16 %v6614, %v6606
  %v6751 = vpack.c.b16 %v6615, %v6607
  %v6752 = vpack.c.b16 %v6624, %v6616
  %v6753 = vpack.c.b16 %v6625, %v6617
  %v6754 = vpack.c.b16 %v6626, %v6618
  %v6755 = vpack.c.b16 %v6627, %v6619
  %v6756 = vpack.c.b16 %v6628, %v6620
  %v6757 = vpack.c.b16 %v6629, %v6621
  %v6758 = vpack.c.b16 %v6630, %v6622
  %v6759 = vpack.c.b16 %v6631, %v6623
  %6888 = vmatprep.subr.bf16.mxu0 %v6633
  %6889 = vmatpush1.bf16.msra.mxu0 %v6632
  %6890 = vmatprep.subr.bf16.mxu0 %v6641
  %6891 = vmatpush1.bf16.msra.mxu0 %v6640
  %6892 = vmatprep.subr.bf16.mxu0 %v6649
  %6893 = vmatpush1.bf16.msra.mxu0 %v6648
  %6894 = vmatprep.subr.bf16.mxu0 %v6657
  %6895 = vmatpush1.bf16.msra.mxu0 %v6656
  %6896 = vmatprep.subr.bf16.mxu0 %v6665
  %6897 = vmatpush1.bf16.msra.mxu0 %v6664
  %6898 = vmatprep.subr.bf16.mxu0 %v6673
  %6899 = vmatpush1.bf16.msra.mxu0 %v6672
  %6900 = vmatprep.subr.bf16.mxu0 %v6681
  %6901 = vmatpush1.bf16.msra.mxu0 %v6680
  %6902 = vmatprep.subr.bf16.mxu0 %v6689
  %6903 = vmatpush1.bf16.msra.mxu0 %v6688
  %6904 = vmatprep.subr.bf16.mxu0 %v6697
  %6905 = vmatpush1.bf16.msra.mxu0 %v6696
  %6906 = vmatprep.subr.bf16.mxu0 %v6705
  %6907 = vmatpush1.bf16.msra.mxu0 %v6704
  %6908 = vmatprep.subr.bf16.mxu0 %v6713
  %6909 = vmatpush1.bf16.msra.mxu0 %v6712
  %6910 = vmatprep.subr.bf16.mxu0 %v6721
  %6911 = vmatpush1.bf16.msra.mxu0 %v6720
  %6912 = vmatprep.subr.bf16.mxu0 %v6729
  %6913 = vmatpush1.bf16.msra.mxu0 %v6728
  %6914 = vmatprep.subr.bf16.mxu0 %v6737
  %6915 = vmatpush1.bf16.msra.mxu0 %v6736
  %6916 = vmatprep.subr.bf16.mxu0 %v6745
  %6917 = vmatpush1.bf16.msra.mxu0 %v6744
  %6918 = vmatprep.subr.bf16.mxu0 %v6753
  %6919 = vmatpush1.bf16.msra.mxu0 %v6752
  %6920 = vmatprep.mubr.bf16.mxu0 %v6113
  %6921 = vmatmul.mubr.bf16.gmra.mrb[0].mxu0 %v6112
  %v6922 = vpop.f32.mrb[0].mxu0
  %v6923 = vadd.f32 0.0, %v6922
  %v6924 = vpop.f32.mrb[0].mxu0
  %v6925 = vadd.f32 0.0, %v6924
  %v6926 = vpop.f32.mrb[0].mxu0
  %v6927 = vadd.f32 0.0, %v6926
  %v6928 = vpop.f32.mrb[0].mxu0
  %v6929 = vadd.f32 0.0, %v6928
  %6930 = vmatprep.mubr.bf16.mxu0 %v6115
  %6931 = vmatmul.mubr.bf16.gmra.mrb[0].mxu0 %v6114
  %v6932 = vpop.f32.mrb[0].mxu0
  %v6933 = vadd.f32 0.0, %v6932
  %v6934 = vpop.f32.mrb[0].mxu0
  %v6935 = vadd.f32 0.0, %v6934
  %v6936 = vpop.f32.mrb[0].mxu0
  %v6937 = vadd.f32 0.0, %v6936
  %v6938 = vpop.f32.mrb[0].mxu0
  %v6939 = vadd.f32 0.0, %v6938
  %6940 = vmatprep.mubr.bf16.mxu0 %v6117
  %6941 = vmatmul.mubr.bf16.gmra.mrb[0].mxu0 %v6116
  %v6942 = vpop.f32.mrb[0].mxu0
  %v6943 = vadd.f32 0.0, %v6942
  %v6944 = vpop.f32.mrb[0].mxu0
  %v6945 = vadd.f32 0.0, %v6944
  %v6946 = vpop.f32.mrb[0].mxu0
  %v6947 = vadd.f32 0.0, %v6946
  %v6948 = vpop.f32.mrb[0].mxu0
  %v6949 = vadd.f32 0.0, %v6948
  %6950 = vmatprep.mubr.bf16.mxu0 %v6119
  %6951 = vmatmul.mubr.bf16.gmra.mrb[0].mxu0 %v6118
  %v6952 = vpop.f32.mrb[0].mxu0
  %v6953 = vadd.f32 0.0, %v6952
  %v6954 = vpop.f32.mrb[0].mxu0
  %v6955 = vadd.f32 0.0, %v6954
  %v6956 = vpop.f32.mrb[0].mxu0
  %v6957 = vadd.f32 0.0, %v6956
  %v6958 = vpop.f32.mrb[0].mxu0
  %v6959 = vadd.f32 0.0, %v6958
  %6960 = vdwg.mxu0
  %6961 = vmatprep.subr.bf16.mxu0 %v6635
  %6962 = vmatpush1.bf16.msra.mxu0 %v6634
  %6963 = vmatprep.subr.bf16.mxu0 %v6643
  %6964 = vmatpush1.bf16.msra.mxu0 %v6642
  %6965 = vmatprep.subr.bf16.mxu0 %v6651
  %6966 = vmatpush1.bf16.msra.mxu0 %v6650
  %6967 = vmatprep.subr.bf16.mxu0 %v6659
  %6968 = vmatpush1.bf16.msra.mxu0 %v6658
  %6969 = vmatprep.subr.bf16.mxu0 %v6667
  %6970 = vmatpush1.bf16.msra.mxu0 %v6666
  %6971 = vmatprep.subr.bf16.mxu0 %v6675
  %6972 = vmatpush1.bf16.msra.mxu0 %v6674
  %6973 = vmatprep.subr.bf16.mxu0 %v6683
  %6974 = vmatpush1.bf16.msra.mxu0 %v6682
  %6975 = vmatprep.subr.bf16.mxu0 %v6691
  %6976 = vmatpush1.bf16.msra.mxu0 %v6690
  %6977 = vmatprep.subr.bf16.mxu0 %v6699
  %6978 = vmatpush1.bf16.msra.mxu0 %v6698
  %6979 = vmatprep.subr.bf16.mxu0 %v6707
  %6980 = vmatpush1.bf16.msra.mxu0 %v6706
  %6981 = vmatprep.subr.bf16.mxu0 %v6715
  %6982 = vmatpush1.bf16.msra.mxu0 %v6714
  %6983 = vmatprep.subr.bf16.mxu0 %v6723
  %6984 = vmatpush1.bf16.msra.mxu0 %v6722
  %6985 = vmatprep.subr.bf16.mxu0 %v6731
  %6986 = vmatpush1.bf16.msra.mxu0 %v6730
  %6987 = vmatprep.subr.bf16.mxu0 %v6739
  %6988 = vmatpush1.bf16.msra.mxu0 %v6738
  %6989 = vmatprep.subr.bf16.mxu0 %v6747
  %6990 = vmatpush1.bf16.msra.mxu0 %v6746
  %6991 = vmatprep.subr.bf16.mxu0 %v6755
  %6992 = vmatpush1.bf16.msra.mxu0 %v6754
  %6993 = vmatprep.mubr.bf16.mxu0 %v6113
  %6994 = vmatmul.mubr.bf16.gmra.mrb[0].mxu0 %v6112
  %v6995 = vpop.f32.mrb[0].mxu0
  %v6996 = vadd.f32 0.0, %v6995
  %v6997 = vpop.f32.mrb[0].mxu0
  %v6998 = vadd.f32 0.0, %v6997
  %v6999 = vpop.f32.mrb[0].mxu0
  %v7000 = vadd.f32 0.0, %v6999
  %v7001 = vpop.f32.mrb[0].mxu0
  %v7002 = vadd.f32 0.0, %v7001
  %7003 = vmatprep.mubr.bf16.mxu0 %v6115
  %7004 = vmatmul.mubr.bf16.gmra.mrb[0].mxu0 %v6114
  %v7005 = vpop.f32.mrb[0].mxu0
  %v7006 = vadd.f32 0.0, %v7005
  %v7007 = vpop.f32.mrb[0].mxu0
  %v7008 = vadd.f32 0.0, %v7007
  %v7009 = vpop.f32.mrb[0].mxu0
  %v7010 = vadd.f32 0.0, %v7009
  %v7011 = vpop.f32.mrb[0].mxu0
  %v7012 = vadd.f32 0.0, %v7011
  %7013 = vmatprep.mubr.bf16.mxu0 %v6117
  %7014 = vmatmul.mubr.bf16.gmra.mrb[0].mxu0 %v6116
  %v7015 = vpop.f32.mrb[0].mxu0
  %v7016 = vadd.f32 0.0, %v7015
  %v7017 = vpop.f32.mrb[0].mxu0
  %v7018 = vadd.f32 0.0, %v7017
  %v7019 = vpop.f32.mrb[0].mxu0
  %v7020 = vadd.f32 0.0, %v7019
  %v7021 = vpop.f32.mrb[0].mxu0
  %v7022 = vadd.f32 0.0, %v7021
  %7023 = vmatprep.mubr.bf16.mxu0 %v6119
  %7024 = vmatmul.mubr.bf16.gmra.mrb[0].mxu0 %v6118
  %v7025 = vpop.f32.mrb[0].mxu0
  %v7026 = vadd.f32 0.0, %v7025
  %v7027 = vpop.f32.mrb[0].mxu0
  %v7028 = vadd.f32 0.0, %v7027
  %v7029 = vpop.f32.mrb[0].mxu0
  %v7030 = vadd.f32 0.0, %v7029
  %v7031 = vpop.f32.mrb[0].mxu0
  %v7032 = vadd.f32 0.0, %v7031
  %7033 = vdwg.mxu0
  %7034 = vmatprep.subr.bf16.mxu0 %v6637
  %7035 = vmatpush1.bf16.msra.mxu0 %v6636
  %7036 = vmatprep.subr.bf16.mxu0 %v6645
  %7037 = vmatpush1.bf16.msra.mxu0 %v6644
  %7038 = vmatprep.subr.bf16.mxu0 %v6653
  %7039 = vmatpush1.bf16.msra.mxu0 %v6652
  %7040 = vmatprep.subr.bf16.mxu0 %v6661
  %7041 = vmatpush1.bf16.msra.mxu0 %v6660
  %7042 = vmatprep.subr.bf16.mxu0 %v6669
  %7043 = vmatpush1.bf16.msra.mxu0 %v6668
  %7044 = vmatprep.subr.bf16.mxu0 %v6677
  %7045 = vmatpush1.bf16.msra.mxu0 %v6676
  %7046 = vmatprep.subr.bf16.mxu0 %v6685
  %7047 = vmatpush1.bf16.msra.mxu0 %v6684
  %7048 = vmatprep.subr.bf16.mxu0 %v6693
  %7049 = vmatpush1.bf16.msra.mxu0 %v6692
  %7050 = vmatprep.subr.bf16.mxu0 %v6701
  %7051 = vmatpush1.bf16.msra.mxu0 %v6700
  %7052 = vmatprep.subr.bf16.mxu0 %v6709
  %7053 = vmatpush1.bf16.msra.mxu0 %v6708
  %7054 = vmatprep.subr.bf16.mxu0 %v6717
  %7055 = vmatpush1.bf16.msra.mxu0 %v6716
  %7056 = vmatprep.subr.bf16.mxu0 %v6725
  %7057 = vmatpush1.bf16.msra.mxu0 %v6724
  %7058 = vmatprep.subr.bf16.mxu0 %v6733
  %7059 = vmatpush1.bf16.msra.mxu0 %v6732
  %7060 = vmatprep.subr.bf16.mxu0 %v6741
  %7061 = vmatpush1.bf16.msra.mxu0 %v6740
  %7062 = vmatprep.subr.bf16.mxu0 %v6749
  %7063 = vmatpush1.bf16.msra.mxu0 %v6748
  %7064 = vmatprep.subr.bf16.mxu0 %v6757
  %7065 = vmatpush1.bf16.msra.mxu0 %v6756
  %7066 = vmatprep.mubr.bf16.mxu0 %v6113
  %7067 = vmatmul.mubr.bf16.gmra.mrb[0].mxu0 %v6112
  %v7068 = vpop.f32.mrb[0].mxu0
  %v7069 = vadd.f32 0.0, %v7068
  %v7070 = vpop.f32.mrb[0].mxu0
  %v7071 = vadd.f32 0.0, %v7070
  %v7072 = vpop.f32.mrb[0].mxu0
  %v7073 = vadd.f32 0.0, %v7072
  %v7074 = vpop.f32.mrb[0].mxu0
  %v7075 = vadd.f32 0.0, %v7074
  %7076 = vmatprep.mubr.bf16.mxu0 %v6115
  %7077 = vmatmul.mubr.bf16.gmra.mrb[0].mxu0 %v6114
  %v7078 = vpop.f32.mrb[0].mxu0
  %v7079 = vadd.f32 0.0, %v7078
  %v7080 = vpop.f32.mrb[0].mxu0
  %v7081 = vadd.f32 0.0, %v7080
  %v7082 = vpop.f32.mrb[0].mxu0
  %v7083 = vadd.f32 0.0, %v7082
  %v7084 = vpop.f32.mrb[0].mxu0
  %v7085 = vadd.f32 0.0, %v7084
  %7086 = vmatprep.mubr.bf16.mxu0 %v6117
  %7087 = vmatmul.mubr.bf16.gmra.mrb[0].mxu0 %v6116
  %v7088 = vpop.f32.mrb[0].mxu0
  %v7089 = vadd.f32 0.0, %v7088
  %v7090 = vpop.f32.mrb[0].mxu0
  %v7091 = vadd.f32 0.0, %v7090
  %v7092 = vpop.f32.mrb[0].mxu0
  %v7093 = vadd.f32 0.0, %v7092
  %v7094 = vpop.f32.mrb[0].mxu0
  %v7095 = vadd.f32 0.0, %v7094
  %7096 = vmatprep.mubr.bf16.mxu0 %v6119
  %7097 = vmatmul.mubr.bf16.gmra.mrb[0].mxu0 %v6118
  %v7098 = vpop.f32.mrb[0].mxu0
  %v7099 = vadd.f32 0.0, %v7098
  %v7100 = vpop.f32.mrb[0].mxu0
  %v7101 = vadd.f32 0.0, %v7100
  %v7102 = vpop.f32.mrb[0].mxu0
  %v7103 = vadd.f32 0.0, %v7102
  %v7104 = vpop.f32.mrb[0].mxu0
  %v7105 = vadd.f32 0.0, %v7104
  %7106 = vdwg.mxu0
  %7107 = vmatprep.subr.bf16.mxu0 %v6639
  %7108 = vmatpush1.bf16.msra.mxu0 %v6638
  %7109 = vmatprep.subr.bf16.mxu0 %v6647
  %7110 = vmatpush1.bf16.msra.mxu0 %v6646
  %7111 = vmatprep.subr.bf16.mxu0 %v6655
  %7112 = vmatpush1.bf16.msra.mxu0 %v6654
  %7113 = vmatprep.subr.bf16.mxu0 %v6663
  %7114 = vmatpush1.bf16.msra.mxu0 %v6662
  %7115 = vmatprep.subr.bf16.mxu0 %v6671
  %7116 = vmatpush1.bf16.msra.mxu0 %v6670
  %7117 = vmatprep.subr.bf16.mxu0 %v6679
  %7118 = vmatpush1.bf16.msra.mxu0 %v6678
  %7119 = vmatprep.subr.bf16.mxu0 %v6687
  %7120 = vmatpush1.bf16.msra.mxu0 %v6686
  %7121 = vmatprep.subr.bf16.mxu0 %v6695
  %7122 = vmatpush1.bf16.msra.mxu0 %v6694
  %7123 = vmatprep.subr.bf16.mxu0 %v6703
  %7124 = vmatpush1.bf16.msra.mxu0 %v6702
  %7125 = vmatprep.subr.bf16.mxu0 %v6711
  %7126 = vmatpush1.bf16.msra.mxu0 %v6710
  %7127 = vmatprep.subr.bf16.mxu0 %v6719
  %7128 = vmatpush1.bf16.msra.mxu0 %v6718
  %7129 = vmatprep.subr.bf16.mxu0 %v6727
  %7130 = vmatpush1.bf16.msra.mxu0 %v6726
  %7131 = vmatprep.subr.bf16.mxu0 %v6735
  %7132 = vmatpush1.bf16.msra.mxu0 %v6734
  %7133 = vmatprep.subr.bf16.mxu0 %v6743
  %7134 = vmatpush1.bf16.msra.mxu0 %v6742
  %7135 = vmatprep.subr.bf16.mxu0 %v6751
  %7136 = vmatpush1.bf16.msra.mxu0 %v6750
  %7137 = vmatprep.subr.bf16.mxu0 %v6759
  %7138 = vmatpush1.bf16.msra.mxu0 %v6758
  %7139 = vmatprep.mubr.bf16.mxu0 %v6113
  %7140 = vmatmul.mubr.bf16.gmra.mrb[0].mxu0 %v6112
  %v7141 = vpop.f32.mrb[0].mxu0
  %v7142 = vadd.f32 0.0, %v7141
  %v7143 = vpop.f32.mrb[0].mxu0
  %v7144 = vadd.f32 0.0, %v7143
  %v7145 = vpop.f32.mrb[0].mxu0
  %v7146 = vadd.f32 0.0, %v7145
  %v7147 = vpop.f32.mrb[0].mxu0
  %v7148 = vadd.f32 0.0, %v7147
  %7149 = vmatprep.mubr.bf16.mxu0 %v6115
  %7150 = vmatmul.mubr.bf16.gmra.mrb[0].mxu0 %v6114
  %v7151 = vpop.f32.mrb[0].mxu0
  %v7152 = vadd.f32 0.0, %v7151
  %v7153 = vpop.f32.mrb[0].mxu0
  %v7154 = vadd.f32 0.0, %v7153
  %v7155 = vpop.f32.mrb[0].mxu0
  %v7156 = vadd.f32 0.0, %v7155
  %v7157 = vpop.f32.mrb[0].mxu0
  %v7158 = vadd.f32 0.0, %v7157
  %7159 = vmatprep.mubr.bf16.mxu0 %v6117
  %7160 = vmatmul.mubr.bf16.gmra.mrb[0].mxu0 %v6116
  %v7161 = vpop.f32.mrb[0].mxu0
  %v7162 = vadd.f32 0.0, %v7161
  %v7163 = vpop.f32.mrb[0].mxu0
  %v7164 = vadd.f32 0.0, %v7163
  %v7165 = vpop.f32.mrb[0].mxu0
  %v7166 = vadd.f32 0.0, %v7165
  %v7167 = vpop.f32.mrb[0].mxu0
  %v7168 = vadd.f32 0.0, %v7167
  %7169 = vmatprep.mubr.bf16.mxu0 %v6119
  %7170 = vmatmul.mubr.bf16.gmra.mrb[0].mxu0 %v6118
  %v7171 = vpop.f32.mrb[0].mxu0
  %v7172 = vadd.f32 0.0, %v7171
  %v7173 = vpop.f32.mrb[0].mxu0
  %v7174 = vadd.f32 0.0, %v7173
  %v7175 = vpop.f32.mrb[0].mxu0
  %v7176 = vadd.f32 0.0, %v7175
  %v7177 = vpop.f32.mrb[0].mxu0
  %v7178 = vadd.f32 0.0, %v7177
  %7179 = vdwg.mxu0
  %v7180 = vpack.c.bf16 %v6927, %v6923
  %v7181 = vpack.c.bf16 %v6929, %v6925
  %v7182 = vpack.c.bf16 %v7000, %v6996
  %v7183 = vpack.c.bf16 %v7002, %v6998
  %v7184 = vpack.c.bf16 %v7073, %v7069
  %v7185 = vpack.c.bf16 %v7075, %v7071
  %v7186 = vpack.c.bf16 %v7146, %v7142
  %v7187 = vpack.c.bf16 %v7148, %v7144
  %v7188 = vpack.c.bf16 %v6937, %v6933
  %v7189 = vpack.c.bf16 %v6939, %v6935
  %v7190 = vpack.c.bf16 %v7010, %v7006
  %v7191 = vpack.c.bf16 %v7012, %v7008
  %v7192 = vpack.c.bf16 %v7083, %v7079
  %v7193 = vpack.c.bf16 %v7085, %v7081
  %v7194 = vpack.c.bf16 %v7156, %v7152
  %v7195 = vpack.c.bf16 %v7158, %v7154
  %v7196 = vpack.c.bf16 %v6947, %v6943
  %v7197 = vpack.c.bf16 %v6949, %v6945
  %v7198 = vpack.c.bf16 %v7020, %v7016
  %v7199 = vpack.c.bf16 %v7022, %v7018
  %v7200 = vpack.c.bf16 %v7093, %v7089
  %v7201 = vpack.c.bf16 %v7095, %v7091
  %v7202 = vpack.c.bf16 %v7166, %v7162
  %v7203 = vpack.c.bf16 %v7168, %v7164
  %v7204 = vpack.c.bf16 %v6957, %v6953
  %v7205 = vpack.c.bf16 %v6959, %v6955
  %v7206 = vpack.c.bf16 %v7030, %v7026
  %v7207 = vpack.c.bf16 %v7032, %v7028
  %v7208 = vpack.c.bf16 %v7103, %v7099
  %v7209 = vpack.c.bf16 %v7105, %v7101
  %v7210 = vpack.c.bf16 %v7176, %v7172
  %v7211 = vpack.c.bf16 %v7178, %v7174
  %v7212 = vld [vmem:[%s18] sm:$0xf]
  %v7213 = vld [vmem:[%s18 + $0x4] sm:$0xf]
  %v7214 = vld [vmem:[%s18 + $0x8] sm:$0xf]
  %v7215 = vld [vmem:[%s18 + $0xc] sm:$0xf]
  %v7216 = vld [vmem:[%s18 + $0x10] sm:$0xf]
  %v7217 = vld [vmem:[%s18 + $0x14] sm:$0xf]
  %v7218 = vld [vmem:[%s18 + $0x18] sm:$0xf]
  %v7219 = vld [vmem:[%s18 + $0x1c] sm:$0xf]
  %v7220 = vld [vmem:[%s18 + $0x20] sm:$0xf]
  %v7221 = vld [vmem:[%s18 + $0x24] sm:$0xf]
  %v7222 = vld [vmem:[%s18 + $0x28] sm:$0xf]
  %v7223 = vld [vmem:[%s18 + $0x2c] sm:$0xf]
  %v7224 = vld [vmem:[%s18 + $0x30] sm:$0xf]
  %v7225 = vld [vmem:[%s18 + $0x34] sm:$0xf]
  %v7226 = vld [vmem:[%s18 + $0x38] sm:$0xf]
  %v7227 = vld [vmem:[%s18 + $0x3c] sm:$0xf]
  %s7228 = scalar_lea.vmem %s18, 64
  %v7229 = vld [vmem:[%s7228] sm:$0xf]
  %v7230 = vld [vmem:[%s7228 + $0x4] sm:$0xf]
  %v7231 = vld [vmem:[%s7228 + $0x8] sm:$0xf]
  %v7232 = vld [vmem:[%s7228 + $0xc] sm:$0xf]
  %v7233 = vld [vmem:[%s7228 + $0x10] sm:$0xf]
  %v7234 = vld [vmem:[%s7228 + $0x14] sm:$0xf]
  %v7235 = vld [vmem:[%s7228 + $0x18] sm:$0xf]
  %v7236 = vld [vmem:[%s7228 + $0x1c] sm:$0xf]
  %v7237 = vld [vmem:[%s7228 + $0x20] sm:$0xf]
  %v7238 = vld [vmem:[%s7228 + $0x24] sm:$0xf]
  %v7239 = vld [vmem:[%s7228 + $0x28] sm:$0xf]
  %v7240 = vld [vmem:[%s7228 + $0x2c] sm:$0xf]
  %v7241 = vld [vmem:[%s7228 + $0x30] sm:$0xf]
  %v7242 = vld [vmem:[%s7228 + $0x34] sm:$0xf]
  %v7243 = vld [vmem:[%s7228 + $0x38] sm:$0xf]
  %v7244 = vld [vmem:[%s7228 + $0x3c] sm:$0xf]
  %v7261 = vunpack.c.l.b16 %v7229
  %v7262 = vunpack.c.l.b16 %v7230
  %v7263 = vunpack.c.l.b16 %v7231
  %v7264 = vunpack.c.l.b16 %v7232
  %v7265 = vunpack.c.l.b16 %v7233
  %v7266 = vunpack.c.l.b16 %v7234
  %v7267 = vunpack.c.l.b16 %v7235
  %v7268 = vunpack.c.l.b16 %v7236
  %v7269 = vunpack.c.l.b16 %v7237
  %v7270 = vunpack.c.l.b16 %v7238
  %v7271 = vunpack.c.l.b16 %v7239
  %v7272 = vunpack.c.l.b16 %v7240
  %v7273 = vunpack.c.l.b16 %v7241
  %v7274 = vunpack.c.l.b16 %v7242
  %v7275 = vunpack.c.l.b16 %v7243
  %v7276 = vunpack.c.l.b16 %v7244
  %v7277 = vpack.c.b16 %v7262, %v7261
  %v7278 = vpack.c.b16 %v7264, %v7263
  %v7279 = vpack.c.b16 %v7266, %v7265
  %v7280 = vpack.c.b16 %v7268, %v7267
  %v7281 = vpack.c.b16 %v7270, %v7269
  %v7282 = vpack.c.b16 %v7272, %v7271
  %v7283 = vpack.c.b16 %v7274, %v7273
  %v7284 = vpack.c.b16 %v7276, %v7275
  %v7286 = vsel %vm724, %v7277, 0
  %v7289 = vsel %vm724, %v7278, 0
  %v7292 = vsel %vm724, %v7279, 0
  %v7295 = vsel %vm724, %v7280, 0
  %v7298 = vsel %vm724, %v7281, 0
  %v7301 = vsel %vm724, %v7282, 0
  %v7304 = vsel %vm724, %v7283, 0
  %v7307 = vsel %vm724, %v7284, 0
  %7309 = vmatprep.subr.bf16.mxu0 %v7183
  %7310 = vmatpush1.bf16.msra.mxu0 %v7182
  %7311 = vmatprep.subr.bf16.mxu0 %v7191
  %7312 = vmatpush1.bf16.msra.mxu0 %v7190
  %7313 = vmatprep.subr.bf16.mxu0 %v7199
  %7314 = vmatpush1.bf16.msra.mxu0 %v7198
  %7315 = vmatprep.subr.bf16.mxu0 %v7207
  %7316 = vmatpush1.bf16.msra.mxu0 %v7206
  %7317 = vmatprep.subr.bf16.mxu0 0
  %7318 = vmatpush1.bf16.msra.mxu0 0
  %7319 = vmatprep.subr.bf16.mxu0 0
  %7320 = vmatpush1.bf16.msra.mxu0 0
  %7321 = vmatprep.subr.bf16.mxu0 0
  %7322 = vmatpush1.bf16.msra.mxu0 0
  %7323 = vmatprep.subr.bf16.mxu0 0
  %7324 = vmatpush1.bf16.msra.mxu0 0
  %7325 = vmatprep.subr.bf16.mxu0 0
  %7326 = vmatpush1.bf16.msra.mxu0 0
  %7327 = vmatprep.subr.bf16.mxu0 0
  %7328 = vmatpush1.bf16.msra.mxu0 0
  %7329 = vmatprep.subr.bf16.mxu0 0
  %7330 = vmatpush1.bf16.msra.mxu0 0
  %7331 = vmatprep.subr.bf16.mxu0 0
  %7332 = vmatpush1.bf16.msra.mxu0 0
  %7333 = vmatprep.subr.bf16.mxu0 0
  %7334 = vmatpush1.bf16.msra.mxu0 0
  %7335 = vmatprep.subr.bf16.mxu0 0
  %7336 = vmatpush1.bf16.msra.mxu0 0
  %7337 = vmatprep.subr.bf16.mxu0 0
  %7338 = vmatpush1.bf16.msra.mxu0 0
  %7339 = vmatprep.subr.bf16.mxu0 0
  %7340 = vmatpush1.bf16.msra.mxu0 0
  %7341 = vmatprep.mubr.bf16.mxu0 0
  %7342 = vmatmul.mubr.bf16.gmra.mrb[0].mxu0 %v7286
  %v7343 = vpop.f32.mrb[0].mxu0
  %v7344 = vadd.f32 0.0, %v7343
  %v7345 = vpop.f32.mrb[0].mxu0
  %v7346 = vadd.f32 0.0, %v7345
  %v7347 = vpop.f32.mrb[0].mxu0
  %v7348 = vadd.f32 0.0, %v7347
  %v7349 = vpop.f32.mrb[0].mxu0
  %v7350 = vadd.f32 0.0, %v7349
  %7351 = vmatprep.mubr.bf16.mxu0 0
  %7352 = vmatmul.mubr.bf16.gmra.mrb[0].mxu0 %v7289
  %v7353 = vpop.f32.mrb[0].mxu0
  %v7354 = vadd.f32 0.0, %v7353
  %v7355 = vpop.f32.mrb[0].mxu0
  %v7356 = vadd.f32 0.0, %v7355
  %v7357 = vpop.f32.mrb[0].mxu0
  %v7358 = vadd.f32 0.0, %v7357
  %v7359 = vpop.f32.mrb[0].mxu0
  %v7360 = vadd.f32 0.0, %v7359
  %7361 = vmatprep.mubr.bf16.mxu0 0
  %7362 = vmatmul.mubr.bf16.gmra.mrb[0].mxu0 %v7292
  %v7363 = vpop.f32.mrb[0].mxu0
  %v7364 = vadd.f32 0.0, %v7363
  %v7365 = vpop.f32.mrb[0].mxu0
  %v7366 = vadd.f32 0.0, %v7365
  %v7367 = vpop.f32.mrb[0].mxu0
  %v7368 = vadd.f32 0.0, %v7367
  %v7369 = vpop.f32.mrb[0].mxu0
  %v7370 = vadd.f32 0.0, %v7369
  %7371 = vmatprep.mubr.bf16.mxu0 0
  %7372 = vmatmul.mubr.bf16.gmra.mrb[0].mxu0 %v7295
  %v7373 = vpop.f32.mrb[0].mxu0
  %v7374 = vadd.f32 0.0, %v7373
  %v7375 = vpop.f32.mrb[0].mxu0
  %v7376 = vadd.f32 0.0, %v7375
  %v7377 = vpop.f32.mrb[0].mxu0
  %v7378 = vadd.f32 0.0, %v7377
  %v7379 = vpop.f32.mrb[0].mxu0
  %v7380 = vadd.f32 0.0, %v7379
  %7381 = vmatprep.mubr.bf16.mxu0 0
  %7382 = vmatmul.mubr.bf16.gmra.mrb[0].mxu0 %v7298
  %v7383 = vpop.f32.mrb[0].mxu0
  %v7384 = vadd.f32 0.0, %v7383
  %v7385 = vpop.f32.mrb[0].mxu0
  %v7386 = vadd.f32 0.0, %v7385
  %v7387 = vpop.f32.mrb[0].mxu0
  %v7388 = vadd.f32 0.0, %v7387
  %v7389 = vpop.f32.mrb[0].mxu0
  %v7390 = vadd.f32 0.0, %v7389
  %7391 = vmatprep.mubr.bf16.mxu0 0
  %7392 = vmatmul.mubr.bf16.gmra.mrb[0].mxu0 %v7301
  %v7393 = vpop.f32.mrb[0].mxu0
  %v7394 = vadd.f32 0.0, %v7393
  %v7395 = vpop.f32.mrb[0].mxu0
  %v7396 = vadd.f32 0.0, %v7395
  %v7397 = vpop.f32.mrb[0].mxu0
  %v7398 = vadd.f32 0.0, %v7397
  %v7399 = vpop.f32.mrb[0].mxu0
  %v7400 = vadd.f32 0.0, %v7399
  %7401 = vmatprep.mubr.bf16.mxu0 0
  %7402 = vmatmul.mubr.bf16.gmra.mrb[0].mxu0 %v7304
  %v7403 = vpop.f32.mrb[0].mxu0
  %v7404 = vadd.f32 0.0, %v7403
  %v7405 = vpop.f32.mrb[0].mxu0
  %v7406 = vadd.f32 0.0, %v7405
  %v7407 = vpop.f32.mrb[0].mxu0
  %v7408 = vadd.f32 0.0, %v7407
  %v7409 = vpop.f32.mrb[0].mxu0
  %v7410 = vadd.f32 0.0, %v7409
  %7411 = vmatprep.mubr.bf16.mxu0 0
  %7412 = vmatmul.mubr.bf16.gmra.mrb[0].mxu0 %v7307
  %v7413 = vpop.f32.mrb[0].mxu0
  %v7414 = vadd.f32 0.0, %v7413
  %v7415 = vpop.f32.mrb[0].mxu0
  %v7416 = vadd.f32 0.0, %v7415
  %v7417 = vpop.f32.mrb[0].mxu0
  %v7418 = vadd.f32 0.0, %v7417
  %v7419 = vpop.f32.mrb[0].mxu0
  %v7420 = vadd.f32 0.0, %v7419
  %7421 = vdwg.mxu0
  %v7438 = vunpack.c.l.b16 %v7212
  %v7439 = vunpack.c.l.b16 %v7213
  %v7440 = vunpack.c.l.b16 %v7214
  %v7441 = vunpack.c.l.b16 %v7215
  %v7442 = vunpack.c.l.b16 %v7216
  %v7443 = vunpack.c.l.b16 %v7217
  %v7444 = vunpack.c.l.b16 %v7218
  %v7445 = vunpack.c.l.b16 %v7219
  %v7446 = vunpack.c.l.b16 %v7220
  %v7447 = vunpack.c.l.b16 %v7221
  %v7448 = vunpack.c.l.b16 %v7222
  %v7449 = vunpack.c.l.b16 %v7223
  %v7450 = vunpack.c.l.b16 %v7224
  %v7451 = vunpack.c.l.b16 %v7225
  %v7452 = vunpack.c.l.b16 %v7226
  %v7453 = vunpack.c.l.b16 %v7227
  %v7454 = vpack.c.b16 %v7439, %v7438
  %v7455 = vpack.c.b16 %v7441, %v7440
  %v7456 = vpack.c.b16 %v7443, %v7442
  %v7457 = vpack.c.b16 %v7445, %v7444
  %v7458 = vpack.c.b16 %v7447, %v7446
  %v7459 = vpack.c.b16 %v7449, %v7448
  %v7460 = vpack.c.b16 %v7451, %v7450
  %v7461 = vpack.c.b16 %v7453, %v7452
  %v7463 = vsel %vm724, %v7454, 0
  %v7466 = vsel %vm724, %v7455, 0
  %v7469 = vsel %vm724, %v7456, 0
  %v7472 = vsel %vm724, %v7457, 0
  %v7475 = vsel %vm724, %v7458, 0
  %v7478 = vsel %vm724, %v7459, 0
  %v7481 = vsel %vm724, %v7460, 0
  %v7484 = vsel %vm724, %v7461, 0
  %7486 = vmatprep.subr.bf16.mxu0 %v7181
  %7487 = vmatpush1.bf16.msra.mxu0 %v7180
  %7488 = vmatprep.subr.bf16.mxu0 %v7189
  %7489 = vmatpush1.bf16.msra.mxu0 %v7188
  %7490 = vmatprep.subr.bf16.mxu0 %v7197
  %7491 = vmatpush1.bf16.msra.mxu0 %v7196
  %7492 = vmatprep.subr.bf16.mxu0 %v7205
  %7493 = vmatpush1.bf16.msra.mxu0 %v7204
  %7494 = vmatprep.subr.bf16.mxu0 0
  %7495 = vmatpush1.bf16.msra.mxu0 0
  %7496 = vmatprep.subr.bf16.mxu0 0
  %7497 = vmatpush1.bf16.msra.mxu0 0
  %7498 = vmatprep.subr.bf16.mxu0 0
  %7499 = vmatpush1.bf16.msra.mxu0 0
  %7500 = vmatprep.subr.bf16.mxu0 0
  %7501 = vmatpush1.bf16.msra.mxu0 0
  %7502 = vmatprep.subr.bf16.mxu0 0
  %7503 = vmatpush1.bf16.msra.mxu0 0
  %7504 = vmatprep.subr.bf16.mxu0 0
  %7505 = vmatpush1.bf16.msra.mxu0 0
  %7506 = vmatprep.subr.bf16.mxu0 0
  %7507 = vmatpush1.bf16.msra.mxu0 0
  %7508 = vmatprep.subr.bf16.mxu0 0
  %7509 = vmatpush1.bf16.msra.mxu0 0
  %7510 = vmatprep.subr.bf16.mxu0 0
  %7511 = vmatpush1.bf16.msra.mxu0 0
  %7512 = vmatprep.subr.bf16.mxu0 0
  %7513 = vmatpush1.bf16.msra.mxu0 0
  %7514 = vmatprep.subr.bf16.mxu0 0
  %7515 = vmatpush1.bf16.msra.mxu0 0
  %7516 = vmatprep.subr.bf16.mxu0 0
  %7517 = vmatpush1.bf16.msra.mxu0 0
  %7518 = vmatprep.mubr.bf16.mxu0 0
  %7519 = vmatmul.mubr.bf16.gmra.mrb[0].mxu0 %v7463
  %v7520 = vpop.f32.mrb[0].mxu0
  %v7521 = vadd.f32 %v7344, %v7520
  %v7522 = vpop.f32.mrb[0].mxu0
  %v7523 = vadd.f32 %v7346, %v7522
  %v7524 = vpop.f32.mrb[0].mxu0
  %v7525 = vadd.f32 %v7348, %v7524
  %v7526 = vpop.f32.mrb[0].mxu0
  %v7527 = vadd.f32 %v7350, %v7526
  %7528 = vmatprep.mubr.bf16.mxu0 0
  %7529 = vmatmul.mubr.bf16.gmra.mrb[0].mxu0 %v7466
  %v7530 = vpop.f32.mrb[0].mxu0
  %v7531 = vadd.f32 %v7354, %v7530
  %v7532 = vpop.f32.mrb[0].mxu0
  %v7533 = vadd.f32 %v7356, %v7532
  %v7534 = vpop.f32.mrb[0].mxu0
  %v7535 = vadd.f32 %v7358, %v7534
  %v7536 = vpop.f32.mrb[0].mxu0
  %v7537 = vadd.f32 %v7360, %v7536
  %7538 = vmatprep.mubr.bf16.mxu0 0
  %7539 = vmatmul.mubr.bf16.gmra.mrb[0].mxu0 %v7469
  %v7540 = vpop.f32.mrb[0].mxu0
  %v7541 = vadd.f32 %v7364, %v7540
  %v7542 = vpop.f32.mrb[0].mxu0
  %v7543 = vadd.f32 %v7366, %v7542
  %v7544 = vpop.f32.mrb[0].mxu0
  %v7545 = vadd.f32 %v7368, %v7544
  %v7546 = vpop.f32.mrb[0].mxu0
  %v7547 = vadd.f32 %v7370, %v7546
  %7548 = vmatprep.mubr.bf16.mxu0 0
  %7549 = vmatmul.mubr.bf16.gmra.mrb[0].mxu0 %v7472
  %v7550 = vpop.f32.mrb[0].mxu0
  %v7551 = vadd.f32 %v7374, %v7550
  %v7552 = vpop.f32.mrb[0].mxu0
  %v7553 = vadd.f32 %v7376, %v7552
  %v7554 = vpop.f32.mrb[0].mxu0
  %v7555 = vadd.f32 %v7378, %v7554
  %v7556 = vpop.f32.mrb[0].mxu0
  %v7557 = vadd.f32 %v7380, %v7556
  %7558 = vmatprep.mubr.bf16.mxu0 0
  %7559 = vmatmul.mubr.bf16.gmra.mrb[0].mxu0 %v7475
  %v7560 = vpop.f32.mrb[0].mxu0
  %v7561 = vadd.f32 %v7384, %v7560
  %v7562 = vpop.f32.mrb[0].mxu0
  %v7563 = vadd.f32 %v7386, %v7562
  %v7564 = vpop.f32.mrb[0].mxu0
  %v7565 = vadd.f32 %v7388, %v7564
  %v7566 = vpop.f32.mrb[0].mxu0
  %v7567 = vadd.f32 %v7390, %v7566
  %7568 = vmatprep.mubr.bf16.mxu0 0
  %7569 = vmatmul.mubr.bf16.gmra.mrb[0].mxu0 %v7478
  %v7570 = vpop.f32.mrb[0].mxu0
  %v7571 = vadd.f32 %v7394, %v7570
  %v7572 = vpop.f32.mrb[0].mxu0
  %v7573 = vadd.f32 %v7396, %v7572
  %v7574 = vpop.f32.mrb[0].mxu0
  %v7575 = vadd.f32 %v7398, %v7574
  %v7576 = vpop.f32.mrb[0].mxu0
  %v7577 = vadd.f32 %v7400, %v7576
  %7578 = vmatprep.mubr.bf16.mxu0 0
  %7579 = vmatmul.mubr.bf16.gmra.mrb[0].mxu0 %v7481
  %v7580 = vpop.f32.mrb[0].mxu0
  %v7581 = vadd.f32 %v7404, %v7580
  %v7582 = vpop.f32.mrb[0].mxu0
  %v7583 = vadd.f32 %v7406, %v7582
  %v7584 = vpop.f32.mrb[0].mxu0
  %v7585 = vadd.f32 %v7408, %v7584
  %v7586 = vpop.f32.mrb[0].mxu0
  %v7587 = vadd.f32 %v7410, %v7586
  %7588 = vmatprep.mubr.bf16.mxu0 0
  %7589 = vmatmul.mubr.bf16.gmra.mrb[0].mxu0 %v7484
  %v7590 = vpop.f32.mrb[0].mxu0
  %v7591 = vadd.f32 %v7414, %v7590
  %v7592 = vpop.f32.mrb[0].mxu0
  %v7593 = vadd.f32 %v7416, %v7592
  %v7594 = vpop.f32.mrb[0].mxu0
  %v7595 = vadd.f32 %v7418, %v7594
  %v7596 = vpop.f32.mrb[0].mxu0
  %v7597 = vadd.f32 %v7420, %v7596
  %7598 = vdwg.mxu0
  %s7599 = scalar_lea.vmem %s18, 128
  %v7600 = vld [vmem:[%s7599] sm:$0xf]
  %v7601 = vld [vmem:[%s7599 + $0x4] sm:$0xf]
  %v7602 = vld [vmem:[%s7599 + $0x8] sm:$0xf]
  %v7603 = vld [vmem:[%s7599 + $0xc] sm:$0xf]
  %v7604 = vld [vmem:[%s7599 + $0x10] sm:$0xf]
  %v7605 = vld [vmem:[%s7599 + $0x14] sm:$0xf]
  %v7606 = vld [vmem:[%s7599 + $0x18] sm:$0xf]
  %v7607 = vld [vmem:[%s7599 + $0x1c] sm:$0xf]
  %v7608 = vld [vmem:[%s7599 + $0x20] sm:$0xf]
  %v7609 = vld [vmem:[%s7599 + $0x24] sm:$0xf]
  %v7610 = vld [vmem:[%s7599 + $0x28] sm:$0xf]
  %v7611 = vld [vmem:[%s7599 + $0x2c] sm:$0xf]
  %v7612 = vld [vmem:[%s7599 + $0x30] sm:$0xf]
  %v7613 = vld [vmem:[%s7599 + $0x34] sm:$0xf]
  %v7614 = vld [vmem:[%s7599 + $0x38] sm:$0xf]
  %v7615 = vld [vmem:[%s7599 + $0x3c] sm:$0xf]
  %v7632 = vunpack.c.l.b16 %v7600
  %v7633 = vunpack.c.l.b16 %v7601
  %v7634 = vunpack.c.l.b16 %v7602
  %v7635 = vunpack.c.l.b16 %v7603
  %v7636 = vunpack.c.l.b16 %v7604
  %v7637 = vunpack.c.l.b16 %v7605
  %v7638 = vunpack.c.l.b16 %v7606
  %v7639 = vunpack.c.l.b16 %v7607
  %v7640 = vunpack.c.l.b16 %v7608
  %v7641 = vunpack.c.l.b16 %v7609
  %v7642 = vunpack.c.l.b16 %v7610
  %v7643 = vunpack.c.l.b16 %v7611
  %v7644 = vunpack.c.l.b16 %v7612
  %v7645 = vunpack.c.l.b16 %v7613
  %v7646 = vunpack.c.l.b16 %v7614
  %v7647 = vunpack.c.l.b16 %v7615
  %v7648 = vpack.c.b16 %v7633, %v7632
  %v7649 = vpack.c.b16 %v7635, %v7634
  %v7650 = vpack.c.b16 %v7637, %v7636
  %v7651 = vpack.c.b16 %v7639, %v7638
  %v7652 = vpack.c.b16 %v7641, %v7640
  %v7653 = vpack.c.b16 %v7643, %v7642
  %v7654 = vpack.c.b16 %v7645, %v7644
  %v7655 = vpack.c.b16 %v7647, %v7646
  %v7657 = vsel %vm724, %v7648, 0
  %v7660 = vsel %vm724, %v7649, 0
  %v7663 = vsel %vm724, %v7650, 0
  %v7666 = vsel %vm724, %v7651, 0
  %v7669 = vsel %vm724, %v7652, 0
  %v7672 = vsel %vm724, %v7653, 0
  %v7675 = vsel %vm724, %v7654, 0
  %v7678 = vsel %vm724, %v7655, 0
  %7680 = vmatprep.subr.bf16.mxu0 %v7185
  %7681 = vmatpush1.bf16.msra.mxu0 %v7184
  %7682 = vmatprep.subr.bf16.mxu0 %v7193
  %7683 = vmatpush1.bf16.msra.mxu0 %v7192
  %7684 = vmatprep.subr.bf16.mxu0 %v7201
  %7685 = vmatpush1.bf16.msra.mxu0 %v7200
  %7686 = vmatprep.subr.bf16.mxu0 %v7209
  %7687 = vmatpush1.bf16.msra.mxu0 %v7208
  %7688 = vmatprep.subr.bf16.mxu0 0
  %7689 = vmatpush1.bf16.msra.mxu0 0
  %7690 = vmatprep.subr.bf16.mxu0 0
  %7691 = vmatpush1.bf16.msra.mxu0 0
  %7692 = vmatprep.subr.bf16.mxu0 0
  %7693 = vmatpush1.bf16.msra.mxu0 0
  %7694 = vmatprep.subr.bf16.mxu0 0
  %7695 = vmatpush1.bf16.msra.mxu0 0
  %7696 = vmatprep.subr.bf16.mxu0 0
  %7697 = vmatpush1.bf16.msra.mxu0 0
  %7698 = vmatprep.subr.bf16.mxu0 0
  %7699 = vmatpush1.bf16.msra.mxu0 0
  %7700 = vmatprep.subr.bf16.mxu0 0
  %7701 = vmatpush1.bf16.msra.mxu0 0
  %7702 = vmatprep.subr.bf16.mxu0 0
  %7703 = vmatpush1.bf16.msra.mxu0 0
  %7704 = vmatprep.subr.bf16.mxu0 0
  %7705 = vmatpush1.bf16.msra.mxu0 0
  %7706 = vmatprep.subr.bf16.mxu0 0
  %7707 = vmatpush1.bf16.msra.mxu0 0
  %7708 = vmatprep.subr.bf16.mxu0 0
  %7709 = vmatpush1.bf16.msra.mxu0 0
  %7710 = vmatprep.subr.bf16.mxu0 0
  %7711 = vmatpush1.bf16.msra.mxu0 0
  %7712 = vmatprep.mubr.bf16.mxu0 0
  %7713 = vmatmul.mubr.bf16.gmra.mrb[0].mxu0 %v7657
  %v7714 = vpop.f32.mrb[0].mxu0
  %v7715 = vadd.f32 0.0, %v7714
  %v7716 = vpop.f32.mrb[0].mxu0
  %v7717 = vadd.f32 0.0, %v7716
  %v7718 = vpop.f32.mrb[0].mxu0
  %v7719 = vadd.f32 0.0, %v7718
  %v7720 = vpop.f32.mrb[0].mxu0
  %v7721 = vadd.f32 0.0, %v7720
  %7722 = vmatprep.mubr.bf16.mxu0 0
  %7723 = vmatmul.mubr.bf16.gmra.mrb[0].mxu0 %v7660
  %v7724 = vpop.f32.mrb[0].mxu0
  %v7725 = vadd.f32 0.0, %v7724
  %v7726 = vpop.f32.mrb[0].mxu0
  %v7727 = vadd.f32 0.0, %v7726
  %v7728 = vpop.f32.mrb[0].mxu0
  %v7729 = vadd.f32 0.0, %v7728
  %v7730 = vpop.f32.mrb[0].mxu0
  %v7731 = vadd.f32 0.0, %v7730
  %7732 = vmatprep.mubr.bf16.mxu0 0
  %7733 = vmatmul.mubr.bf16.gmra.mrb[0].mxu0 %v7663
  %v7734 = vpop.f32.mrb[0].mxu0
  %v7735 = vadd.f32 0.0, %v7734
  %v7736 = vpop.f32.mrb[0].mxu0
  %v7737 = vadd.f32 0.0, %v7736
  %v7738 = vpop.f32.mrb[0].mxu0
  %v7739 = vadd.f32 0.0, %v7738
  %v7740 = vpop.f32.mrb[0].mxu0
  %v7741 = vadd.f32 0.0, %v7740
  %7742 = vmatprep.mubr.bf16.mxu0 0
  %7743 = vmatmul.mubr.bf16.gmra.mrb[0].mxu0 %v7666
  %v7744 = vpop.f32.mrb[0].mxu0
  %v7745 = vadd.f32 0.0, %v7744
  %v7746 = vpop.f32.mrb[0].mxu0
  %v7747 = vadd.f32 0.0, %v7746
  %v7748 = vpop.f32.mrb[0].mxu0
  %v7749 = vadd.f32 0.0, %v7748
  %v7750 = vpop.f32.mrb[0].mxu0
  %v7751 = vadd.f32 0.0, %v7750
  %7752 = vmatprep.mubr.bf16.mxu0 0
  %7753 = vmatmul.mubr.bf16.gmra.mrb[0].mxu0 %v7669
  %v7754 = vpop.f32.mrb[0].mxu0
  %v7755 = vadd.f32 0.0, %v7754
  %v7756 = vpop.f32.mrb[0].mxu0
  %v7757 = vadd.f32 0.0, %v7756
  %v7758 = vpop.f32.mrb[0].mxu0
  %v7759 = vadd.f32 0.0, %v7758
  %v7760 = vpop.f32.mrb[0].mxu0
  %v7761 = vadd.f32 0.0, %v7760
  %7762 = vmatprep.mubr.bf16.mxu0 0
  %7763 = vmatmul.mubr.bf16.gmra.mrb[0].mxu0 %v7672
  %v7764 = vpop.f32.mrb[0].mxu0
  %v7765 = vadd.f32 0.0, %v7764
  %v7766 = vpop.f32.mrb[0].mxu0
  %v7767 = vadd.f32 0.0, %v7766
  %v7768 = vpop.f32.mrb[0].mxu0
  %v7769 = vadd.f32 0.0, %v7768
  %v7770 = vpop.f32.mrb[0].mxu0
  %v7771 = vadd.f32 0.0, %v7770
  %7772 = vmatprep.mubr.bf16.mxu0 0
  %7773 = vmatmul.mubr.bf16.gmra.mrb[0].mxu0 %v7675
  %v7774 = vpop.f32.mrb[0].mxu0
  %v7775 = vadd.f32 0.0, %v7774
  %v7776 = vpop.f32.mrb[0].mxu0
  %v7777 = vadd.f32 0.0, %v7776
  %v7778 = vpop.f32.mrb[0].mxu0
  %v7779 = vadd.f32 0.0, %v7778
  %v7780 = vpop.f32.mrb[0].mxu0
  %v7781 = vadd.f32 0.0, %v7780
  %7782 = vmatprep.mubr.bf16.mxu0 0
  %7783 = vmatmul.mubr.bf16.gmra.mrb[0].mxu0 %v7678
  %v7784 = vpop.f32.mrb[0].mxu0
  %v7785 = vadd.f32 0.0, %v7784
  %v7786 = vpop.f32.mrb[0].mxu0
  %v7787 = vadd.f32 0.0, %v7786
  %v7788 = vpop.f32.mrb[0].mxu0
  %v7789 = vadd.f32 0.0, %v7788
  %v7790 = vpop.f32.mrb[0].mxu0
  %v7791 = vadd.f32 0.0, %v7790
  %7792 = vdwg.mxu0
  %v7793 = vadd.f32 %v7521, %v7715
  %v7794 = vadd.f32 %v7523, %v7717
  %v7795 = vadd.f32 %v7525, %v7719
  %v7796 = vadd.f32 %v7527, %v7721
  %v7797 = vadd.f32 %v7531, %v7725
  %v7798 = vadd.f32 %v7533, %v7727
  %v7799 = vadd.f32 %v7535, %v7729
  %v7800 = vadd.f32 %v7537, %v7731
  %v7801 = vadd.f32 %v7541, %v7735
  %v7802 = vadd.f32 %v7543, %v7737
  %v7803 = vadd.f32 %v7545, %v7739
  %v7804 = vadd.f32 %v7547, %v7741
  %v7805 = vadd.f32 %v7551, %v7745
  %v7806 = vadd.f32 %v7553, %v7747
  %v7807 = vadd.f32 %v7555, %v7749
  %v7808 = vadd.f32 %v7557, %v7751
  %v7809 = vadd.f32 %v7561, %v7755
  %v7810 = vadd.f32 %v7563, %v7757
  %v7811 = vadd.f32 %v7565, %v7759
  %v7812 = vadd.f32 %v7567, %v7761
  %v7813 = vadd.f32 %v7571, %v7765
  %v7814 = vadd.f32 %v7573, %v7767
  %v7815 = vadd.f32 %v7575, %v7769
  %v7816 = vadd.f32 %v7577, %v7771
  %v7817 = vadd.f32 %v7581, %v7775
  %v7818 = vadd.f32 %v7583, %v7777
  %v7819 = vadd.f32 %v7585, %v7779
  %v7820 = vadd.f32 %v7587, %v7781
  %v7821 = vadd.f32 %v7591, %v7785
  %v7822 = vadd.f32 %v7593, %v7787
  %v7823 = vadd.f32 %v7595, %v7789
  %v7824 = vadd.f32 %v7597, %v7791
  %s7825 = scalar_lea.vmem %s18, 192
  %v7826 = vld [vmem:[%s7825] sm:$0xf]
  %v7827 = vld [vmem:[%s7825 + $0x4] sm:$0xf]
  %v7828 = vld [vmem:[%s7825 + $0x8] sm:$0xf]
  %v7829 = vld [vmem:[%s7825 + $0xc] sm:$0xf]
  %v7830 = vld [vmem:[%s7825 + $0x10] sm:$0xf]
  %v7831 = vld [vmem:[%s7825 + $0x14] sm:$0xf]
  %v7832 = vld [vmem:[%s7825 + $0x18] sm:$0xf]
  %v7833 = vld [vmem:[%s7825 + $0x1c] sm:$0xf]
  %v7834 = vld [vmem:[%s7825 + $0x20] sm:$0xf]
  %v7835 = vld [vmem:[%s7825 + $0x24] sm:$0xf]
  %v7836 = vld [vmem:[%s7825 + $0x28] sm:$0xf]
  %v7837 = vld [vmem:[%s7825 + $0x2c] sm:$0xf]
  %v7838 = vld [vmem:[%s7825 + $0x30] sm:$0xf]
  %v7839 = vld [vmem:[%s7825 + $0x34] sm:$0xf]
  %v7840 = vld [vmem:[%s7825 + $0x38] sm:$0xf]
  %v7841 = vld [vmem:[%s7825 + $0x3c] sm:$0xf]
  %v7858 = vunpack.c.l.b16 %v7826
  %v7859 = vunpack.c.l.b16 %v7827
  %v7860 = vunpack.c.l.b16 %v7828
  %v7861 = vunpack.c.l.b16 %v7829
  %v7862 = vunpack.c.l.b16 %v7830
  %v7863 = vunpack.c.l.b16 %v7831
  %v7864 = vunpack.c.l.b16 %v7832
  %v7865 = vunpack.c.l.b16 %v7833
  %v7866 = vunpack.c.l.b16 %v7834
  %v7867 = vunpack.c.l.b16 %v7835
  %v7868 = vunpack.c.l.b16 %v7836
  %v7869 = vunpack.c.l.b16 %v7837
  %v7870 = vunpack.c.l.b16 %v7838
  %v7871 = vunpack.c.l.b16 %v7839
  %v7872 = vunpack.c.l.b16 %v7840
  %v7873 = vunpack.c.l.b16 %v7841
  %v7874 = vpack.c.b16 %v7859, %v7858
  %v7875 = vpack.c.b16 %v7861, %v7860
  %v7876 = vpack.c.b16 %v7863, %v7862
  %v7877 = vpack.c.b16 %v7865, %v7864
  %v7878 = vpack.c.b16 %v7867, %v7866
  %v7879 = vpack.c.b16 %v7869, %v7868
  %v7880 = vpack.c.b16 %v7871, %v7870
  %v7881 = vpack.c.b16 %v7873, %v7872
  %v7883 = vsel %vm724, %v7874, 0
  %v7886 = vsel %vm724, %v7875, 0
  %v7889 = vsel %vm724, %v7876, 0
  %v7892 = vsel %vm724, %v7877, 0
  %v7895 = vsel %vm724, %v7878, 0
  %v7898 = vsel %vm724, %v7879, 0
  %v7901 = vsel %vm724, %v7880, 0
  %v7904 = vsel %vm724, %v7881, 0
  %7906 = vmatprep.subr.bf16.mxu0 %v7187
  %7907 = vmatpush1.bf16.msra.mxu0 %v7186
  %7908 = vmatprep.subr.bf16.mxu0 %v7195
  %7909 = vmatpush1.bf16.msra.mxu0 %v7194
  %7910 = vmatprep.subr.bf16.mxu0 %v7203
  %7911 = vmatpush1.bf16.msra.mxu0 %v7202
  %7912 = vmatprep.subr.bf16.mxu0 %v7211
  %7913 = vmatpush1.bf16.msra.mxu0 %v7210
  %7914 = vmatprep.subr.bf16.mxu0 0
  %7915 = vmatpush1.bf16.msra.mxu0 0
  %7916 = vmatprep.subr.bf16.mxu0 0
  %7917 = vmatpush1.bf16.msra.mxu0 0
  %7918 = vmatprep.subr.bf16.mxu0 0
  %7919 = vmatpush1.bf16.msra.mxu0 0
  %7920 = vmatprep.subr.bf16.mxu0 0
  %7921 = vmatpush1.bf16.msra.mxu0 0
  %7922 = vmatprep.subr.bf16.mxu0 0
  %7923 = vmatpush1.bf16.msra.mxu0 0
  %7924 = vmatprep.subr.bf16.mxu0 0
  %7925 = vmatpush1.bf16.msra.mxu0 0
  %7926 = vmatprep.subr.bf16.mxu0 0
  %7927 = vmatpush1.bf16.msra.mxu0 0
  %7928 = vmatprep.subr.bf16.mxu0 0
  %7929 = vmatpush1.bf16.msra.mxu0 0
  %7930 = vmatprep.subr.bf16.mxu0 0
  %7931 = vmatpush1.bf16.msra.mxu0 0
  %7932 = vmatprep.subr.bf16.mxu0 0
  %7933 = vmatpush1.bf16.msra.mxu0 0
  %7934 = vmatprep.subr.bf16.mxu0 0
  %7935 = vmatpush1.bf16.msra.mxu0 0
  %7936 = vmatprep.subr.bf16.mxu0 0
  %7937 = vmatpush1.bf16.msra.mxu0 0
  %7938 = vmatprep.mubr.bf16.mxu0 0
  %7939 = vmatmul.mubr.bf16.gmra.mrb[0].mxu0 %v7883
  %v7940 = vpop.f32.mrb[0].mxu0
  %v7941 = vadd.f32 0.0, %v7940
  %v7942 = vpop.f32.mrb[0].mxu0
  %v7943 = vadd.f32 0.0, %v7942
  %v7944 = vpop.f32.mrb[0].mxu0
  %v7945 = vadd.f32 0.0, %v7944
  %v7946 = vpop.f32.mrb[0].mxu0
  %v7947 = vadd.f32 0.0, %v7946
  %7948 = vmatprep.mubr.bf16.mxu0 0
  %7949 = vmatmul.mubr.bf16.gmra.mrb[0].mxu0 %v7886
  %v7950 = vpop.f32.mrb[0].mxu0
  %v7951 = vadd.f32 0.0, %v7950
  %v7952 = vpop.f32.mrb[0].mxu0
  %v7953 = vadd.f32 0.0, %v7952
  %v7954 = vpop.f32.mrb[0].mxu0
  %v7955 = vadd.f32 0.0, %v7954
  %v7956 = vpop.f32.mrb[0].mxu0
  %v7957 = vadd.f32 0.0, %v7956
  %7958 = vmatprep.mubr.bf16.mxu0 0
  %7959 = vmatmul.mubr.bf16.gmra.mrb[0].mxu0 %v7889
  %v7960 = vpop.f32.mrb[0].mxu0
  %v7961 = vadd.f32 0.0, %v7960
  %v7962 = vpop.f32.mrb[0].mxu0
  %v7963 = vadd.f32 0.0, %v7962
  %v7964 = vpop.f32.mrb[0].mxu0
  %v7965 = vadd.f32 0.0, %v7964
  %v7966 = vpop.f32.mrb[0].mxu0
  %v7967 = vadd.f32 0.0, %v7966
  %7968 = vmatprep.mubr.bf16.mxu0 0
  %7969 = vmatmul.mubr.bf16.gmra.mrb[0].mxu0 %v7892
  %v7970 = vpop.f32.mrb[0].mxu0
  %v7971 = vadd.f32 0.0, %v7970
  %v7972 = vpop.f32.mrb[0].mxu0
  %v7973 = vadd.f32 0.0, %v7972
  %v7974 = vpop.f32.mrb[0].mxu0
  %v7975 = vadd.f32 0.0, %v7974
  %v7976 = vpop.f32.mrb[0].mxu0
  %v7977 = vadd.f32 0.0, %v7976
  %7978 = vmatprep.mubr.bf16.mxu0 0
  %7979 = vmatmul.mubr.bf16.gmra.mrb[0].mxu0 %v7895
  %v7980 = vpop.f32.mrb[0].mxu0
  %v7981 = vadd.f32 0.0, %v7980
  %v7982 = vpop.f32.mrb[0].mxu0
  %v7983 = vadd.f32 0.0, %v7982
  %v7984 = vpop.f32.mrb[0].mxu0
  %v7985 = vadd.f32 0.0, %v7984
  %v7986 = vpop.f32.mrb[0].mxu0
  %v7987 = vadd.f32 0.0, %v7986
  %7988 = vmatprep.mubr.bf16.mxu0 0
  %7989 = vmatmul.mubr.bf16.gmra.mrb[0].mxu0 %v7898
  %v7990 = vpop.f32.mrb[0].mxu0
  %v7991 = vadd.f32 0.0, %v7990
  %v7992 = vpop.f32.mrb[0].mxu0
  %v7993 = vadd.f32 0.0, %v7992
  %v7994 = vpop.f32.mrb[0].mxu0
  %v7995 = vadd.f32 0.0, %v7994
  %v7996 = vpop.f32.mrb[0].mxu0
  %v7997 = vadd.f32 0.0, %v7996
  %7998 = vmatprep.mubr.bf16.mxu0 0
  %7999 = vmatmul.mubr.bf16.gmra.mrb[0].mxu0 %v7901
  %v8000 = vpop.f32.mrb[0].mxu0
  %v8001 = vadd.f32 0.0, %v8000
  %v8002 = vpop.f32.mrb[0].mxu0
  %v8003 = vadd.f32 0.0, %v8002
  %v8004 = vpop.f32.mrb[0].mxu0
  %v8005 = vadd.f32 0.0, %v8004
  %v8006 = vpop.f32.mrb[0].mxu0
  %v8007 = vadd.f32 0.0, %v8006
  %8008 = vmatprep.mubr.bf16.mxu0 0
  %8009 = vmatmul.mubr.bf16.gmra.mrb[0].mxu0 %v7904
  %v8010 = vpop.f32.mrb[0].mxu0
  %v8011 = vadd.f32 0.0, %v8010
  %v8012 = vpop.f32.mrb[0].mxu0
  %v8013 = vadd.f32 0.0, %v8012
  %v8014 = vpop.f32.mrb[0].mxu0
  %v8015 = vadd.f32 0.0, %v8014
  %v8016 = vpop.f32.mrb[0].mxu0
  %v8017 = vadd.f32 0.0, %v8016
  %8018 = vdwg.mxu0
  %v8019 = vadd.f32 %v7793, %v7941
  %v8020 = vadd.f32 %v7794, %v7943
  %v8021 = vadd.f32 %v7795, %v7945
  %v8022 = vadd.f32 %v7796, %v7947
  %v8023 = vadd.f32 %v7797, %v7951
  %v8024 = vadd.f32 %v7798, %v7953
  %v8025 = vadd.f32 %v7799, %v7955
  %v8026 = vadd.f32 %v7800, %v7957
  %v8027 = vadd.f32 %v7801, %v7961
  %v8028 = vadd.f32 %v7802, %v7963
  %v8029 = vadd.f32 %v7803, %v7965
  %v8030 = vadd.f32 %v7804, %v7967
  %v8031 = vadd.f32 %v7805, %v7971
  %v8032 = vadd.f32 %v7806, %v7973
  %v8033 = vadd.f32 %v7807, %v7975
  %v8034 = vadd.f32 %v7808, %v7977
  %v8035 = vadd.f32 %v7809, %v7981
  %v8036 = vadd.f32 %v7810, %v7983
  %v8037 = vadd.f32 %v7811, %v7985
  %v8038 = vadd.f32 %v7812, %v7987
  %v8039 = vadd.f32 %v7813, %v7991
  %v8040 = vadd.f32 %v7814, %v7993
  %v8041 = vadd.f32 %v7815, %v7995
  %v8042 = vadd.f32 %v7816, %v7997
  %v8043 = vadd.f32 %v7817, %v8001
  %v8044 = vadd.f32 %v7818, %v8003
  %v8045 = vadd.f32 %v7819, %v8005
  %v8046 = vadd.f32 %v7820, %v8007
  %v8047 = vadd.f32 %v7821, %v8011
  %v8048 = vadd.f32 %v7822, %v8013
  %v8049 = vadd.f32 %v7823, %v8015
  %v8050 = vadd.f32 %v7824, %v8017
  %v8051 = vtanh.pop %v8019
  %v8052 = vtanh.pop %v8020
  %v8053 = vtanh.pop %v8021
  %v8054 = vtanh.pop %v8022
  %v8055 = vtanh.pop %v8023
  %v8056 = vtanh.pop %v8024
  %v8057 = vtanh.pop %v8025
  %v8058 = vtanh.pop %v8026
  %v8059 = vtanh.pop %v8027
  %v8060 = vtanh.pop %v8028
  %v8061 = vtanh.pop %v8029
  %v8062 = vtanh.pop %v8030
  %v8063 = vtanh.pop %v8031
  %v8064 = vtanh.pop %v8032
  %v8065 = vtanh.pop %v8033
  %v8066 = vtanh.pop %v8034
  %v8067 = vtanh.pop %v8035
  %v8068 = vtanh.pop %v8036
  %v8069 = vtanh.pop %v8037
  %v8070 = vtanh.pop %v8038
  %v8071 = vtanh.pop %v8039
  %v8072 = vtanh.pop %v8040
  %v8073 = vtanh.pop %v8041
  %v8074 = vtanh.pop %v8042
  %v8075 = vtanh.pop %v8043
  %v8076 = vtanh.pop %v8044
  %v8077 = vtanh.pop %v8045
  %v8078 = vtanh.pop %v8046
  %v8079 = vtanh.pop %v8047
  %v8080 = vtanh.pop %v8048
  %v8081 = vtanh.pop %v8049
  %v8082 = vtanh.pop %v8050
  %v8083 = vpack.c.bf16 %v8053, %v8051
  %v8084 = vpack.c.bf16 %v8054, %v8052
  %v8085 = vpack.c.bf16 %v8057, %v8055
  %v8086 = vpack.c.bf16 %v8058, %v8056
  %v8087 = vpack.c.bf16 %v8061, %v8059
  %v8088 = vpack.c.bf16 %v8062, %v8060
  %v8089 = vpack.c.bf16 %v8065, %v8063
  %v8090 = vpack.c.bf16 %v8066, %v8064
  %v8091 = vpack.c.bf16 %v8069, %v8067
  %v8092 = vpack.c.bf16 %v8070, %v8068
  %v8093 = vpack.c.bf16 %v8073, %v8071
  %v8094 = vpack.c.bf16 %v8074, %v8072
  %v8095 = vpack.c.bf16 %v8077, %v8075
  %v8096 = vpack.c.bf16 %v8078, %v8076
  %v8097 = vpack.c.bf16 %v8081, %v8079
  %v8098 = vpack.c.bf16 %v8082, %v8080
  %v8115 = vunpack.c.l.b16 %v8083
  %v8116 = vunpack.c.l.b16 %v8084
  %v8117 = vunpack.c.h.b16 %v8083
  %v8118 = vunpack.c.h.b16 %v8084
  %v8119 = vunpack.c.l.b16 %v8085
  %v8120 = vunpack.c.l.b16 %v8086
  %v8121 = vunpack.c.h.b16 %v8085
  %v8122 = vunpack.c.h.b16 %v8086
  %v8123 = vunpack.c.l.b16 %v8087
  %v8124 = vunpack.c.l.b16 %v8088
  %v8125 = vunpack.c.h.b16 %v8087
  %v8126 = vunpack.c.h.b16 %v8088
  %v8127 = vunpack.c.l.b16 %v8089
  %v8128 = vunpack.c.l.b16 %v8090
  %v8129 = vunpack.c.h.b16 %v8089
  %v8130 = vunpack.c.h.b16 %v8090
  %v8131 = vunpack.c.l.b16 %v8091
  %v8132 = vunpack.c.l.b16 %v8092
  %v8133 = vunpack.c.h.b16 %v8091
  %v8134 = vunpack.c.h.b16 %v8092
  %v8135 = vunpack.c.l.b16 %v8093
  %v8136 = vunpack.c.l.b16 %v8094
  %v8137 = vunpack.c.h.b16 %v8093
  %v8138 = vunpack.c.h.b16 %v8094
  %v8139 = vunpack.c.l.b16 %v8095
  %v8140 = vunpack.c.l.b16 %v8096
  %v8141 = vunpack.c.h.b16 %v8095
  %v8142 = vunpack.c.h.b16 %v8096
  %v8143 = vunpack.c.l.b16 %v8097
  %v8144 = vunpack.c.l.b16 %v8098
  %v8145 = vunpack.c.h.b16 %v8097
  %v8146 = vunpack.c.h.b16 %v8098
  %v8147 = vpack.c.b16 %v8116, %v8115
  %v8148 = vpack.c.b16 %v8118, %v8117
  %v8149 = vpack.c.b16 %v8120, %v8119
  %v8150 = vpack.c.b16 %v8122, %v8121
  %v8151 = vpack.c.b16 %v8124, %v8123
  %v8152 = vpack.c.b16 %v8126, %v8125
  %v8153 = vpack.c.b16 %v8128, %v8127
  %v8154 = vpack.c.b16 %v8130, %v8129
  %v8155 = vpack.c.b16 %v8132, %v8131
  %v8156 = vpack.c.b16 %v8134, %v8133
  %v8157 = vpack.c.b16 %v8136, %v8135
  %v8158 = vpack.c.b16 %v8138, %v8137
  %v8159 = vpack.c.b16 %v8140, %v8139
  %v8160 = vpack.c.b16 %v8142, %v8141
  %v8161 = vpack.c.b16 %v8144, %v8143
  %v8162 = vpack.c.b16 %v8146, %v8145
  %8179 = vst [vmem:[%s19] sm:$0xff] %v8147
  %8180 = vst [vmem:[%s19 + $0x8] sm:$0xff] %v8148
  %8181 = vst [vmem:[%s19 + $0x10] sm:$0xff] %v8149
  %8182 = vst [vmem:[%s19 + $0x18] sm:$0xff] %v8150
  %8183 = vst [vmem:[%s19 + $0x20] sm:$0xff] %v8151
  %8184 = vst [vmem:[%s19 + $0x28] sm:$0xff] %v8152
  %8185 = vst [vmem:[%s19 + $0x30] sm:$0xff] %v8153
  %8186 = vst [vmem:[%s19 + $0x38] sm:$0xff] %v8154
  %8187 = vst [vmem:[%s19 + $0x40] sm:$0xff] %v8155
  %8188 = vst [vmem:[%s19 + $0x48] sm:$0xff] %v8156
  %8189 = vst [vmem:[%s19 + $0x50] sm:$0xff] %v8157
  %8190 = vst [vmem:[%s19 + $0x58] sm:$0xff] %v8158
  %8191 = vst [vmem:[%s19 + $0x60] sm:$0xff] %v8159
  %8192 = vst [vmem:[%s19 + $0x68] sm:$0xff] %v8160
  %8193 = vst [vmem:[%s19 + $0x70] sm:$0xff] %v8161
  %8194 = vst [vmem:[%s19 + $0x78] sm:$0xff] %v8162
  // Predicated region
  $region78: #{generator_forward_pallas.1} parent=0 // pred_check
    _
  $region79: #{generator_forward_pallas.1} parent=0 // pred_check_branch
    %8196 = sbr.rel (0) target = $region81
  $region80: #{generator_forward_pallas.1} parent=0 // pred_region
    _
  $region81: #{generator_forward_pallas.1} parent=0 // pred_fallthru
    _
  // Predicated region
  $region82: #{generator_forward_pallas.1} parent=0 // pred_check
    _
  $region83: #{generator_forward_pallas.1} parent=0 // pred_check_branch
    %8198 = sbr.rel (0) target = $region85
  $region84: #{generator_forward_pallas.1} parent=0 // pred_region
    _
  $region85: #{generator_forward_pallas.1} parent=0 // pred_fallthru
    _

</llo_original>
